<compile_context>
chip_gen: v7x
topology: tpu7x:2x2x1
jax: 0.10.0
libtpu: 0.0.40
codegen_flags: <defaults>
</compile_context>

<pallas_src>
import functools

import jax
import jax.numpy as jnp
from jax.experimental import pallas as pl
from jax.experimental.pallas import tpu as pltpu

# ----------------------------- configuration -------------------------------
NUM_CLASSES = 5
NUM_ANCHORS = 9
FPN_LAYER = 4
NUM_CHANNEL = 32          # scaled down from 256 for the small demo
BACKBONE_CH = [16, 16, 32, 64, 128]   # stem, C2, C3, C4, C5 (scaled from resnet101)
WEIGHT_STDDEV = 0.01
IMG = 32                  # input spatial size
LEVEL_SIZES = (8, 4, 2, 1)            # C2..C5 spatial sizes for IMG=32
LEVEL_STRIDES = (4, 8, 16, 32)


def _round_up(x, m):
    return ((x + m - 1) // m) * m


# ----------------------------- Pallas kernels ------------------------------
def _mm_bias_kernel(a_ref, b_ref, bias_ref, o_ref, *, activation):
    acc = jnp.dot(a_ref[...], b_ref[...], preferred_element_type=jnp.float32)
    acc = acc + bias_ref[...]
    if activation == "relu":
        acc = jnp.maximum(acc, 0.0)
    elif activation == "sigmoid":
        # exp + approx reciprocal both go to the EUP slot -> ~free epilogue.
        acc = pl.reciprocal(1.0 + jnp.exp(-acc), approx=True)
    o_ref[...] = acc


def matmul_bias(a, b, bias, activation="none"):
    """a: (M, K), b: (K, N), bias: (N,) -> (M, N) in f32.

    bf16 MXU operands, f32 accumulate/epilogue.  N is padded to a multiple of
    128 (lane-dense stores); M uses a single block when small, 256-row blocks
    otherwise (multi-block grid is "parallel" for v7x megacore).
    """
    M, K = a.shape
    _, N = b.shape

    Np = _round_up(N, 128)
    if Np != N:
        b = jnp.pad(b, ((0, 0), (0, Np - N)))
        bias = jnp.pad(bias, (0, Np - N))

    if M <= 256:
        tm = _round_up(M, 16)
        grid_m = 1
    else:
        tm = 256
        grid_m = pl.cdiv(M, tm)
    Mp = tm * grid_m
    if Mp != M:
        a = jnp.pad(a, ((0, Mp - M), (0, 0)))

    a = a.astype(jnp.bfloat16)
    bm = b.astype(jnp.bfloat16)
    bias2 = bias.reshape(1, Np).astype(jnp.float32)

    # TODO(synk): at real RetinaNet scale (NUM_CHANNEL=256, IMG>=512) the full
    # (K, Np) weight block + (tm, K) A block must be re-tiled with a K-split
    # accumulator (P3) and an explicit vmem_limit_bytes; not needed here.
    out = pl.pallas_call(
        functools.partial(_mm_bias_kernel, activation=activation),
        out_shape=jax.ShapeDtypeStruct((Mp, Np), jnp.float32),
        grid=(grid_m,),
        in_specs=[
            pl.BlockSpec((tm, K), lambda i: (i, 0)),
            pl.BlockSpec((K, Np), lambda i: (0, 0)),
            pl.BlockSpec((1, Np), lambda i: (0, 0)),
        ],
        out_specs=pl.BlockSpec((tm, Np), lambda i: (i, 0)),
        compiler_params=pltpu.CompilerParams(
            dimension_semantics=("parallel",)),
    )(a, bm, bias2)
    return out[:M, :N]


def _decode_kernel(pa_ref, o_ref):
    # pa_ref: (8, Mp) = rows (dx,dy,dw,dh, x1a,y1a,x2a,y2a); o_ref: (4, Mp).
    dx, dy = pa_ref[0:1, :], pa_ref[1:2, :]
    dw, dh = pa_ref[2:3, :], pa_ref[3:4, :]
    x1a, y1a = pa_ref[4:5, :], pa_ref[5:6, :]
    x2a, y2a = pa_ref[6:7, :], pa_ref[7:8, :]
    wa = x2a - x1a
    ha = y2a - y1a
    cxa = x1a + 0.5 * wa
    cya = y1a + 0.5 * ha
    cx = dx * wa + cxa
    cy = dy * ha + cya
    w = jnp.exp(dw) * wa
    h = jnp.exp(dh) * ha
    o_ref[0:1, :] = cx - 0.5 * w
    o_ref[1:2, :] = cy - 0.5 * h
    o_ref[2:3, :] = cx + 0.5 * w
    o_ref[3:4, :] = cy + 0.5 * h


def decode_bboxes_pallas(preds, anchors):
    # TODO(synk): exact decode_bboxes() source not provided; standard RetinaNet
    # (dx,dy,dw,dh) -> (x1,y1,x2,y2) decoding is implemented.
    N, A, _ = preds.shape
    M = N * A
    Mp = _round_up(M, 128)
    p_t = jnp.transpose(preds, (2, 0, 1)).reshape(4, M)         # index n*A + a
    a_t = jnp.tile(jnp.transpose(anchors, (1, 0)), (1, N))      # index n*A + a
    pa = jnp.pad(jnp.concatenate([p_t, a_t], axis=0), ((0, 0), (0, Mp - M)))
    out = pl.pallas_call(
        _decode_kernel,
        out_shape=jax.ShapeDtypeStruct((4, Mp), jnp.float32),
    )(pa)
    return jnp.transpose(out[:, :M].reshape(4, N, A), (1, 2, 0))


# ----------------------------- conv via Pallas ------------------------------
def _im2col(x, kh, kw, stride):
    """x: (N,H,W,Cin) NHWC -> (N*Ho*Wo, kh*kw*Cin) patch rows."""
    # TODO(synk): patch extraction still runs in XLA (kh*kw HBM expansion); an
    # in-kernel shifted-accumulate conv would remove it but is not needed at
    # these tiny activation sizes.
    N, H, W, Cin = x.shape
    ph, pw = kh // 2, kw // 2
    xp = jnp.pad(x, ((0, 0), (ph, ph), (pw, pw), (0, 0)))
    Ho = (H + 2 * ph - kh) // stride + 1
    Wo = (W + 2 * pw - kw) // stride + 1
    cols = []
    for dy in range(kh):
        for dx in range(kw):
            cols.append(
                xp[:, dy:dy + stride * (Ho - 1) + 1:stride,
                      dx:dx + stride * (Wo - 1) + 1:stride, :])
    patches = jnp.concatenate(cols, axis=-1)         # (N,Ho,Wo,kh*kw*Cin)
    return patches.reshape(N * Ho * Wo, kh * kw * Cin), (Ho, Wo)


def conv2d(x, w, b, stride=1, activation="none"):
    """x: (N,H,W,Cin) NHWC, w: (kh,kw,Cin,Cout), PyTorch-style padding=k//2."""
    N, H, W, Cin = x.shape
    kh, kw, _, Cout = w.shape
    if kh == 1 and kw == 1 and stride == 1:
        out = matmul_bias(x.reshape(N * H * W, Cin), w.reshape(Cin, Cout), b,
                          activation)
        return out.reshape(N, H, W, Cout)
    a, (Ho, Wo) = _im2col(x, kh, kw, stride)
    out = matmul_bias(a, w.reshape(kh * kw * Cin, Cout), b, activation)
    return out.reshape(N, Ho, Wo, Cout)


def conv3x3_shared_levels(feats, w, b, activation="none"):
    """Apply one shared-weight 3x3 conv to every pyramid level with a SINGLE
    fused matmul: im2col rows of all levels are concatenated along M."""
    kh, kw, Cin, Cout = w.shape
    rows, shapes = [], []
    for f in feats:
        a, (ho, wo) = _im2col(f, kh, kw, 1)
        rows.append(a)
        shapes.append((f.shape[0], ho, wo))
    out = matmul_bias(jnp.concatenate(rows, axis=0),
                      w.reshape(kh * kw * Cin, Cout), b, activation)
    outs, off = [], 0
    for (n, ho, wo) in shapes:
        m = n * ho * wo
        outs.append(out[off:off + m].reshape(n, ho, wo, Cout))
        off += m
    return outs


def upsample2x(x):
    return jnp.repeat(jnp.repeat(x, 2, axis=1), 2, axis=2)


# ----------------------------- parameters -----------------------------------
def _conv_init(key, kh, kw, cin, cout, std=None):
    if std is None:  # He-style init for backbone / FPN
        std = (2.0 / (kh * kw * cin)) ** 0.5
    w = std * jax.random.normal(key, (kh, kw, cin, cout), jnp.float32)
    b = jnp.zeros((cout,), jnp.float32)
    return (w, b)


def init_params(key):
    keys = jax.random.split(key, 32)
    ki = iter(keys)
    params = {}
    # backbone: stem + 4 stages (each stride-2 3x3 conv + ReLU)
    # TODO(synk): resnet101 bottleneck stack not provided; scaled-down stand-in.
    bb = []
    cin = 3
    for cout in BACKBONE_CH:
        bb.append(_conv_init(next(ki), 3, 3, cin, cout))
        cin = cout
    params["backbone"] = bb
    # FPN: lateral 1x1 convs + 3x3 smoothing convs
    params["fpn_lateral"] = [
        _conv_init(next(ki), 1, 1, c, NUM_CHANNEL) for c in BACKBONE_CH[1:]
    ]
    params["fpn_smooth"] = [
        _conv_init(next(ki), 3, 3, NUM_CHANNEL, NUM_CHANNEL) for _ in range(FPN_LAYER)
    ]
    # Head (shared across levels): 4-conv class tower + 4-conv box tower
    # TODO(synk): cls_pred bias kept at zero (reference uses -log((1-pi)/pi) prior).
    params["cls_tower"] = [
        _conv_init(next(ki), 3, 3, NUM_CHANNEL, NUM_CHANNEL, WEIGHT_STDDEV)
        for _ in range(4)
    ]
    params["box_tower"] = [
        _conv_init(next(ki), 3, 3, NUM_CHANNEL, NUM_CHANNEL, WEIGHT_STDDEV)
        for _ in range(4)
    ]
    params["cls_pred"] = _conv_init(
        next(ki), 3, 3, NUM_CHANNEL, NUM_ANCHORS * NUM_CLASSES, WEIGHT_STDDEV)
    params["box_pred"] = _conv_init(
        next(ki), 3, 3, NUM_CHANNEL, NUM_ANCHORS * 4, WEIGHT_STDDEV)
    return params


# ----------------------------- forward ---------------------------------------
def retinanet_forward(params, x_nchw, anchors):
    # layout: NCHW input (PyTorch convention) -> NHWC internally.
    x = jnp.transpose(x_nchw, (0, 2, 3, 1)).astype(jnp.float32)

    # preprocessing(x, 'resnet101')
    # TODO(synk): exact preprocessing() source not provided; ImageNet mean/std
    # per-channel normalization used.
    mean = jnp.array([0.485, 0.456, 0.406], jnp.float32)
    std = jnp.array([0.229, 0.224, 0.225], jnp.float32)
    x = (x - mean) / std

    # backbone -> feature maps C2..C5
    feats = []
    h = x
    for i, (w, b) in enumerate(params["backbone"]):
        h = conv2d(h, w, b, stride=2, activation="relu")
        if i >= 1:
            feats.append(h)

    # FPN: lateral 1x1, top-down add (nearest 2x upsample), 3x3 smooth
    lat = [conv2d(f, w, b, stride=1)
           for f, (w, b) in zip(feats, params["fpn_lateral"])]
    p = [None] * len(lat)
    p[-1] = lat[-1]
    for i in range(len(lat) - 2, -1, -1):
        p[i] = lat[i] + upsample2x(p[i + 1])
    pyr = [conv2d(pi, w, b, stride=1)
           for pi, (w, b) in zip(p, params["fpn_smooth"])]

    # head: shared weights -> each tower/pred layer is one fused matmul over
    # all pyramid levels; sigmoid is fused into the cls_pred epilogue.
    c = pyr
    for (w, b) in params["cls_tower"]:
        c = conv3x3_shared_levels(c, w, b, activation="relu")
    cls_out = conv3x3_shared_levels(c, *params["cls_pred"],
                                    activation="sigmoid")   # already probs
    r = pyr
    for (w, b) in params["box_tower"]:
        r = conv3x3_shared_levels(r, w, b, activation="relu")
    box_out = conv3x3_shared_levels(r, *params["box_pred"])

    n = x.shape[0]
    # NHWC -> (N, H*W*A, C) matches PyTorch permute(0,2,3,1).view(n,-1,C).
    probs = jnp.concatenate(
        [o.reshape(n, -1, NUM_CLASSES) for o in cls_out], axis=1)
    preds = jnp.concatenate([o.reshape(n, -1, 4) for o in box_out], axis=1)

    bboxes = decode_bboxes_pallas(preds, anchors)
    return probs, bboxes


# ----------------------------- anchors ---------------------------------------
def make_anchors():
    all_boxes = []
    scales = jnp.array([2.0 ** (i / 3.0) for i in range(3)], jnp.float32)
    ratios = jnp.array([0.5, 1.0, 2.0], jnp.float32)
    for size, stride in zip(LEVEL_SIZES, LEVEL_STRIDES):
        ys = (jnp.arange(size, dtype=jnp.float32) + 0.5) * stride
        xs = (jnp.arange(size, dtype=jnp.float32) + 0.5) * stride
        cy, cx = jnp.meshgrid(ys, xs, indexing="ij")
        cy = cy.reshape(-1, 1)
        cx = cx.reshape(-1, 1)
        base = 4.0 * stride
        ws = (base * scales[None, :] * jnp.sqrt(ratios)[:, None]).reshape(1, -1)
        hs = (base * scales[None, :] / jnp.sqrt(ratios)[:, None]).reshape(1, -1)
        x1 = cx - ws / 2.0
        y1 = cy - hs / 2.0
        x2 = cx + ws / 2.0
        y2 = cy + hs / 2.0
        boxes = jnp.stack([x1, y1, x2, y2], axis=-1).reshape(-1, 4)
        all_boxes.append(boxes)
    return jnp.concatenate(all_boxes, axis=0)


# ----------------------------- main -------------------------------------------
if __name__ == "__main__":
    key = jax.random.PRNGKey(0)
    x = jax.random.uniform(key, (2, 3, IMG, IMG), jnp.float32)   # NCHW image
    anchors = make_anchors()                                     # (765, 4)
    params = init_params(jax.random.PRNGKey(42))

    fwd = jax.jit(retinanet_forward)
    probs, bboxes = fwd(params, x, anchors)
    jax.block_until_ready((probs, bboxes))

    total_anchors = sum(s * s for s in LEVEL_SIZES) * NUM_ANCHORS
    assert probs.shape == (2, total_anchors, NUM_CLASSES), probs.shape
    assert bboxes.shape == (2, total_anchors, 4), bboxes.shape
    assert bool(jnp.all(jnp.isfinite(probs))) and bool(jnp.all(jnp.isfinite(bboxes)))
    assert bool(jnp.all(probs >= 0.0)) and bool(jnp.all(probs <= 1.0))
    print("KERNEL_OK")
</pallas_src>

<mosaic_0001>
module attributes {stable_mosaic.version = 11 : i64} {
  func.func @_mm_bias_kernel(%arg0: i32, %arg1: memref<256x27xbf16, #tpu.memory_space<vmem>>, %arg2: memref<27x128xbf16, #tpu.memory_space<vmem>>, %arg3: memref<1x128xf32, #tpu.memory_space<vmem>>, %arg4: memref<256x128xf32, #tpu.memory_space<vmem>>) attributes {dimension_semantics = [#tpu.dimension_semantics<parallel>], iteration_bounds = array<i64: 2>, scalar_prefetch = 0 : i64, scratch_operands = 0 : i64, tpu.core_type = #tpu.core_type<tc>, window_params = [{transform_indices = @transform_0, window_bounds = array<i64: 256, 27>}, {pipeline_mode = #tpu.pipeline_mode<synchronous>, transform_indices = @transform_1, window_bounds = array<i64: 27, 128>}, {pipeline_mode = #tpu.pipeline_mode<synchronous>, transform_indices = @transform_2, window_bounds = array<i64: 1, 128>}, {transform_indices = @transform_3, window_bounds = array<i64: 256, 128>}]} {
    %c0 = arith.constant 0 : index
    %c0_0 = arith.constant 0 : index
    %0 = vector.load %arg1[%c0, %c0_0] : memref<256x27xbf16, #tpu.memory_space<vmem>>, vector<256x27xbf16>
    %c0_1 = arith.constant 0 : index
    %c0_2 = arith.constant 0 : index
    %1 = vector.load %arg2[%c0_1, %c0_2] : memref<27x128xbf16, #tpu.memory_space<vmem>>, vector<27x128xbf16>
    %cst = arith.constant dense<0.000000e+00> : vector<256x128xf32>
    %2 = tpu.matmul %0, %1, %cst {dimension_numbers = #tpu.dot_dimension_numbers<[1], [0], [0], [1], [0, 0, 1, 1], [], []>} : vector<256x27xbf16>, vector<27x128xbf16>, vector<256x128xf32> -> vector<256x128xf32>
    %c0_3 = arith.constant 0 : index
    %c0_4 = arith.constant 0 : index
    %3 = vector.load %arg3[%c0_3, %c0_4] : memref<1x128xf32, #tpu.memory_space<vmem>>, vector<1x128xf32>
    %4 = vector.broadcast %3 : vector<1x128xf32> to vector<256x128xf32>
    %5 = arith.addf %2, %4 : vector<256x128xf32>
    %cst_5 = arith.constant 0.000000e+00 : f32
    %6 = vector.broadcast %cst_5 : f32 to vector<256x128xf32>
    %7 = arith.maximumf %5, %6 : vector<256x128xf32>
    %c0_6 = arith.constant 0 : index
    %c0_7 = arith.constant 0 : index
    %8 = vector.load %arg4[%c0_6, %c0_7] : memref<256x128xf32, #tpu.memory_space<vmem>>, vector<256x128xf32>
    tpu.vector_store %arg4[%c0_6, %c0_7], %7 {strides = array<i32>} : memref<256x128xf32, #tpu.memory_space<vmem>>, vector<256x128xf32>,
    return
  }
  func.func @transform_0(%arg0: i32) -> (i32, i32) {
    %c0_i32 = arith.constant 0 : i32
    %c0_i32_0 = arith.constant 0 : i32
    return %arg0, %c0_i32 : i32, i32
  }
  func.func @transform_1(%arg0: i32) -> (i32, i32) {
    %c0_i32 = arith.constant 0 : i32
    %c0_i32_0 = arith.constant 0 : i32
    %c0_i32_1 = arith.constant 0 : i32
    return %c0_i32, %c0_i32_0 : i32, i32
  }
  func.func @transform_2(%arg0: i32) -> (i32, i32) {
    %c0_i32 = arith.constant 0 : i32
    %c0_i32_0 = arith.constant 0 : i32
    %c0_i32_1 = arith.constant 0 : i32
    return %c0_i32, %c0_i32_0 : i32, i32
  }
  func.func @transform_3(%arg0: i32) -> (i32, i32) {
    %c0_i32 = arith.constant 0 : i32
    %c0_i32_0 = arith.constant 0 : i32
    return %arg0, %c0_i32 : i32, i32
  }
}

module attributes {stable_mosaic.version = 11 : i64} {
  func.func @_mm_bias_kernel(%arg0: i32, %arg1: memref<128x144xbf16, #tpu.memory_space<vmem>>, %arg2: memref<144x128xbf16, #tpu.memory_space<vmem>>, %arg3: memref<1x128xf32, #tpu.memory_space<vmem>>, %arg4: memref<128x128xf32, #tpu.memory_space<vmem>>) attributes {dimension_semantics = [#tpu.dimension_semantics<parallel>], iteration_bounds = array<i64: 1>, scalar_prefetch = 0 : i64, scratch_operands = 0 : i64, tpu.core_type = #tpu.core_type<tc>, window_params = [{transform_indices = @transform_0, window_bounds = array<i64: 128, 144>}, {pipeline_mode = #tpu.pipeline_mode<synchronous>, transform_indices = @transform_1, window_bounds = array<i64: 144, 128>}, {pipeline_mode = #tpu.pipeline_mode<synchronous>, transform_indices = @transform_2, window_bounds = array<i64: 1, 128>}, {transform_indices = @transform_3, window_bounds = array<i64: 128, 128>}]} {
    %c0 = arith.constant 0 : index
    %c0_0 = arith.constant 0 : index
    %0 = vector.load %arg1[%c0, %c0_0] : memref<128x144xbf16, #tpu.memory_space<vmem>>, vector<128x144xbf16>
    %c0_1 = arith.constant 0 : index
    %c0_2 = arith.constant 0 : index
    %1 = vector.load %arg2[%c0_1, %c0_2] : memref<144x128xbf16, #tpu.memory_space<vmem>>, vector<144x128xbf16>
    %cst = arith.constant dense<0.000000e+00> : vector<128x128xf32>
    %2 = tpu.matmul %0, %1, %cst {dimension_numbers = #tpu.dot_dimension_numbers<[1], [0], [0], [1], [0, 0, 1, 1], [], []>} : vector<128x144xbf16>, vector<144x128xbf16>, vector<128x128xf32> -> vector<128x128xf32>
    %c0_3 = arith.constant 0 : index
    %c0_4 = arith.constant 0 : index
    %3 = vector.load %arg3[%c0_3, %c0_4] : memref<1x128xf32, #tpu.memory_space<vmem>>, vector<1x128xf32>
    %4 = vector.broadcast %3 : vector<1x128xf32> to vector<128x128xf32>
    %5 = arith.addf %2, %4 : vector<128x128xf32>
    %cst_5 = arith.constant 0.000000e+00 : f32
    %6 = vector.broadcast %cst_5 : f32 to vector<128x128xf32>
    %7 = arith.maximumf %5, %6 : vector<128x128xf32>
    %c0_6 = arith.constant 0 : index
    %c0_7 = arith.constant 0 : index
    %8 = vector.load %arg4[%c0_6, %c0_7] : memref<128x128xf32, #tpu.memory_space<vmem>>, vector<128x128xf32>
    tpu.vector_store %arg4[%c0_6, %c0_7], %7 {strides = array<i32>} : memref<128x128xf32, #tpu.memory_space<vmem>>, vector<128x128xf32>,
    return
  }
  func.func @transform_0(%arg0: i32) -> (i32, i32) {
    %c0_i32 = arith.constant 0 : i32
    %c0_i32_0 = arith.constant 0 : i32
    return %arg0, %c0_i32 : i32, i32
  }
  func.func @transform_1(%arg0: i32) -> (i32, i32) {
    %c0_i32 = arith.constant 0 : i32
    %c0_i32_0 = arith.constant 0 : i32
    %c0_i32_1 = arith.constant 0 : i32
    return %c0_i32, %c0_i32_0 : i32, i32
  }
  func.func @transform_2(%arg0: i32) -> (i32, i32) {
    %c0_i32 = arith.constant 0 : i32
    %c0_i32_0 = arith.constant 0 : i32
    %c0_i32_1 = arith.constant 0 : i32
    return %c0_i32, %c0_i32_0 : i32, i32
  }
  func.func @transform_3(%arg0: i32) -> (i32, i32) {
    %c0_i32 = arith.constant 0 : i32
    %c0_i32_0 = arith.constant 0 : i32
    return %arg0, %c0_i32 : i32, i32
  }
}

module attributes {stable_mosaic.version = 11 : i64} {
  func.func @_mm_bias_kernel(%arg0: i32, %arg1: memref<32x144xbf16, #tpu.memory_space<vmem>>, %arg2: memref<144x128xbf16, #tpu.memory_space<vmem>>, %arg3: memref<1x128xf32, #tpu.memory_space<vmem>>, %arg4: memref<32x128xf32, #tpu.memory_space<vmem>>) attributes {dimension_semantics = [#tpu.dimension_semantics<parallel>], iteration_bounds = array<i64: 1>, scalar_prefetch = 0 : i64, scratch_operands = 0 : i64, tpu.core_type = #tpu.core_type<tc>, window_params = [{transform_indices = @transform_0, window_bounds = array<i64: 32, 144>}, {pipeline_mode = #tpu.pipeline_mode<synchronous>, transform_indices = @transform_1, window_bounds = array<i64: 144, 128>}, {pipeline_mode = #tpu.pipeline_mode<synchronous>, transform_indices = @transform_2, window_bounds = array<i64: 1, 128>}, {transform_indices = @transform_3, window_bounds = array<i64: 32, 128>}]} {
    %c0 = arith.constant 0 : index
    %c0_0 = arith.constant 0 : index
    %0 = vector.load %arg1[%c0, %c0_0] : memref<32x144xbf16, #tpu.memory_space<vmem>>, vector<32x144xbf16>
    %c0_1 = arith.constant 0 : index
    %c0_2 = arith.constant 0 : index
    %1 = vector.load %arg2[%c0_1, %c0_2] : memref<144x128xbf16, #tpu.memory_space<vmem>>, vector<144x128xbf16>
    %cst = arith.constant dense<0.000000e+00> : vector<32x128xf32>
    %2 = tpu.matmul %0, %1, %cst {dimension_numbers = #tpu.dot_dimension_numbers<[1], [0], [0], [1], [0, 0, 1, 1], [], []>} : vector<32x144xbf16>, vector<144x128xbf16>, vector<32x128xf32> -> vector<32x128xf32>
    %c0_3 = arith.constant 0 : index
    %c0_4 = arith.constant 0 : index
    %3 = vector.load %arg3[%c0_3, %c0_4] : memref<1x128xf32, #tpu.memory_space<vmem>>, vector<1x128xf32>
    %4 = vector.broadcast %3 : vector<1x128xf32> to vector<32x128xf32>
    %5 = arith.addf %2, %4 : vector<32x128xf32>
    %cst_5 = arith.constant 0.000000e+00 : f32
    %6 = vector.broadcast %cst_5 : f32 to vector<32x128xf32>
    %7 = arith.maximumf %5, %6 : vector<32x128xf32>
    %c0_6 = arith.constant 0 : index
    %c0_7 = arith.constant 0 : index
    %8 = vector.load %arg4[%c0_6, %c0_7] : memref<32x128xf32, #tpu.memory_space<vmem>>, vector<32x128xf32>
    tpu.vector_store %arg4[%c0_6, %c0_7], %7 {strides = array<i32>} : memref<32x128xf32, #tpu.memory_space<vmem>>, vector<32x128xf32>,
    return
  }
  func.func @transform_0(%arg0: i32) -> (i32, i32) {
    %c0_i32 = arith.constant 0 : i32
    %c0_i32_0 = arith.constant 0 : i32
    return %arg0, %c0_i32 : i32, i32
  }
  func.func @transform_1(%arg0: i32) -> (i32, i32) {
    %c0_i32 = arith.constant 0 : i32
    %c0_i32_0 = arith.constant 0 : i32
    %c0_i32_1 = arith.constant 0 : i32
    return %c0_i32, %c0_i32_0 : i32, i32
  }
  func.func @transform_2(%arg0: i32) -> (i32, i32) {
    %c0_i32 = arith.constant 0 : i32
    %c0_i32_0 = arith.constant 0 : i32
    %c0_i32_1 = arith.constant 0 : i32
    return %c0_i32, %c0_i32_0 : i32, i32
  }
  func.func @transform_3(%arg0: i32) -> (i32, i32) {
    %c0_i32 = arith.constant 0 : i32
    %c0_i32_0 = arith.constant 0 : i32
    return %arg0, %c0_i32 : i32, i32
  }
}

module attributes {stable_mosaic.version = 11 : i64} {
  func.func @_mm_bias_kernel(%arg0: i32, %arg1: memref<16x128xbf16, #tpu.memory_space<vmem>>, %arg2: memref<128x128xbf16, #tpu.memory_space<vmem>>, %arg3: memref<1x128xf32, #tpu.memory_space<vmem>>, %arg4: memref<16x128xf32, #tpu.memory_space<vmem>>) attributes {dimension_semantics = [#tpu.dimension_semantics<parallel>], iteration_bounds = array<i64: 1>, scalar_prefetch = 0 : i64, scratch_operands = 0 : i64, tpu.core_type = #tpu.core_type<tc>, window_params = [{transform_indices = @transform_0, window_bounds = array<i64: 16, 128>}, {pipeline_mode = #tpu.pipeline_mode<synchronous>, transform_indices = @transform_1, window_bounds = array<i64: 128, 128>}, {pipeline_mode = #tpu.pipeline_mode<synchronous>, transform_indices = @transform_2, window_bounds = array<i64: 1, 128>}, {transform_indices = @transform_3, window_bounds = array<i64: 16, 128>}]} {
    %c0 = arith.constant 0 : index
    %c0_0 = arith.constant 0 : index
    %0 = vector.load %arg1[%c0, %c0_0] : memref<16x128xbf16, #tpu.memory_space<vmem>>, vector<16x128xbf16>
    %c0_1 = arith.constant 0 : index
    %c0_2 = arith.constant 0 : index
    %1 = vector.load %arg2[%c0_1, %c0_2] : memref<128x128xbf16, #tpu.memory_space<vmem>>, vector<128x128xbf16>
    %cst = arith.constant dense<0.000000e+00> : vector<16x128xf32>
    %2 = tpu.matmul %0, %1, %cst {dimension_numbers = #tpu.dot_dimension_numbers<[1], [0], [0], [1], [0, 0, 1, 1], [], []>} : vector<16x128xbf16>, vector<128x128xbf16>, vector<16x128xf32> -> vector<16x128xf32>
    %c0_3 = arith.constant 0 : index
    %c0_4 = arith.constant 0 : index
    %3 = vector.load %arg3[%c0_3, %c0_4] : memref<1x128xf32, #tpu.memory_space<vmem>>, vector<1x128xf32>
    %4 = vector.broadcast %3 : vector<1x128xf32> to vector<16x128xf32>
    %5 = arith.addf %2, %4 : vector<16x128xf32>
    %c0_5 = arith.constant 0 : index
    %c0_6 = arith.constant 0 : index
    %6 = vector.load %arg4[%c0_5, %c0_6] : memref<16x128xf32, #tpu.memory_space<vmem>>, vector<16x128xf32>
    tpu.vector_store %arg4[%c0_5, %c0_6], %5 {strides = array<i32>} : memref<16x128xf32, #tpu.memory_space<vmem>>, vector<16x128xf32>,
    return
  }
  func.func @transform_0(%arg0: i32) -> (i32, i32) {
    %c0_i32 = arith.constant 0 : i32
    %c0_i32_0 = arith.constant 0 : i32
    return %arg0, %c0_i32 : i32, i32
  }
  func.func @transform_1(%arg0: i32) -> (i32, i32) {
    %c0_i32 = arith.constant 0 : i32
    %c0_i32_0 = arith.constant 0 : i32
    %c0_i32_1 = arith.constant 0 : i32
    return %c0_i32, %c0_i32_0 : i32, i32
  }
  func.func @transform_2(%arg0: i32) -> (i32, i32) {
    %c0_i32 = arith.constant 0 : i32
    %c0_i32_0 = arith.constant 0 : i32
    %c0_i32_1 = arith.constant 0 : i32
    return %c0_i32, %c0_i32_0 : i32, i32
  }
  func.func @transform_3(%arg0: i32) -> (i32, i32) {
    %c0_i32 = arith.constant 0 : i32
    %c0_i32_0 = arith.constant 0 : i32
    return %arg0, %c0_i32 : i32, i32
  }
}

module attributes {stable_mosaic.version = 11 : i64} {
  func.func @_mm_bias_kernel(%arg0: i32, %arg1: memref<16x576xbf16, #tpu.memory_space<vmem>>, %arg2: memref<576x128xbf16, #tpu.memory_space<vmem>>, %arg3: memref<1x128xf32, #tpu.memory_space<vmem>>, %arg4: memref<16x128xf32, #tpu.memory_space<vmem>>) attributes {dimension_semantics = [#tpu.dimension_semantics<parallel>], iteration_bounds = array<i64: 1>, scalar_prefetch = 0 : i64, scratch_operands = 0 : i64, tpu.core_type = #tpu.core_type<tc>, window_params = [{transform_indices = @transform_0, window_bounds = array<i64: 16, 576>}, {pipeline_mode = #tpu.pipeline_mode<synchronous>, transform_indices = @transform_1, window_bounds = array<i64: 576, 128>}, {pipeline_mode = #tpu.pipeline_mode<synchronous>, transform_indices = @transform_2, window_bounds = array<i64: 1, 128>}, {transform_indices = @transform_3, window_bounds = array<i64: 16, 128>}]} {
    %c0 = arith.constant 0 : index
    %c0_0 = arith.constant 0 : index
    %0 = vector.load %arg1[%c0, %c0_0] : memref<16x576xbf16, #tpu.memory_space<vmem>>, vector<16x576xbf16>
    %c0_1 = arith.constant 0 : index
    %c0_2 = arith.constant 0 : index
    %1 = vector.load %arg2[%c0_1, %c0_2] : memref<576x128xbf16, #tpu.memory_space<vmem>>, vector<576x128xbf16>
    %cst = arith.constant dense<0.000000e+00> : vector<16x128xf32>
    %2 = tpu.matmul %0, %1, %cst {dimension_numbers = #tpu.dot_dimension_numbers<[1], [0], [0], [1], [0, 0, 1, 1], [], []>} : vector<16x576xbf16>, vector<576x128xbf16>, vector<16x128xf32> -> vector<16x128xf32>
    %c0_3 = arith.constant 0 : index
    %c0_4 = arith.constant 0 : index
    %3 = vector.load %arg3[%c0_3, %c0_4] : memref<1x128xf32, #tpu.memory_space<vmem>>, vector<1x128xf32>
    %4 = vector.broadcast %3 : vector<1x128xf32> to vector<16x128xf32>
    %5 = arith.addf %2, %4 : vector<16x128xf32>
    %cst_5 = arith.constant 0.000000e+00 : f32
    %6 = vector.broadcast %cst_5 : f32 to vector<16x128xf32>
    %7 = arith.maximumf %5, %6 : vector<16x128xf32>
    %c0_6 = arith.constant 0 : index
    %c0_7 = arith.constant 0 : index
    %8 = vector.load %arg4[%c0_6, %c0_7] : memref<16x128xf32, #tpu.memory_space<vmem>>, vector<16x128xf32>
    tpu.vector_store %arg4[%c0_6, %c0_7], %7 {strides = array<i32>} : memref<16x128xf32, #tpu.memory_space<vmem>>, vector<16x128xf32>,
    return
  }
  func.func @transform_0(%arg0: i32) -> (i32, i32) {
    %c0_i32 = arith.constant 0 : i32
    %c0_i32_0 = arith.constant 0 : i32
    return %arg0, %c0_i32 : i32, i32
  }
  func.func @transform_1(%arg0: i32) -> (i32, i32) {
    %c0_i32 = arith.constant 0 : i32
    %c0_i32_0 = arith.constant 0 : i32
    %c0_i32_1 = arith.constant 0 : i32
    return %c0_i32, %c0_i32_0 : i32, i32
  }
  func.func @transform_2(%arg0: i32) -> (i32, i32) {
    %c0_i32 = arith.constant 0 : i32
    %c0_i32_0 = arith.constant 0 : i32
    %c0_i32_1 = arith.constant 0 : i32
    return %c0_i32, %c0_i32_0 : i32, i32
  }
  func.func @transform_3(%arg0: i32) -> (i32, i32) {
    %c0_i32 = arith.constant 0 : i32
    %c0_i32_0 = arith.constant 0 : i32
    return %arg0, %c0_i32 : i32, i32
  }
}

module attributes {stable_mosaic.version = 11 : i64} {
  func.func @_mm_bias_kernel(%arg0: i32, %arg1: memref<16x288xbf16, #tpu.memory_space<vmem>>, %arg2: memref<288x128xbf16, #tpu.memory_space<vmem>>, %arg3: memref<1x128xf32, #tpu.memory_space<vmem>>, %arg4: memref<16x128xf32, #tpu.memory_space<vmem>>) attributes {dimension_semantics = [#tpu.dimension_semantics<parallel>], iteration_bounds = array<i64: 1>, scalar_prefetch = 0 : i64, scratch_operands = 0 : i64, tpu.core_type = #tpu.core_type<tc>, window_params = [{transform_indices = @transform_0, window_bounds = array<i64: 16, 288>}, {pipeline_mode = #tpu.pipeline_mode<synchronous>, transform_indices = @transform_1, window_bounds = array<i64: 288, 128>}, {pipeline_mode = #tpu.pipeline_mode<synchronous>, transform_indices = @transform_2, window_bounds = array<i64: 1, 128>}, {transform_indices = @transform_3, window_bounds = array<i64: 16, 128>}]} {
    %c0 = arith.constant 0 : index
    %c0_0 = arith.constant 0 : index
    %0 = vector.load %arg1[%c0, %c0_0] : memref<16x288xbf16, #tpu.memory_space<vmem>>, vector<16x288xbf16>
    %c0_1 = arith.constant 0 : index
    %c0_2 = arith.constant 0 : index
    %1 = vector.load %arg2[%c0_1, %c0_2] : memref<288x128xbf16, #tpu.memory_space<vmem>>, vector<288x128xbf16>
    %cst = arith.constant dense<0.000000e+00> : vector<16x128xf32>
    %2 = tpu.matmul %0, %1, %cst {dimension_numbers = #tpu.dot_dimension_numbers<[1], [0], [0], [1], [0, 0, 1, 1], [], []>} : vector<16x288xbf16>, vector<288x128xbf16>, vector<16x128xf32> -> vector<16x128xf32>
    %c0_3 = arith.constant 0 : index
    %c0_4 = arith.constant 0 : index
    %3 = vector.load %arg3[%c0_3, %c0_4] : memref<1x128xf32, #tpu.memory_space<vmem>>, vector<1x128xf32>
    %4 = vector.broadcast %3 : vector<1x128xf32> to vector<16x128xf32>
    %5 = arith.addf %2, %4 : vector<16x128xf32>
    %cst_5 = arith.constant 0.000000e+00 : f32
    %6 = vector.broadcast %cst_5 : f32 to vector<16x128xf32>
    %7 = arith.maximumf %5, %6 : vector<16x128xf32>
    %c0_6 = arith.constant 0 : index
    %c0_7 = arith.constant 0 : index
    %8 = vector.load %arg4[%c0_6, %c0_7] : memref<16x128xf32, #tpu.memory_space<vmem>>, vector<16x128xf32>
    tpu.vector_store %arg4[%c0_6, %c0_7], %7 {strides = array<i32>} : memref<16x128xf32, #tpu.memory_space<vmem>>, vector<16x128xf32>,
    return
  }
  func.func @transform_0(%arg0: i32) -> (i32, i32) {
    %c0_i32 = arith.constant 0 : i32
    %c0_i32_0 = arith.constant 0 : i32
    return %arg0, %c0_i32 : i32, i32
  }
  func.func @transform_1(%arg0: i32) -> (i32, i32) {
    %c0_i32 = arith.constant 0 : i32
    %c0_i32_0 = arith.constant 0 : i32
    %c0_i32_1 = arith.constant 0 : i32
    return %c0_i32, %c0_i32_0 : i32, i32
  }
  func.func @transform_2(%arg0: i32) -> (i32, i32) {
    %c0_i32 = arith.constant 0 : i32
    %c0_i32_0 = arith.constant 0 : i32
    %c0_i32_1 = arith.constant 0 : i32
    return %c0_i32, %c0_i32_0 : i32, i32
  }
  func.func @transform_3(%arg0: i32) -> (i32, i32) {
    %c0_i32 = arith.constant 0 : i32
    %c0_i32_0 = arith.constant 0 : i32
    return %arg0, %c0_i32 : i32, i32
  }
}

module attributes {stable_mosaic.version = 11 : i64} {
  func.func @_mm_bias_kernel(%arg0: i32, %arg1: memref<16x288xbf16, #tpu.memory_space<vmem>>, %arg2: memref<288x128xbf16, #tpu.memory_space<vmem>>, %arg3: memref<1x128xf32, #tpu.memory_space<vmem>>, %arg4: memref<16x128xf32, #tpu.memory_space<vmem>>) attributes {dimension_semantics = [#tpu.dimension_semantics<parallel>], iteration_bounds = array<i64: 1>, scalar_prefetch = 0 : i64, scratch_operands = 0 : i64, tpu.core_type = #tpu.core_type<tc>, window_params = [{transform_indices = @transform_0, window_bounds = array<i64: 16, 288>}, {pipeline_mode = #tpu.pipeline_mode<synchronous>, transform_indices = @transform_1, window_bounds = array<i64: 288, 128>}, {pipeline_mode = #tpu.pipeline_mode<synchronous>, transform_indices = @transform_2, window_bounds = array<i64: 1, 128>}, {transform_indices = @transform_3, window_bounds = array<i64: 16, 128>}]} {
    %c0 = arith.constant 0 : index
    %c0_0 = arith.constant 0 : index
    %0 = vector.load %arg1[%c0, %c0_0] : memref<16x288xbf16, #tpu.memory_space<vmem>>, vector<16x288xbf16>
    %c0_1 = arith.constant 0 : index
    %c0_2 = arith.constant 0 : index
    %1 = vector.load %arg2[%c0_1, %c0_2] : memref<288x128xbf16, #tpu.memory_space<vmem>>, vector<288x128xbf16>
    %cst = arith.constant dense<0.000000e+00> : vector<16x128xf32>
    %2 = tpu.matmul %0, %1, %cst {dimension_numbers = #tpu.dot_dimension_numbers<[1], [0], [0], [1], [0, 0, 1, 1], [], []>} : vector<16x288xbf16>, vector<288x128xbf16>, vector<16x128xf32> -> vector<16x128xf32>
    %c0_3 = arith.constant 0 : index
    %c0_4 = arith.constant 0 : index
    %3 = vector.load %arg3[%c0_3, %c0_4] : memref<1x128xf32, #tpu.memory_space<vmem>>, vector<1x128xf32>
    %4 = vector.broadcast %3 : vector<1x128xf32> to vector<16x128xf32>
    %5 = arith.addf %2, %4 : vector<16x128xf32>
    %c0_5 = arith.constant 0 : index
    %c0_6 = arith.constant 0 : index
    %6 = vector.load %arg4[%c0_5, %c0_6] : memref<16x128xf32, #tpu.memory_space<vmem>>, vector<16x128xf32>
    tpu.vector_store %arg4[%c0_5, %c0_6], %5 {strides = array<i32>} : memref<16x128xf32, #tpu.memory_space<vmem>>, vector<16x128xf32>,
    return
  }
  func.func @transform_0(%arg0: i32) -> (i32, i32) {
    %c0_i32 = arith.constant 0 : i32
    %c0_i32_0 = arith.constant 0 : i32
    return %arg0, %c0_i32 : i32, i32
  }
  func.func @transform_1(%arg0: i32) -> (i32, i32) {
    %c0_i32 = arith.constant 0 : i32
    %c0_i32_0 = arith.constant 0 : i32
    %c0_i32_1 = arith.constant 0 : i32
    return %c0_i32, %c0_i32_0 : i32, i32
  }
  func.func @transform_2(%arg0: i32) -> (i32, i32) {
    %c0_i32 = arith.constant 0 : i32
    %c0_i32_0 = arith.constant 0 : i32
    %c0_i32_1 = arith.constant 0 : i32
    return %c0_i32, %c0_i32_0 : i32, i32
  }
  func.func @transform_3(%arg0: i32) -> (i32, i32) {
    %c0_i32 = arith.constant 0 : i32
    %c0_i32_0 = arith.constant 0 : i32
    return %arg0, %c0_i32 : i32, i32
  }
}

module attributes {stable_mosaic.version = 11 : i64} {
  func.func @_mm_bias_kernel(%arg0: i32, %arg1: memref<16x64xbf16, #tpu.memory_space<vmem>>, %arg2: memref<64x128xbf16, #tpu.memory_space<vmem>>, %arg3: memref<1x128xf32, #tpu.memory_space<vmem>>, %arg4: memref<16x128xf32, #tpu.memory_space<vmem>>) attributes {dimension_semantics = [#tpu.dimension_semantics<parallel>], iteration_bounds = array<i64: 1>, scalar_prefetch = 0 : i64, scratch_operands = 0 : i64, tpu.core_type = #tpu.core_type<tc>, window_params = [{transform_indices = @transform_0, window_bounds = array<i64: 16, 64>}, {pipeline_mode = #tpu.pipeline_mode<synchronous>, transform_indices = @transform_1, window_bounds = array<i64: 64, 128>}, {pipeline_mode = #tpu.pipeline_mode<synchronous>, transform_indices = @transform_2, window_bounds = array<i64: 1, 128>}, {transform_indices = @transform_3, window_bounds = array<i64: 16, 128>}]} {
    %c0 = arith.constant 0 : index
    %c0_0 = arith.constant 0 : index
    %0 = vector.load %arg1[%c0, %c0_0] : memref<16x64xbf16, #tpu.memory_space<vmem>>, vector<16x64xbf16>
    %c0_1 = arith.constant 0 : index
    %c0_2 = arith.constant 0 : index
    %1 = vector.load %arg2[%c0_1, %c0_2] : memref<64x128xbf16, #tpu.memory_space<vmem>>, vector<64x128xbf16>
    %cst = arith.constant dense<0.000000e+00> : vector<16x128xf32>
    %2 = tpu.matmul %0, %1, %cst {dimension_numbers = #tpu.dot_dimension_numbers<[1], [0], [0], [1], [0, 0, 1, 1], [], []>} : vector<16x64xbf16>, vector<64x128xbf16>, vector<16x128xf32> -> vector<16x128xf32>
    %c0_3 = arith.constant 0 : index
    %c0_4 = arith.constant 0 : index
    %3 = vector.load %arg3[%c0_3, %c0_4] : memref<1x128xf32, #tpu.memory_space<vmem>>, vector<1x128xf32>
    %4 = vector.broadcast %3 : vector<1x128xf32> to vector<16x128xf32>
    %5 = arith.addf %2, %4 : vector<16x128xf32>
    %c0_5 = arith.constant 0 : index
    %c0_6 = arith.constant 0 : index
    %6 = vector.load %arg4[%c0_5, %c0_6] : memref<16x128xf32, #tpu.memory_space<vmem>>, vector<16x128xf32>
    tpu.vector_store %arg4[%c0_5, %c0_6], %5 {strides = array<i32>} : memref<16x128xf32, #tpu.memory_space<vmem>>, vector<16x128xf32>,
    return
  }
  func.func @transform_0(%arg0: i32) -> (i32, i32) {
    %c0_i32 = arith.constant 0 : i32
    %c0_i32_0 = arith.constant 0 : i32
    return %arg0, %c0_i32 : i32, i32
  }
  func.func @transform_1(%arg0: i32) -> (i32, i32) {
    %c0_i32 = arith.constant 0 : i32
    %c0_i32_0 = arith.constant 0 : i32
    %c0_i32_1 = arith.constant 0 : i32
    return %c0_i32, %c0_i32_0 : i32, i32
  }
  func.func @transform_2(%arg0: i32) -> (i32, i32) {
    %c0_i32 = arith.constant 0 : i32
    %c0_i32_0 = arith.constant 0 : i32
    %c0_i32_1 = arith.constant 0 : i32
    return %c0_i32, %c0_i32_0 : i32, i32
  }
  func.func @transform_3(%arg0: i32) -> (i32, i32) {
    %c0_i32 = arith.constant 0 : i32
    %c0_i32_0 = arith.constant 0 : i32
    return %arg0, %c0_i32 : i32, i32
  }
}

module attributes {stable_mosaic.version = 11 : i64} {
  func.func @_mm_bias_kernel(%arg0: i32, %arg1: memref<32x32xbf16, #tpu.memory_space<vmem>>, %arg2: memref<32x128xbf16, #tpu.memory_space<vmem>>, %arg3: memref<1x128xf32, #tpu.memory_space<vmem>>, %arg4: memref<32x128xf32, #tpu.memory_space<vmem>>) attributes {dimension_semantics = [#tpu.dimension_semantics<parallel>], iteration_bounds = array<i64: 1>, scalar_prefetch = 0 : i64, scratch_operands = 0 : i64, tpu.core_type = #tpu.core_type<tc>, window_params = [{transform_indices = @transform_0, window_bounds = array<i64: 32, 32>}, {pipeline_mode = #tpu.pipeline_mode<synchronous>, transform_indices = @transform_1, window_bounds = array<i64: 32, 128>}, {pipeline_mode = #tpu.pipeline_mode<synchronous>, transform_indices = @transform_2, window_bounds = array<i64: 1, 128>}, {transform_indices = @transform_3, window_bounds = array<i64: 32, 128>}]} {
    %c0 = arith.constant 0 : index
    %c0_0 = arith.constant 0 : index
    %0 = vector.load %arg1[%c0, %c0_0] : memref<32x32xbf16, #tpu.memory_space<vmem>>, vector<32x32xbf16>
    %c0_1 = arith.constant 0 : index
    %c0_2 = arith.constant 0 : index
    %1 = vector.load %arg2[%c0_1, %c0_2] : memref<32x128xbf16, #tpu.memory_space<vmem>>, vector<32x128xbf16>
    %cst = arith.constant dense<0.000000e+00> : vector<32x128xf32>
    %2 = tpu.matmul %0, %1, %cst {dimension_numbers = #tpu.dot_dimension_numbers<[1], [0], [0], [1], [0, 0, 1, 1], [], []>} : vector<32x32xbf16>, vector<32x128xbf16>, vector<32x128xf32> -> vector<32x128xf32>
    %c0_3 = arith.constant 0 : index
    %c0_4 = arith.constant 0 : index
    %3 = vector.load %arg3[%c0_3, %c0_4] : memref<1x128xf32, #tpu.memory_space<vmem>>, vector<1x128xf32>
    %4 = vector.broadcast %3 : vector<1x128xf32> to vector<32x128xf32>
    %5 = arith.addf %2, %4 : vector<32x128xf32>
    %c0_5 = arith.constant 0 : index
    %c0_6 = arith.constant 0 : index
    %6 = vector.load %arg4[%c0_5, %c0_6] : memref<32x128xf32, #tpu.memory_space<vmem>>, vector<32x128xf32>
    tpu.vector_store %arg4[%c0_5, %c0_6], %5 {strides = array<i32>} : memref<32x128xf32, #tpu.memory_space<vmem>>, vector<32x128xf32>,
    return
  }
  func.func @transform_0(%arg0: i32) -> (i32, i32) {
    %c0_i32 = arith.constant 0 : i32
    %c0_i32_0 = arith.constant 0 : i32
    return %arg0, %c0_i32 : i32, i32
  }
  func.func @transform_1(%arg0: i32) -> (i32, i32) {
    %c0_i32 = arith.constant 0 : i32
    %c0_i32_0 = arith.constant 0 : i32
    %c0_i32_1 = arith.constant 0 : i32
    return %c0_i32, %c0_i32_0 : i32, i32
  }
  func.func @transform_2(%arg0: i32) -> (i32, i32) {
    %c0_i32 = arith.constant 0 : i32
    %c0_i32_0 = arith.constant 0 : i32
    %c0_i32_1 = arith.constant 0 : i32
    return %c0_i32, %c0_i32_0 : i32, i32
  }
  func.func @transform_3(%arg0: i32) -> (i32, i32) {
    %c0_i32 = arith.constant 0 : i32
    %c0_i32_0 = arith.constant 0 : i32
    return %arg0, %c0_i32 : i32, i32
  }
}

module attributes {stable_mosaic.version = 11 : i64} {
  func.func @_mm_bias_kernel(%arg0: i32, %arg1: memref<32x288xbf16, #tpu.memory_space<vmem>>, %arg2: memref<288x128xbf16, #tpu.memory_space<vmem>>, %arg3: memref<1x128xf32, #tpu.memory_space<vmem>>, %arg4: memref<32x128xf32, #tpu.memory_space<vmem>>) attributes {dimension_semantics = [#tpu.dimension_semantics<parallel>], iteration_bounds = array<i64: 1>, scalar_prefetch = 0 : i64, scratch_operands = 0 : i64, tpu.core_type = #tpu.core_type<tc>, window_params = [{transform_indices = @transform_0, window_bounds = array<i64: 32, 288>}, {pipeline_mode = #tpu.pipeline_mode<synchronous>, transform_indices = @transform_1, window_bounds = array<i64: 288, 128>}, {pipeline_mode = #tpu.pipeline_mode<synchronous>, transform_indices = @transform_2, window_bounds = array<i64: 1, 128>}, {transform_indices = @transform_3, window_bounds = array<i64: 32, 128>}]} {
    %c0 = arith.constant 0 : index
    %c0_0 = arith.constant 0 : index
    %0 = vector.load %arg1[%c0, %c0_0] : memref<32x288xbf16, #tpu.memory_space<vmem>>, vector<32x288xbf16>
    %c0_1 = arith.constant 0 : index
    %c0_2 = arith.constant 0 : index
    %1 = vector.load %arg2[%c0_1, %c0_2] : memref<288x128xbf16, #tpu.memory_space<vmem>>, vector<288x128xbf16>
    %cst = arith.constant dense<0.000000e+00> : vector<32x128xf32>
    %2 = tpu.matmul %0, %1, %cst {dimension_numbers = #tpu.dot_dimension_numbers<[1], [0], [0], [1], [0, 0, 1, 1], [], []>} : vector<32x288xbf16>, vector<288x128xbf16>, vector<32x128xf32> -> vector<32x128xf32>
    %c0_3 = arith.constant 0 : index
    %c0_4 = arith.constant 0 : index
    %3 = vector.load %arg3[%c0_3, %c0_4] : memref<1x128xf32, #tpu.memory_space<vmem>>, vector<1x128xf32>
    %4 = vector.broadcast %3 : vector<1x128xf32> to vector<32x128xf32>
    %5 = arith.addf %2, %4 : vector<32x128xf32>
    %c0_5 = arith.constant 0 : index
    %c0_6 = arith.constant 0 : index
    %6 = vector.load %arg4[%c0_5, %c0_6] : memref<32x128xf32, #tpu.memory_space<vmem>>, vector<32x128xf32>
    tpu.vector_store %arg4[%c0_5, %c0_6], %5 {strides = array<i32>} : memref<32x128xf32, #tpu.memory_space<vmem>>, vector<32x128xf32>,
    return
  }
  func.func @transform_0(%arg0: i32) -> (i32, i32) {
    %c0_i32 = arith.constant 0 : i32
    %c0_i32_0 = arith.constant 0 : i32
    return %arg0, %c0_i32 : i32, i32
  }
  func.func @transform_1(%arg0: i32) -> (i32, i32) {
    %c0_i32 = arith.constant 0 : i32
    %c0_i32_0 = arith.constant 0 : i32
    %c0_i32_1 = arith.constant 0 : i32
    return %c0_i32, %c0_i32_0 : i32, i32
  }
  func.func @transform_2(%arg0: i32) -> (i32, i32) {
    %c0_i32 = arith.constant 0 : i32
    %c0_i32_0 = arith.constant 0 : i32
    %c0_i32_1 = arith.constant 0 : i32
    return %c0_i32, %c0_i32_0 : i32, i32
  }
  func.func @transform_3(%arg0: i32) -> (i32, i32) {
    %c0_i32 = arith.constant 0 : i32
    %c0_i32_0 = arith.constant 0 : i32
    return %arg0, %c0_i32 : i32, i32
  }
}

module attributes {stable_mosaic.version = 11 : i64} {
  func.func @_mm_bias_kernel(%arg0: i32, %arg1: memref<128x16xbf16, #tpu.memory_space<vmem>>, %arg2: memref<16x128xbf16, #tpu.memory_space<vmem>>, %arg3: memref<1x128xf32, #tpu.memory_space<vmem>>, %arg4: memref<128x128xf32, #tpu.memory_space<vmem>>) attributes {dimension_semantics = [#tpu.dimension_semantics<parallel>], iteration_bounds = array<i64: 1>, scalar_prefetch = 0 : i64, scratch_operands = 0 : i64, tpu.core_type = #tpu.core_type<tc>, window_params = [{transform_indices = @transform_0, window_bounds = array<i64: 128, 16>}, {pipeline_mode = #tpu.pipeline_mode<synchronous>, transform_indices = @transform_1, window_bounds = array<i64: 16, 128>}, {pipeline_mode = #tpu.pipeline_mode<synchronous>, transform_indices = @transform_2, window_bounds = array<i64: 1, 128>}, {transform_indices = @transform_3, window_bounds = array<i64: 128, 128>}]} {
    %c0 = arith.constant 0 : index
    %c0_0 = arith.constant 0 : index
    %0 = vector.load %arg1[%c0, %c0_0] : memref<128x16xbf16, #tpu.memory_space<vmem>>, vector<128x16xbf16>
    %c0_1 = arith.constant 0 : index
    %c0_2 = arith.constant 0 : index
    %1 = vector.load %arg2[%c0_1, %c0_2] : memref<16x128xbf16, #tpu.memory_space<vmem>>, vector<16x128xbf16>
    %cst = arith.constant dense<0.000000e+00> : vector<128x128xf32>
    %2 = tpu.matmul %0, %1, %cst {dimension_numbers = #tpu.dot_dimension_numbers<[1], [0], [0], [1], [0, 0, 1, 1], [], []>} : vector<128x16xbf16>, vector<16x128xbf16>, vector<128x128xf32> -> vector<128x128xf32>
    %c0_3 = arith.constant 0 : index
    %c0_4 = arith.constant 0 : index
    %3 = vector.load %arg3[%c0_3, %c0_4] : memref<1x128xf32, #tpu.memory_space<vmem>>, vector<1x128xf32>
    %4 = vector.broadcast %3 : vector<1x128xf32> to vector<128x128xf32>
    %5 = arith.addf %2, %4 : vector<128x128xf32>
    %c0_5 = arith.constant 0 : index
    %c0_6 = arith.constant 0 : index
    %6 = vector.load %arg4[%c0_5, %c0_6] : memref<128x128xf32, #tpu.memory_space<vmem>>, vector<128x128xf32>
    tpu.vector_store %arg4[%c0_5, %c0_6], %5 {strides = array<i32>} : memref<128x128xf32, #tpu.memory_space<vmem>>, vector<128x128xf32>,
    return
  }
  func.func @transform_0(%arg0: i32) -> (i32, i32) {
    %c0_i32 = arith.constant 0 : i32
    %c0_i32_0 = arith.constant 0 : i32
    return %arg0, %c0_i32 : i32, i32
  }
  func.func @transform_1(%arg0: i32) -> (i32, i32) {
    %c0_i32 = arith.constant 0 : i32
    %c0_i32_0 = arith.constant 0 : i32
    %c0_i32_1 = arith.constant 0 : i32
    return %c0_i32, %c0_i32_0 : i32, i32
  }
  func.func @transform_2(%arg0: i32) -> (i32, i32) {
    %c0_i32 = arith.constant 0 : i32
    %c0_i32_0 = arith.constant 0 : i32
    %c0_i32_1 = arith.constant 0 : i32
    return %c0_i32, %c0_i32_0 : i32, i32
  }
  func.func @transform_3(%arg0: i32) -> (i32, i32) {
    %c0_i32 = arith.constant 0 : i32
    %c0_i32_0 = arith.constant 0 : i32
    return %arg0, %c0_i32 : i32, i32
  }
}

module attributes {stable_mosaic.version = 11 : i64} {
  func.func @_mm_bias_kernel(%arg0: i32, %arg1: memref<128x288xbf16, #tpu.memory_space<vmem>>, %arg2: memref<288x128xbf16, #tpu.memory_space<vmem>>, %arg3: memref<1x128xf32, #tpu.memory_space<vmem>>, %arg4: memref<128x128xf32, #tpu.memory_space<vmem>>) attributes {dimension_semantics = [#tpu.dimension_semantics<parallel>], iteration_bounds = array<i64: 1>, scalar_prefetch = 0 : i64, scratch_operands = 0 : i64, tpu.core_type = #tpu.core_type<tc>, window_params = [{transform_indices = @transform_0, window_bounds = array<i64: 128, 288>}, {pipeline_mode = #tpu.pipeline_mode<synchronous>, transform_indices = @transform_1, window_bounds = array<i64: 288, 128>}, {pipeline_mode = #tpu.pipeline_mode<synchronous>, transform_indices = @transform_2, window_bounds = array<i64: 1, 128>}, {transform_indices = @transform_3, window_bounds = array<i64: 128, 128>}]} {
    %c0 = arith.constant 0 : index
    %c0_0 = arith.constant 0 : index
    %0 = vector.load %arg1[%c0, %c0_0] : memref<128x288xbf16, #tpu.memory_space<vmem>>, vector<128x288xbf16>
    %c0_1 = arith.constant 0 : index
    %c0_2 = arith.constant 0 : index
    %1 = vector.load %arg2[%c0_1, %c0_2] : memref<288x128xbf16, #tpu.memory_space<vmem>>, vector<288x128xbf16>
    %cst = arith.constant dense<0.000000e+00> : vector<128x128xf32>
    %2 = tpu.matmul %0, %1, %cst {dimension_numbers = #tpu.dot_dimension_numbers<[1], [0], [0], [1], [0, 0, 1, 1], [], []>} : vector<128x288xbf16>, vector<288x128xbf16>, vector<128x128xf32> -> vector<128x128xf32>
    %c0_3 = arith.constant 0 : index
    %c0_4 = arith.constant 0 : index
    %3 = vector.load %arg3[%c0_3, %c0_4] : memref<1x128xf32, #tpu.memory_space<vmem>>, vector<1x128xf32>
    %4 = vector.broadcast %3 : vector<1x128xf32> to vector<128x128xf32>
    %5 = arith.addf %2, %4 : vector<128x128xf32>
    %c0_5 = arith.constant 0 : index
    %c0_6 = arith.constant 0 : index
    %6 = vector.load %arg4[%c0_5, %c0_6] : memref<128x128xf32, #tpu.memory_space<vmem>>, vector<128x128xf32>
    tpu.vector_store %arg4[%c0_5, %c0_6], %5 {strides = array<i32>} : memref<128x128xf32, #tpu.memory_space<vmem>>, vector<128x128xf32>,
    return
  }
  func.func @transform_0(%arg0: i32) -> (i32, i32) {
    %c0_i32 = arith.constant 0 : i32
    %c0_i32_0 = arith.constant 0 : i32
    return %arg0, %c0_i32 : i32, i32
  }
  func.func @transform_1(%arg0: i32) -> (i32, i32) {
    %c0_i32 = arith.constant 0 : i32
    %c0_i32_0 = arith.constant 0 : i32
    %c0_i32_1 = arith.constant 0 : i32
    return %c0_i32, %c0_i32_0 : i32, i32
  }
  func.func @transform_2(%arg0: i32) -> (i32, i32) {
    %c0_i32 = arith.constant 0 : i32
    %c0_i32_0 = arith.constant 0 : i32
    %c0_i32_1 = arith.constant 0 : i32
    return %c0_i32, %c0_i32_0 : i32, i32
  }
  func.func @transform_3(%arg0: i32) -> (i32, i32) {
    %c0_i32 = arith.constant 0 : i32
    %c0_i32_0 = arith.constant 0 : i32
    return %arg0, %c0_i32 : i32, i32
  }
}

module attributes {stable_mosaic.version = 11 : i64} {
  func.func @_mm_bias_kernel(%arg0: i32, %arg1: memref<176x288xbf16, #tpu.memory_space<vmem>>, %arg2: memref<288x128xbf16, #tpu.memory_space<vmem>>, %arg3: memref<1x128xf32, #tpu.memory_space<vmem>>, %arg4: memref<176x128xf32, #tpu.memory_space<vmem>>) attributes {dimension_semantics = [#tpu.dimension_semantics<parallel>], iteration_bounds = array<i64: 1>, scalar_prefetch = 0 : i64, scratch_operands = 0 : i64, tpu.core_type = #tpu.core_type<tc>, window_params = [{transform_indices = @transform_0, window_bounds = array<i64: 176, 288>}, {pipeline_mode = #tpu.pipeline_mode<synchronous>, transform_indices = @transform_1, window_bounds = array<i64: 288, 128>}, {pipeline_mode = #tpu.pipeline_mode<synchronous>, transform_indices = @transform_2, window_bounds = array<i64: 1, 128>}, {transform_indices = @transform_3, window_bounds = array<i64: 176, 128>}]} {
    %c0 = arith.constant 0 : index
    %c0_0 = arith.constant 0 : index
    %0 = vector.load %arg1[%c0, %c0_0] : memref<176x288xbf16, #tpu.memory_space<vmem>>, vector<176x288xbf16>
    %c0_1 = arith.constant 0 : index
    %c0_2 = arith.constant 0 : index
    %1 = vector.load %arg2[%c0_1, %c0_2] : memref<288x128xbf16, #tpu.memory_space<vmem>>, vector<288x128xbf16>
    %cst = arith.constant dense<0.000000e+00> : vector<176x128xf32>
    %2 = tpu.matmul %0, %1, %cst {dimension_numbers = #tpu.dot_dimension_numbers<[1], [0], [0], [1], [0, 0, 1, 1], [], []>} : vector<176x288xbf16>, vector<288x128xbf16>, vector<176x128xf32> -> vector<176x128xf32>
    %c0_3 = arith.constant 0 : index
    %c0_4 = arith.constant 0 : index
    %3 = vector.load %arg3[%c0_3, %c0_4] : memref<1x128xf32, #tpu.memory_space<vmem>>, vector<1x128xf32>
    %4 = vector.broadcast %3 : vector<1x128xf32> to vector<176x128xf32>
    %5 = arith.addf %2, %4 : vector<176x128xf32>
    %cst_5 = arith.constant 0.000000e+00 : f32
    %6 = vector.broadcast %cst_5 : f32 to vector<176x128xf32>
    %7 = arith.maximumf %5, %6 : vector<176x128xf32>
    %c0_6 = arith.constant 0 : index
    %c0_7 = arith.constant 0 : index
    %8 = vector.load %arg4[%c0_6, %c0_7] : memref<176x128xf32, #tpu.memory_space<vmem>>, vector<176x128xf32>
    tpu.vector_store %arg4[%c0_6, %c0_7], %7 {strides = array<i32>} : memref<176x128xf32, #tpu.memory_space<vmem>>, vector<176x128xf32>,
    return
  }
  func.func @transform_0(%arg0: i32) -> (i32, i32) {
    %c0_i32 = arith.constant 0 : i32
    %c0_i32_0 = arith.constant 0 : i32
    return %arg0, %c0_i32 : i32, i32
  }
  func.func @transform_1(%arg0: i32) -> (i32, i32) {
    %c0_i32 = arith.constant 0 : i32
    %c0_i32_0 = arith.constant 0 : i32
    %c0_i32_1 = arith.constant 0 : i32
    return %c0_i32, %c0_i32_0 : i32, i32
  }
  func.func @transform_2(%arg0: i32) -> (i32, i32) {
    %c0_i32 = arith.constant 0 : i32
    %c0_i32_0 = arith.constant 0 : i32
    %c0_i32_1 = arith.constant 0 : i32
    return %c0_i32, %c0_i32_0 : i32, i32
  }
  func.func @transform_3(%arg0: i32) -> (i32, i32) {
    %c0_i32 = arith.constant 0 : i32
    %c0_i32_0 = arith.constant 0 : i32
    return %arg0, %c0_i32 : i32, i32
  }
}

module attributes {stable_mosaic.version = 11 : i64} {
  func.func @_mm_bias_kernel(%arg0: i32, %arg1: memref<176x288xbf16, #tpu.memory_space<vmem>>, %arg2: memref<288x128xbf16, #tpu.memory_space<vmem>>, %arg3: memref<1x128xf32, #tpu.memory_space<vmem>>, %arg4: memref<176x128xf32, #tpu.memory_space<vmem>>) attributes {dimension_semantics = [#tpu.dimension_semantics<parallel>], iteration_bounds = array<i64: 1>, scalar_prefetch = 0 : i64, scratch_operands = 0 : i64, tpu.core_type = #tpu.core_type<tc>, window_params = [{transform_indices = @transform_0, window_bounds = array<i64: 176, 288>}, {pipeline_mode = #tpu.pipeline_mode<synchronous>, transform_indices = @transform_1, window_bounds = array<i64: 288, 128>}, {pipeline_mode = #tpu.pipeline_mode<synchronous>, transform_indices = @transform_2, window_bounds = array<i64: 1, 128>}, {transform_indices = @transform_3, window_bounds = array<i64: 176, 128>}]} {
    %c0 = arith.constant 0 : index
    %c0_0 = arith.constant 0 : index
    %0 = vector.load %arg1[%c0, %c0_0] : memref<176x288xbf16, #tpu.memory_space<vmem>>, vector<176x288xbf16>
    %c0_1 = arith.constant 0 : index
    %c0_2 = arith.constant 0 : index
    %1 = vector.load %arg2[%c0_1, %c0_2] : memref<288x128xbf16, #tpu.memory_space<vmem>>, vector<288x128xbf16>
    %cst = arith.constant dense<0.000000e+00> : vector<176x128xf32>
    %2 = tpu.matmul %0, %1, %cst {dimension_numbers = #tpu.dot_dimension_numbers<[1], [0], [0], [1], [0, 0, 1, 1], [], []>} : vector<176x288xbf16>, vector<288x128xbf16>, vector<176x128xf32> -> vector<176x128xf32>
    %c0_3 = arith.constant 0 : index
    %c0_4 = arith.constant 0 : index
    %3 = vector.load %arg3[%c0_3, %c0_4] : memref<1x128xf32, #tpu.memory_space<vmem>>, vector<1x128xf32>
    %4 = vector.broadcast %3 : vector<1x128xf32> to vector<176x128xf32>
    %5 = arith.addf %2, %4 : vector<176x128xf32>
    %cst_5 = arith.constant 0.000000e+00 : f32
    %6 = vector.broadcast %cst_5 : f32 to vector<176x128xf32>
    %7 = arith.subf %6, %5 : vector<176x128xf32>
    %8 = math.exp %7 : vector<176x128xf32>
    %cst_6 = arith.constant 1.000000e+00 : f32
    %9 = vector.broadcast %cst_6 : f32 to vector<176x128xf32>
    %10 = arith.addf %9, %8 : vector<176x128xf32>
    %11 = tpu.reciprocal %10 {approx = true} : vector<176x128xf32> -> vector<176x128xf32>
    %c0_7 = arith.constant 0 : index
    %c0_8 = arith.constant 0 : index
    %12 = vector.load %arg4[%c0_7, %c0_8] : memref<176x128xf32, #tpu.memory_space<vmem>>, vector<176x128xf32>
    tpu.vector_store %arg4[%c0_7, %c0_8], %11 {strides = array<i32>} : memref<176x128xf32, #tpu.memory_space<vmem>>, vector<176x128xf32>,
    return
  }
  func.func @transform_0(%arg0: i32) -> (i32, i32) {
    %c0_i32 = arith.constant 0 : i32
    %c0_i32_0 = arith.constant 0 : i32
    return %arg0, %c0_i32 : i32, i32
  }
  func.func @transform_1(%arg0: i32) -> (i32, i32) {
    %c0_i32 = arith.constant 0 : i32
    %c0_i32_0 = arith.constant 0 : i32
    %c0_i32_1 = arith.constant 0 : i32
    return %c0_i32, %c0_i32_0 : i32, i32
  }
  func.func @transform_2(%arg0: i32) -> (i32, i32) {
    %c0_i32 = arith.constant 0 : i32
    %c0_i32_0 = arith.constant 0 : i32
    %c0_i32_1 = arith.constant 0 : i32
    return %c0_i32, %c0_i32_0 : i32, i32
  }
  func.func @transform_3(%arg0: i32) -> (i32, i32) {
    %c0_i32 = arith.constant 0 : i32
    %c0_i32_0 = arith.constant 0 : i32
    return %arg0, %c0_i32 : i32, i32
  }
}

module attributes {stable_mosaic.version = 11 : i64} {
  func.func @_mm_bias_kernel(%arg0: i32, %arg1: memref<176x288xbf16, #tpu.memory_space<vmem>>, %arg2: memref<288x128xbf16, #tpu.memory_space<vmem>>, %arg3: memref<1x128xf32, #tpu.memory_space<vmem>>, %arg4: memref<176x128xf32, #tpu.memory_space<vmem>>) attributes {dimension_semantics = [#tpu.dimension_semantics<parallel>], iteration_bounds = array<i64: 1>, scalar_prefetch = 0 : i64, scratch_operands = 0 : i64, tpu.core_type = #tpu.core_type<tc>, window_params = [{transform_indices = @transform_0, window_bounds = array<i64: 176, 288>}, {pipeline_mode = #tpu.pipeline_mode<synchronous>, transform_indices = @transform_1, window_bounds = array<i64: 288, 128>}, {pipeline_mode = #tpu.pipeline_mode<synchronous>, transform_indices = @transform_2, window_bounds = array<i64: 1, 128>}, {transform_indices = @transform_3, window_bounds = array<i64: 176, 128>}]} {
    %c0 = arith.constant 0 : index
    %c0_0 = arith.constant 0 : index
    %0 = vector.load %arg1[%c0, %c0_0] : memref<176x288xbf16, #tpu.memory_space<vmem>>, vector<176x288xbf16>
    %c0_1 = arith.constant 0 : index
    %c0_2 = arith.constant 0 : index
    %1 = vector.load %arg2[%c0_1, %c0_2] : memref<288x128xbf16, #tpu.memory_space<vmem>>, vector<288x128xbf16>
    %cst = arith.constant dense<0.000000e+00> : vector<176x128xf32>
    %2 = tpu.matmul %0, %1, %cst {dimension_numbers = #tpu.dot_dimension_numbers<[1], [0], [0], [1], [0, 0, 1, 1], [], []>} : vector<176x288xbf16>, vector<288x128xbf16>, vector<176x128xf32> -> vector<176x128xf32>
    %c0_3 = arith.constant 0 : index
    %c0_4 = arith.constant 0 : index
    %3 = vector.load %arg3[%c0_3, %c0_4] : memref<1x128xf32, #tpu.memory_space<vmem>>, vector<1x128xf32>
    %4 = vector.broadcast %3 : vector<1x128xf32> to vector<176x128xf32>
    %5 = arith.addf %2, %4 : vector<176x128xf32>
    %c0_5 = arith.constant 0 : index
    %c0_6 = arith.constant 0 : index
    %6 = vector.load %arg4[%c0_5, %c0_6] : memref<176x128xf32, #tpu.memory_space<vmem>>, vector<176x128xf32>
    tpu.vector_store %arg4[%c0_5, %c0_6], %5 {strides = array<i32>} : memref<176x128xf32, #tpu.memory_space<vmem>>, vector<176x128xf32>,
    return
  }
  func.func @transform_0(%arg0: i32) -> (i32, i32) {
    %c0_i32 = arith.constant 0 : i32
    %c0_i32_0 = arith.constant 0 : i32
    return %arg0, %c0_i32 : i32, i32
  }
  func.func @transform_1(%arg0: i32) -> (i32, i32) {
    %c0_i32 = arith.constant 0 : i32
    %c0_i32_0 = arith.constant 0 : i32
    %c0_i32_1 = arith.constant 0 : i32
    return %c0_i32, %c0_i32_0 : i32, i32
  }
  func.func @transform_2(%arg0: i32) -> (i32, i32) {
    %c0_i32 = arith.constant 0 : i32
    %c0_i32_0 = arith.constant 0 : i32
    %c0_i32_1 = arith.constant 0 : i32
    return %c0_i32, %c0_i32_0 : i32, i32
  }
  func.func @transform_3(%arg0: i32) -> (i32, i32) {
    %c0_i32 = arith.constant 0 : i32
    %c0_i32_0 = arith.constant 0 : i32
    return %arg0, %c0_i32 : i32, i32
  }
}

module attributes {stable_mosaic.version = 11 : i64} {
  func.func @_decode_kernel(%arg0: memref<8x1536xf32, #tpu.memory_space<vmem>>, %arg1: memref<4x1536xf32, #tpu.memory_space<vmem>>) attributes {dimension_semantics = [], scalar_prefetch = 0 : i64, scratch_operands = 0 : i64, tpu.core_type = #tpu.core_type<tc>} {
    %c0 = arith.constant 0 : index
    %c0_0 = arith.constant 0 : index
    %0 = vector.load %arg0[%c0, %c0_0] : memref<8x1536xf32, #tpu.memory_space<vmem>>, vector<1x1536xf32>
    %c1 = arith.constant 1 : index
    %c0_1 = arith.constant 0 : index
    %1 = vector.load %arg0[%c1, %c0_1] : memref<8x1536xf32, #tpu.memory_space<vmem>>, vector<1x1536xf32>
    %c2 = arith.constant 2 : index
    %c0_2 = arith.constant 0 : index
    %2 = vector.load %arg0[%c2, %c0_2] : memref<8x1536xf32, #tpu.memory_space<vmem>>, vector<1x1536xf32>
    %c3 = arith.constant 3 : index
    %c0_3 = arith.constant 0 : index
    %3 = vector.load %arg0[%c3, %c0_3] : memref<8x1536xf32, #tpu.memory_space<vmem>>, vector<1x1536xf32>
    %c4 = arith.constant 4 : index
    %c0_4 = arith.constant 0 : index
    %4 = vector.load %arg0[%c4, %c0_4] : memref<8x1536xf32, #tpu.memory_space<vmem>>, vector<1x1536xf32>
    %c5 = arith.constant 5 : index
    %c0_5 = arith.constant 0 : index
    %5 = vector.load %arg0[%c5, %c0_5] : memref<8x1536xf32, #tpu.memory_space<vmem>>, vector<1x1536xf32>
    %c6 = arith.constant 6 : index
    %c0_6 = arith.constant 0 : index
    %6 = vector.load %arg0[%c6, %c0_6] : memref<8x1536xf32, #tpu.memory_space<vmem>>, vector<1x1536xf32>
    %c7 = arith.constant 7 : index
    %c0_7 = arith.constant 0 : index
    %7 = vector.load %arg0[%c7, %c0_7] : memref<8x1536xf32, #tpu.memory_space<vmem>>, vector<1x1536xf32>
    %8 = arith.subf %6, %4 : vector<1x1536xf32>
    %9 = arith.subf %7, %5 : vector<1x1536xf32>
    %cst = arith.constant 5.000000e-01 : f32
    %10 = vector.broadcast %cst : f32 to vector<1x1536xf32>
    %11 = arith.mulf %10, %8 : vector<1x1536xf32>
    %12 = arith.addf %4, %11 : vector<1x1536xf32>
    %cst_8 = arith.constant 5.000000e-01 : f32
    %13 = vector.broadcast %cst_8 : f32 to vector<1x1536xf32>
    %14 = arith.mulf %13, %9 : vector<1x1536xf32>
    %15 = arith.addf %5, %14 : vector<1x1536xf32>
    %16 = arith.mulf %0, %8 : vector<1x1536xf32>
    %17 = arith.addf %16, %12 : vector<1x1536xf32>
    %18 = arith.mulf %1, %9 : vector<1x1536xf32>
    %19 = arith.addf %18, %15 : vector<1x1536xf32>
    %20 = math.exp %2 : vector<1x1536xf32>
    %21 = arith.mulf %20, %8 : vector<1x1536xf32>
    %22 = math.exp %3 : vector<1x1536xf32>
    %23 = arith.mulf %22, %9 : vector<1x1536xf32>
    %cst_9 = arith.constant 5.000000e-01 : f32
    %24 = vector.broadcast %cst_9 : f32 to vector<1x1536xf32>
    %25 = arith.mulf %24, %21 : vector<1x1536xf32>
    %26 = arith.subf %17, %25 : vector<1x1536xf32>
    %c0_10 = arith.constant 0 : index
    %c0_11 = arith.constant 0 : index
    %27 = vector.load %arg1[%c0_10, %c0_11] : memref<4x1536xf32, #tpu.memory_space<vmem>>, vector<1x1536xf32>
    tpu.vector_store %arg1[%c0_10, %c0_11], %26 {strides = array<i32>} : memref<4x1536xf32, #tpu.memory_space<vmem>>, vector<1x1536xf32>,
    %cst_12 = arith.constant 5.000000e-01 : f32
    %28 = vector.broadcast %cst_12 : f32 to vector<1x1536xf32>
    %29 = arith.mulf %28, %23 : vector<1x1536xf32>
    %30 = arith.subf %19, %29 : vector<1x1536xf32>
    %c1_13 = arith.constant 1 : index
    %c0_14 = arith.constant 0 : index
    %31 = vector.load %arg1[%c1_13, %c0_14] : memref<4x1536xf32, #tpu.memory_space<vmem>>, vector<1x1536xf32>
    tpu.vector_store %arg1[%c1_13, %c0_14], %30 {strides = array<i32>} : memref<4x1536xf32, #tpu.memory_space<vmem>>, vector<1x1536xf32>,
    %cst_15 = arith.constant 5.000000e-01 : f32
    %32 = vector.broadcast %cst_15 : f32 to vector<1x1536xf32>
    %33 = arith.mulf %32, %21 : vector<1x1536xf32>
    %34 = arith.addf %17, %33 : vector<1x1536xf32>
    %c2_16 = arith.constant 2 : index
    %c0_17 = arith.constant 0 : index
    %35 = vector.load %arg1[%c2_16, %c0_17] : memref<4x1536xf32, #tpu.memory_space<vmem>>, vector<1x1536xf32>
    tpu.vector_store %arg1[%c2_16, %c0_17], %34 {strides = array<i32>} : memref<4x1536xf32, #tpu.memory_space<vmem>>, vector<1x1536xf32>,
    %cst_18 = arith.constant 5.000000e-01 : f32
    %36 = vector.broadcast %cst_18 : f32 to vector<1x1536xf32>
    %37 = arith.mulf %36, %23 : vector<1x1536xf32>
    %38 = arith.addf %19, %37 : vector<1x1536xf32>
    %c3_19 = arith.constant 3 : index
    %c0_20 = arith.constant 0 : index
    %39 = vector.load %arg1[%c3_19, %c0_20] : memref<4x1536xf32, #tpu.memory_space<vmem>>, vector<1x1536xf32>
    tpu.vector_store %arg1[%c3_19, %c0_20], %38 {strides = array<i32>} : memref<4x1536xf32, #tpu.memory_space<vmem>>, vector<1x1536xf32>,
    return
  }
}

</mosaic_0001>

<llo_original>
// kernel: retinanet_forward.24
$region0: #{retinanet_forward.24}
  #allocation0 [shape = 'u32[]', space=smem, size = 0x4, offset = 0x4, fixed_abs, tag = 'smem constant byte address 0x4 - core index']
  #allocation1 [shape = 'u32[144,128]{1,0:T(1,128)}', space=vmem, size = 0x12000, scoped, tag = 'internal scratch']
  %s0 = inlined_call_operand.vmem [shape: bf16[512,27], index: 0, kind: input, shape index: {}]
  %s1 = inlined_call_operand.vmem [shape: bf16[27,128], index: 1, kind: input, shape index: {}]
  %s2 = inlined_call_operand.vmem [shape: f32[1,128], index: 2, kind: input, shape index: {}]
  %s3 = inlined_call_operand.vmem [shape: f32[512,128], index: 3, kind: output, shape index: {}]
  %s4 = sld [smem:[#allocation0]]
  $region45: #{retinanet_forward.24} parent=0
    _
  %s6 = ssub.s32 1, %s4
  %s7 = scalar_select 0, %s6, %s4
  loop: start=0, step=1, limit=4
  $region2: #{retinanet_forward.24} parent=0 // loop_pre_header
    _
  $region3: #{retinanet_forward.24} parent=0 // loop_header
    %s9 = sphi 0, %s13
    %p10 = scmp.ge.s32.totalorder %s9, 4
    %s19 = sphi 0, %s21
    %s22 = sphi 0, %s19
    %s23 = sphi 0, %s22
    %s39 = sphi 0, %s23
    %s43 = sphi 0, %s43
    %s45 = sphi 0, %s43
    %s46 = sphi 0, %s45
    %s60 = sphi 0, %s46
    %s64 = sphi 0, %s64
    %s66 = sphi 0, %s64
    %s67 = sphi 0, %s66
    %s81 = sphi 0, %s67
    %s87 = sphi 0, %s89
    %s90 = sphi 0, %s87
    %s91 = sphi 0, %s90
    %s107 = sphi 0, %s91
  $region4: #{retinanet_forward.24} parent=0 // loop_header_branch
    %12 = sbr.rel (%p10) target = $region8
  $region5: #{retinanet_forward.24} parent=0 // loop_body
    %s14 = ssub.s32 %s9, 1
    %s15 = ssub.s32 %s9, 2
    %s16 = sadd.s32 %s9, 1
    %s17 = ssub.s32 %s9, %s16
    %p18 = scmp.eq.s32.totalorder %s17, 0
    %s20 = sadd.s32 %s19, 1
    %s21 = scalar_select %p18, %s19, %s20
    %p24 = pneg %p18
    %p25 = scmp.eq.s32.totalorder %s9, 1
    %p26 = por %p24, %p25
    %p27 = scmp.ne.s32.totalorder %s19, %s22
    %p28 = scmp.eq.s32.totalorder %s9, 0
    %p29 = por %p27, %p28
    %p30 = scmp.ne.s32.totalorder %s19, %s22
    %p31 = scmp.eq.s32.totalorder %s14, 1
    %p32 = por %p30, %p31
    %p33 = scmp.ne.s32.totalorder %s22, %s23
    %p34 = scmp.eq.s32.totalorder %s14, 0
    %p35 = por %p33, %p34
    %p36 = scmp.ne.s32.totalorder %s22, %s23
    %p37 = scmp.eq.s32.totalorder %s15, 1
    %p38 = por %p36, %p37
    %p40 = scmp.ne.s32.totalorder %s23, %s39
    %p41 = scmp.eq.s32.totalorder %s15, 0
    %p42 = por %p40, %p41
    %s44 = sadd.s32 %s43, 1
    %p47 = scmp.eq.s32.totalorder %s9, 1
    %p48 = scmp.ne.s32.totalorder %s43, %s45
    %p49 = scmp.eq.s32.totalorder %s9, 0
    %p50 = por %p48, %p49
    %p51 = scmp.ne.s32.totalorder %s43, %s45
    %p52 = scmp.eq.s32.totalorder %s14, 1
    %p53 = por %p51, %p52
    %p54 = scmp.ne.s32.totalorder %s45, %s46
    %p55 = scmp.eq.s32.totalorder %s14, 0
    %p56 = por %p54, %p55
    %p57 = scmp.ne.s32.totalorder %s45, %s46
    %p58 = scmp.eq.s32.totalorder %s15, 1
    %p59 = por %p57, %p58
    %p61 = scmp.ne.s32.totalorder %s46, %s60
    %p62 = scmp.eq.s32.totalorder %s15, 0
    %p63 = por %p61, %p62
    %s65 = sadd.s32 %s64, 1
    %p68 = scmp.eq.s32.totalorder %s9, 1
    %p69 = scmp.ne.s32.totalorder %s64, %s66
    %p70 = scmp.eq.s32.totalorder %s9, 0
    %p71 = por %p69, %p70
    %p72 = scmp.ne.s32.totalorder %s64, %s66
    %p73 = scmp.eq.s32.totalorder %s14, 1
    %p74 = por %p72, %p73
    %p75 = scmp.ne.s32.totalorder %s66, %s67
    %p76 = scmp.eq.s32.totalorder %s14, 0
    %p77 = por %p75, %p76
    %p78 = scmp.ne.s32.totalorder %s66, %s67
    %p79 = scmp.eq.s32.totalorder %s15, 1
    %p80 = por %p78, %p79
    %p82 = scmp.ne.s32.totalorder %s67, %s81
    %p83 = scmp.eq.s32.totalorder %s15, 0
    %p84 = por %p82, %p83
    %s85 = ssub.s32 %s9, %s16
    %p86 = scmp.eq.s32.totalorder %s85, 0
    %s88 = sadd.s32 %s87, 1
    %s89 = scalar_select %p86, %s87, %s88
    %p92 = pneg %p86
    %p93 = scmp.eq.s32.totalorder %s9, 1
    %p94 = por %p92, %p93
    %p95 = scmp.ne.s32.totalorder %s87, %s90
    %p96 = scmp.eq.s32.totalorder %s9, 0
    %p97 = por %p95, %p96
    %p98 = scmp.ne.s32.totalorder %s87, %s90
    %p99 = scmp.eq.s32.totalorder %s14, 1
    %p100 = por %p98, %p99
    %p101 = scmp.ne.s32.totalorder %s90, %s91
    %p102 = scmp.eq.s32.totalorder %s14, 0
    %p103 = por %p101, %p102
    %p104 = scmp.ne.s32.totalorder %s90, %s91
    %p105 = scmp.eq.s32.totalorder %s15, 1
    %p106 = por %p104, %p105
    %p108 = scmp.ne.s32.totalorder %s91, %s107
    %p109 = scmp.eq.s32.totalorder %s15, 0
    %p110 = por %p108, %p109
    %p111 = scmp.le.s32.totalorder 1, %s9
    %p112 = scmp.lt.s32.totalorder %s9, 3
    %p113 = pnand %p111, %p112
    %p114 = pneg %p113
    // Predicated region
    $region9: #{retinanet_forward.24} parent=5 // pred_check
      _
    $region10: #{retinanet_forward.24} parent=5 // pred_check_branch
      %116 = sbr.rel (%p113) target = $region12
    $region11: #{retinanet_forward.24} parent=5 // pred_region
      %s117 = ssub.s32 %s9, 1
      // Predicated region
      $region13: #{retinanet_forward.24} parent=11 // pred_check
        %p118 = pneg %p56
      $region14: #{retinanet_forward.24} parent=11 // pred_check_branch
        %120 = sbr.rel (%p118) target = $region16
      $region15: #{retinanet_forward.24} parent=11 // pred_region
        _
      $region16: #{retinanet_forward.24} parent=11 // pred_fallthru
        _
      // Predicated region
      $region17: #{retinanet_forward.24} parent=11 // pred_check
        %p121 = pneg %p77
      $region18: #{retinanet_forward.24} parent=11 // pred_check_branch
        %123 = sbr.rel (%p121) target = $region20
      $region19: #{retinanet_forward.24} parent=11 // pred_region
        _
      $region20: #{retinanet_forward.24} parent=11 // pred_fallthru
        _
    $region12: #{retinanet_forward.24} parent=5 // pred_fallthru
      _
    %p124 = scmp.lt.s32.totalorder %s9, 2
    // Predicated region
    $region21: #{retinanet_forward.24} parent=5 // pred_check
      %p125 = pneg %p124
    $region22: #{retinanet_forward.24} parent=5 // pred_check_branch
      %127 = sbr.rel (%p125) target = $region24
    $region23: #{retinanet_forward.24} parent=5 // pred_region
      // Predicated region
      $region25: #{retinanet_forward.24} parent=23 // pred_check
        %p128 = pneg %p29
      $region26: #{retinanet_forward.24} parent=23 // pred_check_branch
        %130 = sbr.rel (%p128) target = $region28
      $region27: #{retinanet_forward.24} parent=23 // pred_region
        %s131 = smul.u32 32, %s9
        %p132 = scmp.lt.s32.totalorder %s131, 63
        %s133 = scalar_select %p132, %s131, 63
        %s134 = smul.addr %s133, 4
        %s135 = scalar_lea.vmem %s0, %s134
        %s136 = smul.u32 32, %s9
      $region28: #{retinanet_forward.24} parent=23 // pred_fallthru
        _
    $region24: #{retinanet_forward.24} parent=5 // pred_fallthru
      _
    %p137 = scmp.le.s32.totalorder 1, %s9
    %p138 = scmp.lt.s32.totalorder %s9, 3
    %p139 = pnand %p137, %p138
    %p140 = pneg %p139
    // Predicated region
    $region29: #{retinanet_forward.24} parent=5 // pred_check
      _
    $region30: #{retinanet_forward.24} parent=5 // pred_check_branch
      %142 = sbr.rel (%p139) target = $region32
    $region31: #{retinanet_forward.24} parent=5 // pred_region
      %s143 = ssub.s32 %s9, 1
      %s144 = smul.u32 32, %s14
      %p145 = scmp.lt.s32.totalorder %s144, 63
      %s146 = scalar_select %p145, %s144, 63
      %s147 = smul.addr %s146, 4
      %s148 = scalar_lea.vmem %s0, %s147
      %p149 = pneg %p35
      %p150 = pneg %p32
      %p151 = pneg %p56
      %p152 = pneg %p53
      %p153 = pneg %p77
      %p154 = pneg %p74
      %p155 = pneg %p103
      %p156 = pneg %p100
      %s157 = smul.u32 32, %s14
      %p158 = scmp.lt.s32.totalorder %s157, 63
      %s159 = scalar_select %p158, %s157, 63
      %s160 = smul.addr %s159, 8
      %s161 = scalar_lea.vmem %s3, %s160
      %s162 = smul.u32 32, %s14
      %p163 = scmp.lt.s32.totalorder %s162, 63
      %s164 = scalar_select %p163, %s162, 63
      %s165 = smul.addr %s164, 4
      %s166 = scalar_lea.vmem %s0, %s165
      %s167 = smul.u32 32, %s14
      %s168 = smul.u32 32, %s14
      %p169 = scmp.lt.s32.totalorder %s168, 63
      %s170 = scalar_select %p169, %s168, 63
      %s171 = smul.addr %s170, 8
      %s172 = scalar_lea.vmem %s3, %s171
      %s173 = smul.u32 32, %s14
      %v175 = vld [vmem:[%s166] sm:$0xf]
      %v176 = vld [vmem:[%s166 + $0x4] sm:$0xf]
      %v177 = vld [vmem:[%s166 + $0x8] sm:$0xf]
      %v178 = vld [vmem:[%s166 + $0xc] sm:$0xf]
      %v179 = vld [vmem:[%s166 + $0x10] sm:$0xf]
      %v180 = vld [vmem:[%s166 + $0x14] sm:$0xf]
      %v181 = vld [vmem:[%s166 + $0x18] sm:$0xf]
      %v182 = vld [vmem:[%s166 + $0x1c] sm:$0xf]
      %v183 = vld [vmem:[%s166 + $0x20] sm:$0xf]
      %v184 = vld [vmem:[%s166 + $0x24] sm:$0xf]
      %v185 = vld [vmem:[%s166 + $0x28] sm:$0xf]
      %v186 = vld [vmem:[%s166 + $0x2c] sm:$0xf]
      %v187 = vld [vmem:[%s166 + $0x30] sm:$0xf]
      %v188 = vld [vmem:[%s166 + $0x34] sm:$0xf]
      %v189 = vld [vmem:[%s166 + $0x38] sm:$0xf]
      %v190 = vld [vmem:[%s166 + $0x3c] sm:$0xf]
      %v191 = vld [vmem:[%s166 + $0x40] sm:$0xf]
      %v192 = vld [vmem:[%s166 + $0x44] sm:$0xf]
      %v193 = vld [vmem:[%s166 + $0x48] sm:$0xf]
      %v194 = vld [vmem:[%s166 + $0x4c] sm:$0xf]
      %v195 = vld [vmem:[%s166 + $0x50] sm:$0xf]
      %v196 = vld [vmem:[%s166 + $0x54] sm:$0xf]
      %v197 = vld [vmem:[%s166 + $0x58] sm:$0xf]
      %v198 = vld [vmem:[%s166 + $0x5c] sm:$0xf]
      %v199 = vld [vmem:[%s166 + $0x60] sm:$0xf]
      %v200 = vld [vmem:[%s166 + $0x64] sm:$0xf]
      %v201 = vld [vmem:[%s166 + $0x68] sm:$0xf]
      %v202 = vld [vmem:[%s166 + $0x6c] sm:$0xf]
      %v203 = vld [vmem:[%s166 + $0x70] sm:$0xf]
      %v204 = vld [vmem:[%s166 + $0x74] sm:$0xf]
      %v205 = vld [vmem:[%s166 + $0x78] sm:$0xf]
      %v206 = vld [vmem:[%s166 + $0x7c] sm:$0xf]
      %v207 = vld [vmem:[%s1] sm:$0xf]
      %v208 = vld [vmem:[%s1 + $0x4] sm:$0xf]
      %v209 = vld [vmem:[%s1 + $0x8] sm:$0xf]
      %v210 = vld [vmem:[%s1 + $0xc] sm:$0x3]
      %v211 = vld [vmem:[%s2] sm:$0x1]
      %v213 = vlaneseq
      %v214 = vshrl.u32 %v213, 7
      %v215 = vsub.s32 0, %v214
      %v216 = vrot.slane %v211, %v215
      %v250 = vunpack.c.l.b16 %v175
      %v251 = vunpack.c.l.b16 %v176
      %v252 = vunpack.c.l.b16 %v177
      %v253 = vunpack.c.l.b16 %v178
      %v254 = vunpack.c.l.b16 %v179
      %v255 = vunpack.c.l.b16 %v180
      %v256 = vunpack.c.l.b16 %v181
      %v257 = vunpack.c.l.b16 %v182
      %v258 = vunpack.c.l.b16 %v183
      %v259 = vunpack.c.l.b16 %v184
      %v260 = vunpack.c.l.b16 %v185
      %v261 = vunpack.c.l.b16 %v186
      %v262 = vunpack.c.l.b16 %v187
      %v263 = vunpack.c.l.b16 %v188
      %v264 = vunpack.c.l.b16 %v189
      %v265 = vunpack.c.l.b16 %v190
      %v266 = vunpack.c.l.b16 %v191
      %v267 = vunpack.c.l.b16 %v192
      %v268 = vunpack.c.l.b16 %v193
      %v269 = vunpack.c.l.b16 %v194
      %v270 = vunpack.c.l.b16 %v195
      %v271 = vunpack.c.l.b16 %v196
      %v272 = vunpack.c.l.b16 %v197
      %v273 = vunpack.c.l.b16 %v198
      %v274 = vunpack.c.l.b16 %v199
      %v275 = vunpack.c.l.b16 %v200
      %v276 = vunpack.c.l.b16 %v201
      %v277 = vunpack.c.l.b16 %v202
      %v278 = vunpack.c.l.b16 %v203
      %v279 = vunpack.c.l.b16 %v204
      %v280 = vunpack.c.l.b16 %v205
      %v281 = vunpack.c.l.b16 %v206
      %v282 = vpack.c.b16 %v251, %v250
      %v283 = vpack.c.b16 %v253, %v252
      %v284 = vpack.c.b16 %v255, %v254
      %v285 = vpack.c.b16 %v257, %v256
      %v286 = vpack.c.b16 %v259, %v258
      %v287 = vpack.c.b16 %v261, %v260
      %v288 = vpack.c.b16 %v263, %v262
      %v289 = vpack.c.b16 %v265, %v264
      %v290 = vpack.c.b16 %v267, %v266
      %v291 = vpack.c.b16 %v269, %v268
      %v292 = vpack.c.b16 %v271, %v270
      %v293 = vpack.c.b16 %v273, %v272
      %v294 = vpack.c.b16 %v275, %v274
      %v295 = vpack.c.b16 %v277, %v276
      %v296 = vpack.c.b16 %v279, %v278
      %v297 = vpack.c.b16 %v281, %v280
      %v302 = vunpack.c.l.b16 %v207
      %v303 = vunpack.c.l.b16 %v208
      %v304 = vunpack.c.l.b16 %v209
      %v305 = vunpack.c.l.b16 %v210
      %v306 = vpack.c.b16 %v303, %v302
      %v307 = vpack.c.b16 %v305, %v304
      %vm309 = vcmask 220160
      %v311 = vsel %vm309, %v282, 0
      %v314 = vsel %vm309, %v283, 0
      %v317 = vsel %vm309, %v284, 0
      %v320 = vsel %vm309, %v285, 0
      %v323 = vsel %vm309, %v286, 0
      %v326 = vsel %vm309, %v287, 0
      %v329 = vsel %vm309, %v288, 0
      %v332 = vsel %vm309, %v289, 0
      %v335 = vsel %vm309, %v290, 0
      %v338 = vsel %vm309, %v291, 0
      %v341 = vsel %vm309, %v292, 0
      %v344 = vsel %vm309, %v293, 0
      %v347 = vsel %vm309, %v294, 0
      %v350 = vsel %vm309, %v295, 0
      %v353 = vsel %vm309, %v296, 0
      %v356 = vsel %vm309, %v297, 0
      %vm358 = vcmask 1044480
      %vm359 = vcmask 1045504
      %v360 = vsel %vm358, 4294967295, 65535
      %v361 = vsel %vm359, %v360, 0
      %v363 = vand.u32 %v307, %v361
      %365 = vmatprep.subr.bf16.mxu0 0
      %366 = vmatpush1.bf16.msra.mxu0 %v306
      %367 = vmatprep.subr.bf16.mxu0 0
      %368 = vmatpush1.bf16.msra.mxu0 %v363
      %369 = vmatprep.subr.bf16.mxu0 0
      %370 = vmatpush1.bf16.msra.mxu0 0
      %371 = vmatprep.subr.bf16.mxu0 0
      %372 = vmatpush1.bf16.msra.mxu0 0
      %373 = vmatprep.subr.bf16.mxu0 0
      %374 = vmatpush1.bf16.msra.mxu0 0
      %375 = vmatprep.subr.bf16.mxu0 0
      %376 = vmatpush1.bf16.msra.mxu0 0
      %377 = vmatprep.subr.bf16.mxu0 0
      %378 = vmatpush1.bf16.msra.mxu0 0
      %379 = vmatprep.subr.bf16.mxu0 0
      %380 = vmatpush1.bf16.msra.mxu0 0
      %381 = vmatprep.subr.bf16.mxu0 0
      %382 = vmatpush1.bf16.msra.mxu0 0
      %383 = vmatprep.subr.bf16.mxu0 0
      %384 = vmatpush1.bf16.msra.mxu0 0
      %385 = vmatprep.subr.bf16.mxu0 0
      %386 = vmatpush1.bf16.msra.mxu0 0
      %387 = vmatprep.subr.bf16.mxu0 0
      %388 = vmatpush1.bf16.msra.mxu0 0
      %389 = vmatprep.subr.bf16.mxu0 0
      %390 = vmatpush1.bf16.msra.mxu0 0
      %391 = vmatprep.subr.bf16.mxu0 0
      %392 = vmatpush1.bf16.msra.mxu0 0
      %393 = vmatprep.subr.bf16.mxu0 0
      %394 = vmatpush1.bf16.msra.mxu0 0
      %395 = vmatprep.subr.bf16.mxu0 0
      %396 = vmatpush1.bf16.msra.mxu0 0
      %397 = vmatprep.mubr.bf16.mxu0 0
      %398 = vmatmul.mubr.bf16.gmra.mrb[0].mxu0 %v311
      %v399 = vpop.f32.mrb[0].mxu0
      %v400 = vadd.f32 %v216, %v399
      %v401 = vpop.f32.mrb[0].mxu0
      %v402 = vpop.f32.mrb[0].mxu0
      %v403 = vadd.f32 %v216, %v402
      %v404 = vpop.f32.mrb[0].mxu0
      %405 = vmatprep.mubr.bf16.mxu0 0
      %406 = vmatmul.mubr.bf16.gmra.mrb[0].mxu0 %v314
      %v407 = vpop.f32.mrb[0].mxu0
      %v408 = vadd.f32 %v216, %v407
      %v409 = vpop.f32.mrb[0].mxu0
      %v410 = vpop.f32.mrb[0].mxu0
      %v411 = vadd.f32 %v216, %v410
      %v412 = vpop.f32.mrb[0].mxu0
      %413 = vmatprep.mubr.bf16.mxu0 0
      %414 = vmatmul.mubr.bf16.gmra.mrb[0].mxu0 %v317
      %v415 = vpop.f32.mrb[0].mxu0
      %v416 = vadd.f32 %v216, %v415
      %v417 = vpop.f32.mrb[0].mxu0
      %v418 = vpop.f32.mrb[0].mxu0
      %v419 = vadd.f32 %v216, %v418
      %v420 = vpop.f32.mrb[0].mxu0
      %421 = vmatprep.mubr.bf16.mxu0 0
      %422 = vmatmul.mubr.bf16.gmra.mrb[0].mxu0 %v320
      %v423 = vpop.f32.mrb[0].mxu0
      %v424 = vadd.f32 %v216, %v423
      %v425 = vpop.f32.mrb[0].mxu0
      %v426 = vpop.f32.mrb[0].mxu0
      %v427 = vadd.f32 %v216, %v426
      %v428 = vpop.f32.mrb[0].mxu0
      %429 = vmatprep.mubr.bf16.mxu0 0
      %430 = vmatmul.mubr.bf16.gmra.mrb[0].mxu0 %v323
      %v431 = vpop.f32.mrb[0].mxu0
      %v432 = vadd.f32 %v216, %v431
      %v433 = vpop.f32.mrb[0].mxu0
      %v434 = vpop.f32.mrb[0].mxu0
      %v435 = vadd.f32 %v216, %v434
      %v436 = vpop.f32.mrb[0].mxu0
      %437 = vmatprep.mubr.bf16.mxu0 0
      %438 = vmatmul.mubr.bf16.gmra.mrb[0].mxu0 %v326
      %v439 = vpop.f32.mrb[0].mxu0
      %v440 = vadd.f32 %v216, %v439
      %v441 = vpop.f32.mrb[0].mxu0
      %v442 = vpop.f32.mrb[0].mxu0
      %v443 = vadd.f32 %v216, %v442
      %v444 = vpop.f32.mrb[0].mxu0
      %445 = vmatprep.mubr.bf16.mxu0 0
      %446 = vmatmul.mubr.bf16.gmra.mrb[0].mxu0 %v329
      %v447 = vpop.f32.mrb[0].mxu0
      %v448 = vadd.f32 %v216, %v447
      %v449 = vpop.f32.mrb[0].mxu0
      %v450 = vpop.f32.mrb[0].mxu0
      %v451 = vadd.f32 %v216, %v450
      %v452 = vpop.f32.mrb[0].mxu0
      %453 = vmatprep.mubr.bf16.mxu0 0
      %454 = vmatmul.mubr.bf16.gmra.mrb[0].mxu0 %v332
      %v455 = vpop.f32.mrb[0].mxu0
      %v456 = vadd.f32 %v216, %v455
      %v457 = vpop.f32.mrb[0].mxu0
      %v458 = vpop.f32.mrb[0].mxu0
      %v459 = vadd.f32 %v216, %v458
      %v460 = vpop.f32.mrb[0].mxu0
      %461 = vmatprep.mubr.bf16.mxu0 0
      %462 = vmatmul.mubr.bf16.gmra.mrb[0].mxu0 %v335
      %v463 = vpop.f32.mrb[0].mxu0
      %v464 = vadd.f32 %v216, %v463
      %v465 = vpop.f32.mrb[0].mxu0
      %v466 = vpop.f32.mrb[0].mxu0
      %v467 = vadd.f32 %v216, %v466
      %v468 = vpop.f32.mrb[0].mxu0
      %469 = vmatprep.mubr.bf16.mxu0 0
      %470 = vmatmul.mubr.bf16.gmra.mrb[0].mxu0 %v338
      %v471 = vpop.f32.mrb[0].mxu0
      %v472 = vadd.f32 %v216, %v471
      %v473 = vpop.f32.mrb[0].mxu0
      %v474 = vpop.f32.mrb[0].mxu0
      %v475 = vadd.f32 %v216, %v474
      %v476 = vpop.f32.mrb[0].mxu0
      %477 = vmatprep.mubr.bf16.mxu0 0
      %478 = vmatmul.mubr.bf16.gmra.mrb[0].mxu0 %v341
      %v479 = vpop.f32.mrb[0].mxu0
      %v480 = vadd.f32 %v216, %v479
      %v481 = vpop.f32.mrb[0].mxu0
      %v482 = vpop.f32.mrb[0].mxu0
      %v483 = vadd.f32 %v216, %v482
      %v484 = vpop.f32.mrb[0].mxu0
      %485 = vmatprep.mubr.bf16.mxu0 0
      %486 = vmatmul.mubr.bf16.gmra.mrb[0].mxu0 %v344
      %v487 = vpop.f32.mrb[0].mxu0
      %v488 = vadd.f32 %v216, %v487
      %v489 = vpop.f32.mrb[0].mxu0
      %v490 = vpop.f32.mrb[0].mxu0
      %v491 = vadd.f32 %v216, %v490
      %v492 = vpop.f32.mrb[0].mxu0
      %493 = vmatprep.mubr.bf16.mxu0 0
      %494 = vmatmul.mubr.bf16.gmra.mrb[0].mxu0 %v347
      %v495 = vpop.f32.mrb[0].mxu0
      %v496 = vadd.f32 %v216, %v495
      %v497 = vpop.f32.mrb[0].mxu0
      %v498 = vpop.f32.mrb[0].mxu0
      %v499 = vadd.f32 %v216, %v498
      %v500 = vpop.f32.mrb[0].mxu0
      %501 = vmatprep.mubr.bf16.mxu0 0
      %502 = vmatmul.mubr.bf16.gmra.mrb[0].mxu0 %v350
      %v503 = vpop.f32.mrb[0].mxu0
      %v504 = vadd.f32 %v216, %v503
      %v505 = vpop.f32.mrb[0].mxu0
      %v506 = vpop.f32.mrb[0].mxu0
      %v507 = vadd.f32 %v216, %v506
      %v508 = vpop.f32.mrb[0].mxu0
      %509 = vmatprep.mubr.bf16.mxu0 0
      %510 = vmatmul.mubr.bf16.gmra.mrb[0].mxu0 %v353
      %v511 = vpop.f32.mrb[0].mxu0
      %v512 = vadd.f32 %v216, %v511
      %v513 = vpop.f32.mrb[0].mxu0
      %v514 = vpop.f32.mrb[0].mxu0
      %v515 = vadd.f32 %v216, %v514
      %v516 = vpop.f32.mrb[0].mxu0
      %517 = vmatprep.mubr.bf16.mxu0 0
      %518 = vmatmul.mubr.bf16.gmra.mrb[0].mxu0 %v356
      %v519 = vpop.f32.mrb[0].mxu0
      %v520 = vadd.f32 %v216, %v519
      %v521 = vpop.f32.mrb[0].mxu0
      %v522 = vpop.f32.mrb[0].mxu0
      %v523 = vadd.f32 %v216, %v522
      %v524 = vpop.f32.mrb[0].mxu0
      %525 = vdwg.mxu0
      %v526 = vmax.f32 %v400, 0.0
      %v527 = vmax.f32 %v403, 0.0
      %v528 = vmax.f32 %v408, 0.0
      %v529 = vmax.f32 %v411, 0.0
      %v530 = vmax.f32 %v416, 0.0
      %v531 = vmax.f32 %v419, 0.0
      %v532 = vmax.f32 %v424, 0.0
      %v533 = vmax.f32 %v427, 0.0
      %v534 = vmax.f32 %v432, 0.0
      %v535 = vmax.f32 %v435, 0.0
      %v536 = vmax.f32 %v440, 0.0
      %v537 = vmax.f32 %v443, 0.0
      %v538 = vmax.f32 %v448, 0.0
      %v539 = vmax.f32 %v451, 0.0
      %v540 = vmax.f32 %v456, 0.0
      %v541 = vmax.f32 %v459, 0.0
      %v542 = vmax.f32 %v464, 0.0
      %v543 = vmax.f32 %v467, 0.0
      %v544 = vmax.f32 %v472, 0.0
      %v545 = vmax.f32 %v475, 0.0
      %v546 = vmax.f32 %v480, 0.0
      %v547 = vmax.f32 %v483, 0.0
      %v548 = vmax.f32 %v488, 0.0
      %v549 = vmax.f32 %v491, 0.0
      %v550 = vmax.f32 %v496, 0.0
      %v551 = vmax.f32 %v499, 0.0
      %v552 = vmax.f32 %v504, 0.0
      %v553 = vmax.f32 %v507, 0.0
      %v554 = vmax.f32 %v512, 0.0
      %v555 = vmax.f32 %v515, 0.0
      %v556 = vmax.f32 %v520, 0.0
      %v557 = vmax.f32 %v523, 0.0
      %558 = vst [vmem:[%s172] sm:$0xff] %v526
      %559 = vst [vmem:[%s172 + $0x8] sm:$0xff] %v527
      %560 = vst [vmem:[%s172 + $0x10] sm:$0xff] %v528
      %561 = vst [vmem:[%s172 + $0x18] sm:$0xff] %v529
      %562 = vst [vmem:[%s172 + $0x20] sm:$0xff] %v530
      %563 = vst [vmem:[%s172 + $0x28] sm:$0xff] %v531
      %564 = vst [vmem:[%s172 + $0x30] sm:$0xff] %v532
      %565 = vst [vmem:[%s172 + $0x38] sm:$0xff] %v533
      %566 = vst [vmem:[%s172 + $0x40] sm:$0xff] %v534
      %567 = vst [vmem:[%s172 + $0x48] sm:$0xff] %v535
      %568 = vst [vmem:[%s172 + $0x50] sm:$0xff] %v536
      %569 = vst [vmem:[%s172 + $0x58] sm:$0xff] %v537
      %570 = vst [vmem:[%s172 + $0x60] sm:$0xff] %v538
      %571 = vst [vmem:[%s172 + $0x68] sm:$0xff] %v539
      %572 = vst [vmem:[%s172 + $0x70] sm:$0xff] %v540
      %573 = vst [vmem:[%s172 + $0x78] sm:$0xff] %v541
      %574 = vst [vmem:[%s172 + $0x80] sm:$0xff] %v542
      %575 = vst [vmem:[%s172 + $0x88] sm:$0xff] %v543
      %576 = vst [vmem:[%s172 + $0x90] sm:$0xff] %v544
      %577 = vst [vmem:[%s172 + $0x98] sm:$0xff] %v545
      %578 = vst [vmem:[%s172 + $0xa0] sm:$0xff] %v546
      %579 = vst [vmem:[%s172 + $0xa8] sm:$0xff] %v547
      %580 = vst [vmem:[%s172 + $0xb0] sm:$0xff] %v548
      %581 = vst [vmem:[%s172 + $0xb8] sm:$0xff] %v549
      %582 = vst [vmem:[%s172 + $0xc0] sm:$0xff] %v550
      %583 = vst [vmem:[%s172 + $0xc8] sm:$0xff] %v551
      %584 = vst [vmem:[%s172 + $0xd0] sm:$0xff] %v552
      %585 = vst [vmem:[%s172 + $0xd8] sm:$0xff] %v553
      %586 = vst [vmem:[%s172 + $0xe0] sm:$0xff] %v554
      %587 = vst [vmem:[%s172 + $0xe8] sm:$0xff] %v555
      %588 = vst [vmem:[%s172 + $0xf0] sm:$0xff] %v556
      %589 = vst [vmem:[%s172 + $0xf8] sm:$0xff] %v557
      %s590 = smul.u32 32, %s14
      %p591 = scmp.lt.s32.totalorder %s590, 63
      %s592 = scalar_select %p591, %s590, 63
      %s593 = smul.addr %s592, 8
      %s594 = scalar_lea.vmem %s3, %s593
      // Predicated region
      $region33: #{retinanet_forward.24} parent=31 // pred_check
        %p595 = pneg %p100
      $region34: #{retinanet_forward.24} parent=31 // pred_check_branch
        %597 = sbr.rel (%p595) target = $region36
      $region35: #{retinanet_forward.24} parent=31 // pred_region
        %s598 = smul.u32 32, %s14
      $region36: #{retinanet_forward.24} parent=31 // pred_fallthru
        _
    $region32: #{retinanet_forward.24} parent=5 // pred_fallthru
      _
    %p599 = scmp.le.s32.totalorder 2, %s9
    // Predicated region
    $region37: #{retinanet_forward.24} parent=5 // pred_check
      %p600 = pneg %p599
    $region38: #{retinanet_forward.24} parent=5 // pred_check_branch
      %602 = sbr.rel (%p600) target = $region40
    $region39: #{retinanet_forward.24} parent=5 // pred_region
      %s603 = ssub.s32 %s9, 2
      // Predicated region
      $region41: #{retinanet_forward.24} parent=39 // pred_check
        %p604 = pneg %p106
      $region42: #{retinanet_forward.24} parent=39 // pred_check_branch
        %606 = sbr.rel (%p604) target = $region44
      $region43: #{retinanet_forward.24} parent=39 // pred_region
        %s607 = smul.u32 32, %s15
        %p608 = scmp.lt.s32.totalorder %s607, 63
        %s609 = scalar_select %p608, %s607, 63
        %s610 = smul.addr %s609, 8
        %s611 = scalar_lea.vmem %s3, %s610
      $region44: #{retinanet_forward.24} parent=39 // pred_fallthru
        _
    $region40: #{retinanet_forward.24} parent=5 // pred_fallthru
      _
  $region6: #{retinanet_forward.24} parent=0 // loop_footer
    %s13 = sadd.s32 1, %s9
  $region7: #{retinanet_forward.24} parent=0 // loop_footer_branch
    %8 = sbr.rel target = $region3
  $region8: #{retinanet_forward.24} parent=0 // loop_exit
    _

// kernel: retinanet_forward.25
$region0: #{retinanet_forward.25}
  #allocation0 [shape = 'u32[]', space=smem, size = 0x4, offset = 0x4, fixed_abs, tag = 'smem constant byte address 0x4 - core index']
  #allocation1 [shape = 'u32[144,128]{1,0:T(1,128)}', space=vmem, size = 0x12000, scoped, tag = 'internal scratch']
  %s0 = inlined_call_operand.vmem [shape: bf16[128,144], index: 0, kind: input, shape index: {}]
  %s1 = inlined_call_operand.vmem [shape: bf16[144,128], index: 1, kind: input, shape index: {}]
  %s2 = inlined_call_operand.vmem [shape: f32[1,128], index: 2, kind: input, shape index: {}]
  %s3 = inlined_call_operand.vmem [shape: f32[128,128], index: 3, kind: output, shape index: {}]
  %s4 = sld [smem:[#allocation0]]
  $region22: #{retinanet_forward.25} parent=0
    _
  %s6 = ssub.s32 1, %s4
  %s7 = scalar_select 0, %s6, %s4
  // Predicated region
  $region2: #{retinanet_forward.25} parent=0 // pred_check
    _
  $region3: #{retinanet_forward.25} parent=0 // pred_check_branch
    %9 = sbr.rel (0) target = $region5
  $region4: #{retinanet_forward.25} parent=0 // pred_region
    _
  $region5: #{retinanet_forward.25} parent=0 // pred_fallthru
    _
  // Predicated region
  $region6: #{retinanet_forward.25} parent=0 // pred_check
    _
  $region7: #{retinanet_forward.25} parent=0 // pred_check_branch
    %11 = sbr.rel (0) target = $region9
  $region8: #{retinanet_forward.25} parent=0 // pred_region
    _
  $region9: #{retinanet_forward.25} parent=0 // pred_fallthru
    _
  // Predicated region
  $region10: #{retinanet_forward.25} parent=0 // pred_check
    _
  $region11: #{retinanet_forward.25} parent=0 // pred_check_branch
    %13 = sbr.rel (0) target = $region13
  $region12: #{retinanet_forward.25} parent=0 // pred_region
    _
  $region13: #{retinanet_forward.25} parent=0 // pred_fallthru
    _
  %v15 = vld [vmem:[%s0] sm:$0xff]
  %v16 = vld [vmem:[%s0 + $0x8] sm:$0xff]
  %v17 = vld [vmem:[%s0 + $0x10] sm:$0xff]
  %v18 = vld [vmem:[%s0 + $0x18] sm:$0xff]
  %v19 = vld [vmem:[%s0 + $0x20] sm:$0xff]
  %v20 = vld [vmem:[%s0 + $0x28] sm:$0xff]
  %v21 = vld [vmem:[%s0 + $0x30] sm:$0xff]
  %v22 = vld [vmem:[%s0 + $0x38] sm:$0xff]
  %v23 = vld [vmem:[%s0 + $0x40] sm:$0xff]
  %v24 = vld [vmem:[%s0 + $0x48] sm:$0xff]
  %v25 = vld [vmem:[%s0 + $0x50] sm:$0xff]
  %v26 = vld [vmem:[%s0 + $0x58] sm:$0xff]
  %v27 = vld [vmem:[%s0 + $0x60] sm:$0xff]
  %v28 = vld [vmem:[%s0 + $0x68] sm:$0xff]
  %v29 = vld [vmem:[%s0 + $0x70] sm:$0xff]
  %v30 = vld [vmem:[%s0 + $0x78] sm:$0xff]
  %v31 = vld [vmem:[%s1] sm:$0xf]
  %v32 = vld [vmem:[%s1 + $0x4] sm:$0xf]
  %v33 = vld [vmem:[%s1 + $0x8] sm:$0xf]
  %v34 = vld [vmem:[%s1 + $0xc] sm:$0xf]
  %v35 = vld [vmem:[%s1 + $0x10] sm:$0xf]
  %v36 = vld [vmem:[%s1 + $0x14] sm:$0xf]
  %v37 = vld [vmem:[%s1 + $0x18] sm:$0xf]
  %v38 = vld [vmem:[%s1 + $0x1c] sm:$0xf]
  %v39 = vld [vmem:[%s1 + $0x20] sm:$0xf]
  %v40 = vld [vmem:[%s1 + $0x24] sm:$0xf]
  %v41 = vld [vmem:[%s1 + $0x28] sm:$0xf]
  %v42 = vld [vmem:[%s1 + $0x2c] sm:$0xf]
  %v43 = vld [vmem:[%s1 + $0x30] sm:$0xf]
  %v44 = vld [vmem:[%s1 + $0x34] sm:$0xf]
  %v45 = vld [vmem:[%s1 + $0x38] sm:$0xf]
  %v46 = vld [vmem:[%s1 + $0x3c] sm:$0xf]
  %v47 = vld [vmem:[%s1 + $0x40] sm:$0xf]
  %v48 = vld [vmem:[%s1 + $0x44] sm:$0xf]
  %v49 = vld [vmem:[%s2] sm:$0x1]
  %v51 = vlaneseq
  %v52 = vshrl.u32 %v51, 7
  %v53 = vsub.s32 0, %v52
  %v54 = vrot.slane %v49, %v53
  %v72 = vunpack.c.l.b16 %v15
  %v73 = vunpack.c.h.b16 %v15
  %v74 = vunpack.c.l.b16 %v16
  %v75 = vunpack.c.h.b16 %v16
  %v76 = vunpack.c.l.b16 %v17
  %v77 = vunpack.c.h.b16 %v17
  %v78 = vunpack.c.l.b16 %v18
  %v79 = vunpack.c.h.b16 %v18
  %v80 = vunpack.c.l.b16 %v19
  %v81 = vunpack.c.h.b16 %v19
  %v82 = vunpack.c.l.b16 %v20
  %v83 = vunpack.c.h.b16 %v20
  %v84 = vunpack.c.l.b16 %v21
  %v85 = vunpack.c.h.b16 %v21
  %v86 = vunpack.c.l.b16 %v22
  %v87 = vunpack.c.h.b16 %v22
  %v88 = vunpack.c.l.b16 %v23
  %v89 = vunpack.c.h.b16 %v23
  %v90 = vunpack.c.l.b16 %v24
  %v91 = vunpack.c.h.b16 %v24
  %v92 = vunpack.c.l.b16 %v25
  %v93 = vunpack.c.h.b16 %v25
  %v94 = vunpack.c.l.b16 %v26
  %v95 = vunpack.c.h.b16 %v26
  %v96 = vunpack.c.l.b16 %v27
  %v97 = vunpack.c.h.b16 %v27
  %v98 = vunpack.c.l.b16 %v28
  %v99 = vunpack.c.h.b16 %v28
  %v100 = vunpack.c.l.b16 %v29
  %v101 = vunpack.c.h.b16 %v29
  %v102 = vunpack.c.l.b16 %v30
  %v103 = vunpack.c.h.b16 %v30
  %v104 = vpack.c.b16 %v74, %v72
  %v105 = vpack.c.b16 %v75, %v73
  %v106 = vpack.c.b16 %v78, %v76
  %v107 = vpack.c.b16 %v79, %v77
  %v108 = vpack.c.b16 %v82, %v80
  %v109 = vpack.c.b16 %v83, %v81
  %v110 = vpack.c.b16 %v86, %v84
  %v111 = vpack.c.b16 %v87, %v85
  %v112 = vpack.c.b16 %v90, %v88
  %v113 = vpack.c.b16 %v91, %v89
  %v114 = vpack.c.b16 %v94, %v92
  %v115 = vpack.c.b16 %v95, %v93
  %v116 = vpack.c.b16 %v98, %v96
  %v117 = vpack.c.b16 %v99, %v97
  %v118 = vpack.c.b16 %v102, %v100
  %v119 = vpack.c.b16 %v103, %v101
  %v146 = vunpack.c.l.b16 %v31
  %v147 = vunpack.c.l.b16 %v32
  %v148 = vunpack.c.l.b16 %v33
  %v149 = vunpack.c.l.b16 %v34
  %v150 = vunpack.c.l.b16 %v35
  %v151 = vunpack.c.l.b16 %v36
  %v152 = vunpack.c.l.b16 %v37
  %v153 = vunpack.c.l.b16 %v38
  %v154 = vunpack.c.l.b16 %v39
  %v155 = vunpack.c.l.b16 %v40
  %v156 = vunpack.c.l.b16 %v41
  %v157 = vunpack.c.l.b16 %v42
  %v158 = vunpack.c.l.b16 %v43
  %v159 = vunpack.c.l.b16 %v44
  %v160 = vunpack.c.l.b16 %v45
  %v161 = vunpack.c.l.b16 %v46
  %v162 = vunpack.c.l.b16 %v47
  %v163 = vunpack.c.l.b16 %v48
  %v164 = vpack.c.b16 %v147, %v146
  %v165 = vpack.c.b16 %v149, %v148
  %v166 = vpack.c.b16 %v151, %v150
  %v167 = vpack.c.b16 %v153, %v152
  %v168 = vpack.c.b16 %v155, %v154
  %v169 = vpack.c.b16 %v157, %v156
  %v170 = vpack.c.b16 %v159, %v158
  %v171 = vpack.c.b16 %v161, %v160
  %v172 = vpack.c.b16 %v163, %v162
  %vm182 = vcmask 130048
  %v184 = vsel %vm182, %v105, 0
  %v187 = vsel %vm182, %v107, 0
  %v190 = vsel %vm182, %v109, 0
  %v193 = vsel %vm182, %v111, 0
  %v196 = vsel %vm182, %v113, 0
  %v199 = vsel %vm182, %v115, 0
  %v202 = vsel %vm182, %v117, 0
  %v205 = vsel %vm182, %v119, 0
  %207 = vmatprep.subr.bf16.mxu0 0
  %208 = vmatpush1.bf16.msra.mxu0 %v164
  %209 = vmatprep.subr.bf16.mxu0 0
  %210 = vmatpush1.bf16.msra.mxu0 %v165
  %211 = vmatprep.subr.bf16.mxu0 0
  %212 = vmatpush1.bf16.msra.mxu0 %v166
  %213 = vmatprep.subr.bf16.mxu0 0
  %214 = vmatpush1.bf16.msra.mxu0 %v167
  %215 = vmatprep.subr.bf16.mxu0 0
  %216 = vmatpush1.bf16.msra.mxu0 %v168
  %217 = vmatprep.subr.bf16.mxu0 0
  %218 = vmatpush1.bf16.msra.mxu0 %v169
  %219 = vmatprep.subr.bf16.mxu0 0
  %220 = vmatpush1.bf16.msra.mxu0 %v170
  %221 = vmatprep.subr.bf16.mxu0 0
  %222 = vmatpush1.bf16.msra.mxu0 %v171
  %223 = vmatprep.subr.bf16.mxu0 0
  %224 = vmatpush1.bf16.msra.mxu0 %v172
  %225 = vmatprep.subr.bf16.mxu0 0
  %226 = vmatpush1.bf16.msra.mxu0 0
  %227 = vmatprep.subr.bf16.mxu0 0
  %228 = vmatpush1.bf16.msra.mxu0 0
  %229 = vmatprep.subr.bf16.mxu0 0
  %230 = vmatpush1.bf16.msra.mxu0 0
  %231 = vmatprep.subr.bf16.mxu0 0
  %232 = vmatpush1.bf16.msra.mxu0 0
  %233 = vmatprep.subr.bf16.mxu0 0
  %234 = vmatpush1.bf16.msra.mxu0 0
  %235 = vmatprep.subr.bf16.mxu0 0
  %236 = vmatpush1.bf16.msra.mxu0 0
  %237 = vmatprep.subr.bf16.mxu0 0
  %238 = vmatpush1.bf16.msra.mxu0 0
  %239 = vmatprep.mubr.bf16.mxu0 %v184
  %240 = vmatmul.mubr.bf16.gmra.mrb[0].mxu0 %v104
  %v241 = vpop.f32.mrb[0].mxu0
  %v242 = vadd.f32 %v54, %v241
  %v243 = vpop.f32.mrb[0].mxu0
  %v244 = vpop.f32.mrb[0].mxu0
  %v245 = vadd.f32 %v54, %v244
  %v246 = vpop.f32.mrb[0].mxu0
  %247 = vmatprep.mubr.bf16.mxu0 %v187
  %248 = vmatmul.mubr.bf16.gmra.mrb[0].mxu0 %v106
  %v249 = vpop.f32.mrb[0].mxu0
  %v250 = vadd.f32 %v54, %v249
  %v251 = vpop.f32.mrb[0].mxu0
  %v252 = vpop.f32.mrb[0].mxu0
  %v253 = vadd.f32 %v54, %v252
  %v254 = vpop.f32.mrb[0].mxu0
  %255 = vmatprep.mubr.bf16.mxu0 %v190
  %256 = vmatmul.mubr.bf16.gmra.mrb[0].mxu0 %v108
  %v257 = vpop.f32.mrb[0].mxu0
  %v258 = vadd.f32 %v54, %v257
  %v259 = vpop.f32.mrb[0].mxu0
  %v260 = vpop.f32.mrb[0].mxu0
  %v261 = vadd.f32 %v54, %v260
  %v262 = vpop.f32.mrb[0].mxu0
  %263 = vmatprep.mubr.bf16.mxu0 %v193
  %264 = vmatmul.mubr.bf16.gmra.mrb[0].mxu0 %v110
  %v265 = vpop.f32.mrb[0].mxu0
  %v266 = vadd.f32 %v54, %v265
  %v267 = vpop.f32.mrb[0].mxu0
  %v268 = vpop.f32.mrb[0].mxu0
  %v269 = vadd.f32 %v54, %v268
  %v270 = vpop.f32.mrb[0].mxu0
  %271 = vmatprep.mubr.bf16.mxu0 %v196
  %272 = vmatmul.mubr.bf16.gmra.mrb[0].mxu0 %v112
  %v273 = vpop.f32.mrb[0].mxu0
  %v274 = vadd.f32 %v54, %v273
  %v275 = vpop.f32.mrb[0].mxu0
  %v276 = vpop.f32.mrb[0].mxu0
  %v277 = vadd.f32 %v54, %v276
  %v278 = vpop.f32.mrb[0].mxu0
  %279 = vmatprep.mubr.bf16.mxu0 %v199
  %280 = vmatmul.mubr.bf16.gmra.mrb[0].mxu0 %v114
  %v281 = vpop.f32.mrb[0].mxu0
  %v282 = vadd.f32 %v54, %v281
  %v283 = vpop.f32.mrb[0].mxu0
  %v284 = vpop.f32.mrb[0].mxu0
  %v285 = vadd.f32 %v54, %v284
  %v286 = vpop.f32.mrb[0].mxu0
  %287 = vmatprep.mubr.bf16.mxu0 %v202
  %288 = vmatmul.mubr.bf16.gmra.mrb[0].mxu0 %v116
  %v289 = vpop.f32.mrb[0].mxu0
  %v290 = vadd.f32 %v54, %v289
  %v291 = vpop.f32.mrb[0].mxu0
  %v292 = vpop.f32.mrb[0].mxu0
  %v293 = vadd.f32 %v54, %v292
  %v294 = vpop.f32.mrb[0].mxu0
  %295 = vmatprep.mubr.bf16.mxu0 %v205
  %296 = vmatmul.mubr.bf16.gmra.mrb[0].mxu0 %v118
  %v297 = vpop.f32.mrb[0].mxu0
  %v298 = vadd.f32 %v54, %v297
  %v299 = vpop.f32.mrb[0].mxu0
  %v300 = vpop.f32.mrb[0].mxu0
  %v301 = vadd.f32 %v54, %v300
  %v302 = vpop.f32.mrb[0].mxu0
  %303 = vdwg.mxu0
  %v304 = vmax.f32 %v242, 0.0
  %v305 = vmax.f32 %v245, 0.0
  %v306 = vmax.f32 %v250, 0.0
  %v307 = vmax.f32 %v253, 0.0
  %v308 = vmax.f32 %v258, 0.0
  %v309 = vmax.f32 %v261, 0.0
  %v310 = vmax.f32 %v266, 0.0
  %v311 = vmax.f32 %v269, 0.0
  %v312 = vmax.f32 %v274, 0.0
  %v313 = vmax.f32 %v277, 0.0
  %v314 = vmax.f32 %v282, 0.0
  %v315 = vmax.f32 %v285, 0.0
  %v316 = vmax.f32 %v290, 0.0
  %v317 = vmax.f32 %v293, 0.0
  %v318 = vmax.f32 %v298, 0.0
  %v319 = vmax.f32 %v301, 0.0
  %320 = vst [vmem:[%s3] sm:$0xff] %v304
  %321 = vst [vmem:[%s3 + $0x8] sm:$0xff] %v305
  %322 = vst [vmem:[%s3 + $0x10] sm:$0xff] %v306
  %323 = vst [vmem:[%s3 + $0x18] sm:$0xff] %v307
  %324 = vst [vmem:[%s3 + $0x20] sm:$0xff] %v308
  %325 = vst [vmem:[%s3 + $0x28] sm:$0xff] %v309
  %326 = vst [vmem:[%s3 + $0x30] sm:$0xff] %v310
  %327 = vst [vmem:[%s3 + $0x38] sm:$0xff] %v311
  %328 = vst [vmem:[%s3 + $0x40] sm:$0xff] %v312
  %329 = vst [vmem:[%s3 + $0x48] sm:$0xff] %v313
  %330 = vst [vmem:[%s3 + $0x50] sm:$0xff] %v314
  %331 = vst [vmem:[%s3 + $0x58] sm:$0xff] %v315
  %332 = vst [vmem:[%s3 + $0x60] sm:$0xff] %v316
  %333 = vst [vmem:[%s3 + $0x68] sm:$0xff] %v317
  %334 = vst [vmem:[%s3 + $0x70] sm:$0xff] %v318
  %335 = vst [vmem:[%s3 + $0x78] sm:$0xff] %v319
  // Predicated region
  $region14: #{retinanet_forward.25} parent=0 // pred_check
    _
  $region15: #{retinanet_forward.25} parent=0 // pred_check_branch
    %337 = sbr.rel (0) target = $region17
  $region16: #{retinanet_forward.25} parent=0 // pred_region
    _
  $region17: #{retinanet_forward.25} parent=0 // pred_fallthru
    _
  // Predicated region
  $region18: #{retinanet_forward.25} parent=0 // pred_check
    _
  $region19: #{retinanet_forward.25} parent=0 // pred_check_branch
    %339 = sbr.rel (0) target = $region21
  $region20: #{retinanet_forward.25} parent=0 // pred_region
    _
  $region21: #{retinanet_forward.25} parent=0 // pred_fallthru
    _

// kernel: retinanet_forward.26
$region0: #{retinanet_forward.26}
  #allocation0 [shape = 'u32[]', space=smem, size = 0x4, offset = 0x4, fixed_abs, tag = 'smem constant byte address 0x4 - core index']
  #allocation1 [shape = 'u32[144,128]{1,0:T(1,128)}', space=vmem, size = 0x12000, scoped, tag = 'internal scratch']
  %s0 = inlined_call_operand.vmem [shape: bf16[32,144], index: 0, kind: input, shape index: {}]
  %s1 = inlined_call_operand.vmem [shape: bf16[144,128], index: 1, kind: input, shape index: {}]
  %s2 = inlined_call_operand.vmem [shape: f32[1,128], index: 2, kind: input, shape index: {}]
  %s3 = inlined_call_operand.vmem [shape: f32[32,128], index: 3, kind: output, shape index: {}]
  %s4 = sld [smem:[#allocation0]]
  $region22: #{retinanet_forward.26} parent=0
    _
  %s6 = ssub.s32 1, %s4
  %s7 = scalar_select 0, %s6, %s4
  // Predicated region
  $region2: #{retinanet_forward.26} parent=0 // pred_check
    _
  $region3: #{retinanet_forward.26} parent=0 // pred_check_branch
    %9 = sbr.rel (0) target = $region5
  $region4: #{retinanet_forward.26} parent=0 // pred_region
    _
  $region5: #{retinanet_forward.26} parent=0 // pred_fallthru
    _
  // Predicated region
  $region6: #{retinanet_forward.26} parent=0 // pred_check
    _
  $region7: #{retinanet_forward.26} parent=0 // pred_check_branch
    %11 = sbr.rel (0) target = $region9
  $region8: #{retinanet_forward.26} parent=0 // pred_region
    _
  $region9: #{retinanet_forward.26} parent=0 // pred_fallthru
    _
  // Predicated region
  $region10: #{retinanet_forward.26} parent=0 // pred_check
    _
  $region11: #{retinanet_forward.26} parent=0 // pred_check_branch
    %13 = sbr.rel (0) target = $region13
  $region12: #{retinanet_forward.26} parent=0 // pred_region
    _
  $region13: #{retinanet_forward.26} parent=0 // pred_fallthru
    _
  %v15 = vld [vmem:[%s0] sm:$0xff]
  %v16 = vld [vmem:[%s0 + $0x8] sm:$0xff]
  %v17 = vld [vmem:[%s0 + $0x10] sm:$0xff]
  %v18 = vld [vmem:[%s0 + $0x18] sm:$0xff]
  %v19 = vld [vmem:[%s1] sm:$0xf]
  %v20 = vld [vmem:[%s1 + $0x4] sm:$0xf]
  %v21 = vld [vmem:[%s1 + $0x8] sm:$0xf]
  %v22 = vld [vmem:[%s1 + $0xc] sm:$0xf]
  %v23 = vld [vmem:[%s1 + $0x10] sm:$0xf]
  %v24 = vld [vmem:[%s1 + $0x14] sm:$0xf]
  %v25 = vld [vmem:[%s1 + $0x18] sm:$0xf]
  %v26 = vld [vmem:[%s1 + $0x1c] sm:$0xf]
  %v27 = vld [vmem:[%s1 + $0x20] sm:$0xf]
  %v28 = vld [vmem:[%s1 + $0x24] sm:$0xf]
  %v29 = vld [vmem:[%s1 + $0x28] sm:$0xf]
  %v30 = vld [vmem:[%s1 + $0x2c] sm:$0xf]
  %v31 = vld [vmem:[%s1 + $0x30] sm:$0xf]
  %v32 = vld [vmem:[%s1 + $0x34] sm:$0xf]
  %v33 = vld [vmem:[%s1 + $0x38] sm:$0xf]
  %v34 = vld [vmem:[%s1 + $0x3c] sm:$0xf]
  %v35 = vld [vmem:[%s1 + $0x40] sm:$0xf]
  %v36 = vld [vmem:[%s1 + $0x44] sm:$0xf]
  %v37 = vld [vmem:[%s2] sm:$0x1]
  %v39 = vlaneseq
  %v40 = vshrl.u32 %v39, 7
  %v41 = vsub.s32 0, %v40
  %v42 = vrot.slane %v37, %v41
  %v48 = vunpack.c.l.b16 %v15
  %v49 = vunpack.c.h.b16 %v15
  %v50 = vunpack.c.l.b16 %v16
  %v51 = vunpack.c.h.b16 %v16
  %v52 = vunpack.c.l.b16 %v17
  %v53 = vunpack.c.h.b16 %v17
  %v54 = vunpack.c.l.b16 %v18
  %v55 = vunpack.c.h.b16 %v18
  %v56 = vpack.c.b16 %v50, %v48
  %v57 = vpack.c.b16 %v51, %v49
  %v58 = vpack.c.b16 %v54, %v52
  %v59 = vpack.c.b16 %v55, %v53
  %v80 = vunpack.c.l.b16 %v19
  %v81 = vunpack.c.l.b16 %v20
  %v82 = vunpack.c.l.b16 %v21
  %v83 = vunpack.c.l.b16 %v22
  %v84 = vunpack.c.l.b16 %v23
  %v85 = vunpack.c.l.b16 %v24
  %v86 = vunpack.c.l.b16 %v25
  %v87 = vunpack.c.l.b16 %v26
  %v88 = vunpack.c.l.b16 %v27
  %v89 = vunpack.c.l.b16 %v28
  %v90 = vunpack.c.l.b16 %v29
  %v91 = vunpack.c.l.b16 %v30
  %v92 = vunpack.c.l.b16 %v31
  %v93 = vunpack.c.l.b16 %v32
  %v94 = vunpack.c.l.b16 %v33
  %v95 = vunpack.c.l.b16 %v34
  %v96 = vunpack.c.l.b16 %v35
  %v97 = vunpack.c.l.b16 %v36
  %v98 = vpack.c.b16 %v81, %v80
  %v99 = vpack.c.b16 %v83, %v82
  %v100 = vpack.c.b16 %v85, %v84
  %v101 = vpack.c.b16 %v87, %v86
  %v102 = vpack.c.b16 %v89, %v88
  %v103 = vpack.c.b16 %v91, %v90
  %v104 = vpack.c.b16 %v93, %v92
  %v105 = vpack.c.b16 %v95, %v94
  %v106 = vpack.c.b16 %v97, %v96
  %vm116 = vcmask 130048
  %v118 = vsel %vm116, %v57, 0
  %v121 = vsel %vm116, %v59, 0
  %123 = vmatprep.subr.bf16.mxu0 0
  %124 = vmatpush1.bf16.msra.mxu0 %v98
  %125 = vmatprep.subr.bf16.mxu0 0
  %126 = vmatpush1.bf16.msra.mxu0 %v99
  %127 = vmatprep.subr.bf16.mxu0 0
  %128 = vmatpush1.bf16.msra.mxu0 %v100
  %129 = vmatprep.subr.bf16.mxu0 0
  %130 = vmatpush1.bf16.msra.mxu0 %v101
  %131 = vmatprep.subr.bf16.mxu0 0
  %132 = vmatpush1.bf16.msra.mxu0 %v102
  %133 = vmatprep.subr.bf16.mxu0 0
  %134 = vmatpush1.bf16.msra.mxu0 %v103
  %135 = vmatprep.subr.bf16.mxu0 0
  %136 = vmatpush1.bf16.msra.mxu0 %v104
  %137 = vmatprep.subr.bf16.mxu0 0
  %138 = vmatpush1.bf16.msra.mxu0 %v105
  %139 = vmatprep.subr.bf16.mxu0 0
  %140 = vmatpush1.bf16.msra.mxu0 %v106
  %141 = vmatprep.subr.bf16.mxu0 0
  %142 = vmatpush1.bf16.msra.mxu0 0
  %143 = vmatprep.subr.bf16.mxu0 0
  %144 = vmatpush1.bf16.msra.mxu0 0
  %145 = vmatprep.subr.bf16.mxu0 0
  %146 = vmatpush1.bf16.msra.mxu0 0
  %147 = vmatprep.subr.bf16.mxu0 0
  %148 = vmatpush1.bf16.msra.mxu0 0
  %149 = vmatprep.subr.bf16.mxu0 0
  %150 = vmatpush1.bf16.msra.mxu0 0
  %151 = vmatprep.subr.bf16.mxu0 0
  %152 = vmatpush1.bf16.msra.mxu0 0
  %153 = vmatprep.subr.bf16.mxu0 0
  %154 = vmatpush1.bf16.msra.mxu0 0
  %155 = vmatprep.mubr.bf16.mxu0 %v118
  %156 = vmatmul.mubr.bf16.gmra.mrb[0].mxu0 %v56
  %v157 = vpop.f32.mrb[0].mxu0
  %v158 = vadd.f32 %v42, %v157
  %v159 = vpop.f32.mrb[0].mxu0
  %v160 = vpop.f32.mrb[0].mxu0
  %v161 = vadd.f32 %v42, %v160
  %v162 = vpop.f32.mrb[0].mxu0
  %163 = vmatprep.mubr.bf16.mxu0 %v121
  %164 = vmatmul.mubr.bf16.gmra.mrb[0].mxu0 %v58
  %v165 = vpop.f32.mrb[0].mxu0
  %v166 = vadd.f32 %v42, %v165
  %v167 = vpop.f32.mrb[0].mxu0
  %v168 = vpop.f32.mrb[0].mxu0
  %v169 = vadd.f32 %v42, %v168
  %v170 = vpop.f32.mrb[0].mxu0
  %171 = vdwg.mxu0
  %v172 = vmax.f32 %v158, 0.0
  %v173 = vmax.f32 %v161, 0.0
  %v174 = vmax.f32 %v166, 0.0
  %v175 = vmax.f32 %v169, 0.0
  %176 = vst [vmem:[%s3] sm:$0xff] %v172
  %177 = vst [vmem:[%s3 + $0x8] sm:$0xff] %v173
  %178 = vst [vmem:[%s3 + $0x10] sm:$0xff] %v174
  %179 = vst [vmem:[%s3 + $0x18] sm:$0xff] %v175
  // Predicated region
  $region14: #{retinanet_forward.26} parent=0 // pred_check
    _
  $region15: #{retinanet_forward.26} parent=0 // pred_check_branch
    %181 = sbr.rel (0) target = $region17
  $region16: #{retinanet_forward.26} parent=0 // pred_region
    _
  $region17: #{retinanet_forward.26} parent=0 // pred_fallthru
    _
  // Predicated region
  $region18: #{retinanet_forward.26} parent=0 // pred_check
    _
  $region19: #{retinanet_forward.26} parent=0 // pred_check_branch
    %183 = sbr.rel (0) target = $region21
  $region20: #{retinanet_forward.26} parent=0 // pred_region
    _
  $region21: #{retinanet_forward.26} parent=0 // pred_fallthru
    _

// kernel: retinanet_forward.32
$region0: #{retinanet_forward.32}
  #allocation0 [shape = 'u32[]', space=smem, size = 0x4, offset = 0x4, fixed_abs, tag = 'smem constant byte address 0x4 - core index']
  #allocation1 [shape = 'u32[144,128]{1,0:T(1,128)}', space=vmem, size = 0x12000, scoped, tag = 'internal scratch']
  %s0 = inlined_call_operand.vmem [shape: bf16[16,128], index: 0, kind: input, shape index: {}]
  %s1 = inlined_call_operand.vmem [shape: bf16[128,128], index: 1, kind: input, shape index: {}]
  %s2 = inlined_call_operand.vmem [shape: f32[1,128], index: 2, kind: input, shape index: {}]
  %s3 = inlined_call_operand.vmem [shape: f32[16,128], index: 3, kind: output, shape index: {}]
  %s4 = sld [smem:[#allocation0]]
  $region22: #{retinanet_forward.32} parent=0
    _
  %s6 = ssub.s32 1, %s4
  %s7 = scalar_select 0, %s6, %s4
  // Predicated region
  $region2: #{retinanet_forward.32} parent=0 // pred_check
    _
  $region3: #{retinanet_forward.32} parent=0 // pred_check_branch
    %9 = sbr.rel (0) target = $region5
  $region4: #{retinanet_forward.32} parent=0 // pred_region
    _
  $region5: #{retinanet_forward.32} parent=0 // pred_fallthru
    _
  // Predicated region
  $region6: #{retinanet_forward.32} parent=0 // pred_check
    _
  $region7: #{retinanet_forward.32} parent=0 // pred_check_branch
    %11 = sbr.rel (0) target = $region9
  $region8: #{retinanet_forward.32} parent=0 // pred_region
    _
  $region9: #{retinanet_forward.32} parent=0 // pred_fallthru
    _
  // Predicated region
  $region10: #{retinanet_forward.32} parent=0 // pred_check
    _
  $region11: #{retinanet_forward.32} parent=0 // pred_check_branch
    %13 = sbr.rel (0) target = $region13
  $region12: #{retinanet_forward.32} parent=0 // pred_region
    _
  $region13: #{retinanet_forward.32} parent=0 // pred_fallthru
    _
  %v15 = vld [vmem:[%s0] sm:$0xf]
  %v16 = vld [vmem:[%s0 + $0x4] sm:$0xf]
  %v17 = vld [vmem:[%s1] sm:$0xf]
  %v18 = vld [vmem:[%s1 + $0x4] sm:$0xf]
  %v19 = vld [vmem:[%s1 + $0x8] sm:$0xf]
  %v20 = vld [vmem:[%s1 + $0xc] sm:$0xf]
  %v21 = vld [vmem:[%s1 + $0x10] sm:$0xf]
  %v22 = vld [vmem:[%s1 + $0x14] sm:$0xf]
  %v23 = vld [vmem:[%s1 + $0x18] sm:$0xf]
  %v24 = vld [vmem:[%s1 + $0x1c] sm:$0xf]
  %v25 = vld [vmem:[%s1 + $0x20] sm:$0xf]
  %v26 = vld [vmem:[%s1 + $0x24] sm:$0xf]
  %v27 = vld [vmem:[%s1 + $0x28] sm:$0xf]
  %v28 = vld [vmem:[%s1 + $0x2c] sm:$0xf]
  %v29 = vld [vmem:[%s1 + $0x30] sm:$0xf]
  %v30 = vld [vmem:[%s1 + $0x34] sm:$0xf]
  %v31 = vld [vmem:[%s1 + $0x38] sm:$0xf]
  %v32 = vld [vmem:[%s1 + $0x3c] sm:$0xf]
  %v33 = vld [vmem:[%s2] sm:$0x1]
  %v35 = vlaneseq
  %v36 = vshrl.u32 %v35, 7
  %v37 = vsub.s32 0, %v36
  %v38 = vrot.slane %v33, %v37
  %v42 = vunpack.c.l.b16 %v15
  %v43 = vunpack.c.l.b16 %v16
  %v44 = vpack.c.b16 %v43, %v42
  %v62 = vunpack.c.l.b16 %v17
  %v63 = vunpack.c.l.b16 %v18
  %v64 = vunpack.c.l.b16 %v19
  %v65 = vunpack.c.l.b16 %v20
  %v66 = vunpack.c.l.b16 %v21
  %v67 = vunpack.c.l.b16 %v22
  %v68 = vunpack.c.l.b16 %v23
  %v69 = vunpack.c.l.b16 %v24
  %v70 = vunpack.c.l.b16 %v25
  %v71 = vunpack.c.l.b16 %v26
  %v72 = vunpack.c.l.b16 %v27
  %v73 = vunpack.c.l.b16 %v28
  %v74 = vunpack.c.l.b16 %v29
  %v75 = vunpack.c.l.b16 %v30
  %v76 = vunpack.c.l.b16 %v31
  %v77 = vunpack.c.l.b16 %v32
  %v78 = vpack.c.b16 %v63, %v62
  %v79 = vpack.c.b16 %v65, %v64
  %v80 = vpack.c.b16 %v67, %v66
  %v81 = vpack.c.b16 %v69, %v68
  %v82 = vpack.c.b16 %v71, %v70
  %v83 = vpack.c.b16 %v73, %v72
  %v84 = vpack.c.b16 %v75, %v74
  %v85 = vpack.c.b16 %v77, %v76
  %94 = vmatprep.subr.bf16.mxu0 0
  %95 = vmatpush1.bf16.msra.mxu0 %v78
  %96 = vmatprep.subr.bf16.mxu0 0
  %97 = vmatpush1.bf16.msra.mxu0 %v79
  %98 = vmatprep.subr.bf16.mxu0 0
  %99 = vmatpush1.bf16.msra.mxu0 %v80
  %100 = vmatprep.subr.bf16.mxu0 0
  %101 = vmatpush1.bf16.msra.mxu0 %v81
  %102 = vmatprep.subr.bf16.mxu0 0
  %103 = vmatpush1.bf16.msra.mxu0 %v82
  %104 = vmatprep.subr.bf16.mxu0 0
  %105 = vmatpush1.bf16.msra.mxu0 %v83
  %106 = vmatprep.subr.bf16.mxu0 0
  %107 = vmatpush1.bf16.msra.mxu0 %v84
  %108 = vmatprep.subr.bf16.mxu0 0
  %109 = vmatpush1.bf16.msra.mxu0 %v85
  %110 = vmatprep.subr.bf16.mxu0 0
  %111 = vmatpush1.bf16.msra.mxu0 0
  %112 = vmatprep.subr.bf16.mxu0 0
  %113 = vmatpush1.bf16.msra.mxu0 0
  %114 = vmatprep.subr.bf16.mxu0 0
  %115 = vmatpush1.bf16.msra.mxu0 0
  %116 = vmatprep.subr.bf16.mxu0 0
  %117 = vmatpush1.bf16.msra.mxu0 0
  %118 = vmatprep.subr.bf16.mxu0 0
  %119 = vmatpush1.bf16.msra.mxu0 0
  %120 = vmatprep.subr.bf16.mxu0 0
  %121 = vmatpush1.bf16.msra.mxu0 0
  %122 = vmatprep.subr.bf16.mxu0 0
  %123 = vmatpush1.bf16.msra.mxu0 0
  %124 = vmatprep.subr.bf16.mxu0 0
  %125 = vmatpush1.bf16.msra.mxu0 0
  %126 = vmatprep.mubr.bf16.mxu0 0
  %127 = vmatmul.mubr.bf16.gmra.mrb[0].mxu0 %v44
  %v128 = vpop.f32.mrb[0].mxu0
  %v129 = vadd.f32 %v38, %v128
  %v130 = vpop.f32.mrb[0].mxu0
  %v131 = vpop.f32.mrb[0].mxu0
  %v132 = vadd.f32 %v38, %v131
  %v133 = vpop.f32.mrb[0].mxu0
  %134 = vdwg.mxu0
  %135 = vst [vmem:[%s3] sm:$0xff] %v129
  %136 = vst [vmem:[%s3 + $0x8] sm:$0xff] %v132
  // Predicated region
  $region14: #{retinanet_forward.32} parent=0 // pred_check
    _
  $region15: #{retinanet_forward.32} parent=0 // pred_check_branch
    %138 = sbr.rel (0) target = $region17
  $region16: #{retinanet_forward.32} parent=0 // pred_region
    _
  $region17: #{retinanet_forward.32} parent=0 // pred_fallthru
    _
  // Predicated region
  $region18: #{retinanet_forward.32} parent=0 // pred_check
    _
  $region19: #{retinanet_forward.32} parent=0 // pred_check_branch
    %140 = sbr.rel (0) target = $region21
  $region20: #{retinanet_forward.32} parent=0 // pred_region
    _
  $region21: #{retinanet_forward.32} parent=0 // pred_fallthru
    _

// kernel: retinanet_forward.27
$region0: #{retinanet_forward.27}
  #allocation0 [shape = 'u32[]', space=smem, size = 0x4, offset = 0x4, fixed_abs, tag = 'smem constant byte address 0x4 - core index']
  #allocation1 [shape = 'u32[144,128]{1,0:T(1,128)}', space=vmem, size = 0x12000, scoped, tag = 'internal scratch']
  %s0 = inlined_call_operand.vmem [shape: bf16[16,288], index: 0, kind: input, shape index: {}]
  %s1 = inlined_call_operand.vmem [shape: bf16[288,128], index: 1, kind: input, shape index: {}]
  %s2 = inlined_call_operand.vmem [shape: f32[1,128], index: 2, kind: input, shape index: {}]
  %s3 = inlined_call_operand.vmem [shape: f32[16,128], index: 3, kind: output, shape index: {}]
  %s4 = sld [smem:[#allocation0]]
  $region22: #{retinanet_forward.27} parent=0
    _
  %s6 = ssub.s32 1, %s4
  %s7 = scalar_select 0, %s6, %s4
  // Predicated region
  $region2: #{retinanet_forward.27} parent=0 // pred_check
    _
  $region3: #{retinanet_forward.27} parent=0 // pred_check_branch
    %9 = sbr.rel (0) target = $region5
  $region4: #{retinanet_forward.27} parent=0 // pred_region
    _
  $region5: #{retinanet_forward.27} parent=0 // pred_fallthru
    _
  // Predicated region
  $region6: #{retinanet_forward.27} parent=0 // pred_check
    _
  $region7: #{retinanet_forward.27} parent=0 // pred_check_branch
    %11 = sbr.rel (0) target = $region9
  $region8: #{retinanet_forward.27} parent=0 // pred_region
    _
  $region9: #{retinanet_forward.27} parent=0 // pred_fallthru
    _
  // Predicated region
  $region10: #{retinanet_forward.27} parent=0 // pred_check
    _
  $region11: #{retinanet_forward.27} parent=0 // pred_check_branch
    %13 = sbr.rel (0) target = $region13
  $region12: #{retinanet_forward.27} parent=0 // pred_region
    _
  $region13: #{retinanet_forward.27} parent=0 // pred_fallthru
    _
  %v15 = vld [vmem:[%s0] sm:$0xff]
  %v16 = vld [vmem:[%s0 + $0x8] sm:$0xf]
  %v17 = vld [vmem:[%s0 + $0xc] sm:$0xff]
  %v18 = vld [vmem:[%s0 + $0x14] sm:$0xf]
  %v19 = vld [vmem:[%s1] sm:$0xf]
  %v20 = vld [vmem:[%s1 + $0x4] sm:$0xf]
  %v21 = vld [vmem:[%s1 + $0x8] sm:$0xf]
  %v22 = vld [vmem:[%s1 + $0xc] sm:$0xf]
  %v23 = vld [vmem:[%s1 + $0x10] sm:$0xf]
  %v24 = vld [vmem:[%s1 + $0x14] sm:$0xf]
  %v25 = vld [vmem:[%s1 + $0x18] sm:$0xf]
  %v26 = vld [vmem:[%s1 + $0x1c] sm:$0xf]
  %v27 = vld [vmem:[%s1 + $0x20] sm:$0xf]
  %v28 = vld [vmem:[%s1 + $0x24] sm:$0xf]
  %v29 = vld [vmem:[%s1 + $0x28] sm:$0xf]
  %v30 = vld [vmem:[%s1 + $0x2c] sm:$0xf]
  %v31 = vld [vmem:[%s1 + $0x30] sm:$0xf]
  %v32 = vld [vmem:[%s1 + $0x34] sm:$0xf]
  %v33 = vld [vmem:[%s1 + $0x38] sm:$0xf]
  %v34 = vld [vmem:[%s1 + $0x3c] sm:$0xf]
  %v35 = vld [vmem:[%s1 + $0x40] sm:$0xf]
  %v36 = vld [vmem:[%s1 + $0x44] sm:$0xf]
  %v37 = vld [vmem:[%s1 + $0x48] sm:$0xf]
  %v38 = vld [vmem:[%s1 + $0x4c] sm:$0xf]
  %v39 = vld [vmem:[%s1 + $0x50] sm:$0xf]
  %v40 = vld [vmem:[%s1 + $0x54] sm:$0xf]
  %v41 = vld [vmem:[%s1 + $0x58] sm:$0xf]
  %v42 = vld [vmem:[%s1 + $0x5c] sm:$0xf]
  %v43 = vld [vmem:[%s1 + $0x60] sm:$0xf]
  %v44 = vld [vmem:[%s1 + $0x64] sm:$0xf]
  %v45 = vld [vmem:[%s1 + $0x68] sm:$0xf]
  %v46 = vld [vmem:[%s1 + $0x6c] sm:$0xf]
  %v47 = vld [vmem:[%s1 + $0x70] sm:$0xf]
  %v48 = vld [vmem:[%s1 + $0x74] sm:$0xf]
  %v49 = vld [vmem:[%s1 + $0x78] sm:$0xf]
  %v50 = vld [vmem:[%s1 + $0x7c] sm:$0xf]
  %v51 = vld [vmem:[%s1 + $0x80] sm:$0xf]
  %v52 = vld [vmem:[%s1 + $0x84] sm:$0xf]
  %v53 = vld [vmem:[%s1 + $0x88] sm:$0xf]
  %v54 = vld [vmem:[%s1 + $0x8c] sm:$0xf]
  %v55 = vld [vmem:[%s2] sm:$0x1]
  %v57 = vlaneseq
  %v58 = vshrl.u32 %v57, 7
  %v59 = vsub.s32 0, %v58
  %v60 = vrot.slane %v55, %v59
  %v66 = vunpack.c.l.b16 %v15
  %v67 = vunpack.c.h.b16 %v15
  %v68 = vunpack.c.l.b16 %v16
  %v69 = vunpack.c.l.b16 %v17
  %v70 = vunpack.c.h.b16 %v17
  %v71 = vunpack.c.l.b16 %v18
  %v72 = vpack.c.b16 %v69, %v66
  %v73 = vpack.c.b16 %v70, %v67
  %v74 = vpack.c.b16 %v71, %v68
  %v113 = vunpack.c.l.b16 %v19
  %v114 = vunpack.c.l.b16 %v20
  %v115 = vunpack.c.l.b16 %v21
  %v116 = vunpack.c.l.b16 %v22
  %v117 = vunpack.c.l.b16 %v23
  %v118 = vunpack.c.l.b16 %v24
  %v119 = vunpack.c.l.b16 %v25
  %v120 = vunpack.c.l.b16 %v26
  %v121 = vunpack.c.l.b16 %v27
  %v122 = vunpack.c.l.b16 %v28
  %v123 = vunpack.c.l.b16 %v29
  %v124 = vunpack.c.l.b16 %v30
  %v125 = vunpack.c.l.b16 %v31
  %v126 = vunpack.c.l.b16 %v32
  %v127 = vunpack.c.l.b16 %v33
  %v128 = vunpack.c.l.b16 %v34
  %v129 = vunpack.c.l.b16 %v35
  %v130 = vunpack.c.l.b16 %v36
  %v131 = vunpack.c.l.b16 %v37
  %v132 = vunpack.c.l.b16 %v38
  %v133 = vunpack.c.l.b16 %v39
  %v134 = vunpack.c.l.b16 %v40
  %v135 = vunpack.c.l.b16 %v41
  %v136 = vunpack.c.l.b16 %v42
  %v137 = vunpack.c.l.b16 %v43
  %v138 = vunpack.c.l.b16 %v44
  %v139 = vunpack.c.l.b16 %v45
  %v140 = vunpack.c.l.b16 %v46
  %v141 = vunpack.c.l.b16 %v47
  %v142 = vunpack.c.l.b16 %v48
  %v143 = vunpack.c.l.b16 %v49
  %v144 = vunpack.c.l.b16 %v50
  %v145 = vunpack.c.l.b16 %v51
  %v146 = vunpack.c.l.b16 %v52
  %v147 = vunpack.c.l.b16 %v53
  %v148 = vunpack.c.l.b16 %v54
  %v149 = vpack.c.b16 %v114, %v113
  %v150 = vpack.c.b16 %v116, %v115
  %v151 = vpack.c.b16 %v118, %v117
  %v152 = vpack.c.b16 %v120, %v119
  %v153 = vpack.c.b16 %v122, %v121
  %v154 = vpack.c.b16 %v124, %v123
  %v155 = vpack.c.b16 %v126, %v125
  %v156 = vpack.c.b16 %v128, %v127
  %v157 = vpack.c.b16 %v130, %v129
  %v158 = vpack.c.b16 %v132, %v131
  %v159 = vpack.c.b16 %v134, %v133
  %v160 = vpack.c.b16 %v136, %v135
  %v161 = vpack.c.b16 %v138, %v137
  %v162 = vpack.c.b16 %v140, %v139
  %v163 = vpack.c.b16 %v142, %v141
  %v164 = vpack.c.b16 %v144, %v143
  %v165 = vpack.c.b16 %v146, %v145
  %v166 = vpack.c.b16 %v148, %v147
  %vm185 = vcmask 261120
  %v187 = vsel %vm185, %v74, 0
  %189 = vmatprep.subr.bf16.mxu0 0
  %190 = vmatpush1.bf16.msra.mxu0 %v149
  %191 = vmatprep.subr.bf16.mxu0 0
  %192 = vmatpush1.bf16.msra.mxu0 %v150
  %193 = vmatprep.subr.bf16.mxu0 0
  %194 = vmatpush1.bf16.msra.mxu0 %v151
  %195 = vmatprep.subr.bf16.mxu0 0
  %196 = vmatpush1.bf16.msra.mxu0 %v152
  %197 = vmatprep.subr.bf16.mxu0 0
  %198 = vmatpush1.bf16.msra.mxu0 %v153
  %199 = vmatprep.subr.bf16.mxu0 0
  %200 = vmatpush1.bf16.msra.mxu0 %v154
  %201 = vmatprep.subr.bf16.mxu0 0
  %202 = vmatpush1.bf16.msra.mxu0 %v155
  %203 = vmatprep.subr.bf16.mxu0 0
  %204 = vmatpush1.bf16.msra.mxu0 %v156
  %205 = vmatprep.subr.bf16.mxu0 0
  %206 = vmatpush1.bf16.msra.mxu0 %v157
  %207 = vmatprep.subr.bf16.mxu0 0
  %208 = vmatpush1.bf16.msra.mxu0 %v158
  %209 = vmatprep.subr.bf16.mxu0 0
  %210 = vmatpush1.bf16.msra.mxu0 %v159
  %211 = vmatprep.subr.bf16.mxu0 0
  %212 = vmatpush1.bf16.msra.mxu0 %v160
  %213 = vmatprep.subr.bf16.mxu0 0
  %214 = vmatpush1.bf16.msra.mxu0 %v161
  %215 = vmatprep.subr.bf16.mxu0 0
  %216 = vmatpush1.bf16.msra.mxu0 %v162
  %217 = vmatprep.subr.bf16.mxu0 0
  %218 = vmatpush1.bf16.msra.mxu0 %v163
  %219 = vmatprep.subr.bf16.mxu0 0
  %220 = vmatpush1.bf16.msra.mxu0 %v164
  %221 = vmatprep.mubr.bf16.mxu0 %v73
  %222 = vmatmul.mubr.bf16.gmra.mrb[0].mxu0 %v72
  %v223 = vpop.f32.mrb[0].mxu0
  %v224 = vadd.f32 %v60, %v223
  %v225 = vpop.f32.mrb[0].mxu0
  %v226 = vpop.f32.mrb[0].mxu0
  %v227 = vadd.f32 %v60, %v226
  %v228 = vpop.f32.mrb[0].mxu0
  %229 = vdwg.mxu0
  %230 = vmatprep.subr.bf16.mxu0 0
  %231 = vmatpush1.bf16.msra.mxu0 %v165
  %232 = vmatprep.subr.bf16.mxu0 0
  %233 = vmatpush1.bf16.msra.mxu0 %v166
  %234 = vmatprep.subr.bf16.mxu0 0
  %235 = vmatpush1.bf16.msra.mxu0 0
  %236 = vmatprep.subr.bf16.mxu0 0
  %237 = vmatpush1.bf16.msra.mxu0 0
  %238 = vmatprep.subr.bf16.mxu0 0
  %239 = vmatpush1.bf16.msra.mxu0 0
  %240 = vmatprep.subr.bf16.mxu0 0
  %241 = vmatpush1.bf16.msra.mxu0 0
  %242 = vmatprep.subr.bf16.mxu0 0
  %243 = vmatpush1.bf16.msra.mxu0 0
  %244 = vmatprep.subr.bf16.mxu0 0
  %245 = vmatpush1.bf16.msra.mxu0 0
  %246 = vmatprep.subr.bf16.mxu0 0
  %247 = vmatpush1.bf16.msra.mxu0 0
  %248 = vmatprep.subr.bf16.mxu0 0
  %249 = vmatpush1.bf16.msra.mxu0 0
  %250 = vmatprep.subr.bf16.mxu0 0
  %251 = vmatpush1.bf16.msra.mxu0 0
  %252 = vmatprep.subr.bf16.mxu0 0
  %253 = vmatpush1.bf16.msra.mxu0 0
  %254 = vmatprep.subr.bf16.mxu0 0
  %255 = vmatpush1.bf16.msra.mxu0 0
  %256 = vmatprep.subr.bf16.mxu0 0
  %257 = vmatpush1.bf16.msra.mxu0 0
  %258 = vmatprep.subr.bf16.mxu0 0
  %259 = vmatpush1.bf16.msra.mxu0 0
  %260 = vmatprep.subr.bf16.mxu0 0
  %261 = vmatpush1.bf16.msra.mxu0 0
  %262 = vmatprep.mubr.bf16.mxu0 0
  %263 = vmatmul.mubr.bf16.gmra.mrb[0].mxu0 %v187
  %v264 = vpop.f32.mrb[0].mxu0
  %v265 = vadd.f32 %v224, %v264
  %v266 = vpop.f32.mrb[0].mxu0
  %v267 = vpop.f32.mrb[0].mxu0
  %v268 = vadd.f32 %v227, %v267
  %v269 = vpop.f32.mrb[0].mxu0
  %270 = vdwg.mxu0
  %v271 = vmax.f32 %v265, 0.0
  %v272 = vmax.f32 %v268, 0.0
  %273 = vst [vmem:[%s3] sm:$0xff] %v271
  %274 = vst [vmem:[%s3 + $0x8] sm:$0xff] %v272
  // Predicated region
  $region14: #{retinanet_forward.27} parent=0 // pred_check
    _
  $region15: #{retinanet_forward.27} parent=0 // pred_check_branch
    %276 = sbr.rel (0) target = $region17
  $region16: #{retinanet_forward.27} parent=0 // pred_region
    _
  $region17: #{retinanet_forward.27} parent=0 // pred_fallthru
    _
  // Predicated region
  $region18: #{retinanet_forward.27} parent=0 // pred_check
    _
  $region19: #{retinanet_forward.27} parent=0 // pred_check_branch
    %278 = sbr.rel (0) target = $region21
  $region20: #{retinanet_forward.27} parent=0 // pred_region
    _
  $region21: #{retinanet_forward.27} parent=0 // pred_fallthru
    _

// kernel: retinanet_forward.28
$region0: #{retinanet_forward.28}
  #allocation0 [shape = 'u32[]', space=smem, size = 0x4, offset = 0x4, fixed_abs, tag = 'smem constant byte address 0x4 - core index']
  #allocation1 [shape = 'u32[144,128]{1,0:T(1,128)}', space=vmem, size = 0x12000, scoped, tag = 'internal scratch']
  %s0 = inlined_call_operand.vmem [shape: bf16[16,576], index: 0, kind: input, shape index: {}]
  %s1 = inlined_call_operand.vmem [shape: bf16[576,128], index: 1, kind: input, shape index: {}]
  %s2 = inlined_call_operand.vmem [shape: f32[1,128], index: 2, kind: input, shape index: {}]
  %s3 = inlined_call_operand.vmem [shape: f32[16,128], index: 3, kind: output, shape index: {}]
  %s4 = sld [smem:[#allocation0]]
  $region22: #{retinanet_forward.28} parent=0
    _
  %s6 = ssub.s32 1, %s4
  %s7 = scalar_select 0, %s6, %s4
  // Predicated region
  $region2: #{retinanet_forward.28} parent=0 // pred_check
    _
  $region3: #{retinanet_forward.28} parent=0 // pred_check_branch
    %9 = sbr.rel (0) target = $region5
  $region4: #{retinanet_forward.28} parent=0 // pred_region
    _
  $region5: #{retinanet_forward.28} parent=0 // pred_fallthru
    _
  // Predicated region
  $region6: #{retinanet_forward.28} parent=0 // pred_check
    _
  $region7: #{retinanet_forward.28} parent=0 // pred_check_branch
    %11 = sbr.rel (0) target = $region9
  $region8: #{retinanet_forward.28} parent=0 // pred_region
    _
  $region9: #{retinanet_forward.28} parent=0 // pred_fallthru
    _
  // Predicated region
  $region10: #{retinanet_forward.28} parent=0 // pred_check
    _
  $region11: #{retinanet_forward.28} parent=0 // pred_check_branch
    %13 = sbr.rel (0) target = $region13
  $region12: #{retinanet_forward.28} parent=0 // pred_region
    _
  $region13: #{retinanet_forward.28} parent=0 // pred_fallthru
    _
  %v15 = vld [vmem:[%s0] sm:$0xff]
  %v16 = vld [vmem:[%s0 + $0x8] sm:$0xff]
  %v17 = vld [vmem:[%s0 + $0x10] sm:$0xf]
  %v18 = vld [vmem:[%s0 + $0x14] sm:$0xff]
  %v19 = vld [vmem:[%s0 + $0x1c] sm:$0xff]
  %v20 = vld [vmem:[%s0 + $0x24] sm:$0xf]
  %v21 = vld [vmem:[%s1] sm:$0xf]
  %v22 = vld [vmem:[%s1 + $0x4] sm:$0xf]
  %v23 = vld [vmem:[%s1 + $0x8] sm:$0xf]
  %v24 = vld [vmem:[%s1 + $0xc] sm:$0xf]
  %v25 = vld [vmem:[%s1 + $0x10] sm:$0xf]
  %v26 = vld [vmem:[%s1 + $0x14] sm:$0xf]
  %v27 = vld [vmem:[%s1 + $0x18] sm:$0xf]
  %v28 = vld [vmem:[%s1 + $0x1c] sm:$0xf]
  %v29 = vld [vmem:[%s1 + $0x20] sm:$0xf]
  %v30 = vld [vmem:[%s1 + $0x24] sm:$0xf]
  %v31 = vld [vmem:[%s1 + $0x28] sm:$0xf]
  %v32 = vld [vmem:[%s1 + $0x2c] sm:$0xf]
  %v33 = vld [vmem:[%s1 + $0x30] sm:$0xf]
  %v34 = vld [vmem:[%s1 + $0x34] sm:$0xf]
  %v35 = vld [vmem:[%s1 + $0x38] sm:$0xf]
  %v36 = vld [vmem:[%s1 + $0x3c] sm:$0xf]
  %v37 = vld [vmem:[%s1 + $0x40] sm:$0xf]
  %v38 = vld [vmem:[%s1 + $0x44] sm:$0xf]
  %v39 = vld [vmem:[%s1 + $0x48] sm:$0xf]
  %v40 = vld [vmem:[%s1 + $0x4c] sm:$0xf]
  %v41 = vld [vmem:[%s1 + $0x50] sm:$0xf]
  %v42 = vld [vmem:[%s1 + $0x54] sm:$0xf]
  %v43 = vld [vmem:[%s1 + $0x58] sm:$0xf]
  %v44 = vld [vmem:[%s1 + $0x5c] sm:$0xf]
  %v45 = vld [vmem:[%s1 + $0x60] sm:$0xf]
  %v46 = vld [vmem:[%s1 + $0x64] sm:$0xf]
  %v47 = vld [vmem:[%s1 + $0x68] sm:$0xf]
  %v48 = vld [vmem:[%s1 + $0x6c] sm:$0xf]
  %v49 = vld [vmem:[%s1 + $0x70] sm:$0xf]
  %v50 = vld [vmem:[%s1 + $0x74] sm:$0xf]
  %v51 = vld [vmem:[%s1 + $0x78] sm:$0xf]
  %v52 = vld [vmem:[%s1 + $0x7c] sm:$0xf]
  %v53 = vld [vmem:[%s1 + $0x80] sm:$0xf]
  %v54 = vld [vmem:[%s1 + $0x84] sm:$0xf]
  %v55 = vld [vmem:[%s1 + $0x88] sm:$0xf]
  %v56 = vld [vmem:[%s1 + $0x8c] sm:$0xf]
  %v57 = vld [vmem:[%s1 + $0x90] sm:$0xf]
  %v58 = vld [vmem:[%s1 + $0x94] sm:$0xf]
  %v59 = vld [vmem:[%s1 + $0x98] sm:$0xf]
  %v60 = vld [vmem:[%s1 + $0x9c] sm:$0xf]
  %v61 = vld [vmem:[%s1 + $0xa0] sm:$0xf]
  %v62 = vld [vmem:[%s1 + $0xa4] sm:$0xf]
  %v63 = vld [vmem:[%s1 + $0xa8] sm:$0xf]
  %v64 = vld [vmem:[%s1 + $0xac] sm:$0xf]
  %v65 = vld [vmem:[%s1 + $0xb0] sm:$0xf]
  %v66 = vld [vmem:[%s1 + $0xb4] sm:$0xf]
  %v67 = vld [vmem:[%s1 + $0xb8] sm:$0xf]
  %v68 = vld [vmem:[%s1 + $0xbc] sm:$0xf]
  %v69 = vld [vmem:[%s1 + $0xc0] sm:$0xf]
  %v70 = vld [vmem:[%s1 + $0xc4] sm:$0xf]
  %v71 = vld [vmem:[%s1 + $0xc8] sm:$0xf]
  %v72 = vld [vmem:[%s1 + $0xcc] sm:$0xf]
  %v73 = vld [vmem:[%s1 + $0xd0] sm:$0xf]
  %v74 = vld [vmem:[%s1 + $0xd4] sm:$0xf]
  %v75 = vld [vmem:[%s1 + $0xd8] sm:$0xf]
  %v76 = vld [vmem:[%s1 + $0xdc] sm:$0xf]
  %v77 = vld [vmem:[%s1 + $0xe0] sm:$0xf]
  %v78 = vld [vmem:[%s1 + $0xe4] sm:$0xf]
  %v79 = vld [vmem:[%s1 + $0xe8] sm:$0xf]
  %v80 = vld [vmem:[%s1 + $0xec] sm:$0xf]
  %v81 = vld [vmem:[%s1 + $0xf0] sm:$0xf]
  %v82 = vld [vmem:[%s1 + $0xf4] sm:$0xf]
  %v83 = vld [vmem:[%s1 + $0xf8] sm:$0xf]
  %v84 = vld [vmem:[%s1 + $0xfc] sm:$0xf]
  %v85 = vld [vmem:[%s1 + $0x100] sm:$0xf]
  %v86 = vld [vmem:[%s1 + $0x104] sm:$0xf]
  %v87 = vld [vmem:[%s1 + $0x108] sm:$0xf]
  %v88 = vld [vmem:[%s1 + $0x10c] sm:$0xf]
  %v89 = vld [vmem:[%s1 + $0x110] sm:$0xf]
  %v90 = vld [vmem:[%s1 + $0x114] sm:$0xf]
  %v91 = vld [vmem:[%s1 + $0x118] sm:$0xf]
  %v92 = vld [vmem:[%s1 + $0x11c] sm:$0xf]
  %v93 = vld [vmem:[%s2] sm:$0x1]
  %v95 = vlaneseq
  %v96 = vshrl.u32 %v95, 7
  %v97 = vsub.s32 0, %v96
  %v98 = vrot.slane %v93, %v97
  %v106 = vunpack.c.l.b16 %v15
  %v107 = vunpack.c.h.b16 %v15
  %v108 = vunpack.c.l.b16 %v16
  %v109 = vunpack.c.h.b16 %v16
  %v110 = vunpack.c.l.b16 %v17
  %v111 = vunpack.c.l.b16 %v18
  %v112 = vunpack.c.h.b16 %v18
  %v113 = vunpack.c.l.b16 %v19
  %v114 = vunpack.c.h.b16 %v19
  %v115 = vunpack.c.l.b16 %v20
  %v116 = vpack.c.b16 %v111, %v106
  %v117 = vpack.c.b16 %v112, %v107
  %v118 = vpack.c.b16 %v113, %v108
  %v119 = vpack.c.b16 %v114, %v109
  %v120 = vpack.c.b16 %v115, %v110
  %v197 = vunpack.c.l.b16 %v21
  %v198 = vunpack.c.l.b16 %v22
  %v199 = vunpack.c.l.b16 %v23
  %v200 = vunpack.c.l.b16 %v24
  %v201 = vunpack.c.l.b16 %v25
  %v202 = vunpack.c.l.b16 %v26
  %v203 = vunpack.c.l.b16 %v27
  %v204 = vunpack.c.l.b16 %v28
  %v205 = vunpack.c.l.b16 %v29
  %v206 = vunpack.c.l.b16 %v30
  %v207 = vunpack.c.l.b16 %v31
  %v208 = vunpack.c.l.b16 %v32
  %v209 = vunpack.c.l.b16 %v33
  %v210 = vunpack.c.l.b16 %v34
  %v211 = vunpack.c.l.b16 %v35
  %v212 = vunpack.c.l.b16 %v36
  %v213 = vunpack.c.l.b16 %v37
  %v214 = vunpack.c.l.b16 %v38
  %v215 = vunpack.c.l.b16 %v39
  %v216 = vunpack.c.l.b16 %v40
  %v217 = vunpack.c.l.b16 %v41
  %v218 = vunpack.c.l.b16 %v42
  %v219 = vunpack.c.l.b16 %v43
  %v220 = vunpack.c.l.b16 %v44
  %v221 = vunpack.c.l.b16 %v45
  %v222 = vunpack.c.l.b16 %v46
  %v223 = vunpack.c.l.b16 %v47
  %v224 = vunpack.c.l.b16 %v48
  %v225 = vunpack.c.l.b16 %v49
  %v226 = vunpack.c.l.b16 %v50
  %v227 = vunpack.c.l.b16 %v51
  %v228 = vunpack.c.l.b16 %v52
  %v229 = vunpack.c.l.b16 %v53
  %v230 = vunpack.c.l.b16 %v54
  %v231 = vunpack.c.l.b16 %v55
  %v232 = vunpack.c.l.b16 %v56
  %v233 = vunpack.c.l.b16 %v57
  %v234 = vunpack.c.l.b16 %v58
  %v235 = vunpack.c.l.b16 %v59
  %v236 = vunpack.c.l.b16 %v60
  %v237 = vunpack.c.l.b16 %v61
  %v238 = vunpack.c.l.b16 %v62
  %v239 = vunpack.c.l.b16 %v63
  %v240 = vunpack.c.l.b16 %v64
  %v241 = vunpack.c.l.b16 %v65
  %v242 = vunpack.c.l.b16 %v66
  %v243 = vunpack.c.l.b16 %v67
  %v244 = vunpack.c.l.b16 %v68
  %v245 = vunpack.c.l.b16 %v69
  %v246 = vunpack.c.l.b16 %v70
  %v247 = vunpack.c.l.b16 %v71
  %v248 = vunpack.c.l.b16 %v72
  %v249 = vunpack.c.l.b16 %v73
  %v250 = vunpack.c.l.b16 %v74
  %v251 = vunpack.c.l.b16 %v75
  %v252 = vunpack.c.l.b16 %v76
  %v253 = vunpack.c.l.b16 %v77
  %v254 = vunpack.c.l.b16 %v78
  %v255 = vunpack.c.l.b16 %v79
  %v256 = vunpack.c.l.b16 %v80
  %v257 = vunpack.c.l.b16 %v81
  %v258 = vunpack.c.l.b16 %v82
  %v259 = vunpack.c.l.b16 %v83
  %v260 = vunpack.c.l.b16 %v84
  %v261 = vunpack.c.l.b16 %v85
  %v262 = vunpack.c.l.b16 %v86
  %v263 = vunpack.c.l.b16 %v87
  %v264 = vunpack.c.l.b16 %v88
  %v265 = vunpack.c.l.b16 %v89
  %v266 = vunpack.c.l.b16 %v90
  %v267 = vunpack.c.l.b16 %v91
  %v268 = vunpack.c.l.b16 %v92
  %v269 = vpack.c.b16 %v198, %v197
  %v270 = vpack.c.b16 %v200, %v199
  %v271 = vpack.c.b16 %v202, %v201
  %v272 = vpack.c.b16 %v204, %v203
  %v273 = vpack.c.b16 %v206, %v205
  %v274 = vpack.c.b16 %v208, %v207
  %v275 = vpack.c.b16 %v210, %v209
  %v276 = vpack.c.b16 %v212, %v211
  %v277 = vpack.c.b16 %v214, %v213
  %v278 = vpack.c.b16 %v216, %v215
  %v279 = vpack.c.b16 %v218, %v217
  %v280 = vpack.c.b16 %v220, %v219
  %v281 = vpack.c.b16 %v222, %v221
  %v282 = vpack.c.b16 %v224, %v223
  %v283 = vpack.c.b16 %v226, %v225
  %v284 = vpack.c.b16 %v228, %v227
  %v285 = vpack.c.b16 %v230, %v229
  %v286 = vpack.c.b16 %v232, %v231
  %v287 = vpack.c.b16 %v234, %v233
  %v288 = vpack.c.b16 %v236, %v235
  %v289 = vpack.c.b16 %v238, %v237
  %v290 = vpack.c.b16 %v240, %v239
  %v291 = vpack.c.b16 %v242, %v241
  %v292 = vpack.c.b16 %v244, %v243
  %v293 = vpack.c.b16 %v246, %v245
  %v294 = vpack.c.b16 %v248, %v247
  %v295 = vpack.c.b16 %v250, %v249
  %v296 = vpack.c.b16 %v252, %v251
  %v297 = vpack.c.b16 %v254, %v253
  %v298 = vpack.c.b16 %v256, %v255
  %v299 = vpack.c.b16 %v258, %v257
  %v300 = vpack.c.b16 %v260, %v259
  %v301 = vpack.c.b16 %v262, %v261
  %v302 = vpack.c.b16 %v264, %v263
  %v303 = vpack.c.b16 %v266, %v265
  %v304 = vpack.c.b16 %v268, %v267
  %vm341 = vcmask 523264
  %v343 = vsel %vm341, %v120, 0
  %345 = vmatprep.subr.bf16.mxu0 0
  %346 = vmatpush1.bf16.msra.mxu0 %v269
  %347 = vmatprep.subr.bf16.mxu0 0
  %348 = vmatpush1.bf16.msra.mxu0 %v270
  %349 = vmatprep.subr.bf16.mxu0 0
  %350 = vmatpush1.bf16.msra.mxu0 %v271
  %351 = vmatprep.subr.bf16.mxu0 0
  %352 = vmatpush1.bf16.msra.mxu0 %v272
  %353 = vmatprep.subr.bf16.mxu0 0
  %354 = vmatpush1.bf16.msra.mxu0 %v273
  %355 = vmatprep.subr.bf16.mxu0 0
  %356 = vmatpush1.bf16.msra.mxu0 %v274
  %357 = vmatprep.subr.bf16.mxu0 0
  %358 = vmatpush1.bf16.msra.mxu0 %v275
  %359 = vmatprep.subr.bf16.mxu0 0
  %360 = vmatpush1.bf16.msra.mxu0 %v276
  %361 = vmatprep.subr.bf16.mxu0 0
  %362 = vmatpush1.bf16.msra.mxu0 %v277
  %363 = vmatprep.subr.bf16.mxu0 0
  %364 = vmatpush1.bf16.msra.mxu0 %v278
  %365 = vmatprep.subr.bf16.mxu0 0
  %366 = vmatpush1.bf16.msra.mxu0 %v279
  %367 = vmatprep.subr.bf16.mxu0 0
  %368 = vmatpush1.bf16.msra.mxu0 %v280
  %369 = vmatprep.subr.bf16.mxu0 0
  %370 = vmatpush1.bf16.msra.mxu0 %v281
  %371 = vmatprep.subr.bf16.mxu0 0
  %372 = vmatpush1.bf16.msra.mxu0 %v282
  %373 = vmatprep.subr.bf16.mxu0 0
  %374 = vmatpush1.bf16.msra.mxu0 %v283
  %375 = vmatprep.subr.bf16.mxu0 0
  %376 = vmatpush1.bf16.msra.mxu0 %v284
  %377 = vmatprep.mubr.bf16.mxu0 %v117
  %378 = vmatmul.mubr.bf16.gmra.mrb[0].mxu0 %v116
  %v379 = vpop.f32.mrb[0].mxu0
  %v380 = vadd.f32 %v98, %v379
  %v381 = vpop.f32.mrb[0].mxu0
  %v382 = vpop.f32.mrb[0].mxu0
  %v383 = vadd.f32 %v98, %v382
  %v384 = vpop.f32.mrb[0].mxu0
  %385 = vdwg.mxu0
  %386 = vmatprep.subr.bf16.mxu0 0
  %387 = vmatpush1.bf16.msra.mxu0 %v285
  %388 = vmatprep.subr.bf16.mxu0 0
  %389 = vmatpush1.bf16.msra.mxu0 %v286
  %390 = vmatprep.subr.bf16.mxu0 0
  %391 = vmatpush1.bf16.msra.mxu0 %v287
  %392 = vmatprep.subr.bf16.mxu0 0
  %393 = vmatpush1.bf16.msra.mxu0 %v288
  %394 = vmatprep.subr.bf16.mxu0 0
  %395 = vmatpush1.bf16.msra.mxu0 %v289
  %396 = vmatprep.subr.bf16.mxu0 0
  %397 = vmatpush1.bf16.msra.mxu0 %v290
  %398 = vmatprep.subr.bf16.mxu0 0
  %399 = vmatpush1.bf16.msra.mxu0 %v291
  %400 = vmatprep.subr.bf16.mxu0 0
  %401 = vmatpush1.bf16.msra.mxu0 %v292
  %402 = vmatprep.subr.bf16.mxu0 0
  %403 = vmatpush1.bf16.msra.mxu0 %v293
  %404 = vmatprep.subr.bf16.mxu0 0
  %405 = vmatpush1.bf16.msra.mxu0 %v294
  %406 = vmatprep.subr.bf16.mxu0 0
  %407 = vmatpush1.bf16.msra.mxu0 %v295
  %408 = vmatprep.subr.bf16.mxu0 0
  %409 = vmatpush1.bf16.msra.mxu0 %v296
  %410 = vmatprep.subr.bf16.mxu0 0
  %411 = vmatpush1.bf16.msra.mxu0 %v297
  %412 = vmatprep.subr.bf16.mxu0 0
  %413 = vmatpush1.bf16.msra.mxu0 %v298
  %414 = vmatprep.subr.bf16.mxu0 0
  %415 = vmatpush1.bf16.msra.mxu0 %v299
  %416 = vmatprep.subr.bf16.mxu0 0
  %417 = vmatpush1.bf16.msra.mxu0 %v300
  %418 = vmatprep.mubr.bf16.mxu0 %v119
  %419 = vmatmul.mubr.bf16.gmra.mrb[0].mxu0 %v118
  %v420 = vpop.f32.mrb[0].mxu0
  %v421 = vadd.f32 %v380, %v420
  %v422 = vpop.f32.mrb[0].mxu0
  %v423 = vpop.f32.mrb[0].mxu0
  %v424 = vadd.f32 %v383, %v423
  %v425 = vpop.f32.mrb[0].mxu0
  %426 = vdwg.mxu0
  %427 = vmatprep.subr.bf16.mxu0 0
  %428 = vmatpush1.bf16.msra.mxu0 %v301
  %429 = vmatprep.subr.bf16.mxu0 0
  %430 = vmatpush1.bf16.msra.mxu0 %v302
  %431 = vmatprep.subr.bf16.mxu0 0
  %432 = vmatpush1.bf16.msra.mxu0 %v303
  %433 = vmatprep.subr.bf16.mxu0 0
  %434 = vmatpush1.bf16.msra.mxu0 %v304
  %435 = vmatprep.subr.bf16.mxu0 0
  %436 = vmatpush1.bf16.msra.mxu0 0
  %437 = vmatprep.subr.bf16.mxu0 0
  %438 = vmatpush1.bf16.msra.mxu0 0
  %439 = vmatprep.subr.bf16.mxu0 0
  %440 = vmatpush1.bf16.msra.mxu0 0
  %441 = vmatprep.subr.bf16.mxu0 0
  %442 = vmatpush1.bf16.msra.mxu0 0
  %443 = vmatprep.subr.bf16.mxu0 0
  %444 = vmatpush1.bf16.msra.mxu0 0
  %445 = vmatprep.subr.bf16.mxu0 0
  %446 = vmatpush1.bf16.msra.mxu0 0
  %447 = vmatprep.subr.bf16.mxu0 0
  %448 = vmatpush1.bf16.msra.mxu0 0
  %449 = vmatprep.subr.bf16.mxu0 0
  %450 = vmatpush1.bf16.msra.mxu0 0
  %451 = vmatprep.subr.bf16.mxu0 0
  %452 = vmatpush1.bf16.msra.mxu0 0
  %453 = vmatprep.subr.bf16.mxu0 0
  %454 = vmatpush1.bf16.msra.mxu0 0
  %455 = vmatprep.subr.bf16.mxu0 0
  %456 = vmatpush1.bf16.msra.mxu0 0
  %457 = vmatprep.subr.bf16.mxu0 0
  %458 = vmatpush1.bf16.msra.mxu0 0
  %459 = vmatprep.mubr.bf16.mxu0 0
  %460 = vmatmul.mubr.bf16.gmra.mrb[0].mxu0 %v343
  %v461 = vpop.f32.mrb[0].mxu0
  %v462 = vadd.f32 %v421, %v461
  %v463 = vpop.f32.mrb[0].mxu0
  %v464 = vpop.f32.mrb[0].mxu0
  %v465 = vadd.f32 %v424, %v464
  %v466 = vpop.f32.mrb[0].mxu0
  %467 = vdwg.mxu0
  %v468 = vmax.f32 %v462, 0.0
  %v469 = vmax.f32 %v465, 0.0
  %470 = vst [vmem:[%s3] sm:$0xff] %v468
  %471 = vst [vmem:[%s3 + $0x8] sm:$0xff] %v469
  // Predicated region
  $region14: #{retinanet_forward.28} parent=0 // pred_check
    _
  $region15: #{retinanet_forward.28} parent=0 // pred_check_branch
    %473 = sbr.rel (0) target = $region17
  $region16: #{retinanet_forward.28} parent=0 // pred_region
    _
  $region17: #{retinanet_forward.28} parent=0 // pred_fallthru
    _
  // Predicated region
  $region18: #{retinanet_forward.28} parent=0 // pred_check
    _
  $region19: #{retinanet_forward.28} parent=0 // pred_check_branch
    %475 = sbr.rel (0) target = $region21
  $region20: #{retinanet_forward.28} parent=0 // pred_region
    _
  $region21: #{retinanet_forward.28} parent=0 // pred_fallthru
    _

// kernel: retinanet_forward.36
$region0: #{retinanet_forward.36}
  #allocation0 [shape = 'u32[]', space=smem, size = 0x4, offset = 0x4, fixed_abs, tag = 'smem constant byte address 0x4 - core index']
  #allocation1 [shape = 'u32[144,128]{1,0:T(1,128)}', space=vmem, size = 0x12000, scoped, tag = 'internal scratch']
  %s0 = inlined_call_operand.vmem [shape: bf16[16,288], index: 0, kind: input, shape index: {}]
  %s1 = inlined_call_operand.vmem [shape: bf16[288,128], index: 1, kind: input, shape index: {}]
  %s2 = inlined_call_operand.vmem [shape: f32[1,128], index: 2, kind: input, shape index: {}]
  %s3 = inlined_call_operand.vmem [shape: f32[16,128], index: 3, kind: output, shape index: {}]
  %s4 = sld [smem:[#allocation0]]
  $region22: #{retinanet_forward.36} parent=0
    _
  %s6 = ssub.s32 1, %s4
  %s7 = scalar_select 0, %s6, %s4
  // Predicated region
  $region2: #{retinanet_forward.36} parent=0 // pred_check
    _
  $region3: #{retinanet_forward.36} parent=0 // pred_check_branch
    %9 = sbr.rel (0) target = $region5
  $region4: #{retinanet_forward.36} parent=0 // pred_region
    _
  $region5: #{retinanet_forward.36} parent=0 // pred_fallthru
    _
  // Predicated region
  $region6: #{retinanet_forward.36} parent=0 // pred_check
    _
  $region7: #{retinanet_forward.36} parent=0 // pred_check_branch
    %11 = sbr.rel (0) target = $region9
  $region8: #{retinanet_forward.36} parent=0 // pred_region
    _
  $region9: #{retinanet_forward.36} parent=0 // pred_fallthru
    _
  // Predicated region
  $region10: #{retinanet_forward.36} parent=0 // pred_check
    _
  $region11: #{retinanet_forward.36} parent=0 // pred_check_branch
    %13 = sbr.rel (0) target = $region13
  $region12: #{retinanet_forward.36} parent=0 // pred_region
    _
  $region13: #{retinanet_forward.36} parent=0 // pred_fallthru
    _
  %v15 = vld [vmem:[%s0] sm:$0xff]
  %v16 = vld [vmem:[%s0 + $0x8] sm:$0xf]
  %v17 = vld [vmem:[%s0 + $0xc] sm:$0xff]
  %v18 = vld [vmem:[%s0 + $0x14] sm:$0xf]
  %v19 = vld [vmem:[%s1] sm:$0xf]
  %v20 = vld [vmem:[%s1 + $0x4] sm:$0xf]
  %v21 = vld [vmem:[%s1 + $0x8] sm:$0xf]
  %v22 = vld [vmem:[%s1 + $0xc] sm:$0xf]
  %v23 = vld [vmem:[%s1 + $0x10] sm:$0xf]
  %v24 = vld [vmem:[%s1 + $0x14] sm:$0xf]
  %v25 = vld [vmem:[%s1 + $0x18] sm:$0xf]
  %v26 = vld [vmem:[%s1 + $0x1c] sm:$0xf]
  %v27 = vld [vmem:[%s1 + $0x20] sm:$0xf]
  %v28 = vld [vmem:[%s1 + $0x24] sm:$0xf]
  %v29 = vld [vmem:[%s1 + $0x28] sm:$0xf]
  %v30 = vld [vmem:[%s1 + $0x2c] sm:$0xf]
  %v31 = vld [vmem:[%s1 + $0x30] sm:$0xf]
  %v32 = vld [vmem:[%s1 + $0x34] sm:$0xf]
  %v33 = vld [vmem:[%s1 + $0x38] sm:$0xf]
  %v34 = vld [vmem:[%s1 + $0x3c] sm:$0xf]
  %v35 = vld [vmem:[%s1 + $0x40] sm:$0xf]
  %v36 = vld [vmem:[%s1 + $0x44] sm:$0xf]
  %v37 = vld [vmem:[%s1 + $0x48] sm:$0xf]
  %v38 = vld [vmem:[%s1 + $0x4c] sm:$0xf]
  %v39 = vld [vmem:[%s1 + $0x50] sm:$0xf]
  %v40 = vld [vmem:[%s1 + $0x54] sm:$0xf]
  %v41 = vld [vmem:[%s1 + $0x58] sm:$0xf]
  %v42 = vld [vmem:[%s1 + $0x5c] sm:$0xf]
  %v43 = vld [vmem:[%s1 + $0x60] sm:$0xf]
  %v44 = vld [vmem:[%s1 + $0x64] sm:$0xf]
  %v45 = vld [vmem:[%s1 + $0x68] sm:$0xf]
  %v46 = vld [vmem:[%s1 + $0x6c] sm:$0xf]
  %v47 = vld [vmem:[%s1 + $0x70] sm:$0xf]
  %v48 = vld [vmem:[%s1 + $0x74] sm:$0xf]
  %v49 = vld [vmem:[%s1 + $0x78] sm:$0xf]
  %v50 = vld [vmem:[%s1 + $0x7c] sm:$0xf]
  %v51 = vld [vmem:[%s1 + $0x80] sm:$0xf]
  %v52 = vld [vmem:[%s1 + $0x84] sm:$0xf]
  %v53 = vld [vmem:[%s1 + $0x88] sm:$0xf]
  %v54 = vld [vmem:[%s1 + $0x8c] sm:$0xf]
  %v55 = vld [vmem:[%s2] sm:$0x1]
  %v57 = vlaneseq
  %v58 = vshrl.u32 %v57, 7
  %v59 = vsub.s32 0, %v58
  %v60 = vrot.slane %v55, %v59
  %v66 = vunpack.c.l.b16 %v15
  %v67 = vunpack.c.h.b16 %v15
  %v68 = vunpack.c.l.b16 %v16
  %v69 = vunpack.c.l.b16 %v17
  %v70 = vunpack.c.h.b16 %v17
  %v71 = vunpack.c.l.b16 %v18
  %v72 = vpack.c.b16 %v69, %v66
  %v73 = vpack.c.b16 %v70, %v67
  %v74 = vpack.c.b16 %v71, %v68
  %v113 = vunpack.c.l.b16 %v19
  %v114 = vunpack.c.l.b16 %v20
  %v115 = vunpack.c.l.b16 %v21
  %v116 = vunpack.c.l.b16 %v22
  %v117 = vunpack.c.l.b16 %v23
  %v118 = vunpack.c.l.b16 %v24
  %v119 = vunpack.c.l.b16 %v25
  %v120 = vunpack.c.l.b16 %v26
  %v121 = vunpack.c.l.b16 %v27
  %v122 = vunpack.c.l.b16 %v28
  %v123 = vunpack.c.l.b16 %v29
  %v124 = vunpack.c.l.b16 %v30
  %v125 = vunpack.c.l.b16 %v31
  %v126 = vunpack.c.l.b16 %v32
  %v127 = vunpack.c.l.b16 %v33
  %v128 = vunpack.c.l.b16 %v34
  %v129 = vunpack.c.l.b16 %v35
  %v130 = vunpack.c.l.b16 %v36
  %v131 = vunpack.c.l.b16 %v37
  %v132 = vunpack.c.l.b16 %v38
  %v133 = vunpack.c.l.b16 %v39
  %v134 = vunpack.c.l.b16 %v40
  %v135 = vunpack.c.l.b16 %v41
  %v136 = vunpack.c.l.b16 %v42
  %v137 = vunpack.c.l.b16 %v43
  %v138 = vunpack.c.l.b16 %v44
  %v139 = vunpack.c.l.b16 %v45
  %v140 = vunpack.c.l.b16 %v46
  %v141 = vunpack.c.l.b16 %v47
  %v142 = vunpack.c.l.b16 %v48
  %v143 = vunpack.c.l.b16 %v49
  %v144 = vunpack.c.l.b16 %v50
  %v145 = vunpack.c.l.b16 %v51
  %v146 = vunpack.c.l.b16 %v52
  %v147 = vunpack.c.l.b16 %v53
  %v148 = vunpack.c.l.b16 %v54
  %v149 = vpack.c.b16 %v114, %v113
  %v150 = vpack.c.b16 %v116, %v115
  %v151 = vpack.c.b16 %v118, %v117
  %v152 = vpack.c.b16 %v120, %v119
  %v153 = vpack.c.b16 %v122, %v121
  %v154 = vpack.c.b16 %v124, %v123
  %v155 = vpack.c.b16 %v126, %v125
  %v156 = vpack.c.b16 %v128, %v127
  %v157 = vpack.c.b16 %v130, %v129
  %v158 = vpack.c.b16 %v132, %v131
  %v159 = vpack.c.b16 %v134, %v133
  %v160 = vpack.c.b16 %v136, %v135
  %v161 = vpack.c.b16 %v138, %v137
  %v162 = vpack.c.b16 %v140, %v139
  %v163 = vpack.c.b16 %v142, %v141
  %v164 = vpack.c.b16 %v144, %v143
  %v165 = vpack.c.b16 %v146, %v145
  %v166 = vpack.c.b16 %v148, %v147
  %vm185 = vcmask 261120
  %v187 = vsel %vm185, %v74, 0
  %189 = vmatprep.subr.bf16.mxu0 0
  %190 = vmatpush1.bf16.msra.mxu0 %v149
  %191 = vmatprep.subr.bf16.mxu0 0
  %192 = vmatpush1.bf16.msra.mxu0 %v150
  %193 = vmatprep.subr.bf16.mxu0 0
  %194 = vmatpush1.bf16.msra.mxu0 %v151
  %195 = vmatprep.subr.bf16.mxu0 0
  %196 = vmatpush1.bf16.msra.mxu0 %v152
  %197 = vmatprep.subr.bf16.mxu0 0
  %198 = vmatpush1.bf16.msra.mxu0 %v153
  %199 = vmatprep.subr.bf16.mxu0 0
  %200 = vmatpush1.bf16.msra.mxu0 %v154
  %201 = vmatprep.subr.bf16.mxu0 0
  %202 = vmatpush1.bf16.msra.mxu0 %v155
  %203 = vmatprep.subr.bf16.mxu0 0
  %204 = vmatpush1.bf16.msra.mxu0 %v156
  %205 = vmatprep.subr.bf16.mxu0 0
  %206 = vmatpush1.bf16.msra.mxu0 %v157
  %207 = vmatprep.subr.bf16.mxu0 0
  %208 = vmatpush1.bf16.msra.mxu0 %v158
  %209 = vmatprep.subr.bf16.mxu0 0
  %210 = vmatpush1.bf16.msra.mxu0 %v159
  %211 = vmatprep.subr.bf16.mxu0 0
  %212 = vmatpush1.bf16.msra.mxu0 %v160
  %213 = vmatprep.subr.bf16.mxu0 0
  %214 = vmatpush1.bf16.msra.mxu0 %v161
  %215 = vmatprep.subr.bf16.mxu0 0
  %216 = vmatpush1.bf16.msra.mxu0 %v162
  %217 = vmatprep.subr.bf16.mxu0 0
  %218 = vmatpush1.bf16.msra.mxu0 %v163
  %219 = vmatprep.subr.bf16.mxu0 0
  %220 = vmatpush1.bf16.msra.mxu0 %v164
  %221 = vmatprep.mubr.bf16.mxu0 %v73
  %222 = vmatmul.mubr.bf16.gmra.mrb[0].mxu0 %v72
  %v223 = vpop.f32.mrb[0].mxu0
  %v224 = vadd.f32 %v60, %v223
  %v225 = vpop.f32.mrb[0].mxu0
  %v226 = vpop.f32.mrb[0].mxu0
  %v227 = vadd.f32 %v60, %v226
  %v228 = vpop.f32.mrb[0].mxu0
  %229 = vdwg.mxu0
  %230 = vmatprep.subr.bf16.mxu0 0
  %231 = vmatpush1.bf16.msra.mxu0 %v165
  %232 = vmatprep.subr.bf16.mxu0 0
  %233 = vmatpush1.bf16.msra.mxu0 %v166
  %234 = vmatprep.subr.bf16.mxu0 0
  %235 = vmatpush1.bf16.msra.mxu0 0
  %236 = vmatprep.subr.bf16.mxu0 0
  %237 = vmatpush1.bf16.msra.mxu0 0
  %238 = vmatprep.subr.bf16.mxu0 0
  %239 = vmatpush1.bf16.msra.mxu0 0
  %240 = vmatprep.subr.bf16.mxu0 0
  %241 = vmatpush1.bf16.msra.mxu0 0
  %242 = vmatprep.subr.bf16.mxu0 0
  %243 = vmatpush1.bf16.msra.mxu0 0
  %244 = vmatprep.subr.bf16.mxu0 0
  %245 = vmatpush1.bf16.msra.mxu0 0
  %246 = vmatprep.subr.bf16.mxu0 0
  %247 = vmatpush1.bf16.msra.mxu0 0
  %248 = vmatprep.subr.bf16.mxu0 0
  %249 = vmatpush1.bf16.msra.mxu0 0
  %250 = vmatprep.subr.bf16.mxu0 0
  %251 = vmatpush1.bf16.msra.mxu0 0
  %252 = vmatprep.subr.bf16.mxu0 0
  %253 = vmatpush1.bf16.msra.mxu0 0
  %254 = vmatprep.subr.bf16.mxu0 0
  %255 = vmatpush1.bf16.msra.mxu0 0
  %256 = vmatprep.subr.bf16.mxu0 0
  %257 = vmatpush1.bf16.msra.mxu0 0
  %258 = vmatprep.subr.bf16.mxu0 0
  %259 = vmatpush1.bf16.msra.mxu0 0
  %260 = vmatprep.subr.bf16.mxu0 0
  %261 = vmatpush1.bf16.msra.mxu0 0
  %262 = vmatprep.mubr.bf16.mxu0 0
  %263 = vmatmul.mubr.bf16.gmra.mrb[0].mxu0 %v187
  %v264 = vpop.f32.mrb[0].mxu0
  %v265 = vadd.f32 %v224, %v264
  %v266 = vpop.f32.mrb[0].mxu0
  %v267 = vpop.f32.mrb[0].mxu0
  %v268 = vadd.f32 %v227, %v267
  %v269 = vpop.f32.mrb[0].mxu0
  %270 = vdwg.mxu0
  %271 = vst [vmem:[%s3] sm:$0xff] %v265
  %272 = vst [vmem:[%s3 + $0x8] sm:$0xff] %v268
  // Predicated region
  $region14: #{retinanet_forward.36} parent=0 // pred_check
    _
  $region15: #{retinanet_forward.36} parent=0 // pred_check_branch
    %274 = sbr.rel (0) target = $region17
  $region16: #{retinanet_forward.36} parent=0 // pred_region
    _
  $region17: #{retinanet_forward.36} parent=0 // pred_fallthru
    _
  // Predicated region
  $region18: #{retinanet_forward.36} parent=0 // pred_check
    _
  $region19: #{retinanet_forward.36} parent=0 // pred_check_branch
    %276 = sbr.rel (0) target = $region21
  $region20: #{retinanet_forward.36} parent=0 // pred_region
    _
  $region21: #{retinanet_forward.36} parent=0 // pred_fallthru
    _

// kernel: retinanet_forward.31
$region0: #{retinanet_forward.31}
  #allocation0 [shape = 'u32[]', space=smem, size = 0x4, offset = 0x4, fixed_abs, tag = 'smem constant byte address 0x4 - core index']
  #allocation1 [shape = 'u32[144,128]{1,0:T(1,128)}', space=vmem, size = 0x12000, scoped, tag = 'internal scratch']
  %s0 = inlined_call_operand.vmem [shape: bf16[16,64], index: 0, kind: input, shape index: {}]
  %s1 = inlined_call_operand.vmem [shape: bf16[64,128], index: 1, kind: input, shape index: {}]
  %s2 = inlined_call_operand.vmem [shape: f32[1,128], index: 2, kind: input, shape index: {}]
  %s3 = inlined_call_operand.vmem [shape: f32[16,128], index: 3, kind: output, shape index: {}]
  %s4 = sld [smem:[#allocation0]]
  $region22: #{retinanet_forward.31} parent=0
    _
  %s6 = ssub.s32 1, %s4
  %s7 = scalar_select 0, %s6, %s4
  // Predicated region
  $region2: #{retinanet_forward.31} parent=0 // pred_check
    _
  $region3: #{retinanet_forward.31} parent=0 // pred_check_branch
    %9 = sbr.rel (0) target = $region5
  $region4: #{retinanet_forward.31} parent=0 // pred_region
    _
  $region5: #{retinanet_forward.31} parent=0 // pred_fallthru
    _
  // Predicated region
  $region6: #{retinanet_forward.31} parent=0 // pred_check
    _
  $region7: #{retinanet_forward.31} parent=0 // pred_check_branch
    %11 = sbr.rel (0) target = $region9
  $region8: #{retinanet_forward.31} parent=0 // pred_region
    _
  $region9: #{retinanet_forward.31} parent=0 // pred_fallthru
    _
  // Predicated region
  $region10: #{retinanet_forward.31} parent=0 // pred_check
    _
  $region11: #{retinanet_forward.31} parent=0 // pred_check_branch
    %13 = sbr.rel (0) target = $region13
  $region12: #{retinanet_forward.31} parent=0 // pred_region
    _
  $region13: #{retinanet_forward.31} parent=0 // pred_fallthru
    _
  %v15 = vld [vmem:[%s0] sm:$0xf]
  %v16 = vld [vmem:[%s0 + $0x4] sm:$0xf]
  %v17 = vld [vmem:[%s1] sm:$0xf]
  %v18 = vld [vmem:[%s1 + $0x4] sm:$0xf]
  %v19 = vld [vmem:[%s1 + $0x8] sm:$0xf]
  %v20 = vld [vmem:[%s1 + $0xc] sm:$0xf]
  %v21 = vld [vmem:[%s1 + $0x10] sm:$0xf]
  %v22 = vld [vmem:[%s1 + $0x14] sm:$0xf]
  %v23 = vld [vmem:[%s1 + $0x18] sm:$0xf]
  %v24 = vld [vmem:[%s1 + $0x1c] sm:$0xf]
  %v25 = vld [vmem:[%s2] sm:$0x1]
  %v27 = vlaneseq
  %v28 = vshrl.u32 %v27, 7
  %v29 = vsub.s32 0, %v28
  %v30 = vrot.slane %v25, %v29
  %v34 = vunpack.c.l.b16 %v15
  %v35 = vunpack.c.l.b16 %v16
  %v36 = vpack.c.b16 %v35, %v34
  %v45 = vunpack.c.l.b16 %v17
  %v46 = vunpack.c.l.b16 %v18
  %v47 = vunpack.c.l.b16 %v19
  %v48 = vunpack.c.l.b16 %v20
  %v49 = vunpack.c.l.b16 %v21
  %v50 = vunpack.c.l.b16 %v22
  %v51 = vunpack.c.l.b16 %v23
  %v52 = vunpack.c.l.b16 %v24
  %v53 = vpack.c.b16 %v46, %v45
  %v54 = vpack.c.b16 %v48, %v47
  %v55 = vpack.c.b16 %v50, %v49
  %v56 = vpack.c.b16 %v52, %v51
  %vm61 = vcmask 523264
  %v63 = vsel %vm61, %v36, 0
  %65 = vmatprep.subr.bf16.mxu0 0
  %66 = vmatpush1.bf16.msra.mxu0 %v53
  %67 = vmatprep.subr.bf16.mxu0 0
  %68 = vmatpush1.bf16.msra.mxu0 %v54
  %69 = vmatprep.subr.bf16.mxu0 0
  %70 = vmatpush1.bf16.msra.mxu0 %v55
  %71 = vmatprep.subr.bf16.mxu0 0
  %72 = vmatpush1.bf16.msra.mxu0 %v56
  %73 = vmatprep.subr.bf16.mxu0 0
  %74 = vmatpush1.bf16.msra.mxu0 0
  %75 = vmatprep.subr.bf16.mxu0 0
  %76 = vmatpush1.bf16.msra.mxu0 0
  %77 = vmatprep.subr.bf16.mxu0 0
  %78 = vmatpush1.bf16.msra.mxu0 0
  %79 = vmatprep.subr.bf16.mxu0 0
  %80 = vmatpush1.bf16.msra.mxu0 0
  %81 = vmatprep.subr.bf16.mxu0 0
  %82 = vmatpush1.bf16.msra.mxu0 0
  %83 = vmatprep.subr.bf16.mxu0 0
  %84 = vmatpush1.bf16.msra.mxu0 0
  %85 = vmatprep.subr.bf16.mxu0 0
  %86 = vmatpush1.bf16.msra.mxu0 0
  %87 = vmatprep.subr.bf16.mxu0 0
  %88 = vmatpush1.bf16.msra.mxu0 0
  %89 = vmatprep.subr.bf16.mxu0 0
  %90 = vmatpush1.bf16.msra.mxu0 0
  %91 = vmatprep.subr.bf16.mxu0 0
  %92 = vmatpush1.bf16.msra.mxu0 0
  %93 = vmatprep.subr.bf16.mxu0 0
  %94 = vmatpush1.bf16.msra.mxu0 0
  %95 = vmatprep.subr.bf16.mxu0 0
  %96 = vmatpush1.bf16.msra.mxu0 0
  %97 = vmatprep.mubr.bf16.mxu0 0
  %98 = vmatmul.mubr.bf16.gmra.mrb[0].mxu0 %v63
  %v99 = vpop.f32.mrb[0].mxu0
  %v100 = vadd.f32 %v30, %v99
  %v101 = vpop.f32.mrb[0].mxu0
  %v102 = vpop.f32.mrb[0].mxu0
  %v103 = vadd.f32 %v30, %v102
  %v104 = vpop.f32.mrb[0].mxu0
  %105 = vdwg.mxu0
  %106 = vst [vmem:[%s3] sm:$0xff] %v100
  %107 = vst [vmem:[%s3 + $0x8] sm:$0xff] %v103
  // Predicated region
  $region14: #{retinanet_forward.31} parent=0 // pred_check
    _
  $region15: #{retinanet_forward.31} parent=0 // pred_check_branch
    %109 = sbr.rel (0) target = $region17
  $region16: #{retinanet_forward.31} parent=0 // pred_region
    _
  $region17: #{retinanet_forward.31} parent=0 // pred_fallthru
    _
  // Predicated region
  $region18: #{retinanet_forward.31} parent=0 // pred_check
    _
  $region19: #{retinanet_forward.31} parent=0 // pred_check_branch
    %111 = sbr.rel (0) target = $region21
  $region20: #{retinanet_forward.31} parent=0 // pred_region
    _
  $region21: #{retinanet_forward.31} parent=0 // pred_fallthru
    _

// kernel: retinanet_forward.30
$region0: #{retinanet_forward.30}
  #allocation0 [shape = 'u32[]', space=smem, size = 0x4, offset = 0x4, fixed_abs, tag = 'smem constant byte address 0x4 - core index']
  #allocation1 [shape = 'u32[144,128]{1,0:T(1,128)}', space=vmem, size = 0x12000, scoped, tag = 'internal scratch']
  %s0 = inlined_call_operand.vmem [shape: bf16[32,32], index: 0, kind: input, shape index: {}]
  %s1 = inlined_call_operand.vmem [shape: bf16[32,128], index: 1, kind: input, shape index: {}]
  %s2 = inlined_call_operand.vmem [shape: f32[1,128], index: 2, kind: input, shape index: {}]
  %s3 = inlined_call_operand.vmem [shape: f32[32,128], index: 3, kind: output, shape index: {}]
  %s4 = sld [smem:[#allocation0]]
  $region22: #{retinanet_forward.30} parent=0
    _
  %s6 = ssub.s32 1, %s4
  %s7 = scalar_select 0, %s6, %s4
  // Predicated region
  $region2: #{retinanet_forward.30} parent=0 // pred_check
    _
  $region3: #{retinanet_forward.30} parent=0 // pred_check_branch
    %9 = sbr.rel (0) target = $region5
  $region4: #{retinanet_forward.30} parent=0 // pred_region
    _
  $region5: #{retinanet_forward.30} parent=0 // pred_fallthru
    _
  // Predicated region
  $region6: #{retinanet_forward.30} parent=0 // pred_check
    _
  $region7: #{retinanet_forward.30} parent=0 // pred_check_branch
    %11 = sbr.rel (0) target = $region9
  $region8: #{retinanet_forward.30} parent=0 // pred_region
    _
  $region9: #{retinanet_forward.30} parent=0 // pred_fallthru
    _
  // Predicated region
  $region10: #{retinanet_forward.30} parent=0 // pred_check
    _
  $region11: #{retinanet_forward.30} parent=0 // pred_check_branch
    %13 = sbr.rel (0) target = $region13
  $region12: #{retinanet_forward.30} parent=0 // pred_region
    _
  $region13: #{retinanet_forward.30} parent=0 // pred_fallthru
    _
  %v15 = vld [vmem:[%s0] sm:$0xf]
  %v16 = vld [vmem:[%s0 + $0x4] sm:$0xf]
  %v17 = vld [vmem:[%s0 + $0x8] sm:$0xf]
  %v18 = vld [vmem:[%s0 + $0xc] sm:$0xf]
  %v19 = vld [vmem:[%s1] sm:$0xf]
  %v20 = vld [vmem:[%s1 + $0x4] sm:$0xf]
  %v21 = vld [vmem:[%s1 + $0x8] sm:$0xf]
  %v22 = vld [vmem:[%s1 + $0xc] sm:$0xf]
  %v23 = vld [vmem:[%s2] sm:$0x1]
  %v25 = vlaneseq
  %v26 = vshrl.u32 %v25, 7
  %v27 = vsub.s32 0, %v26
  %v28 = vrot.slane %v23, %v27
  %v34 = vunpack.c.l.b16 %v15
  %v35 = vunpack.c.l.b16 %v16
  %v36 = vunpack.c.l.b16 %v17
  %v37 = vunpack.c.l.b16 %v18
  %v38 = vpack.c.b16 %v35, %v34
  %v39 = vpack.c.b16 %v37, %v36
  %v44 = vunpack.c.l.b16 %v19
  %v45 = vunpack.c.l.b16 %v20
  %v46 = vunpack.c.l.b16 %v21
  %v47 = vunpack.c.l.b16 %v22
  %v48 = vpack.c.b16 %v45, %v44
  %v49 = vpack.c.b16 %v47, %v46
  %vm52 = vcmask 261120
  %v54 = vsel %vm52, %v38, 0
  %v57 = vsel %vm52, %v39, 0
  %59 = vmatprep.subr.bf16.mxu0 0
  %60 = vmatpush1.bf16.msra.mxu0 %v48
  %61 = vmatprep.subr.bf16.mxu0 0
  %62 = vmatpush1.bf16.msra.mxu0 %v49
  %63 = vmatprep.subr.bf16.mxu0 0
  %64 = vmatpush1.bf16.msra.mxu0 0
  %65 = vmatprep.subr.bf16.mxu0 0
  %66 = vmatpush1.bf16.msra.mxu0 0
  %67 = vmatprep.subr.bf16.mxu0 0
  %68 = vmatpush1.bf16.msra.mxu0 0
  %69 = vmatprep.subr.bf16.mxu0 0
  %70 = vmatpush1.bf16.msra.mxu0 0
  %71 = vmatprep.subr.bf16.mxu0 0
  %72 = vmatpush1.bf16.msra.mxu0 0
  %73 = vmatprep.subr.bf16.mxu0 0
  %74 = vmatpush1.bf16.msra.mxu0 0
  %75 = vmatprep.subr.bf16.mxu0 0
  %76 = vmatpush1.bf16.msra.mxu0 0
  %77 = vmatprep.subr.bf16.mxu0 0
  %78 = vmatpush1.bf16.msra.mxu0 0
  %79 = vmatprep.subr.bf16.mxu0 0
  %80 = vmatpush1.bf16.msra.mxu0 0
  %81 = vmatprep.subr.bf16.mxu0 0
  %82 = vmatpush1.bf16.msra.mxu0 0
  %83 = vmatprep.subr.bf16.mxu0 0
  %84 = vmatpush1.bf16.msra.mxu0 0
  %85 = vmatprep.subr.bf16.mxu0 0
  %86 = vmatpush1.bf16.msra.mxu0 0
  %87 = vmatprep.subr.bf16.mxu0 0
  %88 = vmatpush1.bf16.msra.mxu0 0
  %89 = vmatprep.subr.bf16.mxu0 0
  %90 = vmatpush1.bf16.msra.mxu0 0
  %91 = vmatprep.mubr.bf16.mxu0 0
  %92 = vmatmul.mubr.bf16.gmra.mrb[0].mxu0 %v54
  %v93 = vpop.f32.mrb[0].mxu0
  %v94 = vadd.f32 %v28, %v93
  %v95 = vpop.f32.mrb[0].mxu0
  %v96 = vpop.f32.mrb[0].mxu0
  %v97 = vadd.f32 %v28, %v96
  %v98 = vpop.f32.mrb[0].mxu0
  %99 = vmatprep.mubr.bf16.mxu0 0
  %100 = vmatmul.mubr.bf16.gmra.mrb[0].mxu0 %v57
  %v101 = vpop.f32.mrb[0].mxu0
  %v102 = vadd.f32 %v28, %v101
  %v103 = vpop.f32.mrb[0].mxu0
  %v104 = vpop.f32.mrb[0].mxu0
  %v105 = vadd.f32 %v28, %v104
  %v106 = vpop.f32.mrb[0].mxu0
  %107 = vdwg.mxu0
  %108 = vst [vmem:[%s3] sm:$0xff] %v94
  %109 = vst [vmem:[%s3 + $0x8] sm:$0xff] %v97
  %110 = vst [vmem:[%s3 + $0x10] sm:$0xff] %v102
  %111 = vst [vmem:[%s3 + $0x18] sm:$0xff] %v105
  // Predicated region
  $region14: #{retinanet_forward.30} parent=0 // pred_check
    _
  $region15: #{retinanet_forward.30} parent=0 // pred_check_branch
    %113 = sbr.rel (0) target = $region17
  $region16: #{retinanet_forward.30} parent=0 // pred_region
    _
  $region17: #{retinanet_forward.30} parent=0 // pred_fallthru
    _
  // Predicated region
  $region18: #{retinanet_forward.30} parent=0 // pred_check
    _
  $region19: #{retinanet_forward.30} parent=0 // pred_check_branch
    %115 = sbr.rel (0) target = $region21
  $region20: #{retinanet_forward.30} parent=0 // pred_region
    _
  $region21: #{retinanet_forward.30} parent=0 // pred_fallthru
    _

// kernel: retinanet_forward.34
$region0: #{retinanet_forward.34}
  #allocation0 [shape = 'u32[]', space=smem, size = 0x4, offset = 0x4, fixed_abs, tag = 'smem constant byte address 0x4 - core index']
  #allocation1 [shape = 'u32[144,128]{1,0:T(1,128)}', space=vmem, size = 0x12000, scoped, tag = 'internal scratch']
  %s0 = inlined_call_operand.vmem [shape: bf16[32,288], index: 0, kind: input, shape index: {}]
  %s1 = inlined_call_operand.vmem [shape: bf16[288,128], index: 1, kind: input, shape index: {}]
  %s2 = inlined_call_operand.vmem [shape: f32[1,128], index: 2, kind: input, shape index: {}]
  %s3 = inlined_call_operand.vmem [shape: f32[32,128], index: 3, kind: output, shape index: {}]
  %s4 = sld [smem:[#allocation0]]
  $region22: #{retinanet_forward.34} parent=0
    _
  %s6 = ssub.s32 1, %s4
  %s7 = scalar_select 0, %s6, %s4
  // Predicated region
  $region2: #{retinanet_forward.34} parent=0 // pred_check
    _
  $region3: #{retinanet_forward.34} parent=0 // pred_check_branch
    %9 = sbr.rel (0) target = $region5
  $region4: #{retinanet_forward.34} parent=0 // pred_region
    _
  $region5: #{retinanet_forward.34} parent=0 // pred_fallthru
    _
  // Predicated region
  $region6: #{retinanet_forward.34} parent=0 // pred_check
    _
  $region7: #{retinanet_forward.34} parent=0 // pred_check_branch
    %11 = sbr.rel (0) target = $region9
  $region8: #{retinanet_forward.34} parent=0 // pred_region
    _
  $region9: #{retinanet_forward.34} parent=0 // pred_fallthru
    _
  // Predicated region
  $region10: #{retinanet_forward.34} parent=0 // pred_check
    _
  $region11: #{retinanet_forward.34} parent=0 // pred_check_branch
    %13 = sbr.rel (0) target = $region13
  $region12: #{retinanet_forward.34} parent=0 // pred_region
    _
  $region13: #{retinanet_forward.34} parent=0 // pred_fallthru
    _
  %v15 = vld [vmem:[%s0] sm:$0xff]
  %v16 = vld [vmem:[%s0 + $0x8] sm:$0xf]
  %v17 = vld [vmem:[%s0 + $0xc] sm:$0xff]
  %v18 = vld [vmem:[%s0 + $0x14] sm:$0xf]
  %v19 = vld [vmem:[%s0 + $0x18] sm:$0xff]
  %v20 = vld [vmem:[%s0 + $0x20] sm:$0xf]
  %v21 = vld [vmem:[%s0 + $0x24] sm:$0xff]
  %v22 = vld [vmem:[%s0 + $0x2c] sm:$0xf]
  %v23 = vld [vmem:[%s1] sm:$0xf]
  %v24 = vld [vmem:[%s1 + $0x4] sm:$0xf]
  %v25 = vld [vmem:[%s1 + $0x8] sm:$0xf]
  %v26 = vld [vmem:[%s1 + $0xc] sm:$0xf]
  %v27 = vld [vmem:[%s1 + $0x10] sm:$0xf]
  %v28 = vld [vmem:[%s1 + $0x14] sm:$0xf]
  %v29 = vld [vmem:[%s1 + $0x18] sm:$0xf]
  %v30 = vld [vmem:[%s1 + $0x1c] sm:$0xf]
  %v31 = vld [vmem:[%s1 + $0x20] sm:$0xf]
  %v32 = vld [vmem:[%s1 + $0x24] sm:$0xf]
  %v33 = vld [vmem:[%s1 + $0x28] sm:$0xf]
  %v34 = vld [vmem:[%s1 + $0x2c] sm:$0xf]
  %v35 = vld [vmem:[%s1 + $0x30] sm:$0xf]
  %v36 = vld [vmem:[%s1 + $0x34] sm:$0xf]
  %v37 = vld [vmem:[%s1 + $0x38] sm:$0xf]
  %v38 = vld [vmem:[%s1 + $0x3c] sm:$0xf]
  %v39 = vld [vmem:[%s1 + $0x40] sm:$0xf]
  %v40 = vld [vmem:[%s1 + $0x44] sm:$0xf]
  %v41 = vld [vmem:[%s1 + $0x48] sm:$0xf]
  %v42 = vld [vmem:[%s1 + $0x4c] sm:$0xf]
  %v43 = vld [vmem:[%s1 + $0x50] sm:$0xf]
  %v44 = vld [vmem:[%s1 + $0x54] sm:$0xf]
  %v45 = vld [vmem:[%s1 + $0x58] sm:$0xf]
  %v46 = vld [vmem:[%s1 + $0x5c] sm:$0xf]
  %v47 = vld [vmem:[%s1 + $0x60] sm:$0xf]
  %v48 = vld [vmem:[%s1 + $0x64] sm:$0xf]
  %v49 = vld [vmem:[%s1 + $0x68] sm:$0xf]
  %v50 = vld [vmem:[%s1 + $0x6c] sm:$0xf]
  %v51 = vld [vmem:[%s1 + $0x70] sm:$0xf]
  %v52 = vld [vmem:[%s1 + $0x74] sm:$0xf]
  %v53 = vld [vmem:[%s1 + $0x78] sm:$0xf]
  %v54 = vld [vmem:[%s1 + $0x7c] sm:$0xf]
  %v55 = vld [vmem:[%s1 + $0x80] sm:$0xf]
  %v56 = vld [vmem:[%s1 + $0x84] sm:$0xf]
  %v57 = vld [vmem:[%s1 + $0x88] sm:$0xf]
  %v58 = vld [vmem:[%s1 + $0x8c] sm:$0xf]
  %v59 = vld [vmem:[%s2] sm:$0x1]
  %v61 = vlaneseq
  %v62 = vshrl.u32 %v61, 7
  %v63 = vsub.s32 0, %v62
  %v64 = vrot.slane %v59, %v63
  %v74 = vunpack.c.l.b16 %v15
  %v75 = vunpack.c.h.b16 %v15
  %v76 = vunpack.c.l.b16 %v16
  %v77 = vunpack.c.l.b16 %v17
  %v78 = vunpack.c.h.b16 %v17
  %v79 = vunpack.c.l.b16 %v18
  %v80 = vunpack.c.l.b16 %v19
  %v81 = vunpack.c.h.b16 %v19
  %v82 = vunpack.c.l.b16 %v20
  %v83 = vunpack.c.l.b16 %v21
  %v84 = vunpack.c.h.b16 %v21
  %v85 = vunpack.c.l.b16 %v22
  %v86 = vpack.c.b16 %v77, %v74
  %v87 = vpack.c.b16 %v78, %v75
  %v88 = vpack.c.b16 %v79, %v76
  %v89 = vpack.c.b16 %v83, %v80
  %v90 = vpack.c.b16 %v84, %v81
  %v91 = vpack.c.b16 %v85, %v82
  %v132 = vunpack.c.l.b16 %v23
  %v133 = vunpack.c.l.b16 %v24
  %v134 = vunpack.c.l.b16 %v25
  %v135 = vunpack.c.l.b16 %v26
  %v136 = vunpack.c.l.b16 %v27
  %v137 = vunpack.c.l.b16 %v28
  %v138 = vunpack.c.l.b16 %v29
  %v139 = vunpack.c.l.b16 %v30
  %v140 = vunpack.c.l.b16 %v31
  %v141 = vunpack.c.l.b16 %v32
  %v142 = vunpack.c.l.b16 %v33
  %v143 = vunpack.c.l.b16 %v34
  %v144 = vunpack.c.l.b16 %v35
  %v145 = vunpack.c.l.b16 %v36
  %v146 = vunpack.c.l.b16 %v37
  %v147 = vunpack.c.l.b16 %v38
  %v148 = vunpack.c.l.b16 %v39
  %v149 = vunpack.c.l.b16 %v40
  %v150 = vunpack.c.l.b16 %v41
  %v151 = vunpack.c.l.b16 %v42
  %v152 = vunpack.c.l.b16 %v43
  %v153 = vunpack.c.l.b16 %v44
  %v154 = vunpack.c.l.b16 %v45
  %v155 = vunpack.c.l.b16 %v46
  %v156 = vunpack.c.l.b16 %v47
  %v157 = vunpack.c.l.b16 %v48
  %v158 = vunpack.c.l.b16 %v49
  %v159 = vunpack.c.l.b16 %v50
  %v160 = vunpack.c.l.b16 %v51
  %v161 = vunpack.c.l.b16 %v52
  %v162 = vunpack.c.l.b16 %v53
  %v163 = vunpack.c.l.b16 %v54
  %v164 = vunpack.c.l.b16 %v55
  %v165 = vunpack.c.l.b16 %v56
  %v166 = vunpack.c.l.b16 %v57
  %v167 = vunpack.c.l.b16 %v58
  %v168 = vpack.c.b16 %v133, %v132
  %v169 = vpack.c.b16 %v135, %v134
  %v170 = vpack.c.b16 %v137, %v136
  %v171 = vpack.c.b16 %v139, %v138
  %v172 = vpack.c.b16 %v141, %v140
  %v173 = vpack.c.b16 %v143, %v142
  %v174 = vpack.c.b16 %v145, %v144
  %v175 = vpack.c.b16 %v147, %v146
  %v176 = vpack.c.b16 %v149, %v148
  %v177 = vpack.c.b16 %v151, %v150
  %v178 = vpack.c.b16 %v153, %v152
  %v179 = vpack.c.b16 %v155, %v154
  %v180 = vpack.c.b16 %v157, %v156
  %v181 = vpack.c.b16 %v159, %v158
  %v182 = vpack.c.b16 %v161, %v160
  %v183 = vpack.c.b16 %v163, %v162
  %v184 = vpack.c.b16 %v165, %v164
  %v185 = vpack.c.b16 %v167, %v166
  %vm204 = vcmask 261120
  %v206 = vsel %vm204, %v88, 0
  %v209 = vsel %vm204, %v91, 0
  %211 = vmatprep.subr.bf16.mxu0 0
  %212 = vmatpush1.bf16.msra.mxu0 %v168
  %213 = vmatprep.subr.bf16.mxu0 0
  %214 = vmatpush1.bf16.msra.mxu0 %v169
  %215 = vmatprep.subr.bf16.mxu0 0
  %216 = vmatpush1.bf16.msra.mxu0 %v170
  %217 = vmatprep.subr.bf16.mxu0 0
  %218 = vmatpush1.bf16.msra.mxu0 %v171
  %219 = vmatprep.subr.bf16.mxu0 0
  %220 = vmatpush1.bf16.msra.mxu0 %v172
  %221 = vmatprep.subr.bf16.mxu0 0
  %222 = vmatpush1.bf16.msra.mxu0 %v173
  %223 = vmatprep.subr.bf16.mxu0 0
  %224 = vmatpush1.bf16.msra.mxu0 %v174
  %225 = vmatprep.subr.bf16.mxu0 0
  %226 = vmatpush1.bf16.msra.mxu0 %v175
  %227 = vmatprep.subr.bf16.mxu0 0
  %228 = vmatpush1.bf16.msra.mxu0 %v176
  %229 = vmatprep.subr.bf16.mxu0 0
  %230 = vmatpush1.bf16.msra.mxu0 %v177
  %231 = vmatprep.subr.bf16.mxu0 0
  %232 = vmatpush1.bf16.msra.mxu0 %v178
  %233 = vmatprep.subr.bf16.mxu0 0
  %234 = vmatpush1.bf16.msra.mxu0 %v179
  %235 = vmatprep.subr.bf16.mxu0 0
  %236 = vmatpush1.bf16.msra.mxu0 %v180
  %237 = vmatprep.subr.bf16.mxu0 0
  %238 = vmatpush1.bf16.msra.mxu0 %v181
  %239 = vmatprep.subr.bf16.mxu0 0
  %240 = vmatpush1.bf16.msra.mxu0 %v182
  %241 = vmatprep.subr.bf16.mxu0 0
  %242 = vmatpush1.bf16.msra.mxu0 %v183
  %243 = vmatprep.mubr.bf16.mxu0 %v87
  %244 = vmatmul.mubr.bf16.gmra.mrb[0].mxu0 %v86
  %v245 = vpop.f32.mrb[0].mxu0
  %v246 = vadd.f32 %v64, %v245
  %v247 = vpop.f32.mrb[0].mxu0
  %v248 = vpop.f32.mrb[0].mxu0
  %v249 = vadd.f32 %v64, %v248
  %v250 = vpop.f32.mrb[0].mxu0
  %251 = vmatprep.mubr.bf16.mxu0 %v90
  %252 = vmatmul.mubr.bf16.gmra.mrb[0].mxu0 %v89
  %v253 = vpop.f32.mrb[0].mxu0
  %v254 = vadd.f32 %v64, %v253
  %v255 = vpop.f32.mrb[0].mxu0
  %v256 = vpop.f32.mrb[0].mxu0
  %v257 = vadd.f32 %v64, %v256
  %v258 = vpop.f32.mrb[0].mxu0
  %259 = vdwg.mxu0
  %260 = vmatprep.subr.bf16.mxu0 0
  %261 = vmatpush1.bf16.msra.mxu0 %v184
  %262 = vmatprep.subr.bf16.mxu0 0
  %263 = vmatpush1.bf16.msra.mxu0 %v185
  %264 = vmatprep.subr.bf16.mxu0 0
  %265 = vmatpush1.bf16.msra.mxu0 0
  %266 = vmatprep.subr.bf16.mxu0 0
  %267 = vmatpush1.bf16.msra.mxu0 0
  %268 = vmatprep.subr.bf16.mxu0 0
  %269 = vmatpush1.bf16.msra.mxu0 0
  %270 = vmatprep.subr.bf16.mxu0 0
  %271 = vmatpush1.bf16.msra.mxu0 0
  %272 = vmatprep.subr.bf16.mxu0 0
  %273 = vmatpush1.bf16.msra.mxu0 0
  %274 = vmatprep.subr.bf16.mxu0 0
  %275 = vmatpush1.bf16.msra.mxu0 0
  %276 = vmatprep.subr.bf16.mxu0 0
  %277 = vmatpush1.bf16.msra.mxu0 0
  %278 = vmatprep.subr.bf16.mxu0 0
  %279 = vmatpush1.bf16.msra.mxu0 0
  %280 = vmatprep.subr.bf16.mxu0 0
  %281 = vmatpush1.bf16.msra.mxu0 0
  %282 = vmatprep.subr.bf16.mxu0 0
  %283 = vmatpush1.bf16.msra.mxu0 0
  %284 = vmatprep.subr.bf16.mxu0 0
  %285 = vmatpush1.bf16.msra.mxu0 0
  %286 = vmatprep.subr.bf16.mxu0 0
  %287 = vmatpush1.bf16.msra.mxu0 0
  %288 = vmatprep.subr.bf16.mxu0 0
  %289 = vmatpush1.bf16.msra.mxu0 0
  %290 = vmatprep.subr.bf16.mxu0 0
  %291 = vmatpush1.bf16.msra.mxu0 0
  %292 = vmatprep.mubr.bf16.mxu0 0
  %293 = vmatmul.mubr.bf16.gmra.mrb[0].mxu0 %v206
  %v294 = vpop.f32.mrb[0].mxu0
  %v295 = vadd.f32 %v246, %v294
  %v296 = vpop.f32.mrb[0].mxu0
  %v297 = vpop.f32.mrb[0].mxu0
  %v298 = vadd.f32 %v249, %v297
  %v299 = vpop.f32.mrb[0].mxu0
  %300 = vmatprep.mubr.bf16.mxu0 0
  %301 = vmatmul.mubr.bf16.gmra.mrb[0].mxu0 %v209
  %v302 = vpop.f32.mrb[0].mxu0
  %v303 = vadd.f32 %v254, %v302
  %v304 = vpop.f32.mrb[0].mxu0
  %v305 = vpop.f32.mrb[0].mxu0
  %v306 = vadd.f32 %v257, %v305
  %v307 = vpop.f32.mrb[0].mxu0
  %308 = vdwg.mxu0
  %309 = vst [vmem:[%s3] sm:$0xff] %v295
  %310 = vst [vmem:[%s3 + $0x8] sm:$0xff] %v298
  %311 = vst [vmem:[%s3 + $0x10] sm:$0xff] %v303
  %312 = vst [vmem:[%s3 + $0x18] sm:$0xff] %v306
  // Predicated region
  $region14: #{retinanet_forward.34} parent=0 // pred_check
    _
  $region15: #{retinanet_forward.34} parent=0 // pred_check_branch
    %314 = sbr.rel (0) target = $region17
  $region16: #{retinanet_forward.34} parent=0 // pred_region
    _
  $region17: #{retinanet_forward.34} parent=0 // pred_fallthru
    _
  // Predicated region
  $region18: #{retinanet_forward.34} parent=0 // pred_check
    _
  $region19: #{retinanet_forward.34} parent=0 // pred_check_branch
    %316 = sbr.rel (0) target = $region21
  $region20: #{retinanet_forward.34} parent=0 // pred_region
    _
  $region21: #{retinanet_forward.34} parent=0 // pred_fallthru
    _

// kernel: retinanet_forward.29
$region0: #{retinanet_forward.29}
  #allocation0 [shape = 'u32[]', space=smem, size = 0x4, offset = 0x4, fixed_abs, tag = 'smem constant byte address 0x4 - core index']
  #allocation1 [shape = 'u32[144,128]{1,0:T(1,128)}', space=vmem, size = 0x12000, scoped, tag = 'internal scratch']
  %s0 = inlined_call_operand.vmem [shape: bf16[128,16], index: 0, kind: input, shape index: {}]
  %s1 = inlined_call_operand.vmem [shape: bf16[16,128], index: 1, kind: input, shape index: {}]
  %s2 = inlined_call_operand.vmem [shape: f32[1,128], index: 2, kind: input, shape index: {}]
  %s3 = inlined_call_operand.vmem [shape: f32[128,128], index: 3, kind: output, shape index: {}]
  %s4 = sld [smem:[#allocation0]]
  $region22: #{retinanet_forward.29} parent=0
    _
  %s6 = ssub.s32 1, %s4
  %s7 = scalar_select 0, %s6, %s4
  // Predicated region
  $region2: #{retinanet_forward.29} parent=0 // pred_check
    _
  $region3: #{retinanet_forward.29} parent=0 // pred_check_branch
    %9 = sbr.rel (0) target = $region5
  $region4: #{retinanet_forward.29} parent=0 // pred_region
    _
  $region5: #{retinanet_forward.29} parent=0 // pred_fallthru
    _
  // Predicated region
  $region6: #{retinanet_forward.29} parent=0 // pred_check
    _
  $region7: #{retinanet_forward.29} parent=0 // pred_check_branch
    %11 = sbr.rel (0) target = $region9
  $region8: #{retinanet_forward.29} parent=0 // pred_region
    _
  $region9: #{retinanet_forward.29} parent=0 // pred_fallthru
    _
  // Predicated region
  $region10: #{retinanet_forward.29} parent=0 // pred_check
    _
  $region11: #{retinanet_forward.29} parent=0 // pred_check_branch
    %13 = sbr.rel (0) target = $region13
  $region12: #{retinanet_forward.29} parent=0 // pred_region
    _
  $region13: #{retinanet_forward.29} parent=0 // pred_fallthru
    _
  %v15 = vld [vmem:[%s0] sm:$0xf]
  %v16 = vld [vmem:[%s0 + $0x4] sm:$0xf]
  %v17 = vld [vmem:[%s0 + $0x8] sm:$0xf]
  %v18 = vld [vmem:[%s0 + $0xc] sm:$0xf]
  %v19 = vld [vmem:[%s0 + $0x10] sm:$0xf]
  %v20 = vld [vmem:[%s0 + $0x14] sm:$0xf]
  %v21 = vld [vmem:[%s0 + $0x18] sm:$0xf]
  %v22 = vld [vmem:[%s0 + $0x1c] sm:$0xf]
  %v23 = vld [vmem:[%s0 + $0x20] sm:$0xf]
  %v24 = vld [vmem:[%s0 + $0x24] sm:$0xf]
  %v25 = vld [vmem:[%s0 + $0x28] sm:$0xf]
  %v26 = vld [vmem:[%s0 + $0x2c] sm:$0xf]
  %v27 = vld [vmem:[%s0 + $0x30] sm:$0xf]
  %v28 = vld [vmem:[%s0 + $0x34] sm:$0xf]
  %v29 = vld [vmem:[%s0 + $0x38] sm:$0xf]
  %v30 = vld [vmem:[%s0 + $0x3c] sm:$0xf]
  %v31 = vld [vmem:[%s1] sm:$0xf]
  %v32 = vld [vmem:[%s1 + $0x4] sm:$0xf]
  %v33 = vld [vmem:[%s2] sm:$0x1]
  %v35 = vlaneseq
  %v36 = vshrl.u32 %v35, 7
  %v37 = vsub.s32 0, %v36
  %v38 = vrot.slane %v33, %v37
  %v56 = vunpack.c.l.b16 %v15
  %v57 = vunpack.c.l.b16 %v16
  %v58 = vunpack.c.l.b16 %v17
  %v59 = vunpack.c.l.b16 %v18
  %v60 = vunpack.c.l.b16 %v19
  %v61 = vunpack.c.l.b16 %v20
  %v62 = vunpack.c.l.b16 %v21
  %v63 = vunpack.c.l.b16 %v22
  %v64 = vunpack.c.l.b16 %v23
  %v65 = vunpack.c.l.b16 %v24
  %v66 = vunpack.c.l.b16 %v25
  %v67 = vunpack.c.l.b16 %v26
  %v68 = vunpack.c.l.b16 %v27
  %v69 = vunpack.c.l.b16 %v28
  %v70 = vunpack.c.l.b16 %v29
  %v71 = vunpack.c.l.b16 %v30
  %v72 = vpack.c.b16 %v57, %v56
  %v73 = vpack.c.b16 %v59, %v58
  %v74 = vpack.c.b16 %v61, %v60
  %v75 = vpack.c.b16 %v63, %v62
  %v76 = vpack.c.b16 %v65, %v64
  %v77 = vpack.c.b16 %v67, %v66
  %v78 = vpack.c.b16 %v69, %v68
  %v79 = vpack.c.b16 %v71, %v70
  %v82 = vunpack.c.l.b16 %v31
  %v83 = vunpack.c.l.b16 %v32
  %v84 = vpack.c.b16 %v83, %v82
  %vm86 = vcmask 130048
  %v88 = vsel %vm86, %v72, 0
  %v91 = vsel %vm86, %v73, 0
  %v94 = vsel %vm86, %v74, 0
  %v97 = vsel %vm86, %v75, 0
  %v100 = vsel %vm86, %v76, 0
  %v103 = vsel %vm86, %v77, 0
  %v106 = vsel %vm86, %v78, 0
  %v109 = vsel %vm86, %v79, 0
  %111 = vmatprep.subr.bf16.mxu0 0
  %112 = vmatpush1.bf16.msra.mxu0 %v84
  %113 = vmatprep.subr.bf16.mxu0 0
  %114 = vmatpush1.bf16.msra.mxu0 0
  %115 = vmatprep.subr.bf16.mxu0 0
  %116 = vmatpush1.bf16.msra.mxu0 0
  %117 = vmatprep.subr.bf16.mxu0 0
  %118 = vmatpush1.bf16.msra.mxu0 0
  %119 = vmatprep.subr.bf16.mxu0 0
  %120 = vmatpush1.bf16.msra.mxu0 0
  %121 = vmatprep.subr.bf16.mxu0 0
  %122 = vmatpush1.bf16.msra.mxu0 0
  %123 = vmatprep.subr.bf16.mxu0 0
  %124 = vmatpush1.bf16.msra.mxu0 0
  %125 = vmatprep.subr.bf16.mxu0 0
  %126 = vmatpush1.bf16.msra.mxu0 0
  %127 = vmatprep.subr.bf16.mxu0 0
  %128 = vmatpush1.bf16.msra.mxu0 0
  %129 = vmatprep.subr.bf16.mxu0 0
  %130 = vmatpush1.bf16.msra.mxu0 0
  %131 = vmatprep.subr.bf16.mxu0 0
  %132 = vmatpush1.bf16.msra.mxu0 0
  %133 = vmatprep.subr.bf16.mxu0 0
  %134 = vmatpush1.bf16.msra.mxu0 0
  %135 = vmatprep.subr.bf16.mxu0 0
  %136 = vmatpush1.bf16.msra.mxu0 0
  %137 = vmatprep.subr.bf16.mxu0 0
  %138 = vmatpush1.bf16.msra.mxu0 0
  %139 = vmatprep.subr.bf16.mxu0 0
  %140 = vmatpush1.bf16.msra.mxu0 0
  %141 = vmatprep.subr.bf16.mxu0 0
  %142 = vmatpush1.bf16.msra.mxu0 0
  %143 = vmatprep.mubr.bf16.mxu0 0
  %144 = vmatmul.mubr.bf16.gmra.mrb[0].mxu0 %v88
  %v145 = vpop.f32.mrb[0].mxu0
  %v146 = vadd.f32 %v38, %v145
  %v147 = vpop.f32.mrb[0].mxu0
  %v148 = vpop.f32.mrb[0].mxu0
  %v149 = vadd.f32 %v38, %v148
  %v150 = vpop.f32.mrb[0].mxu0
  %151 = vmatprep.mubr.bf16.mxu0 0
  %152 = vmatmul.mubr.bf16.gmra.mrb[0].mxu0 %v91
  %v153 = vpop.f32.mrb[0].mxu0
  %v154 = vadd.f32 %v38, %v153
  %v155 = vpop.f32.mrb[0].mxu0
  %v156 = vpop.f32.mrb[0].mxu0
  %v157 = vadd.f32 %v38, %v156
  %v158 = vpop.f32.mrb[0].mxu0
  %159 = vmatprep.mubr.bf16.mxu0 0
  %160 = vmatmul.mubr.bf16.gmra.mrb[0].mxu0 %v94
  %v161 = vpop.f32.mrb[0].mxu0
  %v162 = vadd.f32 %v38, %v161
  %v163 = vpop.f32.mrb[0].mxu0
  %v164 = vpop.f32.mrb[0].mxu0
  %v165 = vadd.f32 %v38, %v164
  %v166 = vpop.f32.mrb[0].mxu0
  %167 = vmatprep.mubr.bf16.mxu0 0
  %168 = vmatmul.mubr.bf16.gmra.mrb[0].mxu0 %v97
  %v169 = vpop.f32.mrb[0].mxu0
  %v170 = vadd.f32 %v38, %v169
  %v171 = vpop.f32.mrb[0].mxu0
  %v172 = vpop.f32.mrb[0].mxu0
  %v173 = vadd.f32 %v38, %v172
  %v174 = vpop.f32.mrb[0].mxu0
  %175 = vmatprep.mubr.bf16.mxu0 0
  %176 = vmatmul.mubr.bf16.gmra.mrb[0].mxu0 %v100
  %v177 = vpop.f32.mrb[0].mxu0
  %v178 = vadd.f32 %v38, %v177
  %v179 = vpop.f32.mrb[0].mxu0
  %v180 = vpop.f32.mrb[0].mxu0
  %v181 = vadd.f32 %v38, %v180
  %v182 = vpop.f32.mrb[0].mxu0
  %183 = vmatprep.mubr.bf16.mxu0 0
  %184 = vmatmul.mubr.bf16.gmra.mrb[0].mxu0 %v103
  %v185 = vpop.f32.mrb[0].mxu0
  %v186 = vadd.f32 %v38, %v185
  %v187 = vpop.f32.mrb[0].mxu0
  %v188 = vpop.f32.mrb[0].mxu0
  %v189 = vadd.f32 %v38, %v188
  %v190 = vpop.f32.mrb[0].mxu0
  %191 = vmatprep.mubr.bf16.mxu0 0
  %192 = vmatmul.mubr.bf16.gmra.mrb[0].mxu0 %v106
  %v193 = vpop.f32.mrb[0].mxu0
  %v194 = vadd.f32 %v38, %v193
  %v195 = vpop.f32.mrb[0].mxu0
  %v196 = vpop.f32.mrb[0].mxu0
  %v197 = vadd.f32 %v38, %v196
  %v198 = vpop.f32.mrb[0].mxu0
  %199 = vmatprep.mubr.bf16.mxu0 0
  %200 = vmatmul.mubr.bf16.gmra.mrb[0].mxu0 %v109
  %v201 = vpop.f32.mrb[0].mxu0
  %v202 = vadd.f32 %v38, %v201
  %v203 = vpop.f32.mrb[0].mxu0
  %v204 = vpop.f32.mrb[0].mxu0
  %v205 = vadd.f32 %v38, %v204
  %v206 = vpop.f32.mrb[0].mxu0
  %207 = vdwg.mxu0
  %208 = vst [vmem:[%s3] sm:$0xff] %v146
  %209 = vst [vmem:[%s3 + $0x8] sm:$0xff] %v149
  %210 = vst [vmem:[%s3 + $0x10] sm:$0xff] %v154
  %211 = vst [vmem:[%s3 + $0x18] sm:$0xff] %v157
  %212 = vst [vmem:[%s3 + $0x20] sm:$0xff] %v162
  %213 = vst [vmem:[%s3 + $0x28] sm:$0xff] %v165
  %214 = vst [vmem:[%s3 + $0x30] sm:$0xff] %v170
  %215 = vst [vmem:[%s3 + $0x38] sm:$0xff] %v173
  %216 = vst [vmem:[%s3 + $0x40] sm:$0xff] %v178
  %217 = vst [vmem:[%s3 + $0x48] sm:$0xff] %v181
  %218 = vst [vmem:[%s3 + $0x50] sm:$0xff] %v186
  %219 = vst [vmem:[%s3 + $0x58] sm:$0xff] %v189
  %220 = vst [vmem:[%s3 + $0x60] sm:$0xff] %v194
  %221 = vst [vmem:[%s3 + $0x68] sm:$0xff] %v197
  %222 = vst [vmem:[%s3 + $0x70] sm:$0xff] %v202
  %223 = vst [vmem:[%s3 + $0x78] sm:$0xff] %v205
  // Predicated region
  $region14: #{retinanet_forward.29} parent=0 // pred_check
    _
  $region15: #{retinanet_forward.29} parent=0 // pred_check_branch
    %225 = sbr.rel (0) target = $region17
  $region16: #{retinanet_forward.29} parent=0 // pred_region
    _
  $region17: #{retinanet_forward.29} parent=0 // pred_fallthru
    _
  // Predicated region
  $region18: #{retinanet_forward.29} parent=0 // pred_check
    _
  $region19: #{retinanet_forward.29} parent=0 // pred_check_branch
    %227 = sbr.rel (0) target = $region21
  $region20: #{retinanet_forward.29} parent=0 // pred_region
    _
  $region21: #{retinanet_forward.29} parent=0 // pred_fallthru
    _

// kernel: retinanet_forward.33
$region0: #{retinanet_forward.33}
  #allocation0 [shape = 'u32[]', space=smem, size = 0x4, offset = 0x4, fixed_abs, tag = 'smem constant byte address 0x4 - core index']
  #allocation1 [shape = 'u32[144,128]{1,0:T(1,128)}', space=vmem, size = 0x12000, scoped, tag = 'internal scratch']
  %s0 = inlined_call_operand.vmem [shape: bf16[128,288], index: 0, kind: input, shape index: {}]
  %s1 = inlined_call_operand.vmem [shape: bf16[288,128], index: 1, kind: input, shape index: {}]
  %s2 = inlined_call_operand.vmem [shape: f32[1,128], index: 2, kind: input, shape index: {}]
  %s3 = inlined_call_operand.vmem [shape: f32[128,128], index: 3, kind: output, shape index: {}]
  %s4 = sld [smem:[#allocation0]]
  $region22: #{retinanet_forward.33} parent=0
    _
  %s6 = ssub.s32 1, %s4
  %s7 = scalar_select 0, %s6, %s4
  // Predicated region
  $region2: #{retinanet_forward.33} parent=0 // pred_check
    _
  $region3: #{retinanet_forward.33} parent=0 // pred_check_branch
    %9 = sbr.rel (0) target = $region5
  $region4: #{retinanet_forward.33} parent=0 // pred_region
    _
  $region5: #{retinanet_forward.33} parent=0 // pred_fallthru
    _
  // Predicated region
  $region6: #{retinanet_forward.33} parent=0 // pred_check
    _
  $region7: #{retinanet_forward.33} parent=0 // pred_check_branch
    %11 = sbr.rel (0) target = $region9
  $region8: #{retinanet_forward.33} parent=0 // pred_region
    _
  $region9: #{retinanet_forward.33} parent=0 // pred_fallthru
    _
  // Predicated region
  $region10: #{retinanet_forward.33} parent=0 // pred_check
    _
  $region11: #{retinanet_forward.33} parent=0 // pred_check_branch
    %13 = sbr.rel (0) target = $region13
  $region12: #{retinanet_forward.33} parent=0 // pred_region
    _
  $region13: #{retinanet_forward.33} parent=0 // pred_fallthru
    _
  %v15 = vld [vmem:[%s0] sm:$0xff]
  %v16 = vld [vmem:[%s0 + $0x8] sm:$0xf]
  %v17 = vld [vmem:[%s0 + $0xc] sm:$0xff]
  %v18 = vld [vmem:[%s0 + $0x14] sm:$0xf]
  %v19 = vld [vmem:[%s0 + $0x18] sm:$0xff]
  %v20 = vld [vmem:[%s0 + $0x20] sm:$0xf]
  %v21 = vld [vmem:[%s0 + $0x24] sm:$0xff]
  %v22 = vld [vmem:[%s0 + $0x2c] sm:$0xf]
  %v23 = vld [vmem:[%s0 + $0x30] sm:$0xff]
  %v24 = vld [vmem:[%s0 + $0x38] sm:$0xf]
  %v25 = vld [vmem:[%s0 + $0x3c] sm:$0xff]
  %v26 = vld [vmem:[%s0 + $0x44] sm:$0xf]
  %v27 = vld [vmem:[%s0 + $0x48] sm:$0xff]
  %v28 = vld [vmem:[%s0 + $0x50] sm:$0xf]
  %v29 = vld [vmem:[%s0 + $0x54] sm:$0xff]
  %v30 = vld [vmem:[%s0 + $0x5c] sm:$0xf]
  %v31 = vld [vmem:[%s0 + $0x60] sm:$0xff]
  %v32 = vld [vmem:[%s0 + $0x68] sm:$0xf]
  %v33 = vld [vmem:[%s0 + $0x6c] sm:$0xff]
  %v34 = vld [vmem:[%s0 + $0x74] sm:$0xf]
  %v35 = vld [vmem:[%s0 + $0x78] sm:$0xff]
  %v36 = vld [vmem:[%s0 + $0x80] sm:$0xf]
  %v37 = vld [vmem:[%s0 + $0x84] sm:$0xff]
  %v38 = vld [vmem:[%s0 + $0x8c] sm:$0xf]
  %v39 = vld [vmem:[%s0 + $0x90] sm:$0xff]
  %v40 = vld [vmem:[%s0 + $0x98] sm:$0xf]
  %v41 = vld [vmem:[%s0 + $0x9c] sm:$0xff]
  %v42 = vld [vmem:[%s0 + $0xa4] sm:$0xf]
  %v43 = vld [vmem:[%s0 + $0xa8] sm:$0xff]
  %v44 = vld [vmem:[%s0 + $0xb0] sm:$0xf]
  %v45 = vld [vmem:[%s0 + $0xb4] sm:$0xff]
  %v46 = vld [vmem:[%s0 + $0xbc] sm:$0xf]
  %v47 = vld [vmem:[%s1] sm:$0xf]
  %v48 = vld [vmem:[%s1 + $0x4] sm:$0xf]
  %v49 = vld [vmem:[%s1 + $0x8] sm:$0xf]
  %v50 = vld [vmem:[%s1 + $0xc] sm:$0xf]
  %v51 = vld [vmem:[%s1 + $0x10] sm:$0xf]
  %v52 = vld [vmem:[%s1 + $0x14] sm:$0xf]
  %v53 = vld [vmem:[%s1 + $0x18] sm:$0xf]
  %v54 = vld [vmem:[%s1 + $0x1c] sm:$0xf]
  %v55 = vld [vmem:[%s1 + $0x20] sm:$0xf]
  %v56 = vld [vmem:[%s1 + $0x24] sm:$0xf]
  %v57 = vld [vmem:[%s1 + $0x28] sm:$0xf]
  %v58 = vld [vmem:[%s1 + $0x2c] sm:$0xf]
  %v59 = vld [vmem:[%s1 + $0x30] sm:$0xf]
  %v60 = vld [vmem:[%s1 + $0x34] sm:$0xf]
  %v61 = vld [vmem:[%s1 + $0x38] sm:$0xf]
  %v62 = vld [vmem:[%s1 + $0x3c] sm:$0xf]
  %v63 = vld [vmem:[%s1 + $0x40] sm:$0xf]
  %v64 = vld [vmem:[%s1 + $0x44] sm:$0xf]
  %v65 = vld [vmem:[%s1 + $0x48] sm:$0xf]
  %v66 = vld [vmem:[%s1 + $0x4c] sm:$0xf]
  %v67 = vld [vmem:[%s1 + $0x50] sm:$0xf]
  %v68 = vld [vmem:[%s1 + $0x54] sm:$0xf]
  %v69 = vld [vmem:[%s1 + $0x58] sm:$0xf]
  %v70 = vld [vmem:[%s1 + $0x5c] sm:$0xf]
  %v71 = vld [vmem:[%s1 + $0x60] sm:$0xf]
  %v72 = vld [vmem:[%s1 + $0x64] sm:$0xf]
  %v73 = vld [vmem:[%s1 + $0x68] sm:$0xf]
  %v74 = vld [vmem:[%s1 + $0x6c] sm:$0xf]
  %v75 = vld [vmem:[%s1 + $0x70] sm:$0xf]
  %v76 = vld [vmem:[%s1 + $0x74] sm:$0xf]
  %v77 = vld [vmem:[%s1 + $0x78] sm:$0xf]
  %v78 = vld [vmem:[%s1 + $0x7c] sm:$0xf]
  %v79 = vld [vmem:[%s1 + $0x80] sm:$0xf]
  %v80 = vld [vmem:[%s1 + $0x84] sm:$0xf]
  %v81 = vld [vmem:[%s1 + $0x88] sm:$0xf]
  %v82 = vld [vmem:[%s1 + $0x8c] sm:$0xf]
  %v83 = vld [vmem:[%s2] sm:$0x1]
  %v85 = vlaneseq
  %v86 = vshrl.u32 %v85, 7
  %v87 = vsub.s32 0, %v86
  %v88 = vrot.slane %v83, %v87
  %v122 = vunpack.c.l.b16 %v15
  %v123 = vunpack.c.h.b16 %v15
  %v124 = vunpack.c.l.b16 %v16
  %v125 = vunpack.c.l.b16 %v17
  %v126 = vunpack.c.h.b16 %v17
  %v127 = vunpack.c.l.b16 %v18
  %v128 = vunpack.c.l.b16 %v19
  %v129 = vunpack.c.h.b16 %v19
  %v130 = vunpack.c.l.b16 %v20
  %v131 = vunpack.c.l.b16 %v21
  %v132 = vunpack.c.h.b16 %v21
  %v133 = vunpack.c.l.b16 %v22
  %v134 = vunpack.c.l.b16 %v23
  %v135 = vunpack.c.h.b16 %v23
  %v136 = vunpack.c.l.b16 %v24
  %v137 = vunpack.c.l.b16 %v25
  %v138 = vunpack.c.h.b16 %v25
  %v139 = vunpack.c.l.b16 %v26
  %v140 = vunpack.c.l.b16 %v27
  %v141 = vunpack.c.h.b16 %v27
  %v142 = vunpack.c.l.b16 %v28
  %v143 = vunpack.c.l.b16 %v29
  %v144 = vunpack.c.h.b16 %v29
  %v145 = vunpack.c.l.b16 %v30
  %v146 = vunpack.c.l.b16 %v31
  %v147 = vunpack.c.h.b16 %v31
  %v148 = vunpack.c.l.b16 %v32
  %v149 = vunpack.c.l.b16 %v33
  %v150 = vunpack.c.h.b16 %v33
  %v151 = vunpack.c.l.b16 %v34
  %v152 = vunpack.c.l.b16 %v35
  %v153 = vunpack.c.h.b16 %v35
  %v154 = vunpack.c.l.b16 %v36
  %v155 = vunpack.c.l.b16 %v37
  %v156 = vunpack.c.h.b16 %v37
  %v157 = vunpack.c.l.b16 %v38
  %v158 = vunpack.c.l.b16 %v39
  %v159 = vunpack.c.h.b16 %v39
  %v160 = vunpack.c.l.b16 %v40
  %v161 = vunpack.c.l.b16 %v41
  %v162 = vunpack.c.h.b16 %v41
  %v163 = vunpack.c.l.b16 %v42
  %v164 = vunpack.c.l.b16 %v43
  %v165 = vunpack.c.h.b16 %v43
  %v166 = vunpack.c.l.b16 %v44
  %v167 = vunpack.c.l.b16 %v45
  %v168 = vunpack.c.h.b16 %v45
  %v169 = vunpack.c.l.b16 %v46
  %v170 = vpack.c.b16 %v125, %v122
  %v171 = vpack.c.b16 %v126, %v123
  %v172 = vpack.c.b16 %v127, %v124
  %v173 = vpack.c.b16 %v131, %v128
  %v174 = vpack.c.b16 %v132, %v129
  %v175 = vpack.c.b16 %v133, %v130
  %v176 = vpack.c.b16 %v137, %v134
  %v177 = vpack.c.b16 %v138, %v135
  %v178 = vpack.c.b16 %v139, %v136
  %v179 = vpack.c.b16 %v143, %v140
  %v180 = vpack.c.b16 %v144, %v141
  %v181 = vpack.c.b16 %v145, %v142
  %v182 = vpack.c.b16 %v149, %v146
  %v183 = vpack.c.b16 %v150, %v147
  %v184 = vpack.c.b16 %v151, %v148
  %v185 = vpack.c.b16 %v155, %v152
  %v186 = vpack.c.b16 %v156, %v153
  %v187 = vpack.c.b16 %v157, %v154
  %v188 = vpack.c.b16 %v161, %v158
  %v189 = vpack.c.b16 %v162, %v159
  %v190 = vpack.c.b16 %v163, %v160
  %v191 = vpack.c.b16 %v167, %v164
  %v192 = vpack.c.b16 %v168, %v165
  %v193 = vpack.c.b16 %v169, %v166
  %v246 = vunpack.c.l.b16 %v47
  %v247 = vunpack.c.l.b16 %v48
  %v248 = vunpack.c.l.b16 %v49
  %v249 = vunpack.c.l.b16 %v50
  %v250 = vunpack.c.l.b16 %v51
  %v251 = vunpack.c.l.b16 %v52
  %v252 = vunpack.c.l.b16 %v53
  %v253 = vunpack.c.l.b16 %v54
  %v254 = vunpack.c.l.b16 %v55
  %v255 = vunpack.c.l.b16 %v56
  %v256 = vunpack.c.l.b16 %v57
  %v257 = vunpack.c.l.b16 %v58
  %v258 = vunpack.c.l.b16 %v59
  %v259 = vunpack.c.l.b16 %v60
  %v260 = vunpack.c.l.b16 %v61
  %v261 = vunpack.c.l.b16 %v62
  %v262 = vunpack.c.l.b16 %v63
  %v263 = vunpack.c.l.b16 %v64
  %v264 = vunpack.c.l.b16 %v65
  %v265 = vunpack.c.l.b16 %v66
  %v266 = vunpack.c.l.b16 %v67
  %v267 = vunpack.c.l.b16 %v68
  %v268 = vunpack.c.l.b16 %v69
  %v269 = vunpack.c.l.b16 %v70
  %v270 = vunpack.c.l.b16 %v71
  %v271 = vunpack.c.l.b16 %v72
  %v272 = vunpack.c.l.b16 %v73
  %v273 = vunpack.c.l.b16 %v74
  %v274 = vunpack.c.l.b16 %v75
  %v275 = vunpack.c.l.b16 %v76
  %v276 = vunpack.c.l.b16 %v77
  %v277 = vunpack.c.l.b16 %v78
  %v278 = vunpack.c.l.b16 %v79
  %v279 = vunpack.c.l.b16 %v80
  %v280 = vunpack.c.l.b16 %v81
  %v281 = vunpack.c.l.b16 %v82
  %v282 = vpack.c.b16 %v247, %v246
  %v283 = vpack.c.b16 %v249, %v248
  %v284 = vpack.c.b16 %v251, %v250
  %v285 = vpack.c.b16 %v253, %v252
  %v286 = vpack.c.b16 %v255, %v254
  %v287 = vpack.c.b16 %v257, %v256
  %v288 = vpack.c.b16 %v259, %v258
  %v289 = vpack.c.b16 %v261, %v260
  %v290 = vpack.c.b16 %v263, %v262
  %v291 = vpack.c.b16 %v265, %v264
  %v292 = vpack.c.b16 %v267, %v266
  %v293 = vpack.c.b16 %v269, %v268
  %v294 = vpack.c.b16 %v271, %v270
  %v295 = vpack.c.b16 %v273, %v272
  %v296 = vpack.c.b16 %v275, %v274
  %v297 = vpack.c.b16 %v277, %v276
  %v298 = vpack.c.b16 %v279, %v278
  %v299 = vpack.c.b16 %v281, %v280
  %vm318 = vcmask 261120
  %v320 = vsel %vm318, %v172, 0
  %v323 = vsel %vm318, %v175, 0
  %v326 = vsel %vm318, %v178, 0
  %v329 = vsel %vm318, %v181, 0
  %v332 = vsel %vm318, %v184, 0
  %v335 = vsel %vm318, %v187, 0
  %v338 = vsel %vm318, %v190, 0
  %v341 = vsel %vm318, %v193, 0
  %343 = vmatprep.subr.bf16.mxu0 0
  %344 = vmatpush1.bf16.msra.mxu0 %v282
  %345 = vmatprep.subr.bf16.mxu0 0
  %346 = vmatpush1.bf16.msra.mxu0 %v283
  %347 = vmatprep.subr.bf16.mxu0 0
  %348 = vmatpush1.bf16.msra.mxu0 %v284
  %349 = vmatprep.subr.bf16.mxu0 0
  %350 = vmatpush1.bf16.msra.mxu0 %v285
  %351 = vmatprep.subr.bf16.mxu0 0
  %352 = vmatpush1.bf16.msra.mxu0 %v286
  %353 = vmatprep.subr.bf16.mxu0 0
  %354 = vmatpush1.bf16.msra.mxu0 %v287
  %355 = vmatprep.subr.bf16.mxu0 0
  %356 = vmatpush1.bf16.msra.mxu0 %v288
  %357 = vmatprep.subr.bf16.mxu0 0
  %358 = vmatpush1.bf16.msra.mxu0 %v289
  %359 = vmatprep.subr.bf16.mxu0 0
  %360 = vmatpush1.bf16.msra.mxu0 %v290
  %361 = vmatprep.subr.bf16.mxu0 0
  %362 = vmatpush1.bf16.msra.mxu0 %v291
  %363 = vmatprep.subr.bf16.mxu0 0
  %364 = vmatpush1.bf16.msra.mxu0 %v292
  %365 = vmatprep.subr.bf16.mxu0 0
  %366 = vmatpush1.bf16.msra.mxu0 %v293
  %367 = vmatprep.subr.bf16.mxu0 0
  %368 = vmatpush1.bf16.msra.mxu0 %v294
  %369 = vmatprep.subr.bf16.mxu0 0
  %370 = vmatpush1.bf16.msra.mxu0 %v295
  %371 = vmatprep.subr.bf16.mxu0 0
  %372 = vmatpush1.bf16.msra.mxu0 %v296
  %373 = vmatprep.subr.bf16.mxu0 0
  %374 = vmatpush1.bf16.msra.mxu0 %v297
  %375 = vmatprep.mubr.bf16.mxu0 %v171
  %376 = vmatmul.mubr.bf16.gmra.mrb[0].mxu0 %v170
  %v377 = vpop.f32.mrb[0].mxu0
  %v378 = vadd.f32 %v88, %v377
  %v379 = vpop.f32.mrb[0].mxu0
  %v380 = vpop.f32.mrb[0].mxu0
  %v381 = vadd.f32 %v88, %v380
  %v382 = vpop.f32.mrb[0].mxu0
  %383 = vmatprep.mubr.bf16.mxu0 %v174
  %384 = vmatmul.mubr.bf16.gmra.mrb[0].mxu0 %v173
  %v385 = vpop.f32.mrb[0].mxu0
  %v386 = vadd.f32 %v88, %v385
  %v387 = vpop.f32.mrb[0].mxu0
  %v388 = vpop.f32.mrb[0].mxu0
  %v389 = vadd.f32 %v88, %v388
  %v390 = vpop.f32.mrb[0].mxu0
  %391 = vmatprep.mubr.bf16.mxu0 %v177
  %392 = vmatmul.mubr.bf16.gmra.mrb[0].mxu0 %v176
  %v393 = vpop.f32.mrb[0].mxu0
  %v394 = vadd.f32 %v88, %v393
  %v395 = vpop.f32.mrb[0].mxu0
  %v396 = vpop.f32.mrb[0].mxu0
  %v397 = vadd.f32 %v88, %v396
  %v398 = vpop.f32.mrb[0].mxu0
  %399 = vmatprep.mubr.bf16.mxu0 %v180
  %400 = vmatmul.mubr.bf16.gmra.mrb[0].mxu0 %v179
  %v401 = vpop.f32.mrb[0].mxu0
  %v402 = vadd.f32 %v88, %v401
  %v403 = vpop.f32.mrb[0].mxu0
  %v404 = vpop.f32.mrb[0].mxu0
  %v405 = vadd.f32 %v88, %v404
  %v406 = vpop.f32.mrb[0].mxu0
  %407 = vmatprep.mubr.bf16.mxu0 %v183
  %408 = vmatmul.mubr.bf16.gmra.mrb[0].mxu0 %v182
  %v409 = vpop.f32.mrb[0].mxu0
  %v410 = vadd.f32 %v88, %v409
  %v411 = vpop.f32.mrb[0].mxu0
  %v412 = vpop.f32.mrb[0].mxu0
  %v413 = vadd.f32 %v88, %v412
  %v414 = vpop.f32.mrb[0].mxu0
  %415 = vmatprep.mubr.bf16.mxu0 %v186
  %416 = vmatmul.mubr.bf16.gmra.mrb[0].mxu0 %v185
  %v417 = vpop.f32.mrb[0].mxu0
  %v418 = vadd.f32 %v88, %v417
  %v419 = vpop.f32.mrb[0].mxu0
  %v420 = vpop.f32.mrb[0].mxu0
  %v421 = vadd.f32 %v88, %v420
  %v422 = vpop.f32.mrb[0].mxu0
  %423 = vmatprep.mubr.bf16.mxu0 %v189
  %424 = vmatmul.mubr.bf16.gmra.mrb[0].mxu0 %v188
  %v425 = vpop.f32.mrb[0].mxu0
  %v426 = vadd.f32 %v88, %v425
  %v427 = vpop.f32.mrb[0].mxu0
  %v428 = vpop.f32.mrb[0].mxu0
  %v429 = vadd.f32 %v88, %v428
  %v430 = vpop.f32.mrb[0].mxu0
  %431 = vmatprep.mubr.bf16.mxu0 %v192
  %432 = vmatmul.mubr.bf16.gmra.mrb[0].mxu0 %v191
  %v433 = vpop.f32.mrb[0].mxu0
  %v434 = vadd.f32 %v88, %v433
  %v435 = vpop.f32.mrb[0].mxu0
  %v436 = vpop.f32.mrb[0].mxu0
  %v437 = vadd.f32 %v88, %v436
  %v438 = vpop.f32.mrb[0].mxu0
  %439 = vdwg.mxu0
  %440 = vmatprep.subr.bf16.mxu0 0
  %441 = vmatpush1.bf16.msra.mxu0 %v298
  %442 = vmatprep.subr.bf16.mxu0 0
  %443 = vmatpush1.bf16.msra.mxu0 %v299
  %444 = vmatprep.subr.bf16.mxu0 0
  %445 = vmatpush1.bf16.msra.mxu0 0
  %446 = vmatprep.subr.bf16.mxu0 0
  %447 = vmatpush1.bf16.msra.mxu0 0
  %448 = vmatprep.subr.bf16.mxu0 0
  %449 = vmatpush1.bf16.msra.mxu0 0
  %450 = vmatprep.subr.bf16.mxu0 0
  %451 = vmatpush1.bf16.msra.mxu0 0
  %452 = vmatprep.subr.bf16.mxu0 0
  %453 = vmatpush1.bf16.msra.mxu0 0
  %454 = vmatprep.subr.bf16.mxu0 0
  %455 = vmatpush1.bf16.msra.mxu0 0
  %456 = vmatprep.subr.bf16.mxu0 0
  %457 = vmatpush1.bf16.msra.mxu0 0
  %458 = vmatprep.subr.bf16.mxu0 0
  %459 = vmatpush1.bf16.msra.mxu0 0
  %460 = vmatprep.subr.bf16.mxu0 0
  %461 = vmatpush1.bf16.msra.mxu0 0
  %462 = vmatprep.subr.bf16.mxu0 0
  %463 = vmatpush1.bf16.msra.mxu0 0
  %464 = vmatprep.subr.bf16.mxu0 0
  %465 = vmatpush1.bf16.msra.mxu0 0
  %466 = vmatprep.subr.bf16.mxu0 0
  %467 = vmatpush1.bf16.msra.mxu0 0
  %468 = vmatprep.subr.bf16.mxu0 0
  %469 = vmatpush1.bf16.msra.mxu0 0
  %470 = vmatprep.subr.bf16.mxu0 0
  %471 = vmatpush1.bf16.msra.mxu0 0
  %472 = vmatprep.mubr.bf16.mxu0 0
  %473 = vmatmul.mubr.bf16.gmra.mrb[0].mxu0 %v320
  %v474 = vpop.f32.mrb[0].mxu0
  %v475 = vadd.f32 %v378, %v474
  %v476 = vpop.f32.mrb[0].mxu0
  %v477 = vpop.f32.mrb[0].mxu0
  %v478 = vadd.f32 %v381, %v477
  %v479 = vpop.f32.mrb[0].mxu0
  %480 = vmatprep.mubr.bf16.mxu0 0
  %481 = vmatmul.mubr.bf16.gmra.mrb[0].mxu0 %v323
  %v482 = vpop.f32.mrb[0].mxu0
  %v483 = vadd.f32 %v386, %v482
  %v484 = vpop.f32.mrb[0].mxu0
  %v485 = vpop.f32.mrb[0].mxu0
  %v486 = vadd.f32 %v389, %v485
  %v487 = vpop.f32.mrb[0].mxu0
  %488 = vmatprep.mubr.bf16.mxu0 0
  %489 = vmatmul.mubr.bf16.gmra.mrb[0].mxu0 %v326
  %v490 = vpop.f32.mrb[0].mxu0
  %v491 = vadd.f32 %v394, %v490
  %v492 = vpop.f32.mrb[0].mxu0
  %v493 = vpop.f32.mrb[0].mxu0
  %v494 = vadd.f32 %v397, %v493
  %v495 = vpop.f32.mrb[0].mxu0
  %496 = vmatprep.mubr.bf16.mxu0 0
  %497 = vmatmul.mubr.bf16.gmra.mrb[0].mxu0 %v329
  %v498 = vpop.f32.mrb[0].mxu0
  %v499 = vadd.f32 %v402, %v498
  %v500 = vpop.f32.mrb[0].mxu0
  %v501 = vpop.f32.mrb[0].mxu0
  %v502 = vadd.f32 %v405, %v501
  %v503 = vpop.f32.mrb[0].mxu0
  %504 = vmatprep.mubr.bf16.mxu0 0
  %505 = vmatmul.mubr.bf16.gmra.mrb[0].mxu0 %v332
  %v506 = vpop.f32.mrb[0].mxu0
  %v507 = vadd.f32 %v410, %v506
  %v508 = vpop.f32.mrb[0].mxu0
  %v509 = vpop.f32.mrb[0].mxu0
  %v510 = vadd.f32 %v413, %v509
  %v511 = vpop.f32.mrb[0].mxu0
  %512 = vmatprep.mubr.bf16.mxu0 0
  %513 = vmatmul.mubr.bf16.gmra.mrb[0].mxu0 %v335
  %v514 = vpop.f32.mrb[0].mxu0
  %v515 = vadd.f32 %v418, %v514
  %v516 = vpop.f32.mrb[0].mxu0
  %v517 = vpop.f32.mrb[0].mxu0
  %v518 = vadd.f32 %v421, %v517
  %v519 = vpop.f32.mrb[0].mxu0
  %520 = vmatprep.mubr.bf16.mxu0 0
  %521 = vmatmul.mubr.bf16.gmra.mrb[0].mxu0 %v338
  %v522 = vpop.f32.mrb[0].mxu0
  %v523 = vadd.f32 %v426, %v522
  %v524 = vpop.f32.mrb[0].mxu0
  %v525 = vpop.f32.mrb[0].mxu0
  %v526 = vadd.f32 %v429, %v525
  %v527 = vpop.f32.mrb[0].mxu0
  %528 = vmatprep.mubr.bf16.mxu0 0
  %529 = vmatmul.mubr.bf16.gmra.mrb[0].mxu0 %v341
  %v530 = vpop.f32.mrb[0].mxu0
  %v531 = vadd.f32 %v434, %v530
  %v532 = vpop.f32.mrb[0].mxu0
  %v533 = vpop.f32.mrb[0].mxu0
  %v534 = vadd.f32 %v437, %v533
  %v535 = vpop.f32.mrb[0].mxu0
  %536 = vdwg.mxu0
  %537 = vst [vmem:[%s3] sm:$0xff] %v475
  %538 = vst [vmem:[%s3 + $0x8] sm:$0xff] %v478
  %539 = vst [vmem:[%s3 + $0x10] sm:$0xff] %v483
  %540 = vst [vmem:[%s3 + $0x18] sm:$0xff] %v486
  %541 = vst [vmem:[%s3 + $0x20] sm:$0xff] %v491
  %542 = vst [vmem:[%s3 + $0x28] sm:$0xff] %v494
  %543 = vst [vmem:[%s3 + $0x30] sm:$0xff] %v499
  %544 = vst [vmem:[%s3 + $0x38] sm:$0xff] %v502
  %545 = vst [vmem:[%s3 + $0x40] sm:$0xff] %v507
  %546 = vst [vmem:[%s3 + $0x48] sm:$0xff] %v510
  %547 = vst [vmem:[%s3 + $0x50] sm:$0xff] %v515
  %548 = vst [vmem:[%s3 + $0x58] sm:$0xff] %v518
  %549 = vst [vmem:[%s3 + $0x60] sm:$0xff] %v523
  %550 = vst [vmem:[%s3 + $0x68] sm:$0xff] %v526
  %551 = vst [vmem:[%s3 + $0x70] sm:$0xff] %v531
  %552 = vst [vmem:[%s3 + $0x78] sm:$0xff] %v534
  // Predicated region
  $region14: #{retinanet_forward.33} parent=0 // pred_check
    _
  $region15: #{retinanet_forward.33} parent=0 // pred_check_branch
    %554 = sbr.rel (0) target = $region17
  $region16: #{retinanet_forward.33} parent=0 // pred_region
    _
  $region17: #{retinanet_forward.33} parent=0 // pred_fallthru
    _
  // Predicated region
  $region18: #{retinanet_forward.33} parent=0 // pred_check
    _
  $region19: #{retinanet_forward.33} parent=0 // pred_check_branch
    %556 = sbr.rel (0) target = $region21
  $region20: #{retinanet_forward.33} parent=0 // pred_region
    _
  $region21: #{retinanet_forward.33} parent=0 // pred_fallthru
    _

// kernel: retinanet_forward.37
$region0: #{retinanet_forward.37}
  #allocation0 [shape = 'u32[]', space=smem, size = 0x4, offset = 0x4, fixed_abs, tag = 'smem constant byte address 0x4 - core index']
  #allocation1 [shape = 'u32[144,128]{1,0:T(1,128)}', space=vmem, size = 0x12000, scoped, tag = 'internal scratch']
  %s0 = inlined_call_operand.vmem [shape: bf16[176,288], index: 0, kind: input, shape index: {}]
  %s1 = inlined_call_operand.vmem [shape: bf16[288,128], index: 1, kind: input, shape index: {}]
  %s2 = inlined_call_operand.vmem [shape: f32[1,128], index: 2, kind: input, shape index: {}]
  %s3 = inlined_call_operand.vmem [shape: f32[176,128], index: 3, kind: output, shape index: {}]
  %s4 = sld [smem:[#allocation0]]
  $region22: #{retinanet_forward.37} parent=0
    _
  %s6 = ssub.s32 1, %s4
  %s7 = scalar_select 0, %s6, %s4
  // Predicated region
  $region2: #{retinanet_forward.37} parent=0 // pred_check
    _
  $region3: #{retinanet_forward.37} parent=0 // pred_check_branch
    %9 = sbr.rel (0) target = $region5
  $region4: #{retinanet_forward.37} parent=0 // pred_region
    _
  $region5: #{retinanet_forward.37} parent=0 // pred_fallthru
    _
  // Predicated region
  $region6: #{retinanet_forward.37} parent=0 // pred_check
    _
  $region7: #{retinanet_forward.37} parent=0 // pred_check_branch
    %11 = sbr.rel (0) target = $region9
  $region8: #{retinanet_forward.37} parent=0 // pred_region
    _
  $region9: #{retinanet_forward.37} parent=0 // pred_fallthru
    _
  // Predicated region
  $region10: #{retinanet_forward.37} parent=0 // pred_check
    _
  $region11: #{retinanet_forward.37} parent=0 // pred_check_branch
    %13 = sbr.rel (0) target = $region13
  $region12: #{retinanet_forward.37} parent=0 // pred_region
    _
  $region13: #{retinanet_forward.37} parent=0 // pred_fallthru
    _
  %v15 = vld [vmem:[%s0] sm:$0xff]
  %v16 = vld [vmem:[%s0 + $0x8] sm:$0xf]
  %v17 = vld [vmem:[%s0 + $0xc] sm:$0xff]
  %v18 = vld [vmem:[%s0 + $0x14] sm:$0xf]
  %v19 = vld [vmem:[%s0 + $0x18] sm:$0xff]
  %v20 = vld [vmem:[%s0 + $0x20] sm:$0xf]
  %v21 = vld [vmem:[%s0 + $0x24] sm:$0xff]
  %v22 = vld [vmem:[%s0 + $0x2c] sm:$0xf]
  %v23 = vld [vmem:[%s0 + $0x30] sm:$0xff]
  %v24 = vld [vmem:[%s0 + $0x38] sm:$0xf]
  %v25 = vld [vmem:[%s0 + $0x3c] sm:$0xff]
  %v26 = vld [vmem:[%s0 + $0x44] sm:$0xf]
  %v27 = vld [vmem:[%s0 + $0x48] sm:$0xff]
  %v28 = vld [vmem:[%s0 + $0x50] sm:$0xf]
  %v29 = vld [vmem:[%s0 + $0x54] sm:$0xff]
  %v30 = vld [vmem:[%s0 + $0x5c] sm:$0xf]
  %v31 = vld [vmem:[%s0 + $0x60] sm:$0xff]
  %v32 = vld [vmem:[%s0 + $0x68] sm:$0xf]
  %v33 = vld [vmem:[%s0 + $0x6c] sm:$0xff]
  %v34 = vld [vmem:[%s0 + $0x74] sm:$0xf]
  %v35 = vld [vmem:[%s0 + $0x78] sm:$0xff]
  %v36 = vld [vmem:[%s0 + $0x80] sm:$0xf]
  %v37 = vld [vmem:[%s0 + $0x84] sm:$0xff]
  %v38 = vld [vmem:[%s0 + $0x8c] sm:$0xf]
  %v39 = vld [vmem:[%s0 + $0x90] sm:$0xff]
  %v40 = vld [vmem:[%s0 + $0x98] sm:$0xf]
  %v41 = vld [vmem:[%s0 + $0x9c] sm:$0xff]
  %v42 = vld [vmem:[%s0 + $0xa4] sm:$0xf]
  %v43 = vld [vmem:[%s0 + $0xa8] sm:$0xff]
  %v44 = vld [vmem:[%s0 + $0xb0] sm:$0xf]
  %v45 = vld [vmem:[%s0 + $0xb4] sm:$0xff]
  %v46 = vld [vmem:[%s0 + $0xbc] sm:$0xf]
  %v47 = vld [vmem:[%s0 + $0xc0] sm:$0xff]
  %v48 = vld [vmem:[%s0 + $0xc8] sm:$0xf]
  %v49 = vld [vmem:[%s0 + $0xcc] sm:$0xff]
  %v50 = vld [vmem:[%s0 + $0xd4] sm:$0xf]
  %v51 = vld [vmem:[%s0 + $0xd8] sm:$0xff]
  %v52 = vld [vmem:[%s0 + $0xe0] sm:$0xf]
  %v53 = vld [vmem:[%s0 + $0xe4] sm:$0xff]
  %v54 = vld [vmem:[%s0 + $0xec] sm:$0xf]
  %v55 = vld [vmem:[%s0 + $0xf0] sm:$0xff]
  %v56 = vld [vmem:[%s0 + $0xf8] sm:$0xf]
  %v57 = vld [vmem:[%s0 + $0xfc] sm:$0xff]
  %v58 = vld [vmem:[%s0 + $0x104] sm:$0xf]
  %v59 = vld [vmem:[%s1] sm:$0xf]
  %v60 = vld [vmem:[%s1 + $0x4] sm:$0xf]
  %v61 = vld [vmem:[%s1 + $0x8] sm:$0xf]
  %v62 = vld [vmem:[%s1 + $0xc] sm:$0xf]
  %v63 = vld [vmem:[%s1 + $0x10] sm:$0xf]
  %v64 = vld [vmem:[%s1 + $0x14] sm:$0xf]
  %v65 = vld [vmem:[%s1 + $0x18] sm:$0xf]
  %v66 = vld [vmem:[%s1 + $0x1c] sm:$0xf]
  %v67 = vld [vmem:[%s1 + $0x20] sm:$0xf]
  %v68 = vld [vmem:[%s1 + $0x24] sm:$0xf]
  %v69 = vld [vmem:[%s1 + $0x28] sm:$0xf]
  %v70 = vld [vmem:[%s1 + $0x2c] sm:$0xf]
  %v71 = vld [vmem:[%s1 + $0x30] sm:$0xf]
  %v72 = vld [vmem:[%s1 + $0x34] sm:$0xf]
  %v73 = vld [vmem:[%s1 + $0x38] sm:$0xf]
  %v74 = vld [vmem:[%s1 + $0x3c] sm:$0xf]
  %v75 = vld [vmem:[%s1 + $0x40] sm:$0xf]
  %v76 = vld [vmem:[%s1 + $0x44] sm:$0xf]
  %v77 = vld [vmem:[%s1 + $0x48] sm:$0xf]
  %v78 = vld [vmem:[%s1 + $0x4c] sm:$0xf]
  %v79 = vld [vmem:[%s1 + $0x50] sm:$0xf]
  %v80 = vld [vmem:[%s1 + $0x54] sm:$0xf]
  %v81 = vld [vmem:[%s1 + $0x58] sm:$0xf]
  %v82 = vld [vmem:[%s1 + $0x5c] sm:$0xf]
  %v83 = vld [vmem:[%s1 + $0x60] sm:$0xf]
  %v84 = vld [vmem:[%s1 + $0x64] sm:$0xf]
  %v85 = vld [vmem:[%s1 + $0x68] sm:$0xf]
  %v86 = vld [vmem:[%s1 + $0x6c] sm:$0xf]
  %v87 = vld [vmem:[%s1 + $0x70] sm:$0xf]
  %v88 = vld [vmem:[%s1 + $0x74] sm:$0xf]
  %v89 = vld [vmem:[%s1 + $0x78] sm:$0xf]
  %v90 = vld [vmem:[%s1 + $0x7c] sm:$0xf]
  %v91 = vld [vmem:[%s1 + $0x80] sm:$0xf]
  %v92 = vld [vmem:[%s1 + $0x84] sm:$0xf]
  %v93 = vld [vmem:[%s1 + $0x88] sm:$0xf]
  %v94 = vld [vmem:[%s1 + $0x8c] sm:$0xf]
  %v95 = vld [vmem:[%s2] sm:$0x1]
  %v97 = vlaneseq
  %v98 = vshrl.u32 %v97, 7
  %v99 = vsub.s32 0, %v98
  %v100 = vrot.slane %v95, %v99
  %v146 = vunpack.c.l.b16 %v15
  %v147 = vunpack.c.h.b16 %v15
  %v148 = vunpack.c.l.b16 %v16
  %v149 = vunpack.c.l.b16 %v17
  %v150 = vunpack.c.h.b16 %v17
  %v151 = vunpack.c.l.b16 %v18
  %v152 = vunpack.c.l.b16 %v19
  %v153 = vunpack.c.h.b16 %v19
  %v154 = vunpack.c.l.b16 %v20
  %v155 = vunpack.c.l.b16 %v21
  %v156 = vunpack.c.h.b16 %v21
  %v157 = vunpack.c.l.b16 %v22
  %v158 = vunpack.c.l.b16 %v23
  %v159 = vunpack.c.h.b16 %v23
  %v160 = vunpack.c.l.b16 %v24
  %v161 = vunpack.c.l.b16 %v25
  %v162 = vunpack.c.h.b16 %v25
  %v163 = vunpack.c.l.b16 %v26
  %v164 = vunpack.c.l.b16 %v27
  %v165 = vunpack.c.h.b16 %v27
  %v166 = vunpack.c.l.b16 %v28
  %v167 = vunpack.c.l.b16 %v29
  %v168 = vunpack.c.h.b16 %v29
  %v169 = vunpack.c.l.b16 %v30
  %v170 = vunpack.c.l.b16 %v31
  %v171 = vunpack.c.h.b16 %v31
  %v172 = vunpack.c.l.b16 %v32
  %v173 = vunpack.c.l.b16 %v33
  %v174 = vunpack.c.h.b16 %v33
  %v175 = vunpack.c.l.b16 %v34
  %v176 = vunpack.c.l.b16 %v35
  %v177 = vunpack.c.h.b16 %v35
  %v178 = vunpack.c.l.b16 %v36
  %v179 = vunpack.c.l.b16 %v37
  %v180 = vunpack.c.h.b16 %v37
  %v181 = vunpack.c.l.b16 %v38
  %v182 = vunpack.c.l.b16 %v39
  %v183 = vunpack.c.h.b16 %v39
  %v184 = vunpack.c.l.b16 %v40
  %v185 = vunpack.c.l.b16 %v41
  %v186 = vunpack.c.h.b16 %v41
  %v187 = vunpack.c.l.b16 %v42
  %v188 = vunpack.c.l.b16 %v43
  %v189 = vunpack.c.h.b16 %v43
  %v190 = vunpack.c.l.b16 %v44
  %v191 = vunpack.c.l.b16 %v45
  %v192 = vunpack.c.h.b16 %v45
  %v193 = vunpack.c.l.b16 %v46
  %v194 = vunpack.c.l.b16 %v47
  %v195 = vunpack.c.h.b16 %v47
  %v196 = vunpack.c.l.b16 %v48
  %v197 = vunpack.c.l.b16 %v49
  %v198 = vunpack.c.h.b16 %v49
  %v199 = vunpack.c.l.b16 %v50
  %v200 = vunpack.c.l.b16 %v51
  %v201 = vunpack.c.h.b16 %v51
  %v202 = vunpack.c.l.b16 %v52
  %v203 = vunpack.c.l.b16 %v53
  %v204 = vunpack.c.h.b16 %v53
  %v205 = vunpack.c.l.b16 %v54
  %v206 = vunpack.c.l.b16 %v55
  %v207 = vunpack.c.h.b16 %v55
  %v208 = vunpack.c.l.b16 %v56
  %v209 = vunpack.c.l.b16 %v57
  %v210 = vunpack.c.h.b16 %v57
  %v211 = vunpack.c.l.b16 %v58
  %v212 = vpack.c.b16 %v149, %v146
  %v213 = vpack.c.b16 %v150, %v147
  %v214 = vpack.c.b16 %v151, %v148
  %v215 = vpack.c.b16 %v155, %v152
  %v216 = vpack.c.b16 %v156, %v153
  %v217 = vpack.c.b16 %v157, %v154
  %v218 = vpack.c.b16 %v161, %v158
  %v219 = vpack.c.b16 %v162, %v159
  %v220 = vpack.c.b16 %v163, %v160
  %v221 = vpack.c.b16 %v167, %v164
  %v222 = vpack.c.b16 %v168, %v165
  %v223 = vpack.c.b16 %v169, %v166
  %v224 = vpack.c.b16 %v173, %v170
  %v225 = vpack.c.b16 %v174, %v171
  %v226 = vpack.c.b16 %v175, %v172
  %v227 = vpack.c.b16 %v179, %v176
  %v228 = vpack.c.b16 %v180, %v177
  %v229 = vpack.c.b16 %v181, %v178
  %v230 = vpack.c.b16 %v185, %v182
  %v231 = vpack.c.b16 %v186, %v183
  %v232 = vpack.c.b16 %v187, %v184
  %v233 = vpack.c.b16 %v191, %v188
  %v234 = vpack.c.b16 %v192, %v189
  %v235 = vpack.c.b16 %v193, %v190
  %v236 = vpack.c.b16 %v197, %v194
  %v237 = vpack.c.b16 %v198, %v195
  %v238 = vpack.c.b16 %v199, %v196
  %v239 = vpack.c.b16 %v203, %v200
  %v240 = vpack.c.b16 %v204, %v201
  %v241 = vpack.c.b16 %v205, %v202
  %v242 = vpack.c.b16 %v209, %v206
  %v243 = vpack.c.b16 %v210, %v207
  %v244 = vpack.c.b16 %v211, %v208
  %v303 = vunpack.c.l.b16 %v59
  %v304 = vunpack.c.l.b16 %v60
  %v305 = vunpack.c.l.b16 %v61
  %v306 = vunpack.c.l.b16 %v62
  %v307 = vunpack.c.l.b16 %v63
  %v308 = vunpack.c.l.b16 %v64
  %v309 = vunpack.c.l.b16 %v65
  %v310 = vunpack.c.l.b16 %v66
  %v311 = vunpack.c.l.b16 %v67
  %v312 = vunpack.c.l.b16 %v68
  %v313 = vunpack.c.l.b16 %v69
  %v314 = vunpack.c.l.b16 %v70
  %v315 = vunpack.c.l.b16 %v71
  %v316 = vunpack.c.l.b16 %v72
  %v317 = vunpack.c.l.b16 %v73
  %v318 = vunpack.c.l.b16 %v74
  %v319 = vunpack.c.l.b16 %v75
  %v320 = vunpack.c.l.b16 %v76
  %v321 = vunpack.c.l.b16 %v77
  %v322 = vunpack.c.l.b16 %v78
  %v323 = vunpack.c.l.b16 %v79
  %v324 = vunpack.c.l.b16 %v80
  %v325 = vunpack.c.l.b16 %v81
  %v326 = vunpack.c.l.b16 %v82
  %v327 = vunpack.c.l.b16 %v83
  %v328 = vunpack.c.l.b16 %v84
  %v329 = vunpack.c.l.b16 %v85
  %v330 = vunpack.c.l.b16 %v86
  %v331 = vunpack.c.l.b16 %v87
  %v332 = vunpack.c.l.b16 %v88
  %v333 = vunpack.c.l.b16 %v89
  %v334 = vunpack.c.l.b16 %v90
  %v335 = vunpack.c.l.b16 %v91
  %v336 = vunpack.c.l.b16 %v92
  %v337 = vunpack.c.l.b16 %v93
  %v338 = vunpack.c.l.b16 %v94
  %v339 = vpack.c.b16 %v304, %v303
  %v340 = vpack.c.b16 %v306, %v305
  %v341 = vpack.c.b16 %v308, %v307
  %v342 = vpack.c.b16 %v310, %v309
  %v343 = vpack.c.b16 %v312, %v311
  %v344 = vpack.c.b16 %v314, %v313
  %v345 = vpack.c.b16 %v316, %v315
  %v346 = vpack.c.b16 %v318, %v317
  %v347 = vpack.c.b16 %v320, %v319
  %v348 = vpack.c.b16 %v322, %v321
  %v349 = vpack.c.b16 %v324, %v323
  %v350 = vpack.c.b16 %v326, %v325
  %v351 = vpack.c.b16 %v328, %v327
  %v352 = vpack.c.b16 %v330, %v329
  %v353 = vpack.c.b16 %v332, %v331
  %v354 = vpack.c.b16 %v334, %v333
  %v355 = vpack.c.b16 %v336, %v335
  %v356 = vpack.c.b16 %v338, %v337
  %vm375 = vcmask 261120
  %v377 = vsel %vm375, %v214, 0
  %v380 = vsel %vm375, %v217, 0
  %v383 = vsel %vm375, %v220, 0
  %v386 = vsel %vm375, %v223, 0
  %v389 = vsel %vm375, %v226, 0
  %v392 = vsel %vm375, %v229, 0
  %v395 = vsel %vm375, %v232, 0
  %v398 = vsel %vm375, %v235, 0
  %v401 = vsel %vm375, %v238, 0
  %v404 = vsel %vm375, %v241, 0
  %v407 = vsel %vm375, %v244, 0
  %409 = vmatprep.subr.bf16.mxu0 0
  %410 = vmatpush1.bf16.msra.mxu0 %v339
  %411 = vmatprep.subr.bf16.mxu0 0
  %412 = vmatpush1.bf16.msra.mxu0 %v340
  %413 = vmatprep.subr.bf16.mxu0 0
  %414 = vmatpush1.bf16.msra.mxu0 %v341
  %415 = vmatprep.subr.bf16.mxu0 0
  %416 = vmatpush1.bf16.msra.mxu0 %v342
  %417 = vmatprep.subr.bf16.mxu0 0
  %418 = vmatpush1.bf16.msra.mxu0 %v343
  %419 = vmatprep.subr.bf16.mxu0 0
  %420 = vmatpush1.bf16.msra.mxu0 %v344
  %421 = vmatprep.subr.bf16.mxu0 0
  %422 = vmatpush1.bf16.msra.mxu0 %v345
  %423 = vmatprep.subr.bf16.mxu0 0
  %424 = vmatpush1.bf16.msra.mxu0 %v346
  %425 = vmatprep.subr.bf16.mxu0 0
  %426 = vmatpush1.bf16.msra.mxu0 %v347
  %427 = vmatprep.subr.bf16.mxu0 0
  %428 = vmatpush1.bf16.msra.mxu0 %v348
  %429 = vmatprep.subr.bf16.mxu0 0
  %430 = vmatpush1.bf16.msra.mxu0 %v349
  %431 = vmatprep.subr.bf16.mxu0 0
  %432 = vmatpush1.bf16.msra.mxu0 %v350
  %433 = vmatprep.subr.bf16.mxu0 0
  %434 = vmatpush1.bf16.msra.mxu0 %v351
  %435 = vmatprep.subr.bf16.mxu0 0
  %436 = vmatpush1.bf16.msra.mxu0 %v352
  %437 = vmatprep.subr.bf16.mxu0 0
  %438 = vmatpush1.bf16.msra.mxu0 %v353
  %439 = vmatprep.subr.bf16.mxu0 0
  %440 = vmatpush1.bf16.msra.mxu0 %v354
  %441 = vmatprep.mubr.bf16.mxu0 %v213
  %442 = vmatmul.mubr.bf16.gmra.mrb[0].mxu0 %v212
  %v443 = vpop.f32.mrb[0].mxu0
  %v444 = vadd.f32 %v100, %v443
  %v445 = vpop.f32.mrb[0].mxu0
  %v446 = vpop.f32.mrb[0].mxu0
  %v447 = vadd.f32 %v100, %v446
  %v448 = vpop.f32.mrb[0].mxu0
  %449 = vmatprep.mubr.bf16.mxu0 %v216
  %450 = vmatmul.mubr.bf16.gmra.mrb[0].mxu0 %v215
  %v451 = vpop.f32.mrb[0].mxu0
  %v452 = vadd.f32 %v100, %v451
  %v453 = vpop.f32.mrb[0].mxu0
  %v454 = vpop.f32.mrb[0].mxu0
  %v455 = vadd.f32 %v100, %v454
  %v456 = vpop.f32.mrb[0].mxu0
  %457 = vmatprep.mubr.bf16.mxu0 %v219
  %458 = vmatmul.mubr.bf16.gmra.mrb[0].mxu0 %v218
  %v459 = vpop.f32.mrb[0].mxu0
  %v460 = vadd.f32 %v100, %v459
  %v461 = vpop.f32.mrb[0].mxu0
  %v462 = vpop.f32.mrb[0].mxu0
  %v463 = vadd.f32 %v100, %v462
  %v464 = vpop.f32.mrb[0].mxu0
  %465 = vmatprep.mubr.bf16.mxu0 %v222
  %466 = vmatmul.mubr.bf16.gmra.mrb[0].mxu0 %v221
  %v467 = vpop.f32.mrb[0].mxu0
  %v468 = vadd.f32 %v100, %v467
  %v469 = vpop.f32.mrb[0].mxu0
  %v470 = vpop.f32.mrb[0].mxu0
  %v471 = vadd.f32 %v100, %v470
  %v472 = vpop.f32.mrb[0].mxu0
  %473 = vmatprep.mubr.bf16.mxu0 %v225
  %474 = vmatmul.mubr.bf16.gmra.mrb[0].mxu0 %v224
  %v475 = vpop.f32.mrb[0].mxu0
  %v476 = vadd.f32 %v100, %v475
  %v477 = vpop.f32.mrb[0].mxu0
  %v478 = vpop.f32.mrb[0].mxu0
  %v479 = vadd.f32 %v100, %v478
  %v480 = vpop.f32.mrb[0].mxu0
  %481 = vmatprep.mubr.bf16.mxu0 %v228
  %482 = vmatmul.mubr.bf16.gmra.mrb[0].mxu0 %v227
  %v483 = vpop.f32.mrb[0].mxu0
  %v484 = vadd.f32 %v100, %v483
  %v485 = vpop.f32.mrb[0].mxu0
  %v486 = vpop.f32.mrb[0].mxu0
  %v487 = vadd.f32 %v100, %v486
  %v488 = vpop.f32.mrb[0].mxu0
  %489 = vmatprep.mubr.bf16.mxu0 %v231
  %490 = vmatmul.mubr.bf16.gmra.mrb[0].mxu0 %v230
  %v491 = vpop.f32.mrb[0].mxu0
  %v492 = vadd.f32 %v100, %v491
  %v493 = vpop.f32.mrb[0].mxu0
  %v494 = vpop.f32.mrb[0].mxu0
  %v495 = vadd.f32 %v100, %v494
  %v496 = vpop.f32.mrb[0].mxu0
  %497 = vmatprep.mubr.bf16.mxu0 %v234
  %498 = vmatmul.mubr.bf16.gmra.mrb[0].mxu0 %v233
  %v499 = vpop.f32.mrb[0].mxu0
  %v500 = vadd.f32 %v100, %v499
  %v501 = vpop.f32.mrb[0].mxu0
  %v502 = vpop.f32.mrb[0].mxu0
  %v503 = vadd.f32 %v100, %v502
  %v504 = vpop.f32.mrb[0].mxu0
  %505 = vmatprep.mubr.bf16.mxu0 %v237
  %506 = vmatmul.mubr.bf16.gmra.mrb[0].mxu0 %v236
  %v507 = vpop.f32.mrb[0].mxu0
  %v508 = vadd.f32 %v100, %v507
  %v509 = vpop.f32.mrb[0].mxu0
  %v510 = vpop.f32.mrb[0].mxu0
  %v511 = vadd.f32 %v100, %v510
  %v512 = vpop.f32.mrb[0].mxu0
  %513 = vmatprep.mubr.bf16.mxu0 %v240
  %514 = vmatmul.mubr.bf16.gmra.mrb[0].mxu0 %v239
  %v515 = vpop.f32.mrb[0].mxu0
  %v516 = vadd.f32 %v100, %v515
  %v517 = vpop.f32.mrb[0].mxu0
  %v518 = vpop.f32.mrb[0].mxu0
  %v519 = vadd.f32 %v100, %v518
  %v520 = vpop.f32.mrb[0].mxu0
  %521 = vmatprep.mubr.bf16.mxu0 %v243
  %522 = vmatmul.mubr.bf16.gmra.mrb[0].mxu0 %v242
  %v523 = vpop.f32.mrb[0].mxu0
  %v524 = vadd.f32 %v100, %v523
  %v525 = vpop.f32.mrb[0].mxu0
  %v526 = vpop.f32.mrb[0].mxu0
  %v527 = vadd.f32 %v100, %v526
  %v528 = vpop.f32.mrb[0].mxu0
  %529 = vdwg.mxu0
  %530 = vmatprep.subr.bf16.mxu0 0
  %531 = vmatpush1.bf16.msra.mxu0 %v355
  %532 = vmatprep.subr.bf16.mxu0 0
  %533 = vmatpush1.bf16.msra.mxu0 %v356
  %534 = vmatprep.subr.bf16.mxu0 0
  %535 = vmatpush1.bf16.msra.mxu0 0
  %536 = vmatprep.subr.bf16.mxu0 0
  %537 = vmatpush1.bf16.msra.mxu0 0
  %538 = vmatprep.subr.bf16.mxu0 0
  %539 = vmatpush1.bf16.msra.mxu0 0
  %540 = vmatprep.subr.bf16.mxu0 0
  %541 = vmatpush1.bf16.msra.mxu0 0
  %542 = vmatprep.subr.bf16.mxu0 0
  %543 = vmatpush1.bf16.msra.mxu0 0
  %544 = vmatprep.subr.bf16.mxu0 0
  %545 = vmatpush1.bf16.msra.mxu0 0
  %546 = vmatprep.subr.bf16.mxu0 0
  %547 = vmatpush1.bf16.msra.mxu0 0
  %548 = vmatprep.subr.bf16.mxu0 0
  %549 = vmatpush1.bf16.msra.mxu0 0
  %550 = vmatprep.subr.bf16.mxu0 0
  %551 = vmatpush1.bf16.msra.mxu0 0
  %552 = vmatprep.subr.bf16.mxu0 0
  %553 = vmatpush1.bf16.msra.mxu0 0
  %554 = vmatprep.subr.bf16.mxu0 0
  %555 = vmatpush1.bf16.msra.mxu0 0
  %556 = vmatprep.subr.bf16.mxu0 0
  %557 = vmatpush1.bf16.msra.mxu0 0
  %558 = vmatprep.subr.bf16.mxu0 0
  %559 = vmatpush1.bf16.msra.mxu0 0
  %560 = vmatprep.subr.bf16.mxu0 0
  %561 = vmatpush1.bf16.msra.mxu0 0
  %562 = vmatprep.mubr.bf16.mxu0 0
  %563 = vmatmul.mubr.bf16.gmra.mrb[0].mxu0 %v377
  %v564 = vpop.f32.mrb[0].mxu0
  %v565 = vadd.f32 %v444, %v564
  %v566 = vpop.f32.mrb[0].mxu0
  %v567 = vpop.f32.mrb[0].mxu0
  %v568 = vadd.f32 %v447, %v567
  %v569 = vpop.f32.mrb[0].mxu0
  %570 = vmatprep.mubr.bf16.mxu0 0
  %571 = vmatmul.mubr.bf16.gmra.mrb[0].mxu0 %v380
  %v572 = vpop.f32.mrb[0].mxu0
  %v573 = vadd.f32 %v452, %v572
  %v574 = vpop.f32.mrb[0].mxu0
  %v575 = vpop.f32.mrb[0].mxu0
  %v576 = vadd.f32 %v455, %v575
  %v577 = vpop.f32.mrb[0].mxu0
  %578 = vmatprep.mubr.bf16.mxu0 0
  %579 = vmatmul.mubr.bf16.gmra.mrb[0].mxu0 %v383
  %v580 = vpop.f32.mrb[0].mxu0
  %v581 = vadd.f32 %v460, %v580
  %v582 = vpop.f32.mrb[0].mxu0
  %v583 = vpop.f32.mrb[0].mxu0
  %v584 = vadd.f32 %v463, %v583
  %v585 = vpop.f32.mrb[0].mxu0
  %586 = vmatprep.mubr.bf16.mxu0 0
  %587 = vmatmul.mubr.bf16.gmra.mrb[0].mxu0 %v386
  %v588 = vpop.f32.mrb[0].mxu0
  %v589 = vadd.f32 %v468, %v588
  %v590 = vpop.f32.mrb[0].mxu0
  %v591 = vpop.f32.mrb[0].mxu0
  %v592 = vadd.f32 %v471, %v591
  %v593 = vpop.f32.mrb[0].mxu0
  %594 = vmatprep.mubr.bf16.mxu0 0
  %595 = vmatmul.mubr.bf16.gmra.mrb[0].mxu0 %v389
  %v596 = vpop.f32.mrb[0].mxu0
  %v597 = vadd.f32 %v476, %v596
  %v598 = vpop.f32.mrb[0].mxu0
  %v599 = vpop.f32.mrb[0].mxu0
  %v600 = vadd.f32 %v479, %v599
  %v601 = vpop.f32.mrb[0].mxu0
  %602 = vmatprep.mubr.bf16.mxu0 0
  %603 = vmatmul.mubr.bf16.gmra.mrb[0].mxu0 %v392
  %v604 = vpop.f32.mrb[0].mxu0
  %v605 = vadd.f32 %v484, %v604
  %v606 = vpop.f32.mrb[0].mxu0
  %v607 = vpop.f32.mrb[0].mxu0
  %v608 = vadd.f32 %v487, %v607
  %v609 = vpop.f32.mrb[0].mxu0
  %610 = vmatprep.mubr.bf16.mxu0 0
  %611 = vmatmul.mubr.bf16.gmra.mrb[0].mxu0 %v395
  %v612 = vpop.f32.mrb[0].mxu0
  %v613 = vadd.f32 %v492, %v612
  %v614 = vpop.f32.mrb[0].mxu0
  %v615 = vpop.f32.mrb[0].mxu0
  %v616 = vadd.f32 %v495, %v615
  %v617 = vpop.f32.mrb[0].mxu0
  %618 = vmatprep.mubr.bf16.mxu0 0
  %619 = vmatmul.mubr.bf16.gmra.mrb[0].mxu0 %v398
  %v620 = vpop.f32.mrb[0].mxu0
  %v621 = vadd.f32 %v500, %v620
  %v622 = vpop.f32.mrb[0].mxu0
  %v623 = vpop.f32.mrb[0].mxu0
  %v624 = vadd.f32 %v503, %v623
  %v625 = vpop.f32.mrb[0].mxu0
  %626 = vmatprep.mubr.bf16.mxu0 0
  %627 = vmatmul.mubr.bf16.gmra.mrb[0].mxu0 %v401
  %v628 = vpop.f32.mrb[0].mxu0
  %v629 = vadd.f32 %v508, %v628
  %v630 = vpop.f32.mrb[0].mxu0
  %v631 = vpop.f32.mrb[0].mxu0
  %v632 = vadd.f32 %v511, %v631
  %v633 = vpop.f32.mrb[0].mxu0
  %634 = vmatprep.mubr.bf16.mxu0 0
  %635 = vmatmul.mubr.bf16.gmra.mrb[0].mxu0 %v404
  %v636 = vpop.f32.mrb[0].mxu0
  %v637 = vadd.f32 %v516, %v636
  %v638 = vpop.f32.mrb[0].mxu0
  %v639 = vpop.f32.mrb[0].mxu0
  %v640 = vadd.f32 %v519, %v639
  %v641 = vpop.f32.mrb[0].mxu0
  %642 = vmatprep.mubr.bf16.mxu0 0
  %643 = vmatmul.mubr.bf16.gmra.mrb[0].mxu0 %v407
  %v644 = vpop.f32.mrb[0].mxu0
  %v645 = vadd.f32 %v524, %v644
  %v646 = vpop.f32.mrb[0].mxu0
  %v647 = vpop.f32.mrb[0].mxu0
  %v648 = vadd.f32 %v527, %v647
  %v649 = vpop.f32.mrb[0].mxu0
  %650 = vdwg.mxu0
  %v651 = vmax.f32 %v565, 0.0
  %v652 = vmax.f32 %v568, 0.0
  %v653 = vmax.f32 %v573, 0.0
  %v654 = vmax.f32 %v576, 0.0
  %v655 = vmax.f32 %v581, 0.0
  %v656 = vmax.f32 %v584, 0.0
  %v657 = vmax.f32 %v589, 0.0
  %v658 = vmax.f32 %v592, 0.0
  %v659 = vmax.f32 %v597, 0.0
  %v660 = vmax.f32 %v600, 0.0
  %v661 = vmax.f32 %v605, 0.0
  %v662 = vmax.f32 %v608, 0.0
  %v663 = vmax.f32 %v613, 0.0
  %v664 = vmax.f32 %v616, 0.0
  %v665 = vmax.f32 %v621, 0.0
  %v666 = vmax.f32 %v624, 0.0
  %v667 = vmax.f32 %v629, 0.0
  %v668 = vmax.f32 %v632, 0.0
  %v669 = vmax.f32 %v637, 0.0
  %v670 = vmax.f32 %v640, 0.0
  %v671 = vmax.f32 %v645, 0.0
  %v672 = vmax.f32 %v648, 0.0
  %673 = vst [vmem:[%s3] sm:$0xff] %v651
  %674 = vst [vmem:[%s3 + $0x8] sm:$0xff] %v652
  %675 = vst [vmem:[%s3 + $0x10] sm:$0xff] %v653
  %676 = vst [vmem:[%s3 + $0x18] sm:$0xff] %v654
  %677 = vst [vmem:[%s3 + $0x20] sm:$0xff] %v655
  %678 = vst [vmem:[%s3 + $0x28] sm:$0xff] %v656
  %679 = vst [vmem:[%s3 + $0x30] sm:$0xff] %v657
  %680 = vst [vmem:[%s3 + $0x38] sm:$0xff] %v658
  %681 = vst [vmem:[%s3 + $0x40] sm:$0xff] %v659
  %682 = vst [vmem:[%s3 + $0x48] sm:$0xff] %v660
  %683 = vst [vmem:[%s3 + $0x50] sm:$0xff] %v661
  %684 = vst [vmem:[%s3 + $0x58] sm:$0xff] %v662
  %685 = vst [vmem:[%s3 + $0x60] sm:$0xff] %v663
  %686 = vst [vmem:[%s3 + $0x68] sm:$0xff] %v664
  %687 = vst [vmem:[%s3 + $0x70] sm:$0xff] %v665
  %688 = vst [vmem:[%s3 + $0x78] sm:$0xff] %v666
  %689 = vst [vmem:[%s3 + $0x80] sm:$0xff] %v667
  %690 = vst [vmem:[%s3 + $0x88] sm:$0xff] %v668
  %691 = vst [vmem:[%s3 + $0x90] sm:$0xff] %v669
  %692 = vst [vmem:[%s3 + $0x98] sm:$0xff] %v670
  %693 = vst [vmem:[%s3 + $0xa0] sm:$0xff] %v671
  %694 = vst [vmem:[%s3 + $0xa8] sm:$0xff] %v672
  // Predicated region
  $region14: #{retinanet_forward.37} parent=0 // pred_check
    _
  $region15: #{retinanet_forward.37} parent=0 // pred_check_branch
    %696 = sbr.rel (0) target = $region17
  $region16: #{retinanet_forward.37} parent=0 // pred_region
    _
  $region17: #{retinanet_forward.37} parent=0 // pred_fallthru
    _
  // Predicated region
  $region18: #{retinanet_forward.37} parent=0 // pred_check
    _
  $region19: #{retinanet_forward.37} parent=0 // pred_check_branch
    %698 = sbr.rel (0) target = $region21
  $region20: #{retinanet_forward.37} parent=0 // pred_region
    _
  $region21: #{retinanet_forward.37} parent=0 // pred_fallthru
    _

// kernel: retinanet_forward.41
$region0: #{retinanet_forward.41}
  #allocation0 [shape = 'u32[]', space=smem, size = 0x4, offset = 0x4, fixed_abs, tag = 'smem constant byte address 0x4 - core index']
  #allocation1 [shape = 'u32[144,128]{1,0:T(1,128)}', space=vmem, size = 0x12000, scoped, tag = 'internal scratch']
  %s0 = inlined_call_operand.vmem [shape: bf16[176,288], index: 0, kind: input, shape index: {}]
  %s1 = inlined_call_operand.vmem [shape: bf16[288,128], index: 1, kind: input, shape index: {}]
  %s2 = inlined_call_operand.vmem [shape: f32[1,128], index: 2, kind: input, shape index: {}]
  %s3 = inlined_call_operand.vmem [shape: f32[176,128], index: 3, kind: output, shape index: {}]
  %s4 = sld [smem:[#allocation0]]
  $region22: #{retinanet_forward.41} parent=0
    _
  %s6 = ssub.s32 1, %s4
  %s7 = scalar_select 0, %s6, %s4
  // Predicated region
  $region2: #{retinanet_forward.41} parent=0 // pred_check
    _
  $region3: #{retinanet_forward.41} parent=0 // pred_check_branch
    %9 = sbr.rel (0) target = $region5
  $region4: #{retinanet_forward.41} parent=0 // pred_region
    _
  $region5: #{retinanet_forward.41} parent=0 // pred_fallthru
    _
  // Predicated region
  $region6: #{retinanet_forward.41} parent=0 // pred_check
    _
  $region7: #{retinanet_forward.41} parent=0 // pred_check_branch
    %11 = sbr.rel (0) target = $region9
  $region8: #{retinanet_forward.41} parent=0 // pred_region
    _
  $region9: #{retinanet_forward.41} parent=0 // pred_fallthru
    _
  // Predicated region
  $region10: #{retinanet_forward.41} parent=0 // pred_check
    _
  $region11: #{retinanet_forward.41} parent=0 // pred_check_branch
    %13 = sbr.rel (0) target = $region13
  $region12: #{retinanet_forward.41} parent=0 // pred_region
    _
  $region13: #{retinanet_forward.41} parent=0 // pred_fallthru
    _
  %v15 = vld [vmem:[%s0] sm:$0xff]
  %v16 = vld [vmem:[%s0 + $0x8] sm:$0xf]
  %v17 = vld [vmem:[%s0 + $0xc] sm:$0xff]
  %v18 = vld [vmem:[%s0 + $0x14] sm:$0xf]
  %v19 = vld [vmem:[%s0 + $0x18] sm:$0xff]
  %v20 = vld [vmem:[%s0 + $0x20] sm:$0xf]
  %v21 = vld [vmem:[%s0 + $0x24] sm:$0xff]
  %v22 = vld [vmem:[%s0 + $0x2c] sm:$0xf]
  %v23 = vld [vmem:[%s0 + $0x30] sm:$0xff]
  %v24 = vld [vmem:[%s0 + $0x38] sm:$0xf]
  %v25 = vld [vmem:[%s0 + $0x3c] sm:$0xff]
  %v26 = vld [vmem:[%s0 + $0x44] sm:$0xf]
  %v27 = vld [vmem:[%s0 + $0x48] sm:$0xff]
  %v28 = vld [vmem:[%s0 + $0x50] sm:$0xf]
  %v29 = vld [vmem:[%s0 + $0x54] sm:$0xff]
  %v30 = vld [vmem:[%s0 + $0x5c] sm:$0xf]
  %v31 = vld [vmem:[%s0 + $0x60] sm:$0xff]
  %v32 = vld [vmem:[%s0 + $0x68] sm:$0xf]
  %v33 = vld [vmem:[%s0 + $0x6c] sm:$0xff]
  %v34 = vld [vmem:[%s0 + $0x74] sm:$0xf]
  %v35 = vld [vmem:[%s0 + $0x78] sm:$0xff]
  %v36 = vld [vmem:[%s0 + $0x80] sm:$0xf]
  %v37 = vld [vmem:[%s0 + $0x84] sm:$0xff]
  %v38 = vld [vmem:[%s0 + $0x8c] sm:$0xf]
  %v39 = vld [vmem:[%s0 + $0x90] sm:$0xff]
  %v40 = vld [vmem:[%s0 + $0x98] sm:$0xf]
  %v41 = vld [vmem:[%s0 + $0x9c] sm:$0xff]
  %v42 = vld [vmem:[%s0 + $0xa4] sm:$0xf]
  %v43 = vld [vmem:[%s0 + $0xa8] sm:$0xff]
  %v44 = vld [vmem:[%s0 + $0xb0] sm:$0xf]
  %v45 = vld [vmem:[%s0 + $0xb4] sm:$0xff]
  %v46 = vld [vmem:[%s0 + $0xbc] sm:$0xf]
  %v47 = vld [vmem:[%s0 + $0xc0] sm:$0xff]
  %v48 = vld [vmem:[%s0 + $0xc8] sm:$0xf]
  %v49 = vld [vmem:[%s0 + $0xcc] sm:$0xff]
  %v50 = vld [vmem:[%s0 + $0xd4] sm:$0xf]
  %v51 = vld [vmem:[%s0 + $0xd8] sm:$0xff]
  %v52 = vld [vmem:[%s0 + $0xe0] sm:$0xf]
  %v53 = vld [vmem:[%s0 + $0xe4] sm:$0xff]
  %v54 = vld [vmem:[%s0 + $0xec] sm:$0xf]
  %v55 = vld [vmem:[%s0 + $0xf0] sm:$0xff]
  %v56 = vld [vmem:[%s0 + $0xf8] sm:$0xf]
  %v57 = vld [vmem:[%s0 + $0xfc] sm:$0xff]
  %v58 = vld [vmem:[%s0 + $0x104] sm:$0xf]
  %v59 = vld [vmem:[%s1] sm:$0xf]
  %v60 = vld [vmem:[%s1 + $0x4] sm:$0xf]
  %v61 = vld [vmem:[%s1 + $0x8] sm:$0xf]
  %v62 = vld [vmem:[%s1 + $0xc] sm:$0xf]
  %v63 = vld [vmem:[%s1 + $0x10] sm:$0xf]
  %v64 = vld [vmem:[%s1 + $0x14] sm:$0xf]
  %v65 = vld [vmem:[%s1 + $0x18] sm:$0xf]
  %v66 = vld [vmem:[%s1 + $0x1c] sm:$0xf]
  %v67 = vld [vmem:[%s1 + $0x20] sm:$0xf]
  %v68 = vld [vmem:[%s1 + $0x24] sm:$0xf]
  %v69 = vld [vmem:[%s1 + $0x28] sm:$0xf]
  %v70 = vld [vmem:[%s1 + $0x2c] sm:$0xf]
  %v71 = vld [vmem:[%s1 + $0x30] sm:$0xf]
  %v72 = vld [vmem:[%s1 + $0x34] sm:$0xf]
  %v73 = vld [vmem:[%s1 + $0x38] sm:$0xf]
  %v74 = vld [vmem:[%s1 + $0x3c] sm:$0xf]
  %v75 = vld [vmem:[%s1 + $0x40] sm:$0xf]
  %v76 = vld [vmem:[%s1 + $0x44] sm:$0xf]
  %v77 = vld [vmem:[%s1 + $0x48] sm:$0xf]
  %v78 = vld [vmem:[%s1 + $0x4c] sm:$0xf]
  %v79 = vld [vmem:[%s1 + $0x50] sm:$0xf]
  %v80 = vld [vmem:[%s1 + $0x54] sm:$0xf]
  %v81 = vld [vmem:[%s1 + $0x58] sm:$0xf]
  %v82 = vld [vmem:[%s1 + $0x5c] sm:$0xf]
  %v83 = vld [vmem:[%s1 + $0x60] sm:$0xf]
  %v84 = vld [vmem:[%s1 + $0x64] sm:$0xf]
  %v85 = vld [vmem:[%s1 + $0x68] sm:$0xf]
  %v86 = vld [vmem:[%s1 + $0x6c] sm:$0xf]
  %v87 = vld [vmem:[%s1 + $0x70] sm:$0xf]
  %v88 = vld [vmem:[%s1 + $0x74] sm:$0xf]
  %v89 = vld [vmem:[%s1 + $0x78] sm:$0xf]
  %v90 = vld [vmem:[%s1 + $0x7c] sm:$0xf]
  %v91 = vld [vmem:[%s1 + $0x80] sm:$0xf]
  %v92 = vld [vmem:[%s1 + $0x84] sm:$0xf]
  %v93 = vld [vmem:[%s1 + $0x88] sm:$0xf]
  %v94 = vld [vmem:[%s1 + $0x8c] sm:$0xf]
  %v95 = vld [vmem:[%s2] sm:$0x1]
  %v97 = vlaneseq
  %v98 = vshrl.u32 %v97, 7
  %v99 = vsub.s32 0, %v98
  %v100 = vrot.slane %v95, %v99
  %v146 = vunpack.c.l.b16 %v15
  %v147 = vunpack.c.h.b16 %v15
  %v148 = vunpack.c.l.b16 %v16
  %v149 = vunpack.c.l.b16 %v17
  %v150 = vunpack.c.h.b16 %v17
  %v151 = vunpack.c.l.b16 %v18
  %v152 = vunpack.c.l.b16 %v19
  %v153 = vunpack.c.h.b16 %v19
  %v154 = vunpack.c.l.b16 %v20
  %v155 = vunpack.c.l.b16 %v21
  %v156 = vunpack.c.h.b16 %v21
  %v157 = vunpack.c.l.b16 %v22
  %v158 = vunpack.c.l.b16 %v23
  %v159 = vunpack.c.h.b16 %v23
  %v160 = vunpack.c.l.b16 %v24
  %v161 = vunpack.c.l.b16 %v25
  %v162 = vunpack.c.h.b16 %v25
  %v163 = vunpack.c.l.b16 %v26
  %v164 = vunpack.c.l.b16 %v27
  %v165 = vunpack.c.h.b16 %v27
  %v166 = vunpack.c.l.b16 %v28
  %v167 = vunpack.c.l.b16 %v29
  %v168 = vunpack.c.h.b16 %v29
  %v169 = vunpack.c.l.b16 %v30
  %v170 = vunpack.c.l.b16 %v31
  %v171 = vunpack.c.h.b16 %v31
  %v172 = vunpack.c.l.b16 %v32
  %v173 = vunpack.c.l.b16 %v33
  %v174 = vunpack.c.h.b16 %v33
  %v175 = vunpack.c.l.b16 %v34
  %v176 = vunpack.c.l.b16 %v35
  %v177 = vunpack.c.h.b16 %v35
  %v178 = vunpack.c.l.b16 %v36
  %v179 = vunpack.c.l.b16 %v37
  %v180 = vunpack.c.h.b16 %v37
  %v181 = vunpack.c.l.b16 %v38
  %v182 = vunpack.c.l.b16 %v39
  %v183 = vunpack.c.h.b16 %v39
  %v184 = vunpack.c.l.b16 %v40
  %v185 = vunpack.c.l.b16 %v41
  %v186 = vunpack.c.h.b16 %v41
  %v187 = vunpack.c.l.b16 %v42
  %v188 = vunpack.c.l.b16 %v43
  %v189 = vunpack.c.h.b16 %v43
  %v190 = vunpack.c.l.b16 %v44
  %v191 = vunpack.c.l.b16 %v45
  %v192 = vunpack.c.h.b16 %v45
  %v193 = vunpack.c.l.b16 %v46
  %v194 = vunpack.c.l.b16 %v47
  %v195 = vunpack.c.h.b16 %v47
  %v196 = vunpack.c.l.b16 %v48
  %v197 = vunpack.c.l.b16 %v49
  %v198 = vunpack.c.h.b16 %v49
  %v199 = vunpack.c.l.b16 %v50
  %v200 = vunpack.c.l.b16 %v51
  %v201 = vunpack.c.h.b16 %v51
  %v202 = vunpack.c.l.b16 %v52
  %v203 = vunpack.c.l.b16 %v53
  %v204 = vunpack.c.h.b16 %v53
  %v205 = vunpack.c.l.b16 %v54
  %v206 = vunpack.c.l.b16 %v55
  %v207 = vunpack.c.h.b16 %v55
  %v208 = vunpack.c.l.b16 %v56
  %v209 = vunpack.c.l.b16 %v57
  %v210 = vunpack.c.h.b16 %v57
  %v211 = vunpack.c.l.b16 %v58
  %v212 = vpack.c.b16 %v149, %v146
  %v213 = vpack.c.b16 %v150, %v147
  %v214 = vpack.c.b16 %v151, %v148
  %v215 = vpack.c.b16 %v155, %v152
  %v216 = vpack.c.b16 %v156, %v153
  %v217 = vpack.c.b16 %v157, %v154
  %v218 = vpack.c.b16 %v161, %v158
  %v219 = vpack.c.b16 %v162, %v159
  %v220 = vpack.c.b16 %v163, %v160
  %v221 = vpack.c.b16 %v167, %v164
  %v222 = vpack.c.b16 %v168, %v165
  %v223 = vpack.c.b16 %v169, %v166
  %v224 = vpack.c.b16 %v173, %v170
  %v225 = vpack.c.b16 %v174, %v171
  %v226 = vpack.c.b16 %v175, %v172
  %v227 = vpack.c.b16 %v179, %v176
  %v228 = vpack.c.b16 %v180, %v177
  %v229 = vpack.c.b16 %v181, %v178
  %v230 = vpack.c.b16 %v185, %v182
  %v231 = vpack.c.b16 %v186, %v183
  %v232 = vpack.c.b16 %v187, %v184
  %v233 = vpack.c.b16 %v191, %v188
  %v234 = vpack.c.b16 %v192, %v189
  %v235 = vpack.c.b16 %v193, %v190
  %v236 = vpack.c.b16 %v197, %v194
  %v237 = vpack.c.b16 %v198, %v195
  %v238 = vpack.c.b16 %v199, %v196
  %v239 = vpack.c.b16 %v203, %v200
  %v240 = vpack.c.b16 %v204, %v201
  %v241 = vpack.c.b16 %v205, %v202
  %v242 = vpack.c.b16 %v209, %v206
  %v243 = vpack.c.b16 %v210, %v207
  %v244 = vpack.c.b16 %v211, %v208
  %v303 = vunpack.c.l.b16 %v59
  %v304 = vunpack.c.l.b16 %v60
  %v305 = vunpack.c.l.b16 %v61
  %v306 = vunpack.c.l.b16 %v62
  %v307 = vunpack.c.l.b16 %v63
  %v308 = vunpack.c.l.b16 %v64
  %v309 = vunpack.c.l.b16 %v65
  %v310 = vunpack.c.l.b16 %v66
  %v311 = vunpack.c.l.b16 %v67
  %v312 = vunpack.c.l.b16 %v68
  %v313 = vunpack.c.l.b16 %v69
  %v314 = vunpack.c.l.b16 %v70
  %v315 = vunpack.c.l.b16 %v71
  %v316 = vunpack.c.l.b16 %v72
  %v317 = vunpack.c.l.b16 %v73
  %v318 = vunpack.c.l.b16 %v74
  %v319 = vunpack.c.l.b16 %v75
  %v320 = vunpack.c.l.b16 %v76
  %v321 = vunpack.c.l.b16 %v77
  %v322 = vunpack.c.l.b16 %v78
  %v323 = vunpack.c.l.b16 %v79
  %v324 = vunpack.c.l.b16 %v80
  %v325 = vunpack.c.l.b16 %v81
  %v326 = vunpack.c.l.b16 %v82
  %v327 = vunpack.c.l.b16 %v83
  %v328 = vunpack.c.l.b16 %v84
  %v329 = vunpack.c.l.b16 %v85
  %v330 = vunpack.c.l.b16 %v86
  %v331 = vunpack.c.l.b16 %v87
  %v332 = vunpack.c.l.b16 %v88
  %v333 = vunpack.c.l.b16 %v89
  %v334 = vunpack.c.l.b16 %v90
  %v335 = vunpack.c.l.b16 %v91
  %v336 = vunpack.c.l.b16 %v92
  %v337 = vunpack.c.l.b16 %v93
  %v338 = vunpack.c.l.b16 %v94
  %v339 = vpack.c.b16 %v304, %v303
  %v340 = vpack.c.b16 %v306, %v305
  %v341 = vpack.c.b16 %v308, %v307
  %v342 = vpack.c.b16 %v310, %v309
  %v343 = vpack.c.b16 %v312, %v311
  %v344 = vpack.c.b16 %v314, %v313
  %v345 = vpack.c.b16 %v316, %v315
  %v346 = vpack.c.b16 %v318, %v317
  %v347 = vpack.c.b16 %v320, %v319
  %v348 = vpack.c.b16 %v322, %v321
  %v349 = vpack.c.b16 %v324, %v323
  %v350 = vpack.c.b16 %v326, %v325
  %v351 = vpack.c.b16 %v328, %v327
  %v352 = vpack.c.b16 %v330, %v329
  %v353 = vpack.c.b16 %v332, %v331
  %v354 = vpack.c.b16 %v334, %v333
  %v355 = vpack.c.b16 %v336, %v335
  %v356 = vpack.c.b16 %v338, %v337
  %vm375 = vcmask 261120
  %v377 = vsel %vm375, %v214, 0
  %v380 = vsel %vm375, %v217, 0
  %v383 = vsel %vm375, %v220, 0
  %v386 = vsel %vm375, %v223, 0
  %v389 = vsel %vm375, %v226, 0
  %v392 = vsel %vm375, %v229, 0
  %v395 = vsel %vm375, %v232, 0
  %v398 = vsel %vm375, %v235, 0
  %v401 = vsel %vm375, %v238, 0
  %v404 = vsel %vm375, %v241, 0
  %v407 = vsel %vm375, %v244, 0
  %409 = vmatprep.subr.bf16.mxu0 0
  %410 = vmatpush1.bf16.msra.mxu0 %v339
  %411 = vmatprep.subr.bf16.mxu0 0
  %412 = vmatpush1.bf16.msra.mxu0 %v340
  %413 = vmatprep.subr.bf16.mxu0 0
  %414 = vmatpush1.bf16.msra.mxu0 %v341
  %415 = vmatprep.subr.bf16.mxu0 0
  %416 = vmatpush1.bf16.msra.mxu0 %v342
  %417 = vmatprep.subr.bf16.mxu0 0
  %418 = vmatpush1.bf16.msra.mxu0 %v343
  %419 = vmatprep.subr.bf16.mxu0 0
  %420 = vmatpush1.bf16.msra.mxu0 %v344
  %421 = vmatprep.subr.bf16.mxu0 0
  %422 = vmatpush1.bf16.msra.mxu0 %v345
  %423 = vmatprep.subr.bf16.mxu0 0
  %424 = vmatpush1.bf16.msra.mxu0 %v346
  %425 = vmatprep.subr.bf16.mxu0 0
  %426 = vmatpush1.bf16.msra.mxu0 %v347
  %427 = vmatprep.subr.bf16.mxu0 0
  %428 = vmatpush1.bf16.msra.mxu0 %v348
  %429 = vmatprep.subr.bf16.mxu0 0
  %430 = vmatpush1.bf16.msra.mxu0 %v349
  %431 = vmatprep.subr.bf16.mxu0 0
  %432 = vmatpush1.bf16.msra.mxu0 %v350
  %433 = vmatprep.subr.bf16.mxu0 0
  %434 = vmatpush1.bf16.msra.mxu0 %v351
  %435 = vmatprep.subr.bf16.mxu0 0
  %436 = vmatpush1.bf16.msra.mxu0 %v352
  %437 = vmatprep.subr.bf16.mxu0 0
  %438 = vmatpush1.bf16.msra.mxu0 %v353
  %439 = vmatprep.subr.bf16.mxu0 0
  %440 = vmatpush1.bf16.msra.mxu0 %v354
  %441 = vmatprep.mubr.bf16.mxu0 %v213
  %442 = vmatmul.mubr.bf16.gmra.mrb[0].mxu0 %v212
  %v443 = vpop.f32.mrb[0].mxu0
  %v444 = vadd.f32 %v100, %v443
  %v445 = vpop.f32.mrb[0].mxu0
  %v446 = vpop.f32.mrb[0].mxu0
  %v447 = vadd.f32 %v100, %v446
  %v448 = vpop.f32.mrb[0].mxu0
  %449 = vmatprep.mubr.bf16.mxu0 %v216
  %450 = vmatmul.mubr.bf16.gmra.mrb[0].mxu0 %v215
  %v451 = vpop.f32.mrb[0].mxu0
  %v452 = vadd.f32 %v100, %v451
  %v453 = vpop.f32.mrb[0].mxu0
  %v454 = vpop.f32.mrb[0].mxu0
  %v455 = vadd.f32 %v100, %v454
  %v456 = vpop.f32.mrb[0].mxu0
  %457 = vmatprep.mubr.bf16.mxu0 %v219
  %458 = vmatmul.mubr.bf16.gmra.mrb[0].mxu0 %v218
  %v459 = vpop.f32.mrb[0].mxu0
  %v460 = vadd.f32 %v100, %v459
  %v461 = vpop.f32.mrb[0].mxu0
  %v462 = vpop.f32.mrb[0].mxu0
  %v463 = vadd.f32 %v100, %v462
  %v464 = vpop.f32.mrb[0].mxu0
  %465 = vmatprep.mubr.bf16.mxu0 %v222
  %466 = vmatmul.mubr.bf16.gmra.mrb[0].mxu0 %v221
  %v467 = vpop.f32.mrb[0].mxu0
  %v468 = vadd.f32 %v100, %v467
  %v469 = vpop.f32.mrb[0].mxu0
  %v470 = vpop.f32.mrb[0].mxu0
  %v471 = vadd.f32 %v100, %v470
  %v472 = vpop.f32.mrb[0].mxu0
  %473 = vmatprep.mubr.bf16.mxu0 %v225
  %474 = vmatmul.mubr.bf16.gmra.mrb[0].mxu0 %v224
  %v475 = vpop.f32.mrb[0].mxu0
  %v476 = vadd.f32 %v100, %v475
  %v477 = vpop.f32.mrb[0].mxu0
  %v478 = vpop.f32.mrb[0].mxu0
  %v479 = vadd.f32 %v100, %v478
  %v480 = vpop.f32.mrb[0].mxu0
  %481 = vmatprep.mubr.bf16.mxu0 %v228
  %482 = vmatmul.mubr.bf16.gmra.mrb[0].mxu0 %v227
  %v483 = vpop.f32.mrb[0].mxu0
  %v484 = vadd.f32 %v100, %v483
  %v485 = vpop.f32.mrb[0].mxu0
  %v486 = vpop.f32.mrb[0].mxu0
  %v487 = vadd.f32 %v100, %v486
  %v488 = vpop.f32.mrb[0].mxu0
  %489 = vmatprep.mubr.bf16.mxu0 %v231
  %490 = vmatmul.mubr.bf16.gmra.mrb[0].mxu0 %v230
  %v491 = vpop.f32.mrb[0].mxu0
  %v492 = vadd.f32 %v100, %v491
  %v493 = vpop.f32.mrb[0].mxu0
  %v494 = vpop.f32.mrb[0].mxu0
  %v495 = vadd.f32 %v100, %v494
  %v496 = vpop.f32.mrb[0].mxu0
  %497 = vmatprep.mubr.bf16.mxu0 %v234
  %498 = vmatmul.mubr.bf16.gmra.mrb[0].mxu0 %v233
  %v499 = vpop.f32.mrb[0].mxu0
  %v500 = vadd.f32 %v100, %v499
  %v501 = vpop.f32.mrb[0].mxu0
  %v502 = vpop.f32.mrb[0].mxu0
  %v503 = vadd.f32 %v100, %v502
  %v504 = vpop.f32.mrb[0].mxu0
  %505 = vmatprep.mubr.bf16.mxu0 %v237
  %506 = vmatmul.mubr.bf16.gmra.mrb[0].mxu0 %v236
  %v507 = vpop.f32.mrb[0].mxu0
  %v508 = vadd.f32 %v100, %v507
  %v509 = vpop.f32.mrb[0].mxu0
  %v510 = vpop.f32.mrb[0].mxu0
  %v511 = vadd.f32 %v100, %v510
  %v512 = vpop.f32.mrb[0].mxu0
  %513 = vmatprep.mubr.bf16.mxu0 %v240
  %514 = vmatmul.mubr.bf16.gmra.mrb[0].mxu0 %v239
  %v515 = vpop.f32.mrb[0].mxu0
  %v516 = vadd.f32 %v100, %v515
  %v517 = vpop.f32.mrb[0].mxu0
  %v518 = vpop.f32.mrb[0].mxu0
  %v519 = vadd.f32 %v100, %v518
  %v520 = vpop.f32.mrb[0].mxu0
  %521 = vmatprep.mubr.bf16.mxu0 %v243
  %522 = vmatmul.mubr.bf16.gmra.mrb[0].mxu0 %v242
  %v523 = vpop.f32.mrb[0].mxu0
  %v524 = vadd.f32 %v100, %v523
  %v525 = vpop.f32.mrb[0].mxu0
  %v526 = vpop.f32.mrb[0].mxu0
  %v527 = vadd.f32 %v100, %v526
  %v528 = vpop.f32.mrb[0].mxu0
  %529 = vdwg.mxu0
  %530 = vmatprep.subr.bf16.mxu0 0
  %531 = vmatpush1.bf16.msra.mxu0 %v355
  %532 = vmatprep.subr.bf16.mxu0 0
  %533 = vmatpush1.bf16.msra.mxu0 %v356
  %534 = vmatprep.subr.bf16.mxu0 0
  %535 = vmatpush1.bf16.msra.mxu0 0
  %536 = vmatprep.subr.bf16.mxu0 0
  %537 = vmatpush1.bf16.msra.mxu0 0
  %538 = vmatprep.subr.bf16.mxu0 0
  %539 = vmatpush1.bf16.msra.mxu0 0
  %540 = vmatprep.subr.bf16.mxu0 0
  %541 = vmatpush1.bf16.msra.mxu0 0
  %542 = vmatprep.subr.bf16.mxu0 0
  %543 = vmatpush1.bf16.msra.mxu0 0
  %544 = vmatprep.subr.bf16.mxu0 0
  %545 = vmatpush1.bf16.msra.mxu0 0
  %546 = vmatprep.subr.bf16.mxu0 0
  %547 = vmatpush1.bf16.msra.mxu0 0
  %548 = vmatprep.subr.bf16.mxu0 0
  %549 = vmatpush1.bf16.msra.mxu0 0
  %550 = vmatprep.subr.bf16.mxu0 0
  %551 = vmatpush1.bf16.msra.mxu0 0
  %552 = vmatprep.subr.bf16.mxu0 0
  %553 = vmatpush1.bf16.msra.mxu0 0
  %554 = vmatprep.subr.bf16.mxu0 0
  %555 = vmatpush1.bf16.msra.mxu0 0
  %556 = vmatprep.subr.bf16.mxu0 0
  %557 = vmatpush1.bf16.msra.mxu0 0
  %558 = vmatprep.subr.bf16.mxu0 0
  %559 = vmatpush1.bf16.msra.mxu0 0
  %560 = vmatprep.subr.bf16.mxu0 0
  %561 = vmatpush1.bf16.msra.mxu0 0
  %562 = vmatprep.mubr.bf16.mxu0 0
  %563 = vmatmul.mubr.bf16.gmra.mrb[0].mxu0 %v377
  %v564 = vpop.f32.mrb[0].mxu0
  %v565 = vadd.f32 %v444, %v564
  %v566 = vpop.f32.mrb[0].mxu0
  %v567 = vpop.f32.mrb[0].mxu0
  %v568 = vadd.f32 %v447, %v567
  %v569 = vpop.f32.mrb[0].mxu0
  %570 = vmatprep.mubr.bf16.mxu0 0
  %571 = vmatmul.mubr.bf16.gmra.mrb[0].mxu0 %v380
  %v572 = vpop.f32.mrb[0].mxu0
  %v573 = vadd.f32 %v452, %v572
  %v574 = vpop.f32.mrb[0].mxu0
  %v575 = vpop.f32.mrb[0].mxu0
  %v576 = vadd.f32 %v455, %v575
  %v577 = vpop.f32.mrb[0].mxu0
  %578 = vmatprep.mubr.bf16.mxu0 0
  %579 = vmatmul.mubr.bf16.gmra.mrb[0].mxu0 %v383
  %v580 = vpop.f32.mrb[0].mxu0
  %v581 = vadd.f32 %v460, %v580
  %v582 = vpop.f32.mrb[0].mxu0
  %v583 = vpop.f32.mrb[0].mxu0
  %v584 = vadd.f32 %v463, %v583
  %v585 = vpop.f32.mrb[0].mxu0
  %586 = vmatprep.mubr.bf16.mxu0 0
  %587 = vmatmul.mubr.bf16.gmra.mrb[0].mxu0 %v386
  %v588 = vpop.f32.mrb[0].mxu0
  %v589 = vadd.f32 %v468, %v588
  %v590 = vpop.f32.mrb[0].mxu0
  %v591 = vpop.f32.mrb[0].mxu0
  %v592 = vadd.f32 %v471, %v591
  %v593 = vpop.f32.mrb[0].mxu0
  %594 = vmatprep.mubr.bf16.mxu0 0
  %595 = vmatmul.mubr.bf16.gmra.mrb[0].mxu0 %v389
  %v596 = vpop.f32.mrb[0].mxu0
  %v597 = vadd.f32 %v476, %v596
  %v598 = vpop.f32.mrb[0].mxu0
  %v599 = vpop.f32.mrb[0].mxu0
  %v600 = vadd.f32 %v479, %v599
  %v601 = vpop.f32.mrb[0].mxu0
  %602 = vmatprep.mubr.bf16.mxu0 0
  %603 = vmatmul.mubr.bf16.gmra.mrb[0].mxu0 %v392
  %v604 = vpop.f32.mrb[0].mxu0
  %v605 = vadd.f32 %v484, %v604
  %v606 = vpop.f32.mrb[0].mxu0
  %v607 = vpop.f32.mrb[0].mxu0
  %v608 = vadd.f32 %v487, %v607
  %v609 = vpop.f32.mrb[0].mxu0
  %610 = vmatprep.mubr.bf16.mxu0 0
  %611 = vmatmul.mubr.bf16.gmra.mrb[0].mxu0 %v395
  %v612 = vpop.f32.mrb[0].mxu0
  %v613 = vadd.f32 %v492, %v612
  %v614 = vpop.f32.mrb[0].mxu0
  %v615 = vpop.f32.mrb[0].mxu0
  %v616 = vadd.f32 %v495, %v615
  %v617 = vpop.f32.mrb[0].mxu0
  %618 = vmatprep.mubr.bf16.mxu0 0
  %619 = vmatmul.mubr.bf16.gmra.mrb[0].mxu0 %v398
  %v620 = vpop.f32.mrb[0].mxu0
  %v621 = vadd.f32 %v500, %v620
  %v622 = vpop.f32.mrb[0].mxu0
  %v623 = vpop.f32.mrb[0].mxu0
  %v624 = vadd.f32 %v503, %v623
  %v625 = vpop.f32.mrb[0].mxu0
  %626 = vmatprep.mubr.bf16.mxu0 0
  %627 = vmatmul.mubr.bf16.gmra.mrb[0].mxu0 %v401
  %v628 = vpop.f32.mrb[0].mxu0
  %v629 = vadd.f32 %v508, %v628
  %v630 = vpop.f32.mrb[0].mxu0
  %v631 = vpop.f32.mrb[0].mxu0
  %v632 = vadd.f32 %v511, %v631
  %v633 = vpop.f32.mrb[0].mxu0
  %634 = vmatprep.mubr.bf16.mxu0 0
  %635 = vmatmul.mubr.bf16.gmra.mrb[0].mxu0 %v404
  %v636 = vpop.f32.mrb[0].mxu0
  %v637 = vadd.f32 %v516, %v636
  %v638 = vpop.f32.mrb[0].mxu0
  %v639 = vpop.f32.mrb[0].mxu0
  %v640 = vadd.f32 %v519, %v639
  %v641 = vpop.f32.mrb[0].mxu0
  %642 = vmatprep.mubr.bf16.mxu0 0
  %643 = vmatmul.mubr.bf16.gmra.mrb[0].mxu0 %v407
  %v644 = vpop.f32.mrb[0].mxu0
  %v645 = vadd.f32 %v524, %v644
  %v646 = vpop.f32.mrb[0].mxu0
  %v647 = vpop.f32.mrb[0].mxu0
  %v648 = vadd.f32 %v527, %v647
  %v649 = vpop.f32.mrb[0].mxu0
  %650 = vdwg.mxu0
  %v651 = vsub.f32 0.0, %v565
  %v652 = vsub.f32 0.0, %v568
  %v653 = vsub.f32 0.0, %v573
  %v654 = vsub.f32 0.0, %v576
  %v655 = vsub.f32 0.0, %v581
  %v656 = vsub.f32 0.0, %v584
  %v657 = vsub.f32 0.0, %v589
  %v658 = vsub.f32 0.0, %v592
  %v659 = vsub.f32 0.0, %v597
  %v660 = vsub.f32 0.0, %v600
  %v661 = vsub.f32 0.0, %v605
  %v662 = vsub.f32 0.0, %v608
  %v663 = vsub.f32 0.0, %v613
  %v664 = vsub.f32 0.0, %v616
  %v665 = vsub.f32 0.0, %v621
  %v666 = vsub.f32 0.0, %v624
  %v667 = vsub.f32 0.0, %v629
  %v668 = vsub.f32 0.0, %v632
  %v669 = vsub.f32 0.0, %v637
  %v670 = vsub.f32 0.0, %v640
  %v671 = vsub.f32 0.0, %v645
  %v672 = vsub.f32 0.0, %v648
  %v673 = vmul.f32 %v651, 1.442695
  %v674 = vpow.pop %v673
  %v675 = vmul.f32 %v652, 1.442695
  %v676 = vpow.pop %v675
  %v677 = vmul.f32 %v653, 1.442695
  %v678 = vpow.pop %v677
  %v679 = vmul.f32 %v654, 1.442695
  %v680 = vpow.pop %v679
  %v681 = vmul.f32 %v655, 1.442695
  %v682 = vpow.pop %v681
  %v683 = vmul.f32 %v656, 1.442695
  %v684 = vpow.pop %v683
  %v685 = vmul.f32 %v657, 1.442695
  %v686 = vpow.pop %v685
  %v687 = vmul.f32 %v658, 1.442695
  %v688 = vpow.pop %v687
  %v689 = vmul.f32 %v659, 1.442695
  %v690 = vpow.pop %v689
  %v691 = vmul.f32 %v660, 1.442695
  %v692 = vpow.pop %v691
  %v693 = vmul.f32 %v661, 1.442695
  %v694 = vpow.pop %v693
  %v695 = vmul.f32 %v662, 1.442695
  %v696 = vpow.pop %v695
  %v697 = vmul.f32 %v663, 1.442695
  %v698 = vpow.pop %v697
  %v699 = vmul.f32 %v664, 1.442695
  %v700 = vpow.pop %v699
  %v701 = vmul.f32 %v665, 1.442695
  %v702 = vpow.pop %v701
  %v703 = vmul.f32 %v666, 1.442695
  %v704 = vpow.pop %v703
  %v705 = vmul.f32 %v667, 1.442695
  %v706 = vpow.pop %v705
  %v707 = vmul.f32 %v668, 1.442695
  %v708 = vpow.pop %v707
  %v709 = vmul.f32 %v669, 1.442695
  %v710 = vpow.pop %v709
  %v711 = vmul.f32 %v670, 1.442695
  %v712 = vpow.pop %v711
  %v713 = vmul.f32 %v671, 1.442695
  %v714 = vpow.pop %v713
  %v715 = vmul.f32 %v672, 1.442695
  %v716 = vpow.pop %v715
  %v717 = vadd.f32 %v674, 1.0
  %v718 = vadd.f32 %v676, 1.0
  %v719 = vadd.f32 %v678, 1.0
  %v720 = vadd.f32 %v680, 1.0
  %v721 = vadd.f32 %v682, 1.0
  %v722 = vadd.f32 %v684, 1.0
  %v723 = vadd.f32 %v686, 1.0
  %v724 = vadd.f32 %v688, 1.0
  %v725 = vadd.f32 %v690, 1.0
  %v726 = vadd.f32 %v692, 1.0
  %v727 = vadd.f32 %v694, 1.0
  %v728 = vadd.f32 %v696, 1.0
  %v729 = vadd.f32 %v698, 1.0
  %v730 = vadd.f32 %v700, 1.0
  %v731 = vadd.f32 %v702, 1.0
  %v732 = vadd.f32 %v704, 1.0
  %v733 = vadd.f32 %v706, 1.0
  %v734 = vadd.f32 %v708, 1.0
  %v735 = vadd.f32 %v710, 1.0
  %v736 = vadd.f32 %v712, 1.0
  %v737 = vadd.f32 %v714, 1.0
  %v738 = vadd.f32 %v716, 1.0
  %v739 = vrcp.pop %v717
  %v740 = vrcp.pop %v718
  %v741 = vrcp.pop %v719
  %v742 = vrcp.pop %v720
  %v743 = vrcp.pop %v721
  %v744 = vrcp.pop %v722
  %v745 = vrcp.pop %v723
  %v746 = vrcp.pop %v724
  %v747 = vrcp.pop %v725
  %v748 = vrcp.pop %v726
  %v749 = vrcp.pop %v727
  %v750 = vrcp.pop %v728
  %v751 = vrcp.pop %v729
  %v752 = vrcp.pop %v730
  %v753 = vrcp.pop %v731
  %v754 = vrcp.pop %v732
  %v755 = vrcp.pop %v733
  %v756 = vrcp.pop %v734
  %v757 = vrcp.pop %v735
  %v758 = vrcp.pop %v736
  %v759 = vrcp.pop %v737
  %v760 = vrcp.pop %v738
  %761 = vst [vmem:[%s3] sm:$0xff] %v739
  %762 = vst [vmem:[%s3 + $0x8] sm:$0xff] %v740
  %763 = vst [vmem:[%s3 + $0x10] sm:$0xff] %v741
  %764 = vst [vmem:[%s3 + $0x18] sm:$0xff] %v742
  %765 = vst [vmem:[%s3 + $0x20] sm:$0xff] %v743
  %766 = vst [vmem:[%s3 + $0x28] sm:$0xff] %v744
  %767 = vst [vmem:[%s3 + $0x30] sm:$0xff] %v745
  %768 = vst [vmem:[%s3 + $0x38] sm:$0xff] %v746
  %769 = vst [vmem:[%s3 + $0x40] sm:$0xff] %v747
  %770 = vst [vmem:[%s3 + $0x48] sm:$0xff] %v748
  %771 = vst [vmem:[%s3 + $0x50] sm:$0xff] %v749
  %772 = vst [vmem:[%s3 + $0x58] sm:$0xff] %v750
  %773 = vst [vmem:[%s3 + $0x60] sm:$0xff] %v751
  %774 = vst [vmem:[%s3 + $0x68] sm:$0xff] %v752
  %775 = vst [vmem:[%s3 + $0x70] sm:$0xff] %v753
  %776 = vst [vmem:[%s3 + $0x78] sm:$0xff] %v754
  %777 = vst [vmem:[%s3 + $0x80] sm:$0xff] %v755
  %778 = vst [vmem:[%s3 + $0x88] sm:$0xff] %v756
  %779 = vst [vmem:[%s3 + $0x90] sm:$0xff] %v757
  %780 = vst [vmem:[%s3 + $0x98] sm:$0xff] %v758
  %781 = vst [vmem:[%s3 + $0xa0] sm:$0xff] %v759
  %782 = vst [vmem:[%s3 + $0xa8] sm:$0xff] %v760
  // Predicated region
  $region14: #{retinanet_forward.41} parent=0 // pred_check
    _
  $region15: #{retinanet_forward.41} parent=0 // pred_check_branch
    %784 = sbr.rel (0) target = $region17
  $region16: #{retinanet_forward.41} parent=0 // pred_region
    _
  $region17: #{retinanet_forward.41} parent=0 // pred_fallthru
    _
  // Predicated region
  $region18: #{retinanet_forward.41} parent=0 // pred_check
    _
  $region19: #{retinanet_forward.41} parent=0 // pred_check_branch
    %786 = sbr.rel (0) target = $region21
  $region20: #{retinanet_forward.41} parent=0 // pred_region
    _
  $region21: #{retinanet_forward.41} parent=0 // pred_fallthru
    _

// kernel: tile.9
$region0: #{tile.9}
  %s0 = inlined_call_operand.vmem [shape: f32[4,2,765], index: 0, kind: input, shape index: {}]
  %s1 = inlined_call_operand.vmem [shape: f32[4,1530], index: 1, kind: output, shape index: {}]
  $region1: #{tile.9} parent=0
    #allocation0 [shape = 'u8[49152]{0}', space=vmem, size = 0xc000, scoped, tag = 'scoped mem for output reshape']
    #allocation1 [shape = 'u8[98304]{0}', space=vmem, size = 0x18000, scoped, tag = 'scoped mem for input reshape']
    %s3 = sshllo.u32 0, 2
    %s4 = smul.addr 2, 23
    %s5 = scalar_lea.vmem %s0, %s4
    %v6 = vld [vmem:[%s5] sm:%s3]
    %s7 = scalar_lea.vmem [#allocation1], 184
    %8 = vst [vmem:[%s7] sm:%s3] %v6
    %s9 = smul.addr 2, 22
    %s10 = scalar_lea.vmem %s0, %s9
    %v11 = vld [vmem:[%s10] sm:%s3]
    %s12 = scalar_lea.vmem [#allocation1], 176
    %13 = vst [vmem:[%s12] sm:%s3] %v11
    %s14 = smul.addr 2, 21
    %s15 = scalar_lea.vmem %s0, %s14
    %v16 = vld [vmem:[%s15] sm:%s3]
    %s17 = scalar_lea.vmem [#allocation1], 168
    %18 = vst [vmem:[%s17] sm:%s3] %v16
    %s19 = smul.addr 2, 20
    %s20 = scalar_lea.vmem %s0, %s19
    %v21 = vld [vmem:[%s20] sm:%s3]
    %s22 = scalar_lea.vmem [#allocation1], 160
    %23 = vst [vmem:[%s22] sm:%s3] %v21
    %s24 = smul.addr 2, 19
    %s25 = scalar_lea.vmem %s0, %s24
    %v26 = vld [vmem:[%s25] sm:%s3]
    %s27 = scalar_lea.vmem [#allocation1], 152
    %28 = vst [vmem:[%s27] sm:%s3] %v26
    %s29 = smul.addr 2, 18
    %s30 = scalar_lea.vmem %s0, %s29
    %v31 = vld [vmem:[%s30] sm:%s3]
    %s32 = scalar_lea.vmem [#allocation1], 144
    %33 = vst [vmem:[%s32] sm:%s3] %v31
    %s34 = smul.addr 2, 17
    %s35 = scalar_lea.vmem %s0, %s34
    %v36 = vld [vmem:[%s35] sm:%s3]
    %s37 = scalar_lea.vmem [#allocation1], 136
    %38 = vst [vmem:[%s37] sm:%s3] %v36
    %s39 = smul.addr 2, 16
    %s40 = scalar_lea.vmem %s0, %s39
    %v41 = vld [vmem:[%s40] sm:%s3]
    %s42 = scalar_lea.vmem [#allocation1], 128
    %43 = vst [vmem:[%s42] sm:%s3] %v41
    %s44 = smul.addr 2, 15
    %s45 = scalar_lea.vmem %s0, %s44
    %v46 = vld [vmem:[%s45] sm:%s3]
    %s47 = scalar_lea.vmem [#allocation1], 120
    %48 = vst [vmem:[%s47] sm:%s3] %v46
    %s49 = smul.addr 2, 14
    %s50 = scalar_lea.vmem %s0, %s49
    %v51 = vld [vmem:[%s50] sm:%s3]
    %s52 = scalar_lea.vmem [#allocation1], 112
    %53 = vst [vmem:[%s52] sm:%s3] %v51
    %s54 = smul.addr 2, 13
    %s55 = scalar_lea.vmem %s0, %s54
    %v56 = vld [vmem:[%s55] sm:%s3]
    %s57 = scalar_lea.vmem [#allocation1], 104
    %58 = vst [vmem:[%s57] sm:%s3] %v56
    %s59 = smul.addr 2, 12
    %s60 = scalar_lea.vmem %s0, %s59
    %v61 = vld [vmem:[%s60] sm:%s3]
    %s62 = scalar_lea.vmem [#allocation1], 96
    %63 = vst [vmem:[%s62] sm:%s3] %v61
    %s64 = smul.addr 2, 11
    %s65 = scalar_lea.vmem %s0, %s64
    %v66 = vld [vmem:[%s65] sm:%s3]
    %s67 = scalar_lea.vmem [#allocation1], 88
    %68 = vst [vmem:[%s67] sm:%s3] %v66
    %s69 = smul.addr 2, 10
    %s70 = scalar_lea.vmem %s0, %s69
    %v71 = vld [vmem:[%s70] sm:%s3]
    %s72 = scalar_lea.vmem [#allocation1], 80
    %73 = vst [vmem:[%s72] sm:%s3] %v71
    %s74 = smul.addr 2, 9
    %s75 = scalar_lea.vmem %s0, %s74
    %v76 = vld [vmem:[%s75] sm:%s3]
    %s77 = scalar_lea.vmem [#allocation1], 72
    %78 = vst [vmem:[%s77] sm:%s3] %v76
    %s79 = smul.addr 2, 8
    %s80 = scalar_lea.vmem %s0, %s79
    %v81 = vld [vmem:[%s80] sm:%s3]
    %s82 = scalar_lea.vmem [#allocation1], 64
    %83 = vst [vmem:[%s82] sm:%s3] %v81
    %s84 = smul.addr 2, 7
    %s85 = scalar_lea.vmem %s0, %s84
    %v86 = vld [vmem:[%s85] sm:%s3]
    %s87 = scalar_lea.vmem [#allocation1], 56
    %88 = vst [vmem:[%s87] sm:%s3] %v86
    %s89 = smul.addr 2, 6
    %s90 = scalar_lea.vmem %s0, %s89
    %v91 = vld [vmem:[%s90] sm:%s3]
    %s92 = scalar_lea.vmem [#allocation1], 48
    %93 = vst [vmem:[%s92] sm:%s3] %v91
    %s94 = smul.addr 2, 5
    %s95 = scalar_lea.vmem %s0, %s94
    %v96 = vld [vmem:[%s95] sm:%s3]
    %s97 = scalar_lea.vmem [#allocation1], 40
    %98 = vst [vmem:[%s97] sm:%s3] %v96
    %s99 = smul.addr 2, 4
    %s100 = scalar_lea.vmem %s0, %s99
    %v101 = vld [vmem:[%s100] sm:%s3]
    %s102 = scalar_lea.vmem [#allocation1], 32
    %103 = vst [vmem:[%s102] sm:%s3] %v101
    %s104 = smul.addr 2, 3
    %s105 = scalar_lea.vmem %s0, %s104
    %v106 = vld [vmem:[%s105] sm:%s3]
    %s107 = scalar_lea.vmem [#allocation1], 24
    %108 = vst [vmem:[%s107] sm:%s3] %v106
    %s109 = smul.addr 2, 2
    %s110 = scalar_lea.vmem %s0, %s109
    %v111 = vld [vmem:[%s110] sm:%s3]
    %s112 = scalar_lea.vmem [#allocation1], 16
    %113 = vst [vmem:[%s112] sm:%s3] %v111
    %s114 = scalar_lea.vmem %s0, 2
    %v115 = vld [vmem:[%s114] sm:%s3]
    %s116 = scalar_lea.vmem [#allocation1], 8
    %117 = vst [vmem:[%s116] sm:%s3] %v115
    %v118 = vld [vmem:[%s0] sm:%s3]
    %119 = vst [vmem:[#allocation1] sm:%s3] %v118
    %s120 = scalar_lea.vmem [#allocation1], 40
    %s121 = smov 3
    %v122 = vld [vmem:[%s120] ss:$48 sm:%s121]
    %s123 = scalar_lea.vmem [#allocation1], 40
    %s124 = smov 12
    %v125 = vld [vmem:[%s123] ss:$48 sm:%s124]
    %vm126 = vcmask 1043458
    %v127 = vsel %vm126, %v125, %v122
    %vm128 = vcmask 1022976
    %s129 = scalar_lea.vmem [#allocation0], 40
    %130 = vst.msk [vmem:[%s129] sm:$0xf] %vm128, %v127
    %v131 = vld [vmem:[#allocation1] ss:$8 sm:$0xf]
    %s132 = scalar_lea.vmem [#allocation1], 28
    %v133 = vld [vmem:[%s132] sm:$0x10]
    %vm134 = vcmask 1044484
    %v135 = vsel %vm134, %v133, %v131
    %136 = vst [vmem:[#allocation0] ss:$8 sm:$0xf] %v135
    %s137 = scalar_lea.vmem [#allocation0], 28
    %138 = vst [vmem:[%s137] sm:$0x10] %v135
    %s139 = scalar_lea.vmem [#allocation1], 48
    %v140 = vld [vmem:[%s139] ss:$8 sm:$0xf]
    %s141 = scalar_lea.vmem [#allocation1], 76
    %v142 = vld [vmem:[%s141] sm:$0x10]
    %vm143 = vcmask 1044484
    %v144 = vsel %vm143, %v142, %v140
    %s145 = scalar_lea.vmem [#allocation0], 1
    %146 = vst [vmem:[%s145] ss:$8 sm:$0xf] %v144
    %s147 = scalar_lea.vmem [#allocation0], 29
    %148 = vst [vmem:[%s147] sm:$0x10] %v144
    %s149 = scalar_lea.vmem [#allocation1], 96
    %v150 = vld [vmem:[%s149] ss:$8 sm:$0xf]
    %s151 = scalar_lea.vmem [#allocation1], 124
    %v152 = vld [vmem:[%s151] sm:$0x10]
    %vm153 = vcmask 1044484
    %v154 = vsel %vm153, %v152, %v150
    %s155 = scalar_lea.vmem [#allocation0], 2
    %156 = vst [vmem:[%s155] ss:$8 sm:$0xf] %v154
    %s157 = scalar_lea.vmem [#allocation0], 30
    %158 = vst [vmem:[%s157] sm:$0x10] %v154
    %s159 = scalar_lea.vmem [#allocation1], 144
    %v160 = vld [vmem:[%s159] ss:$8 sm:$0xf]
    %s161 = scalar_lea.vmem [#allocation1], 172
    %v162 = vld [vmem:[%s161] sm:$0x10]
    %vm163 = vcmask 1044484
    %v164 = vsel %vm163, %v162, %v160
    %s165 = scalar_lea.vmem [#allocation0], 3
    %166 = vst [vmem:[%s165] ss:$8 sm:$0xf] %v164
    %s167 = scalar_lea.vmem [#allocation0], 31
    %168 = vst [vmem:[%s167] sm:$0x10] %v164
    %s169 = scalar_lea.vmem [#allocation1], 41
    %s170 = smov 3
    %v171 = vld [vmem:[%s169] ss:$48 sm:%s170]
    %s172 = scalar_lea.vmem [#allocation1], 41
    %s173 = smov 12
    %v174 = vld [vmem:[%s172] ss:$48 sm:%s173]
    %vm175 = vcmask 1043458
    %v176 = vsel %vm175, %v174, %v171
    %s177 = scalar_lea.vmem [#allocation1], 25
    %s178 = smov 3
    %v179 = vld [vmem:[%s177] ss:$48 sm:%s178]
    %s180 = scalar_lea.vmem [#allocation1], 25
    %s181 = smov 12
    %v182 = vld [vmem:[%s180] ss:$48 sm:%s181]
    %vm183 = vcmask 1043458
    %v184 = vsel %vm183, %v182, %v179
    %s185 = scalar_lea.vmem [#allocation1], 4294967105
    %s186 = smov 48
    %v187 = vld [vmem:[%s185] ss:$48 sm:%s186]
    %vm188 = vcmask 1045508
    %v189 = vsel %vm188, %v187, %v184
    %s190 = scalar_lea.vmem [#allocation1], 4294967105
    %s191 = smov 192
    %v192 = vld [vmem:[%s190] ss:$48 sm:%s191]
    %vm193 = vcmask 1047558
    %v194 = vsel %vm193, %v192, %v189
    %vm195 = vcmask 23552
    %v196 = vsel %vm195, %v194, %v176
    %197 = vrot.lane.b32.xlu0 %v196, 125
    %v198 = vpop.permute.xlu0 %197
    %vm199 = vcmask 998400
    %s200 = scalar_lea.vmem [#allocation0], 88
    %201 = vst.msk [vmem:[%s200] sm:$0xf] %vm199, %v198
    %vm202 = vcmask 1048552
    %s203 = scalar_lea.vmem [#allocation0], 64
    %204 = vst.msk [vmem:[%s203] sm:$0xf] %vm202, %v198
    %s205 = scalar_lea.vmem [#allocation0], 36
    %206 = vst.msk [vmem:[%s205] sm:$0xf0] %vm202, %v198
    %s207 = scalar_lea.vmem [#allocation1], 17
    %s208 = smov 3
    %v209 = vld [vmem:[%s207] ss:$48 sm:%s208]
    %s210 = scalar_lea.vmem [#allocation1], 17
    %s211 = smov 12
    %v212 = vld [vmem:[%s210] ss:$48 sm:%s211]
    %vm213 = vcmask 1043458
    %v214 = vsel %vm213, %v212, %v209
    %s215 = scalar_lea.vmem [#allocation1], 4294967129
    %s216 = smov 48
    %v217 = vld [vmem:[%s215] ss:$48 sm:%s216]
    %vm218 = vcmask 1045508
    %v219 = vsel %vm218, %v217, %v214
    %s220 = scalar_lea.vmem [#allocation1], 4294967129
    %s221 = smov 192
    %v222 = vld [vmem:[%s220] ss:$48 sm:%s221]
    %vm223 = vcmask 1047558
    %v224 = vsel %vm223, %v222, %v219
    %s225 = scalar_lea.vmem [#allocation1], 33
    %s226 = smov 3
    %v227 = vld [vmem:[%s225] ss:$48 sm:%s226]
    %s228 = scalar_lea.vmem [#allocation1], 33
    %s229 = smov 12
    %v230 = vld [vmem:[%s228] ss:$48 sm:%s229]
    %vm231 = vcmask 1043458
    %v232 = vsel %vm231, %v230, %v227
    %s233 = scalar_lea.vmem [#allocation1], 4294967113
    %s234 = smov 48
    %v235 = vld [vmem:[%s233] ss:$48 sm:%s234]
    %vm236 = vcmask 1045508
    %v237 = vsel %vm236, %v235, %v232
    %s238 = scalar_lea.vmem [#allocation1], 4294967113
    %s239 = smov 192
    %v240 = vld [vmem:[%s238] ss:$48 sm:%s239]
    %vm241 = vcmask 1047558
    %v242 = vsel %vm241, %v240, %v237
    %vm243 = vcmask 23552
    %v244 = vsel %vm243, %v242, %v224
    %245 = vrot.lane.b32.xlu0 %v244, 125
    %v246 = vpop.permute.xlu0 %245
    %vm247 = vcmask 1022976
    %s248 = scalar_lea.vmem [#allocation0], 64
    %249 = vst.msk [vmem:[%s248] sm:$0xf] %vm247, %v246
    %s250 = scalar_lea.vmem [#allocation0], 68
    %251 = vst.msk [vmem:[%s250] sm:$0xf0] %vm247, %v246
    %vm252 = vcmask 1048552
    %s253 = scalar_lea.vmem [#allocation0], 72
    %254 = vst.msk [vmem:[%s253] sm:$0xf] %vm252, %v246
    %s255 = scalar_lea.vmem [#allocation0], 44
    %256 = vst.msk [vmem:[%s255] sm:$0xf0] %vm252, %v246
    %s257 = scalar_lea.vmem [#allocation1], 1
    %s258 = smov 3
    %v259 = vld [vmem:[%s257] ss:$48 sm:%s258]
    %s260 = scalar_lea.vmem [#allocation1], 1
    %s261 = smov 12
    %v262 = vld [vmem:[%s260] ss:$48 sm:%s261]
    %vm263 = vcmask 1043458
    %v264 = vsel %vm263, %v262, %v259
    %s265 = scalar_lea.vmem [#allocation1], 4294967113
    %s266 = smov 48
    %v267 = vld [vmem:[%s265] ss:$48 sm:%s266]
    %vm268 = vcmask 1045508
    %v269 = vsel %vm268, %v267, %v264
    %s270 = scalar_lea.vmem [#allocation1], 4294967113
    %s271 = smov 192
    %v272 = vld [vmem:[%s270] ss:$48 sm:%s271]
    %vm273 = vcmask 1047558
    %v274 = vsel %vm273, %v272, %v269
    %s275 = scalar_lea.vmem [#allocation1], 41
    %s276 = smov 3
    %v277 = vld [vmem:[%s275] ss:$48 sm:%s276]
    %s278 = scalar_lea.vmem [#allocation1], 41
    %s279 = smov 12
    %v280 = vld [vmem:[%s278] ss:$48 sm:%s279]
    %vm281 = vcmask 1043458
    %v282 = vsel %vm281, %v280, %v277
    %s283 = scalar_lea.vmem [#allocation1], 4294967121
    %s284 = smov 48
    %v285 = vld [vmem:[%s283] ss:$48 sm:%s284]
    %vm286 = vcmask 1045508
    %v287 = vsel %vm286, %v285, %v282
    %s288 = scalar_lea.vmem [#allocation1], 4294967121
    %s289 = smov 192
    %v290 = vld [vmem:[%s288] ss:$48 sm:%s289]
    %vm291 = vcmask 1047558
    %v292 = vsel %vm291, %v290, %v287
    %vm293 = vcmask 23552
    %v294 = vsel %vm293, %v292, %v274
    %295 = vrot.lane.b32.xlu0 %v294, 125
    %v296 = vpop.permute.xlu0 %295
    %vm297 = vcmask 1022976
    %s298 = scalar_lea.vmem [#allocation0], 48
    %299 = vst.msk [vmem:[%s298] sm:$0xf] %vm297, %v296
    %s300 = scalar_lea.vmem [#allocation0], 52
    %301 = vst.msk [vmem:[%s300] sm:$0xf0] %vm297, %v296
    %vm302 = vcmask 1048552
    %s303 = scalar_lea.vmem [#allocation0], 80
    %304 = vst.msk [vmem:[%s303] sm:$0xf] %vm302, %v296
    %s305 = scalar_lea.vmem [#allocation0], 52
    %306 = vst.msk [vmem:[%s305] sm:$0xf0] %vm302, %v296
    %s307 = scalar_lea.vmem [#allocation1], 33
    %s308 = smov 3
    %v309 = vld [vmem:[%s307] ss:$48 sm:%s308]
    %s310 = scalar_lea.vmem [#allocation1], 33
    %s311 = smov 12
    %v312 = vld [vmem:[%s310] ss:$48 sm:%s311]
    %vm313 = vcmask 1043458
    %v314 = vsel %vm313, %v312, %v309
    %315 = vrot.lane.b32.xlu0 %v314, 125
    %v316 = vpop.permute.xlu0 %315
    %vm317 = vcmask 1022976
    %s318 = scalar_lea.vmem [#allocation0], 80
    %319 = vst.msk [vmem:[%s318] sm:$0xf] %vm317, %v316
    %s321 = sshllo.u32 0, 4
    %v323 = vld [vmem:[#allocation0] sm:%s321]
    %s324 = sshllo.u32 0, 4
    %325 = vst [vmem:[%s1] sm:%s324] %v323
    %s326 = scalar_lea.vmem [#allocation0], 8
    %v327 = vld [vmem:[%s326] sm:%s321]
    %s328 = sshllo.u32 0, 4
    %s329 = scalar_lea.vmem %s1, 4
    %330 = vst [vmem:[%s329] sm:%s328] %v327
    %s331 = scalar_lea.vmem [#allocation0], 16
    %v332 = vld [vmem:[%s331] sm:%s321]
    %s333 = sshllo.u32 0, 4
    %s334 = smul.addr 4, 2
    %s335 = scalar_lea.vmem %s1, %s334
    %336 = vst [vmem:[%s335] sm:%s333] %v332
    %s337 = scalar_lea.vmem [#allocation0], 24
    %v338 = vld [vmem:[%s337] sm:%s321]
    %s339 = sshllo.u32 0, 4
    %s340 = smul.addr 4, 3
    %s341 = scalar_lea.vmem %s1, %s340
    %342 = vst [vmem:[%s341] sm:%s339] %v338
    %s343 = scalar_lea.vmem [#allocation0], 32
    %v344 = vld [vmem:[%s343] sm:%s321]
    %s345 = sshllo.u32 0, 4
    %s346 = smul.addr 4, 4
    %s347 = scalar_lea.vmem %s1, %s346
    %348 = vst [vmem:[%s347] sm:%s345] %v344
    %s349 = scalar_lea.vmem [#allocation0], 40
    %v350 = vld [vmem:[%s349] sm:%s321]
    %s351 = sshllo.u32 0, 4
    %s352 = smul.addr 4, 5
    %s353 = scalar_lea.vmem %s1, %s352
    %354 = vst [vmem:[%s353] sm:%s351] %v350
    %s355 = scalar_lea.vmem [#allocation0], 48
    %v356 = vld [vmem:[%s355] sm:%s321]
    %s357 = sshllo.u32 0, 4
    %s358 = smul.addr 4, 6
    %s359 = scalar_lea.vmem %s1, %s358
    %360 = vst [vmem:[%s359] sm:%s357] %v356
    %s361 = scalar_lea.vmem [#allocation0], 56
    %v362 = vld [vmem:[%s361] sm:%s321]
    %s363 = sshllo.u32 0, 4
    %s364 = smul.addr 4, 7
    %s365 = scalar_lea.vmem %s1, %s364
    %366 = vst [vmem:[%s365] sm:%s363] %v362
    %s367 = scalar_lea.vmem [#allocation0], 64
    %v368 = vld [vmem:[%s367] sm:%s321]
    %s369 = sshllo.u32 0, 4
    %s370 = smul.addr 4, 8
    %s371 = scalar_lea.vmem %s1, %s370
    %372 = vst [vmem:[%s371] sm:%s369] %v368
    %s373 = scalar_lea.vmem [#allocation0], 72
    %v374 = vld [vmem:[%s373] sm:%s321]
    %s375 = sshllo.u32 0, 4
    %s376 = smul.addr 4, 9
    %s377 = scalar_lea.vmem %s1, %s376
    %378 = vst [vmem:[%s377] sm:%s375] %v374
    %s379 = scalar_lea.vmem [#allocation0], 80
    %v380 = vld [vmem:[%s379] sm:%s321]
    %s381 = sshllo.u32 0, 4
    %s382 = smul.addr 4, 10
    %s383 = scalar_lea.vmem %s1, %s382
    %384 = vst [vmem:[%s383] sm:%s381] %v380
    %s385 = scalar_lea.vmem [#allocation0], 88
    %v386 = vld [vmem:[%s385] sm:%s321]
    %s387 = sshllo.u32 0, 4
    %s388 = smul.addr 4, 11
    %s389 = scalar_lea.vmem %s1, %s388
    %390 = vst [vmem:[%s389] sm:%s387] %v386

// kernel: retinanet_forward.46
$region0: #{retinanet_forward.46}
  #allocation0 [shape = 'u32[]', space=smem, size = 0x4, offset = 0x4, fixed_abs, tag = 'smem constant byte address 0x4 - core index']
  #allocation1 [shape = 'u32[144,128]{1,0:T(1,128)}', space=vmem, size = 0x12000, scoped, tag = 'internal scratch']
  %s0 = inlined_call_operand.vmem [shape: bf16[176,288], index: 0, kind: input, shape index: {}]
  %s1 = inlined_call_operand.vmem [shape: bf16[288,128], index: 1, kind: input, shape index: {}]
  %s2 = inlined_call_operand.vmem [shape: f32[1,128], index: 2, kind: input, shape index: {}]
  %s3 = inlined_call_operand.vmem [shape: f32[176,128], index: 3, kind: output, shape index: {}]
  %s4 = sld [smem:[#allocation0]]
  $region22: #{retinanet_forward.46} parent=0
    _
  %s6 = ssub.s32 1, %s4
  %s7 = scalar_select 0, %s6, %s4
  // Predicated region
  $region2: #{retinanet_forward.46} parent=0 // pred_check
    _
  $region3: #{retinanet_forward.46} parent=0 // pred_check_branch
    %9 = sbr.rel (0) target = $region5
  $region4: #{retinanet_forward.46} parent=0 // pred_region
    _
  $region5: #{retinanet_forward.46} parent=0 // pred_fallthru
    _
  // Predicated region
  $region6: #{retinanet_forward.46} parent=0 // pred_check
    _
  $region7: #{retinanet_forward.46} parent=0 // pred_check_branch
    %11 = sbr.rel (0) target = $region9
  $region8: #{retinanet_forward.46} parent=0 // pred_region
    _
  $region9: #{retinanet_forward.46} parent=0 // pred_fallthru
    _
  // Predicated region
  $region10: #{retinanet_forward.46} parent=0 // pred_check
    _
  $region11: #{retinanet_forward.46} parent=0 // pred_check_branch
    %13 = sbr.rel (0) target = $region13
  $region12: #{retinanet_forward.46} parent=0 // pred_region
    _
  $region13: #{retinanet_forward.46} parent=0 // pred_fallthru
    _
  %v15 = vld [vmem:[%s0] sm:$0xff]
  %v16 = vld [vmem:[%s0 + $0x8] sm:$0xf]
  %v17 = vld [vmem:[%s0 + $0xc] sm:$0xff]
  %v18 = vld [vmem:[%s0 + $0x14] sm:$0xf]
  %v19 = vld [vmem:[%s0 + $0x18] sm:$0xff]
  %v20 = vld [vmem:[%s0 + $0x20] sm:$0xf]
  %v21 = vld [vmem:[%s0 + $0x24] sm:$0xff]
  %v22 = vld [vmem:[%s0 + $0x2c] sm:$0xf]
  %v23 = vld [vmem:[%s0 + $0x30] sm:$0xff]
  %v24 = vld [vmem:[%s0 + $0x38] sm:$0xf]
  %v25 = vld [vmem:[%s0 + $0x3c] sm:$0xff]
  %v26 = vld [vmem:[%s0 + $0x44] sm:$0xf]
  %v27 = vld [vmem:[%s0 + $0x48] sm:$0xff]
  %v28 = vld [vmem:[%s0 + $0x50] sm:$0xf]
  %v29 = vld [vmem:[%s0 + $0x54] sm:$0xff]
  %v30 = vld [vmem:[%s0 + $0x5c] sm:$0xf]
  %v31 = vld [vmem:[%s0 + $0x60] sm:$0xff]
  %v32 = vld [vmem:[%s0 + $0x68] sm:$0xf]
  %v33 = vld [vmem:[%s0 + $0x6c] sm:$0xff]
  %v34 = vld [vmem:[%s0 + $0x74] sm:$0xf]
  %v35 = vld [vmem:[%s0 + $0x78] sm:$0xff]
  %v36 = vld [vmem:[%s0 + $0x80] sm:$0xf]
  %v37 = vld [vmem:[%s0 + $0x84] sm:$0xff]
  %v38 = vld [vmem:[%s0 + $0x8c] sm:$0xf]
  %v39 = vld [vmem:[%s0 + $0x90] sm:$0xff]
  %v40 = vld [vmem:[%s0 + $0x98] sm:$0xf]
  %v41 = vld [vmem:[%s0 + $0x9c] sm:$0xff]
  %v42 = vld [vmem:[%s0 + $0xa4] sm:$0xf]
  %v43 = vld [vmem:[%s0 + $0xa8] sm:$0xff]
  %v44 = vld [vmem:[%s0 + $0xb0] sm:$0xf]
  %v45 = vld [vmem:[%s0 + $0xb4] sm:$0xff]
  %v46 = vld [vmem:[%s0 + $0xbc] sm:$0xf]
  %v47 = vld [vmem:[%s0 + $0xc0] sm:$0xff]
  %v48 = vld [vmem:[%s0 + $0xc8] sm:$0xf]
  %v49 = vld [vmem:[%s0 + $0xcc] sm:$0xff]
  %v50 = vld [vmem:[%s0 + $0xd4] sm:$0xf]
  %v51 = vld [vmem:[%s0 + $0xd8] sm:$0xff]
  %v52 = vld [vmem:[%s0 + $0xe0] sm:$0xf]
  %v53 = vld [vmem:[%s0 + $0xe4] sm:$0xff]
  %v54 = vld [vmem:[%s0 + $0xec] sm:$0xf]
  %v55 = vld [vmem:[%s0 + $0xf0] sm:$0xff]
  %v56 = vld [vmem:[%s0 + $0xf8] sm:$0xf]
  %v57 = vld [vmem:[%s0 + $0xfc] sm:$0xff]
  %v58 = vld [vmem:[%s0 + $0x104] sm:$0xf]
  %v59 = vld [vmem:[%s1] sm:$0xf]
  %v60 = vld [vmem:[%s1 + $0x4] sm:$0xf]
  %v61 = vld [vmem:[%s1 + $0x8] sm:$0xf]
  %v62 = vld [vmem:[%s1 + $0xc] sm:$0xf]
  %v63 = vld [vmem:[%s1 + $0x10] sm:$0xf]
  %v64 = vld [vmem:[%s1 + $0x14] sm:$0xf]
  %v65 = vld [vmem:[%s1 + $0x18] sm:$0xf]
  %v66 = vld [vmem:[%s1 + $0x1c] sm:$0xf]
  %v67 = vld [vmem:[%s1 + $0x20] sm:$0xf]
  %v68 = vld [vmem:[%s1 + $0x24] sm:$0xf]
  %v69 = vld [vmem:[%s1 + $0x28] sm:$0xf]
  %v70 = vld [vmem:[%s1 + $0x2c] sm:$0xf]
  %v71 = vld [vmem:[%s1 + $0x30] sm:$0xf]
  %v72 = vld [vmem:[%s1 + $0x34] sm:$0xf]
  %v73 = vld [vmem:[%s1 + $0x38] sm:$0xf]
  %v74 = vld [vmem:[%s1 + $0x3c] sm:$0xf]
  %v75 = vld [vmem:[%s1 + $0x40] sm:$0xf]
  %v76 = vld [vmem:[%s1 + $0x44] sm:$0xf]
  %v77 = vld [vmem:[%s1 + $0x48] sm:$0xf]
  %v78 = vld [vmem:[%s1 + $0x4c] sm:$0xf]
  %v79 = vld [vmem:[%s1 + $0x50] sm:$0xf]
  %v80 = vld [vmem:[%s1 + $0x54] sm:$0xf]
  %v81 = vld [vmem:[%s1 + $0x58] sm:$0xf]
  %v82 = vld [vmem:[%s1 + $0x5c] sm:$0xf]
  %v83 = vld [vmem:[%s1 + $0x60] sm:$0xf]
  %v84 = vld [vmem:[%s1 + $0x64] sm:$0xf]
  %v85 = vld [vmem:[%s1 + $0x68] sm:$0xf]
  %v86 = vld [vmem:[%s1 + $0x6c] sm:$0xf]
  %v87 = vld [vmem:[%s1 + $0x70] sm:$0xf]
  %v88 = vld [vmem:[%s1 + $0x74] sm:$0xf]
  %v89 = vld [vmem:[%s1 + $0x78] sm:$0xf]
  %v90 = vld [vmem:[%s1 + $0x7c] sm:$0xf]
  %v91 = vld [vmem:[%s1 + $0x80] sm:$0xf]
  %v92 = vld [vmem:[%s1 + $0x84] sm:$0xf]
  %v93 = vld [vmem:[%s1 + $0x88] sm:$0xf]
  %v94 = vld [vmem:[%s1 + $0x8c] sm:$0xf]
  %v95 = vld [vmem:[%s2] sm:$0x1]
  %v97 = vlaneseq
  %v98 = vshrl.u32 %v97, 7
  %v99 = vsub.s32 0, %v98
  %v100 = vrot.slane %v95, %v99
  %v146 = vunpack.c.l.b16 %v15
  %v147 = vunpack.c.h.b16 %v15
  %v148 = vunpack.c.l.b16 %v16
  %v149 = vunpack.c.l.b16 %v17
  %v150 = vunpack.c.h.b16 %v17
  %v151 = vunpack.c.l.b16 %v18
  %v152 = vunpack.c.l.b16 %v19
  %v153 = vunpack.c.h.b16 %v19
  %v154 = vunpack.c.l.b16 %v20
  %v155 = vunpack.c.l.b16 %v21
  %v156 = vunpack.c.h.b16 %v21
  %v157 = vunpack.c.l.b16 %v22
  %v158 = vunpack.c.l.b16 %v23
  %v159 = vunpack.c.h.b16 %v23
  %v160 = vunpack.c.l.b16 %v24
  %v161 = vunpack.c.l.b16 %v25
  %v162 = vunpack.c.h.b16 %v25
  %v163 = vunpack.c.l.b16 %v26
  %v164 = vunpack.c.l.b16 %v27
  %v165 = vunpack.c.h.b16 %v27
  %v166 = vunpack.c.l.b16 %v28
  %v167 = vunpack.c.l.b16 %v29
  %v168 = vunpack.c.h.b16 %v29
  %v169 = vunpack.c.l.b16 %v30
  %v170 = vunpack.c.l.b16 %v31
  %v171 = vunpack.c.h.b16 %v31
  %v172 = vunpack.c.l.b16 %v32
  %v173 = vunpack.c.l.b16 %v33
  %v174 = vunpack.c.h.b16 %v33
  %v175 = vunpack.c.l.b16 %v34
  %v176 = vunpack.c.l.b16 %v35
  %v177 = vunpack.c.h.b16 %v35
  %v178 = vunpack.c.l.b16 %v36
  %v179 = vunpack.c.l.b16 %v37
  %v180 = vunpack.c.h.b16 %v37
  %v181 = vunpack.c.l.b16 %v38
  %v182 = vunpack.c.l.b16 %v39
  %v183 = vunpack.c.h.b16 %v39
  %v184 = vunpack.c.l.b16 %v40
  %v185 = vunpack.c.l.b16 %v41
  %v186 = vunpack.c.h.b16 %v41
  %v187 = vunpack.c.l.b16 %v42
  %v188 = vunpack.c.l.b16 %v43
  %v189 = vunpack.c.h.b16 %v43
  %v190 = vunpack.c.l.b16 %v44
  %v191 = vunpack.c.l.b16 %v45
  %v192 = vunpack.c.h.b16 %v45
  %v193 = vunpack.c.l.b16 %v46
  %v194 = vunpack.c.l.b16 %v47
  %v195 = vunpack.c.h.b16 %v47
  %v196 = vunpack.c.l.b16 %v48
  %v197 = vunpack.c.l.b16 %v49
  %v198 = vunpack.c.h.b16 %v49
  %v199 = vunpack.c.l.b16 %v50
  %v200 = vunpack.c.l.b16 %v51
  %v201 = vunpack.c.h.b16 %v51
  %v202 = vunpack.c.l.b16 %v52
  %v203 = vunpack.c.l.b16 %v53
  %v204 = vunpack.c.h.b16 %v53
  %v205 = vunpack.c.l.b16 %v54
  %v206 = vunpack.c.l.b16 %v55
  %v207 = vunpack.c.h.b16 %v55
  %v208 = vunpack.c.l.b16 %v56
  %v209 = vunpack.c.l.b16 %v57
  %v210 = vunpack.c.h.b16 %v57
  %v211 = vunpack.c.l.b16 %v58
  %v212 = vpack.c.b16 %v149, %v146
  %v213 = vpack.c.b16 %v150, %v147
  %v214 = vpack.c.b16 %v151, %v148
  %v215 = vpack.c.b16 %v155, %v152
  %v216 = vpack.c.b16 %v156, %v153
  %v217 = vpack.c.b16 %v157, %v154
  %v218 = vpack.c.b16 %v161, %v158
  %v219 = vpack.c.b16 %v162, %v159
  %v220 = vpack.c.b16 %v163, %v160
  %v221 = vpack.c.b16 %v167, %v164
  %v222 = vpack.c.b16 %v168, %v165
  %v223 = vpack.c.b16 %v169, %v166
  %v224 = vpack.c.b16 %v173, %v170
  %v225 = vpack.c.b16 %v174, %v171
  %v226 = vpack.c.b16 %v175, %v172
  %v227 = vpack.c.b16 %v179, %v176
  %v228 = vpack.c.b16 %v180, %v177
  %v229 = vpack.c.b16 %v181, %v178
  %v230 = vpack.c.b16 %v185, %v182
  %v231 = vpack.c.b16 %v186, %v183
  %v232 = vpack.c.b16 %v187, %v184
  %v233 = vpack.c.b16 %v191, %v188
  %v234 = vpack.c.b16 %v192, %v189
  %v235 = vpack.c.b16 %v193, %v190
  %v236 = vpack.c.b16 %v197, %v194
  %v237 = vpack.c.b16 %v198, %v195
  %v238 = vpack.c.b16 %v199, %v196
  %v239 = vpack.c.b16 %v203, %v200
  %v240 = vpack.c.b16 %v204, %v201
  %v241 = vpack.c.b16 %v205, %v202
  %v242 = vpack.c.b16 %v209, %v206
  %v243 = vpack.c.b16 %v210, %v207
  %v244 = vpack.c.b16 %v211, %v208
  %v303 = vunpack.c.l.b16 %v59
  %v304 = vunpack.c.l.b16 %v60
  %v305 = vunpack.c.l.b16 %v61
  %v306 = vunpack.c.l.b16 %v62
  %v307 = vunpack.c.l.b16 %v63
  %v308 = vunpack.c.l.b16 %v64
  %v309 = vunpack.c.l.b16 %v65
  %v310 = vunpack.c.l.b16 %v66
  %v311 = vunpack.c.l.b16 %v67
  %v312 = vunpack.c.l.b16 %v68
  %v313 = vunpack.c.l.b16 %v69
  %v314 = vunpack.c.l.b16 %v70
  %v315 = vunpack.c.l.b16 %v71
  %v316 = vunpack.c.l.b16 %v72
  %v317 = vunpack.c.l.b16 %v73
  %v318 = vunpack.c.l.b16 %v74
  %v319 = vunpack.c.l.b16 %v75
  %v320 = vunpack.c.l.b16 %v76
  %v321 = vunpack.c.l.b16 %v77
  %v322 = vunpack.c.l.b16 %v78
  %v323 = vunpack.c.l.b16 %v79
  %v324 = vunpack.c.l.b16 %v80
  %v325 = vunpack.c.l.b16 %v81
  %v326 = vunpack.c.l.b16 %v82
  %v327 = vunpack.c.l.b16 %v83
  %v328 = vunpack.c.l.b16 %v84
  %v329 = vunpack.c.l.b16 %v85
  %v330 = vunpack.c.l.b16 %v86
  %v331 = vunpack.c.l.b16 %v87
  %v332 = vunpack.c.l.b16 %v88
  %v333 = vunpack.c.l.b16 %v89
  %v334 = vunpack.c.l.b16 %v90
  %v335 = vunpack.c.l.b16 %v91
  %v336 = vunpack.c.l.b16 %v92
  %v337 = vunpack.c.l.b16 %v93
  %v338 = vunpack.c.l.b16 %v94
  %v339 = vpack.c.b16 %v304, %v303
  %v340 = vpack.c.b16 %v306, %v305
  %v341 = vpack.c.b16 %v308, %v307
  %v342 = vpack.c.b16 %v310, %v309
  %v343 = vpack.c.b16 %v312, %v311
  %v344 = vpack.c.b16 %v314, %v313
  %v345 = vpack.c.b16 %v316, %v315
  %v346 = vpack.c.b16 %v318, %v317
  %v347 = vpack.c.b16 %v320, %v319
  %v348 = vpack.c.b16 %v322, %v321
  %v349 = vpack.c.b16 %v324, %v323
  %v350 = vpack.c.b16 %v326, %v325
  %v351 = vpack.c.b16 %v328, %v327
  %v352 = vpack.c.b16 %v330, %v329
  %v353 = vpack.c.b16 %v332, %v331
  %v354 = vpack.c.b16 %v334, %v333
  %v355 = vpack.c.b16 %v336, %v335
  %v356 = vpack.c.b16 %v338, %v337
  %vm375 = vcmask 261120
  %v377 = vsel %vm375, %v214, 0
  %v380 = vsel %vm375, %v217, 0
  %v383 = vsel %vm375, %v220, 0
  %v386 = vsel %vm375, %v223, 0
  %v389 = vsel %vm375, %v226, 0
  %v392 = vsel %vm375, %v229, 0
  %v395 = vsel %vm375, %v232, 0
  %v398 = vsel %vm375, %v235, 0
  %v401 = vsel %vm375, %v238, 0
  %v404 = vsel %vm375, %v241, 0
  %v407 = vsel %vm375, %v244, 0
  %409 = vmatprep.subr.bf16.mxu0 0
  %410 = vmatpush1.bf16.msra.mxu0 %v339
  %411 = vmatprep.subr.bf16.mxu0 0
  %412 = vmatpush1.bf16.msra.mxu0 %v340
  %413 = vmatprep.subr.bf16.mxu0 0
  %414 = vmatpush1.bf16.msra.mxu0 %v341
  %415 = vmatprep.subr.bf16.mxu0 0
  %416 = vmatpush1.bf16.msra.mxu0 %v342
  %417 = vmatprep.subr.bf16.mxu0 0
  %418 = vmatpush1.bf16.msra.mxu0 %v343
  %419 = vmatprep.subr.bf16.mxu0 0
  %420 = vmatpush1.bf16.msra.mxu0 %v344
  %421 = vmatprep.subr.bf16.mxu0 0
  %422 = vmatpush1.bf16.msra.mxu0 %v345
  %423 = vmatprep.subr.bf16.mxu0 0
  %424 = vmatpush1.bf16.msra.mxu0 %v346
  %425 = vmatprep.subr.bf16.mxu0 0
  %426 = vmatpush1.bf16.msra.mxu0 %v347
  %427 = vmatprep.subr.bf16.mxu0 0
  %428 = vmatpush1.bf16.msra.mxu0 %v348
  %429 = vmatprep.subr.bf16.mxu0 0
  %430 = vmatpush1.bf16.msra.mxu0 %v349
  %431 = vmatprep.subr.bf16.mxu0 0
  %432 = vmatpush1.bf16.msra.mxu0 %v350
  %433 = vmatprep.subr.bf16.mxu0 0
  %434 = vmatpush1.bf16.msra.mxu0 %v351
  %435 = vmatprep.subr.bf16.mxu0 0
  %436 = vmatpush1.bf16.msra.mxu0 %v352
  %437 = vmatprep.subr.bf16.mxu0 0
  %438 = vmatpush1.bf16.msra.mxu0 %v353
  %439 = vmatprep.subr.bf16.mxu0 0
  %440 = vmatpush1.bf16.msra.mxu0 %v354
  %441 = vmatprep.mubr.bf16.mxu0 %v213
  %442 = vmatmul.mubr.bf16.gmra.mrb[0].mxu0 %v212
  %v443 = vpop.f32.mrb[0].mxu0
  %v444 = vadd.f32 %v100, %v443
  %v445 = vpop.f32.mrb[0].mxu0
  %v446 = vpop.f32.mrb[0].mxu0
  %v447 = vadd.f32 %v100, %v446
  %v448 = vpop.f32.mrb[0].mxu0
  %449 = vmatprep.mubr.bf16.mxu0 %v216
  %450 = vmatmul.mubr.bf16.gmra.mrb[0].mxu0 %v215
  %v451 = vpop.f32.mrb[0].mxu0
  %v452 = vadd.f32 %v100, %v451
  %v453 = vpop.f32.mrb[0].mxu0
  %v454 = vpop.f32.mrb[0].mxu0
  %v455 = vadd.f32 %v100, %v454
  %v456 = vpop.f32.mrb[0].mxu0
  %457 = vmatprep.mubr.bf16.mxu0 %v219
  %458 = vmatmul.mubr.bf16.gmra.mrb[0].mxu0 %v218
  %v459 = vpop.f32.mrb[0].mxu0
  %v460 = vadd.f32 %v100, %v459
  %v461 = vpop.f32.mrb[0].mxu0
  %v462 = vpop.f32.mrb[0].mxu0
  %v463 = vadd.f32 %v100, %v462
  %v464 = vpop.f32.mrb[0].mxu0
  %465 = vmatprep.mubr.bf16.mxu0 %v222
  %466 = vmatmul.mubr.bf16.gmra.mrb[0].mxu0 %v221
  %v467 = vpop.f32.mrb[0].mxu0
  %v468 = vadd.f32 %v100, %v467
  %v469 = vpop.f32.mrb[0].mxu0
  %v470 = vpop.f32.mrb[0].mxu0
  %v471 = vadd.f32 %v100, %v470
  %v472 = vpop.f32.mrb[0].mxu0
  %473 = vmatprep.mubr.bf16.mxu0 %v225
  %474 = vmatmul.mubr.bf16.gmra.mrb[0].mxu0 %v224
  %v475 = vpop.f32.mrb[0].mxu0
  %v476 = vadd.f32 %v100, %v475
  %v477 = vpop.f32.mrb[0].mxu0
  %v478 = vpop.f32.mrb[0].mxu0
  %v479 = vadd.f32 %v100, %v478
  %v480 = vpop.f32.mrb[0].mxu0
  %481 = vmatprep.mubr.bf16.mxu0 %v228
  %482 = vmatmul.mubr.bf16.gmra.mrb[0].mxu0 %v227
  %v483 = vpop.f32.mrb[0].mxu0
  %v484 = vadd.f32 %v100, %v483
  %v485 = vpop.f32.mrb[0].mxu0
  %v486 = vpop.f32.mrb[0].mxu0
  %v487 = vadd.f32 %v100, %v486
  %v488 = vpop.f32.mrb[0].mxu0
  %489 = vmatprep.mubr.bf16.mxu0 %v231
  %490 = vmatmul.mubr.bf16.gmra.mrb[0].mxu0 %v230
  %v491 = vpop.f32.mrb[0].mxu0
  %v492 = vadd.f32 %v100, %v491
  %v493 = vpop.f32.mrb[0].mxu0
  %v494 = vpop.f32.mrb[0].mxu0
  %v495 = vadd.f32 %v100, %v494
  %v496 = vpop.f32.mrb[0].mxu0
  %497 = vmatprep.mubr.bf16.mxu0 %v234
  %498 = vmatmul.mubr.bf16.gmra.mrb[0].mxu0 %v233
  %v499 = vpop.f32.mrb[0].mxu0
  %v500 = vadd.f32 %v100, %v499
  %v501 = vpop.f32.mrb[0].mxu0
  %v502 = vpop.f32.mrb[0].mxu0
  %v503 = vadd.f32 %v100, %v502
  %v504 = vpop.f32.mrb[0].mxu0
  %505 = vmatprep.mubr.bf16.mxu0 %v237
  %506 = vmatmul.mubr.bf16.gmra.mrb[0].mxu0 %v236
  %v507 = vpop.f32.mrb[0].mxu0
  %v508 = vadd.f32 %v100, %v507
  %v509 = vpop.f32.mrb[0].mxu0
  %v510 = vpop.f32.mrb[0].mxu0
  %v511 = vadd.f32 %v100, %v510
  %v512 = vpop.f32.mrb[0].mxu0
  %513 = vmatprep.mubr.bf16.mxu0 %v240
  %514 = vmatmul.mubr.bf16.gmra.mrb[0].mxu0 %v239
  %v515 = vpop.f32.mrb[0].mxu0
  %v516 = vadd.f32 %v100, %v515
  %v517 = vpop.f32.mrb[0].mxu0
  %v518 = vpop.f32.mrb[0].mxu0
  %v519 = vadd.f32 %v100, %v518
  %v520 = vpop.f32.mrb[0].mxu0
  %521 = vmatprep.mubr.bf16.mxu0 %v243
  %522 = vmatmul.mubr.bf16.gmra.mrb[0].mxu0 %v242
  %v523 = vpop.f32.mrb[0].mxu0
  %v524 = vadd.f32 %v100, %v523
  %v525 = vpop.f32.mrb[0].mxu0
  %v526 = vpop.f32.mrb[0].mxu0
  %v527 = vadd.f32 %v100, %v526
  %v528 = vpop.f32.mrb[0].mxu0
  %529 = vdwg.mxu0
  %530 = vmatprep.subr.bf16.mxu0 0
  %531 = vmatpush1.bf16.msra.mxu0 %v355
  %532 = vmatprep.subr.bf16.mxu0 0
  %533 = vmatpush1.bf16.msra.mxu0 %v356
  %534 = vmatprep.subr.bf16.mxu0 0
  %535 = vmatpush1.bf16.msra.mxu0 0
  %536 = vmatprep.subr.bf16.mxu0 0
  %537 = vmatpush1.bf16.msra.mxu0 0
  %538 = vmatprep.subr.bf16.mxu0 0
  %539 = vmatpush1.bf16.msra.mxu0 0
  %540 = vmatprep.subr.bf16.mxu0 0
  %541 = vmatpush1.bf16.msra.mxu0 0
  %542 = vmatprep.subr.bf16.mxu0 0
  %543 = vmatpush1.bf16.msra.mxu0 0
  %544 = vmatprep.subr.bf16.mxu0 0
  %545 = vmatpush1.bf16.msra.mxu0 0
  %546 = vmatprep.subr.bf16.mxu0 0
  %547 = vmatpush1.bf16.msra.mxu0 0
  %548 = vmatprep.subr.bf16.mxu0 0
  %549 = vmatpush1.bf16.msra.mxu0 0
  %550 = vmatprep.subr.bf16.mxu0 0
  %551 = vmatpush1.bf16.msra.mxu0 0
  %552 = vmatprep.subr.bf16.mxu0 0
  %553 = vmatpush1.bf16.msra.mxu0 0
  %554 = vmatprep.subr.bf16.mxu0 0
  %555 = vmatpush1.bf16.msra.mxu0 0
  %556 = vmatprep.subr.bf16.mxu0 0
  %557 = vmatpush1.bf16.msra.mxu0 0
  %558 = vmatprep.subr.bf16.mxu0 0
  %559 = vmatpush1.bf16.msra.mxu0 0
  %560 = vmatprep.subr.bf16.mxu0 0
  %561 = vmatpush1.bf16.msra.mxu0 0
  %562 = vmatprep.mubr.bf16.mxu0 0
  %563 = vmatmul.mubr.bf16.gmra.mrb[0].mxu0 %v377
  %v564 = vpop.f32.mrb[0].mxu0
  %v565 = vadd.f32 %v444, %v564
  %v566 = vpop.f32.mrb[0].mxu0
  %v567 = vpop.f32.mrb[0].mxu0
  %v568 = vadd.f32 %v447, %v567
  %v569 = vpop.f32.mrb[0].mxu0
  %570 = vmatprep.mubr.bf16.mxu0 0
  %571 = vmatmul.mubr.bf16.gmra.mrb[0].mxu0 %v380
  %v572 = vpop.f32.mrb[0].mxu0
  %v573 = vadd.f32 %v452, %v572
  %v574 = vpop.f32.mrb[0].mxu0
  %v575 = vpop.f32.mrb[0].mxu0
  %v576 = vadd.f32 %v455, %v575
  %v577 = vpop.f32.mrb[0].mxu0
  %578 = vmatprep.mubr.bf16.mxu0 0
  %579 = vmatmul.mubr.bf16.gmra.mrb[0].mxu0 %v383
  %v580 = vpop.f32.mrb[0].mxu0
  %v581 = vadd.f32 %v460, %v580
  %v582 = vpop.f32.mrb[0].mxu0
  %v583 = vpop.f32.mrb[0].mxu0
  %v584 = vadd.f32 %v463, %v583
  %v585 = vpop.f32.mrb[0].mxu0
  %586 = vmatprep.mubr.bf16.mxu0 0
  %587 = vmatmul.mubr.bf16.gmra.mrb[0].mxu0 %v386
  %v588 = vpop.f32.mrb[0].mxu0
  %v589 = vadd.f32 %v468, %v588
  %v590 = vpop.f32.mrb[0].mxu0
  %v591 = vpop.f32.mrb[0].mxu0
  %v592 = vadd.f32 %v471, %v591
  %v593 = vpop.f32.mrb[0].mxu0
  %594 = vmatprep.mubr.bf16.mxu0 0
  %595 = vmatmul.mubr.bf16.gmra.mrb[0].mxu0 %v389
  %v596 = vpop.f32.mrb[0].mxu0
  %v597 = vadd.f32 %v476, %v596
  %v598 = vpop.f32.mrb[0].mxu0
  %v599 = vpop.f32.mrb[0].mxu0
  %v600 = vadd.f32 %v479, %v599
  %v601 = vpop.f32.mrb[0].mxu0
  %602 = vmatprep.mubr.bf16.mxu0 0
  %603 = vmatmul.mubr.bf16.gmra.mrb[0].mxu0 %v392
  %v604 = vpop.f32.mrb[0].mxu0
  %v605 = vadd.f32 %v484, %v604
  %v606 = vpop.f32.mrb[0].mxu0
  %v607 = vpop.f32.mrb[0].mxu0
  %v608 = vadd.f32 %v487, %v607
  %v609 = vpop.f32.mrb[0].mxu0
  %610 = vmatprep.mubr.bf16.mxu0 0
  %611 = vmatmul.mubr.bf16.gmra.mrb[0].mxu0 %v395
  %v612 = vpop.f32.mrb[0].mxu0
  %v613 = vadd.f32 %v492, %v612
  %v614 = vpop.f32.mrb[0].mxu0
  %v615 = vpop.f32.mrb[0].mxu0
  %v616 = vadd.f32 %v495, %v615
  %v617 = vpop.f32.mrb[0].mxu0
  %618 = vmatprep.mubr.bf16.mxu0 0
  %619 = vmatmul.mubr.bf16.gmra.mrb[0].mxu0 %v398
  %v620 = vpop.f32.mrb[0].mxu0
  %v621 = vadd.f32 %v500, %v620
  %v622 = vpop.f32.mrb[0].mxu0
  %v623 = vpop.f32.mrb[0].mxu0
  %v624 = vadd.f32 %v503, %v623
  %v625 = vpop.f32.mrb[0].mxu0
  %626 = vmatprep.mubr.bf16.mxu0 0
  %627 = vmatmul.mubr.bf16.gmra.mrb[0].mxu0 %v401
  %v628 = vpop.f32.mrb[0].mxu0
  %v629 = vadd.f32 %v508, %v628
  %v630 = vpop.f32.mrb[0].mxu0
  %v631 = vpop.f32.mrb[0].mxu0
  %v632 = vadd.f32 %v511, %v631
  %v633 = vpop.f32.mrb[0].mxu0
  %634 = vmatprep.mubr.bf16.mxu0 0
  %635 = vmatmul.mubr.bf16.gmra.mrb[0].mxu0 %v404
  %v636 = vpop.f32.mrb[0].mxu0
  %v637 = vadd.f32 %v516, %v636
  %v638 = vpop.f32.mrb[0].mxu0
  %v639 = vpop.f32.mrb[0].mxu0
  %v640 = vadd.f32 %v519, %v639
  %v641 = vpop.f32.mrb[0].mxu0
  %642 = vmatprep.mubr.bf16.mxu0 0
  %643 = vmatmul.mubr.bf16.gmra.mrb[0].mxu0 %v407
  %v644 = vpop.f32.mrb[0].mxu0
  %v645 = vadd.f32 %v524, %v644
  %v646 = vpop.f32.mrb[0].mxu0
  %v647 = vpop.f32.mrb[0].mxu0
  %v648 = vadd.f32 %v527, %v647
  %v649 = vpop.f32.mrb[0].mxu0
  %650 = vdwg.mxu0
  %651 = vst [vmem:[%s3] sm:$0xff] %v565
  %652 = vst [vmem:[%s3 + $0x8] sm:$0xff] %v568
  %653 = vst [vmem:[%s3 + $0x10] sm:$0xff] %v573
  %654 = vst [vmem:[%s3 + $0x18] sm:$0xff] %v576
  %655 = vst [vmem:[%s3 + $0x20] sm:$0xff] %v581
  %656 = vst [vmem:[%s3 + $0x28] sm:$0xff] %v584
  %657 = vst [vmem:[%s3 + $0x30] sm:$0xff] %v589
  %658 = vst [vmem:[%s3 + $0x38] sm:$0xff] %v592
  %659 = vst [vmem:[%s3 + $0x40] sm:$0xff] %v597
  %660 = vst [vmem:[%s3 + $0x48] sm:$0xff] %v600
  %661 = vst [vmem:[%s3 + $0x50] sm:$0xff] %v605
  %662 = vst [vmem:[%s3 + $0x58] sm:$0xff] %v608
  %663 = vst [vmem:[%s3 + $0x60] sm:$0xff] %v613
  %664 = vst [vmem:[%s3 + $0x68] sm:$0xff] %v616
  %665 = vst [vmem:[%s3 + $0x70] sm:$0xff] %v621
  %666 = vst [vmem:[%s3 + $0x78] sm:$0xff] %v624
  %667 = vst [vmem:[%s3 + $0x80] sm:$0xff] %v629
  %668 = vst [vmem:[%s3 + $0x88] sm:$0xff] %v632
  %669 = vst [vmem:[%s3 + $0x90] sm:$0xff] %v637
  %670 = vst [vmem:[%s3 + $0x98] sm:$0xff] %v640
  %671 = vst [vmem:[%s3 + $0xa0] sm:$0xff] %v645
  %672 = vst [vmem:[%s3 + $0xa8] sm:$0xff] %v648
  // Predicated region
  $region14: #{retinanet_forward.46} parent=0 // pred_check
    _
  $region15: #{retinanet_forward.46} parent=0 // pred_check_branch
    %674 = sbr.rel (0) target = $region17
  $region16: #{retinanet_forward.46} parent=0 // pred_region
    _
  $region17: #{retinanet_forward.46} parent=0 // pred_fallthru
    _
  // Predicated region
  $region18: #{retinanet_forward.46} parent=0 // pred_check
    _
  $region19: #{retinanet_forward.46} parent=0 // pred_check_branch
    %676 = sbr.rel (0) target = $region21
  $region20: #{retinanet_forward.46} parent=0 // pred_region
    _
  $region21: #{retinanet_forward.46} parent=0 // pred_fallthru
    _

// kernel: retinanet_forward.47
$region0: #{retinanet_forward.47}
  #allocation0 [shape = 'u32[]', space=smem, size = 0x4, offset = 0x4, fixed_abs, tag = 'smem constant byte address 0x4 - core index']
  #allocation1 [shape = 'u32[144,128]{1,0:T(1,128)}', space=vmem, size = 0x12000, scoped, tag = 'internal scratch']
  %s0 = inlined_call_operand.vmem [shape: f32[8,1536], index: 0, kind: input, shape index: {}]
  %s1 = inlined_call_operand.vmem [shape: f32[4,1536], index: 1, kind: output, shape index: {}]
  %s2 = sld [smem:[#allocation0]]
  $region14: #{retinanet_forward.47} parent=0
    _
  %s4 = ssub.s32 1, %s2
  %s5 = scalar_select 0, %s4, %s2
  // Predicated region
  $region2: #{retinanet_forward.47} parent=0 // pred_check
    _
  $region3: #{retinanet_forward.47} parent=0 // pred_check_branch
    %7 = sbr.rel (0) target = $region5
  $region4: #{retinanet_forward.47} parent=0 // pred_region
    _
  $region5: #{retinanet_forward.47} parent=0 // pred_fallthru
    _
  %v8 = vld [vmem:[%s0] ss:$8 sm:$0xf]
  %v9 = vld [vmem:[%s0] ss:$8 sm:$0xf0]
  %v10 = vor.u32 %v8, %v9
  %s11 = scalar_lea.vmem %s0, 64
  %v12 = vld [vmem:[%s11] ss:$8 sm:$0xf]
  %s13 = scalar_lea.vmem %s0, 1
  %v14 = vld [vmem:[%s13] ss:$8 sm:$0xf]
  %v15 = vld [vmem:[%s13] ss:$8 sm:$0xf0]
  %v16 = vor.u32 %v14, %v15
  %s17 = scalar_lea.vmem %s0, 65
  %v18 = vld [vmem:[%s17] ss:$8 sm:$0xf]
  %s19 = scalar_lea.vmem %s0, 2
  %v20 = vld [vmem:[%s19] ss:$8 sm:$0xf]
  %v21 = vld [vmem:[%s19] ss:$8 sm:$0xf0]
  %v22 = vor.u32 %v20, %v21
  %s23 = scalar_lea.vmem %s0, 66
  %v24 = vld [vmem:[%s23] ss:$8 sm:$0xf]
  %s25 = scalar_lea.vmem %s0, 3
  %v26 = vld [vmem:[%s25] ss:$8 sm:$0xf]
  %v27 = vld [vmem:[%s25] ss:$8 sm:$0xf0]
  %v28 = vor.u32 %v26, %v27
  %s29 = scalar_lea.vmem %s0, 67
  %v30 = vld [vmem:[%s29] ss:$8 sm:$0xf]
  %s31 = scalar_lea.vmem %s0, 4
  %v32 = vld [vmem:[%s31] ss:$8 sm:$0xf]
  %v33 = vld [vmem:[%s31] ss:$8 sm:$0xf0]
  %v34 = vor.u32 %v32, %v33
  %s35 = scalar_lea.vmem %s0, 68
  %v36 = vld [vmem:[%s35] ss:$8 sm:$0xf]
  %s37 = scalar_lea.vmem %s0, 5
  %v38 = vld [vmem:[%s37] ss:$8 sm:$0xf]
  %v39 = vld [vmem:[%s37] ss:$8 sm:$0xf0]
  %v40 = vor.u32 %v38, %v39
  %s41 = scalar_lea.vmem %s0, 69
  %v42 = vld [vmem:[%s41] ss:$8 sm:$0xf]
  %s43 = scalar_lea.vmem %s0, 6
  %v44 = vld [vmem:[%s43] ss:$8 sm:$0xf]
  %v45 = vld [vmem:[%s43] ss:$8 sm:$0xf0]
  %v46 = vor.u32 %v44, %v45
  %s47 = scalar_lea.vmem %s0, 70
  %v48 = vld [vmem:[%s47] ss:$8 sm:$0xf]
  %s49 = scalar_lea.vmem %s0, 7
  %v50 = vld [vmem:[%s49] ss:$8 sm:$0xf]
  %v51 = vld [vmem:[%s49] ss:$8 sm:$0xf0]
  %v52 = vor.u32 %v50, %v51
  %s53 = scalar_lea.vmem %s0, 71
  %v54 = vld [vmem:[%s53] ss:$8 sm:$0xf]
  %v55 = vsub.f32 %v46, %v34
  %v56 = vsub.f32 %v48, %v36
  %v57 = vsub.f32 %v52, %v40
  %v58 = vsub.f32 %v54, %v42
  %v59 = vmul.f32 %v55, 0.5
  %v60 = vmul.f32 %v56, 0.5
  %v61 = vadd.f32 %v34, %v59
  %v62 = vadd.f32 %v36, %v60
  %v63 = vmul.f32 %v57, 0.5
  %v64 = vmul.f32 %v58, 0.5
  %v65 = vadd.f32 %v40, %v63
  %v66 = vadd.f32 %v42, %v64
  %v67 = vmul.f32 %v10, %v55
  %v68 = vmul.f32 %v12, %v56
  %v69 = vadd.f32 %v67, %v61
  %v70 = vadd.f32 %v68, %v62
  %v71 = vmul.f32 %v16, %v57
  %v72 = vmul.f32 %v18, %v58
  %v73 = vadd.f32 %v71, %v65
  %v74 = vadd.f32 %v72, %v66
  %v75 = vmul.f32 %v22, 1.442695
  %v76 = vpow.pop %v75
  %v77 = vmul.f32 %v24, 1.442695
  %v78 = vpow.pop %v77
  %v79 = vmul.f32 %v76, %v55
  %v80 = vmul.f32 %v78, %v56
  %v81 = vmul.f32 %v28, 1.442695
  %v82 = vpow.pop %v81
  %v83 = vmul.f32 %v30, 1.442695
  %v84 = vpow.pop %v83
  %v85 = vmul.f32 %v82, %v57
  %v86 = vmul.f32 %v84, %v58
  %v87 = vmul.f32 %v79, 0.5
  %v88 = vmul.f32 %v80, 0.5
  %v89 = vsub.f32 %v69, %v87
  %v90 = vsub.f32 %v70, %v88
  %91 = vst [vmem:[%s1] ss:$4 sm:$0xff] %v89
  %v92 = vlaneseq
  %vm93 = vcmp.ge.s32.totalorder %v92, 0
  %vm94 = vcmp.lt.s32.totalorder %v92, 512
  %vm95 = vmand %vm93, %vm94
  %s96 = scalar_lea.vmem %s1, 32
  %97 = vst.msk [vmem:[%s96] ss:$4 sm:$0xf] %vm95, %v90
  %v98 = vmul.f32 %v85, 0.5
  %v99 = vmul.f32 %v86, 0.5
  %v100 = vsub.f32 %v73, %v98
  %v101 = vsub.f32 %v74, %v99
  %s102 = scalar_lea.vmem %s1, 1
  %103 = vst [vmem:[%s102] ss:$4 sm:$0xff] %v100
  %s104 = scalar_lea.vmem %s1, 33
  %105 = vst.msk [vmem:[%s104] ss:$4 sm:$0xf] %vm95, %v101
  %v106 = vadd.f32 %v69, %v87
  %v107 = vadd.f32 %v70, %v88
  %s108 = scalar_lea.vmem %s1, 2
  %109 = vst [vmem:[%s108] ss:$4 sm:$0xff] %v106
  %s110 = scalar_lea.vmem %s1, 34
  %111 = vst.msk [vmem:[%s110] ss:$4 sm:$0xf] %vm95, %v107
  %v112 = vadd.f32 %v73, %v98
  %v113 = vadd.f32 %v74, %v99
  %s114 = scalar_lea.vmem %s1, 3
  %115 = vst [vmem:[%s114] ss:$4 sm:$0xff] %v112
  %s116 = scalar_lea.vmem %s1, 35
  %117 = vst.msk [vmem:[%s116] ss:$4 sm:$0xf] %vm95, %v113
  // Predicated region
  $region6: #{retinanet_forward.47} parent=0 // pred_check
    _
  $region7: #{retinanet_forward.47} parent=0 // pred_check_branch
    %119 = sbr.rel (0) target = $region9
  $region8: #{retinanet_forward.47} parent=0 // pred_region
    _
  $region9: #{retinanet_forward.47} parent=0 // pred_fallthru
    _
  // Predicated region
  $region10: #{retinanet_forward.47} parent=0 // pred_check
    _
  $region11: #{retinanet_forward.47} parent=0 // pred_check_branch
    %121 = sbr.rel (0) target = $region13
  $region12: #{retinanet_forward.47} parent=0 // pred_region
    _
  $region13: #{retinanet_forward.47} parent=0 // pred_fallthru
    _

</llo_original>
